<compile_context>
chip_gen: v5e
topology: v5e:2x2
jax: 0.10.0
libtpu: 0.0.40
codegen_flags: <defaults>
</compile_context>

<pallas_src>
import numpy as np
import jax
import jax.numpy as jnp
from jax import lax
from jax.experimental import pallas as pl
from jax.experimental.pallas import tpu as pltpu


# --------------------------------------------------------------------------
# Stage 1 kernel: three_nn + three_interpolate + shared MLP + attention
# projections.  Emits the value embedding (D, T) and the 4 attention logits
# (4, T) per n-tile, all channels-first (lane dim = points).
# --------------------------------------------------------------------------
def _fp_stage1_kernel(xyz_u_pts_ref, xyz_u_cf_ref, uf_ref, xyz_k_cf_ref, kf_ref,
                      w_m1a_ref, w_m1b_ref, w_m2_ref, w_pos_ref, w_key_ref,
                      w_v1_ref, w_v2_ref, w_att_ref, w_pc_ref, w_kc_ref,
                      val_ref, att_ref):
    f32 = jnp.float32
    bf16 = jnp.bfloat16
    relu = lambda x: jnp.maximum(x, 0.0)
    sigmoid = lambda x: 1.0 / (1.0 + jnp.exp(-x))

    def mm(w_ref, x_bf16):  # (Cout,Cin) @ (Cin,T): bf16 operands, f32 accumulate (MXU)
        return jnp.dot(w_ref[...], x_bf16, preferred_element_type=f32)

    u_pts = xyz_u_pts_ref[0]        # (T, 3)  unknown xyz, points-major (f32)
    u_cf = xyz_u_cf_ref[0]          # (3, T)  unknown xyz, channels-first (f32)
    k_cf = xyz_k_cf_ref[0]          # (3, m)  known xyz, channels-first, lane-dense (f32)
    uf = uf_ref[0]                  # (C1, T) features to propagate to (bf16)
    kf = kf_ref[0]                  # (C2, m) features to propagate (bf16)

    T = u_pts.shape[0]
    m = k_cf.shape[1]

    # ---- three_nn squared distances on the VPU: exact f32, no MXU, no
    #      cancellation, no clamp.  d2[i,j] = sum_c (u[i,c] - k[c,j])^2.
    d2 = ((u_pts[:, 0:1] - k_cf[0:1, :]) ** 2
          + (u_pts[:, 1:2] - k_cf[1:2, :]) ** 2
          + (u_pts[:, 2:3] - k_cf[2:3, :]) ** 2)                     # (T, m)

    # ---- 3 nearest neighbours with a deterministic lowest-index tie-break
    #      (matches top_k under duplicated / padded known points).  Inverse
    #      distances are scattered into a sparse (T, m) weight matrix that is
    #      applied with one MXU matmul (gather-free three_interpolate).
    BIG = jnp.float32(1e30)
    col_idx = lax.broadcasted_iota(jnp.int32, (T, m), 1)
    d_work = d2
    sel = jnp.zeros((T, m), f32)
    recip_sum = jnp.zeros((T, 1), f32)
    for _ in range(3):
        dmin = jnp.min(d_work, axis=1, keepdims=True)                # (T, 1)
        hit = d_work == dmin
        first = jnp.min(jnp.where(hit, col_idx, m), axis=1, keepdims=True)
        pick = col_idx == first                                      # exactly one col/row
        r = 1.0 / (jnp.sqrt(dmin) + 1e-8)                            # dist_recip
        sel = sel + jnp.where(pick, r, 0.0)
        recip_sum = recip_sum + r
        d_work = jnp.where(pick, BIG, d_work)
    w_sel = sel * (1.0 / recip_sum)                                  # rows sum to 1

    # interp (C2, T) = kf (C2, m) . w_sel^T  -- NT matmul contracting on m.
    interp = lax.dot_general(kf, w_sel.astype(bf16),
                             (((1,), (1,)), ((), ())),
                             preferred_element_type=f32)

    # ---- shared MLP; cat([interp, unknow_feats]) folded into a split matmul.
    h = relu(mm(w_m1a_ref, interp.astype(bf16)) + mm(w_m1b_ref, uf))     # (H1, T)
    nf = relu(mm(w_m2_ref, h.astype(bf16)))                              # (D, T)
    nf_bf = nf.astype(bf16)                                              # cast once

    # ---- attention projections (channels-first == native conv1d orientation).
    pos = relu(mm(w_pos_ref, u_cf.astype(bf16)))                         # (D, T)
    key = relu(mm(w_key_ref, nf_bf))                                     # (D, T)
    val = relu(mm(w_v2_ref, relu(mm(w_v1_ref, nf_bf)).astype(bf16)))     # (D, T)

    pc = sigmoid(mm(w_pc_ref, pos.astype(bf16)))                         # (2, T): [q; v]
    k_coef = sigmoid(mm(w_kc_ref, key.astype(bf16)))                     # (1, T)
    q_coef = pc[0:1, :]
    v_coef = pc[1:2, :]
    # NOTE: the PyTorch forward also builds qk_coef(pos*key) but never uses it.

    val = val + pos * v_coef
    att_emb = pos * q_coef + key * k_coef
    att = mm(w_att_ref, att_emb.astype(bf16))                            # (4, T) logits

    val_ref[0] = val.astype(val_ref.dtype)
    att_ref[0] = att


# --------------------------------------------------------------------------
# Generation-aware tiling: v7x cores have 64 MiB VMEM, v5e/v6e have 128 MiB.
# --------------------------------------------------------------------------
def _select_tiling(n, m):
    try:
        vmem_cap = int(pltpu.get_tpu_info().vmem_capacity_bytes)
    except Exception:
        vmem_cap = 128 * 1024 * 1024
    budget = (44 if vmem_cap <= 64 * 1024 * 1024 else 100) * 1024 * 1024
    n_cap = pl.cdiv(n, 128) * 128
    tile = 128
    # ~5 live (tile, m) f32/i32 temporaries in the 3-NN block; keep them under
    # half the scoped budget so resident feats / weights / IO tiles still fit.
    while (tile < 512 and tile * 2 <= n_cap
           and 5 * (tile * 2) * max(m, 8) * 4 <= budget // 2):
        tile *= 2
    return tile, budget


# --------------------------------------------------------------------------
# Wrapper
# --------------------------------------------------------------------------
def pointnet_fp_forward(unknown, known, unknow_feats, known_feats, kparams,
                        *, tile_n=None, out_dtype=jnp.float32):
    """unknown (B,n,3), known (B,m,3), unknow_feats (B,C1,n), known_feats (B,C2,m)
    -> (B, D, n) with D = mlp[-1]."""
    B, n, _ = unknown.shape
    m = known.shape[1]
    C1 = unknow_feats.shape[1]
    C2 = known_feats.shape[1]
    D = kparams["w_key"].shape[0]
    H1 = kparams["w_mlp2"].shape[1]
    Dh = kparams["w_v2"].shape[1]
    assert D % 4 == 0

    auto_tile, vmem_budget = _select_tiling(n, m)
    tile = auto_tile if tile_n is None else max(128, (int(tile_n) // 128) * 128)
    tile = min(tile, pl.cdiv(n, 128) * 128)
    n_pad = pl.cdiv(n, tile) * tile
    nt = n_pad // tile

    # Pad the point dimension up to a tile multiple (padded columns are sliced
    # off before the global-n softmax, so they never affect the result).
    if n_pad != n:
        pad = n_pad - n
        unknown_p = jnp.pad(unknown, ((0, 0), (0, pad), (0, 0)))
        unknow_feats_p = jnp.pad(unknow_feats, ((0, 0), (0, 0), (0, pad)))
    else:
        unknown_p, unknow_feats_p = unknown, unknow_feats

    # Lane-dense layouts + one-time bf16 casts of the matmul-only feature inputs.
    unknown_cf = jnp.transpose(unknown_p, (0, 2, 1))          # (B, 3, n_pad) f32
    known_cf = jnp.transpose(known, (0, 2, 1))                # (B, 3, m)    f32
    uf_bf = unknow_feats_p.astype(jnp.bfloat16)               # (B, C1, n_pad)
    kf_bf = known_feats.astype(jnp.bfloat16)                  # (B, C2, m)

    weight_order = ("w_mlp1a", "w_mlp1b", "w_mlp2", "w_pos", "w_key",
                    "w_v1", "w_v2", "w_att", "w_pc", "w_kc")
    weights = [kparams[k] for k in weight_order]

    pts_map = lambda b, t: (b, t, 0)     # (B, n_pad, 3), tiled on axis 1
    tile_map = lambda b, t: (b, 0, t)    # (B, C, n_pad), tiled on last axis
    batch_map = lambda b, t: (b, 0, 0)   # batch-resident inputs
    const_map = lambda b, t: (0, 0)      # weights

    cparams = pltpu.CompilerParams(
        dimension_semantics=("parallel", "parallel"),
        vmem_limit_bytes=vmem_budget,
    )

    flops_per_point = (25 * m + 2 * C2 * m
                       + 2 * (C1 + C2) * H1 + 2 * H1 * D
                       + 2 * (3 * D + D * D + 2 * D * Dh + 7 * D))
    cost1 = pl.CostEstimate(
        flops=int(B * n_pad * flops_per_point),
        transcendentals=int(B * n_pad * 6),
        bytes_accessed=int(
            4 * (unknown_p.size + unknown_cf.size + known_cf.size)
            + 2 * (uf_bf.size + kf_bf.size)
            + 2 * sum(int(w.size) for w in weights)
            + 2 * B * D * n_pad + 4 * B * 4 * n_pad),
    )

    val_e, att_logits = pl.pallas_call(
        _fp_stage1_kernel,
        out_shape=(jax.ShapeDtypeStruct((B, D, n_pad), jnp.bfloat16),   # value embedding
                   jax.ShapeDtypeStruct((B, 4, n_pad), jnp.float32)),   # attention logits
        grid_spec=pltpu.PrefetchScalarGridSpec(
            num_scalar_prefetch=0,
            grid=(B, nt),
            in_specs=[pl.BlockSpec((1, tile, 3), pts_map),     # unknown xyz, points-major
                      pl.BlockSpec((1, 3, tile), tile_map),    # unknown xyz, channels-first
                      pl.BlockSpec((1, C1, tile), tile_map),   # unknow_feats (bf16)
                      pl.BlockSpec((1, 3, m), batch_map),      # known xyz, lane-dense
                      pl.BlockSpec((1, C2, m), batch_map)]     # known_feats (bf16)
                     + [pl.BlockSpec(w.shape, const_map) for w in weights],
            out_specs=(pl.BlockSpec((1, D, tile), tile_map),
                       pl.BlockSpec((1, 4, tile), tile_map)),
        ),
        compiler_params=cparams,
        cost_estimate=cost1,
    )(unknown_p, unknown_cf, uf_bf, known_cf, kf_bf, *weights)

    # Epilogue as fused XLA elementwise ops (per perf review): the softmax
    # couples all n-tiles and the remaining work is purely memory-bound, so a
    # per-tile pallas_call would be dominated by pipeline overhead.
    att = att_logits[:, :, :n]                          # drop padded columns
    val = val_e[:, :, :n].astype(jnp.float32)
    att = jax.nn.softmax(att, axis=-1)                  # softmax over the full n
    head_dim = D // 4
    att_full = jnp.repeat(att, head_dim, axis=1)        # repeat_interleave heads -> (B,D,n)
    return (att_full * val).astype(out_dtype)           # (B, D, n)


# --------------------------------------------------------------------------
# Parameters
# --------------------------------------------------------------------------
def init_params(key, mlp):
    """Synthetic parameters matching the module's __init__ shapes, stored in
    (C_in, C_out) math layout; BatchNorm folded in eval mode with default
    statistics (scale = 1/sqrt(1+eps))."""
    assert len(mlp) == 3, "this synthetic instance uses a 2-layer shared MLP"
    D = mlp[-1]
    Dh = D // 2
    assert D % 4 == 0
    bn_fold = 1.0 / np.sqrt(1.0 + 1e-5)
    keys = jax.random.split(key, 11)

    def w(k, shape):
        return jax.random.normal(k, shape, jnp.float32) / np.sqrt(shape[0])

    return {
        "w_mlp1": w(keys[0], (mlp[0], mlp[1])) * bn_fold,
        "w_mlp2": w(keys[1], (mlp[1], mlp[2])) * bn_fold,
        "w_pos": w(keys[2], (3, D)),
        "w_key": w(keys[3], (D, D)),
        "w_v1": w(keys[4], (D, Dh)) * bn_fold,
        "w_v2": w(keys[5], (Dh, D)) * bn_fold,
        "w_att": w(keys[6], (D, 4)),
        "w_qc": w(keys[7], (D, 1)),
        "w_kc": w(keys[8], (D, 1)),
        "w_vc": w(keys[9], (D, 1)),
        "w_qkc": w(keys[10], (D, 1)),   # created by the module, unused in forward
    }


def prepare_kernel_params(params, C2):
    """Kernel-side weights: channels-first (C_out, C_in) = PyTorch conv layout,
    first MLP layer split for the concat-free matmul, q/v coefficient heads
    fused, everything cast to bf16 for the MXU fast path.
    NOTE: a trained checkpoint must fold its BatchNorm running stats into the
    w_mlp* / w_v* weights before calling this (eval-mode default stats assumed)."""
    t = lambda x: jnp.asarray(x).T.astype(jnp.bfloat16)
    return {
        "w_mlp1a": t(params["w_mlp1"][:C2]),     # multiplies interpolated feats
        "w_mlp1b": t(params["w_mlp1"][C2:]),     # multiplies unknow_feats
        "w_mlp2": t(params["w_mlp2"]),
        "w_pos": t(params["w_pos"]),
        "w_key": t(params["w_key"]),
        "w_v1": t(params["w_v1"]),
        "w_v2": t(params["w_v2"]),
        "w_att": t(params["w_att"]),
        "w_pc": jnp.concatenate([t(params["w_qc"]), t(params["w_vc"])], axis=0),  # (2,D)
        "w_kc": t(params["w_kc"]),
    }


# --------------------------------------------------------------------------
# Pure-JAX reference (f32, highest precision) mirroring the PyTorch forward.
# --------------------------------------------------------------------------
def reference_forward(unknown, known, unknow_feats, known_feats, params):
    with jax.default_matmul_precision("highest"):
        relu = lambda x: jnp.maximum(x, 0.0)
        sigmoid = jax.nn.sigmoid

        # three_nn: exact squared differences (same formulation as the kernel).
        diff = unknown[:, :, None, :] - known[:, None, :, :]           # (B,n,m,3)
        d2 = jnp.sum(diff * diff, axis=-1)                             # (B,n,m)

        neg_d2, idx = lax.top_k(-d2, 3)                                # (B,n,3)
        dist = jnp.sqrt(jnp.maximum(-neg_d2, 0.0))
        dist_recip = 1.0 / (dist + 1e-8)
        weight = dist_recip / jnp.sum(dist_recip, axis=2, keepdims=True)

        kf = jnp.transpose(known_feats, (0, 2, 1))                     # (B,m,C2)

        def gather_one(kf_b, idx_b, w_b):
            return jnp.sum(kf_b[idx_b] * w_b[..., None], axis=1)       # (n,C2)

        interp = jax.vmap(gather_one)(kf, idx, weight)                 # (B,n,C2)

        uf_t = jnp.transpose(unknow_feats, (0, 2, 1))                  # (B,n,C1)
        feats = jnp.concatenate([interp, uf_t], axis=-1)
        h = relu(feats @ params["w_mlp1"])
        nf = relu(h @ params["w_mlp2"])

        pos = relu(unknown @ params["w_pos"])
        key_e = relu(nf @ params["w_key"])
        val = relu(relu(nf @ params["w_v1"]) @ params["w_v2"])

        v_coef = sigmoid(pos @ params["w_vc"])
        q_coef = sigmoid(pos @ params["w_qc"])
        k_coef = sigmoid(key_e @ params["w_kc"])

        val = val + pos * v_coef
        att = (pos * q_coef + key_e * k_coef) @ params["w_att"]        # (B,n,4)
        att = jax.nn.softmax(att, axis=1)                              # over n

        head_dim = params["w_key"].shape[0] // 4
        head_rep = jnp.repeat(jnp.eye(4, dtype=jnp.float32), head_dim, axis=1)
        out = (att @ head_rep) * val                                   # (B,n,D)
        return jnp.transpose(out, (0, 2, 1))                           # (B,D,n)


if __name__ == "__main__":
    key = jax.random.PRNGKey(0)
    B, n, m, C1, C2 = 2, 256, 32, 6, 10     # FP module upsamples m known -> n unknown
    mlp = [C1 + C2, 32, 64]
    D = mlp[-1]

    k1, k2, k3, k4, kp = jax.random.split(key, 5)
    unknown = jax.random.normal(k1, (B, n, 3), jnp.float32)
    known = jax.random.normal(k2, (B, m, 3), jnp.float32)
    unknow_feats = jax.random.normal(k3, (B, C1, n), jnp.float32)
    known_feats = jax.random.normal(k4, (B, C2, m), jnp.float32)

    params = init_params(kp, mlp)
    kparams = prepare_kernel_params(params, C2)

    fp_forward = jax.jit(pointnet_fp_forward, static_argnames=("tile_n", "out_dtype"))
    out = fp_forward(unknown, known, unknow_feats, known_feats, kparams)
    out = jax.block_until_ready(out)
    assert out.shape == (B, D, n)

    ref = reference_forward(unknown, known, unknow_feats, known_feats, params)
    # Tolerance reflects the intentional bf16-in / f32-accumulate MXU path for
    # the MLP / projection / interpolation matmuls (distances stay exact f32).
    np.testing.assert_allclose(np.asarray(out), np.asarray(ref), rtol=5e-2, atol=2e-3)

    print("KERNEL_OK")
</pallas_src>

<mosaic_0001>
module attributes {stable_mosaic.version = 11 : i64} {
  func.func @_fp_stage1_kernel(%arg0: i32, %arg1: i32, %arg2: memref<1x256x3xf32, #tpu.memory_space<vmem>>, %arg3: memref<1x3x256xf32, #tpu.memory_space<vmem>>, %arg4: memref<1x6x256xbf16, #tpu.memory_space<vmem>>, %arg5: memref<1x3x32xf32, #tpu.memory_space<vmem>>, %arg6: memref<1x10x32xbf16, #tpu.memory_space<vmem>>, %arg7: memref<32x10xbf16, #tpu.memory_space<vmem>>, %arg8: memref<32x6xbf16, #tpu.memory_space<vmem>>, %arg9: memref<64x32xbf16, #tpu.memory_space<vmem>>, %arg10: memref<64x3xbf16, #tpu.memory_space<vmem>>, %arg11: memref<64x64xbf16, #tpu.memory_space<vmem>>, %arg12: memref<32x64xbf16, #tpu.memory_space<vmem>>, %arg13: memref<64x32xbf16, #tpu.memory_space<vmem>>, %arg14: memref<4x64xbf16, #tpu.memory_space<vmem>>, %arg15: memref<2x64xbf16, #tpu.memory_space<vmem>>, %arg16: memref<1x64xbf16, #tpu.memory_space<vmem>>, %arg17: memref<1x64x256xbf16, #tpu.memory_space<vmem>>, %arg18: memref<1x4x256xf32, #tpu.memory_space<vmem>>) attributes {dimension_semantics = [#tpu.dimension_semantics<parallel>, #tpu.dimension_semantics<parallel>], iteration_bounds = array<i64: 2, 1>, scalar_prefetch = 0 : i64, scratch_operands = 0 : i64, tpu.core_type = #tpu.core_type<tc>, window_params = [{transform_indices = @transform_0, window_bounds = array<i64: 1, 256, 3>}, {transform_indices = @transform_1, window_bounds = array<i64: 1, 3, 256>}, {transform_indices = @transform_2, window_bounds = array<i64: 1, 6, 256>}, {transform_indices = @transform_3, window_bounds = array<i64: 1, 3, 32>}, {transform_indices = @transform_4, window_bounds = array<i64: 1, 10, 32>}, {pipeline_mode = #tpu.pipeline_mode<synchronous>, transform_indices = @transform_5, window_bounds = array<i64: 32, 10>}, {pipeline_mode = #tpu.pipeline_mode<synchronous>, transform_indices = @transform_6, window_bounds = array<i64: 32, 6>}, {pipeline_mode = #tpu.pipeline_mode<synchronous>, transform_indices = @transform_7, window_bounds = array<i64: 64, 32>}, {pipeline_mode = #tpu.pipeline_mode<synchronous>, transform_indices = @transform_8, window_bounds = array<i64: 64, 3>}, {pipeline_mode = #tpu.pipeline_mode<synchronous>, transform_indices = @transform_9, window_bounds = array<i64: 64, 64>}, {pipeline_mode = #tpu.pipeline_mode<synchronous>, transform_indices = @transform_10, window_bounds = array<i64: 32, 64>}, {pipeline_mode = #tpu.pipeline_mode<synchronous>, transform_indices = @transform_11, window_bounds = array<i64: 64, 32>}, {pipeline_mode = #tpu.pipeline_mode<synchronous>, transform_indices = @transform_12, window_bounds = array<i64: 4, 64>}, {pipeline_mode = #tpu.pipeline_mode<synchronous>, transform_indices = @transform_13, window_bounds = array<i64: 2, 64>}, {pipeline_mode = #tpu.pipeline_mode<synchronous>, transform_indices = @transform_14, window_bounds = array<i64: 1, 64>}, {transform_indices = @transform_15, window_bounds = array<i64: 1, 64, 256>}, {transform_indices = @transform_16, window_bounds = array<i64: 1, 4, 256>}]} {
    %c0 = arith.constant 0 : index
    %c0_0 = arith.constant 0 : index
    %c0_1 = arith.constant 0 : index
    %0 = vector.load %arg2[%c0, %c0_0, %c0_1] : memref<1x256x3xf32, #tpu.memory_space<vmem>>, vector<1x256x3xf32>
    %1 = vector.shape_cast %0 : vector<1x256x3xf32> to vector<256x3xf32>
    %c0_2 = arith.constant 0 : index
    %c0_3 = arith.constant 0 : index
    %c0_4 = arith.constant 0 : index
    %2 = vector.load %arg3[%c0_2, %c0_3, %c0_4] : memref<1x3x256xf32, #tpu.memory_space<vmem>>, vector<1x3x256xf32>
    %3 = vector.shape_cast %2 : vector<1x3x256xf32> to vector<3x256xf32>
    %c0_5 = arith.constant 0 : index
    %c0_6 = arith.constant 0 : index
    %c0_7 = arith.constant 0 : index
    %4 = vector.load %arg5[%c0_5, %c0_6, %c0_7] : memref<1x3x32xf32, #tpu.memory_space<vmem>>, vector<1x3x32xf32>
    %5 = vector.shape_cast %4 : vector<1x3x32xf32> to vector<3x32xf32>
    %c0_8 = arith.constant 0 : index
    %c0_9 = arith.constant 0 : index
    %c0_10 = arith.constant 0 : index
    %6 = vector.load %arg4[%c0_8, %c0_9, %c0_10] : memref<1x6x256xbf16, #tpu.memory_space<vmem>>, vector<1x6x256xbf16>
    %7 = vector.shape_cast %6 : vector<1x6x256xbf16> to vector<6x256xbf16>
    %c0_11 = arith.constant 0 : index
    %c0_12 = arith.constant 0 : index
    %c0_13 = arith.constant 0 : index
    %8 = vector.load %arg6[%c0_11, %c0_12, %c0_13] : memref<1x10x32xbf16, #tpu.memory_space<vmem>>, vector<1x10x32xbf16>
    %9 = vector.shape_cast %8 : vector<1x10x32xbf16> to vector<10x32xbf16>
    %10 = vector.extract_strided_slice %1 {offsets = [0, 0], sizes = [256, 1], strides = [1, 1]} : vector<256x3xf32> to vector<256x1xf32>
    %11 = vector.extract_strided_slice %5 {offsets = [0, 0], sizes = [1, 32], strides = [1, 1]} : vector<3x32xf32> to vector<1x32xf32>
    %12 = vector.broadcast %10 : vector<256x1xf32> to vector<256x32xf32>
    %13 = vector.broadcast %11 : vector<1x32xf32> to vector<256x32xf32>
    %14 = arith.subf %12, %13 : vector<256x32xf32>
    %15 = arith.mulf %14, %14 : vector<256x32xf32>
    %16 = vector.extract_strided_slice %1 {offsets = [0, 1], sizes = [256, 1], strides = [1, 1]} : vector<256x3xf32> to vector<256x1xf32>
    %17 = vector.extract_strided_slice %5 {offsets = [1, 0], sizes = [1, 32], strides = [1, 1]} : vector<3x32xf32> to vector<1x32xf32>
    %18 = vector.broadcast %16 : vector<256x1xf32> to vector<256x32xf32>
    %19 = vector.broadcast %17 : vector<1x32xf32> to vector<256x32xf32>
    %20 = arith.subf %18, %19 : vector<256x32xf32>
    %21 = arith.mulf %20, %20 : vector<256x32xf32>
    %22 = arith.addf %15, %21 : vector<256x32xf32>
    %23 = vector.extract_strided_slice %1 {offsets = [0, 2], sizes = [256, 1], strides = [1, 1]} : vector<256x3xf32> to vector<256x1xf32>
    %24 = vector.extract_strided_slice %5 {offsets = [2, 0], sizes = [1, 32], strides = [1, 1]} : vector<3x32xf32> to vector<1x32xf32>
    %25 = vector.broadcast %23 : vector<256x1xf32> to vector<256x32xf32>
    %26 = vector.broadcast %24 : vector<1x32xf32> to vector<256x32xf32>
    %27 = arith.subf %25, %26 : vector<256x32xf32>
    %28 = arith.mulf %27, %27 : vector<256x32xf32>
    %29 = arith.addf %22, %28 : vector<256x32xf32>
    %30 = tpu.iota {dimensions = array<i32: 1>} : vector<256x32xi32>
    %cst = arith.constant 0.000000e+00 : f32
    %31 = vector.broadcast %cst : f32 to vector<256x32xf32>
    %cst_14 = arith.constant 0.000000e+00 : f32
    %32 = vector.broadcast %cst_14 : f32 to vector<256x1xf32>
    %cst_15 = arith.constant dense<0x7F800000> : vector<256xf32>
    %33 = vector.multi_reduction <minimumf>, %29, %cst_15 [1] : vector<256x32xf32> to vector<256xf32>
    %34 = vector.shape_cast %33 : vector<256xf32> to vector<256x1xf32>
    %35 = vector.broadcast %34 : vector<256x1xf32> to vector<256x32xf32>
    %36 = arith.cmpf oeq, %29, %35 : vector<256x32xf32>
    %c32_i32 = arith.constant 32 : i32
    %37 = vector.broadcast %c32_i32 : i32 to vector<256x32xi32>
    %38 = arith.select %36, %30, %37 : vector<256x32xi1>, vector<256x32xi32>
    %cst_16 = arith.constant dense<2147483647> : vector<256xi32>
    %39 = vector.multi_reduction <minsi>, %38, %cst_16 [1] : vector<256x32xi32> to vector<256xi32>
    %40 = vector.shape_cast %39 : vector<256xi32> to vector<256x1xi32>
    %41 = vector.broadcast %40 : vector<256x1xi32> to vector<256x32xi32>
    %42 = arith.cmpi eq, %30, %41 : vector<256x32xi32>
    %43 = math.sqrt %34 : vector<256x1xf32>
    %cst_17 = arith.constant 9.99999993E-9 : f32
    %44 = vector.broadcast %cst_17 : f32 to vector<256x1xf32>
    %45 = arith.addf %43, %44 : vector<256x1xf32>
    %cst_18 = arith.constant 1.000000e+00 : f32
    %46 = vector.broadcast %cst_18 : f32 to vector<256x1xf32>
    %47 = arith.divf %46, %45 : vector<256x1xf32>
    %cst_19 = arith.constant 0.000000e+00 : f32
    %48 = vector.shape_cast %47 : vector<256x1xf32> to vector<256x1xf32>
    %49 = vector.broadcast %48 : vector<256x1xf32> to vector<256x32xf32>
    %50 = vector.broadcast %cst_19 : f32 to vector<256x32xf32>
    %51 = arith.select %42, %49, %50 : vector<256x32xi1>, vector<256x32xf32>
    %52 = arith.addf %31, %51 : vector<256x32xf32>
    %53 = arith.addf %32, %47 : vector<256x1xf32>
    %cst_20 = arith.constant 1.000000e+30 : f32
    %54 = vector.broadcast %cst_20 : f32 to vector<256x32xf32>
    %55 = arith.select %42, %54, %29 : vector<256x32xi1>, vector<256x32xf32>
    %cst_21 = arith.constant dense<0x7F800000> : vector<256xf32>
    %56 = vector.multi_reduction <minimumf>, %55, %cst_21 [1] : vector<256x32xf32> to vector<256xf32>
    %57 = vector.shape_cast %56 : vector<256xf32> to vector<256x1xf32>
    %58 = vector.broadcast %57 : vector<256x1xf32> to vector<256x32xf32>
    %59 = arith.cmpf oeq, %55, %58 : vector<256x32xf32>
    %c32_i32_22 = arith.constant 32 : i32
    %60 = vector.broadcast %c32_i32_22 : i32 to vector<256x32xi32>
    %61 = arith.select %59, %30, %60 : vector<256x32xi1>, vector<256x32xi32>
    %cst_23 = arith.constant dense<2147483647> : vector<256xi32>
    %62 = vector.multi_reduction <minsi>, %61, %cst_23 [1] : vector<256x32xi32> to vector<256xi32>
    %63 = vector.shape_cast %62 : vector<256xi32> to vector<256x1xi32>
    %64 = vector.broadcast %63 : vector<256x1xi32> to vector<256x32xi32>
    %65 = arith.cmpi eq, %30, %64 : vector<256x32xi32>
    %66 = math.sqrt %57 : vector<256x1xf32>
    %cst_24 = arith.constant 9.99999993E-9 : f32
    %67 = vector.broadcast %cst_24 : f32 to vector<256x1xf32>
    %68 = arith.addf %66, %67 : vector<256x1xf32>
    %cst_25 = arith.constant 1.000000e+00 : f32
    %69 = vector.broadcast %cst_25 : f32 to vector<256x1xf32>
    %70 = arith.divf %69, %68 : vector<256x1xf32>
    %cst_26 = arith.constant 0.000000e+00 : f32
    %71 = vector.shape_cast %70 : vector<256x1xf32> to vector<256x1xf32>
    %72 = vector.broadcast %71 : vector<256x1xf32> to vector<256x32xf32>
    %73 = vector.broadcast %cst_26 : f32 to vector<256x32xf32>
    %74 = arith.select %65, %72, %73 : vector<256x32xi1>, vector<256x32xf32>
    %75 = arith.addf %52, %74 : vector<256x32xf32>
    %76 = arith.addf %53, %70 : vector<256x1xf32>
    %cst_27 = arith.constant 1.000000e+30 : f32
    %77 = vector.broadcast %cst_27 : f32 to vector<256x32xf32>
    %78 = arith.select %65, %77, %55 : vector<256x32xi1>, vector<256x32xf32>
    %cst_28 = arith.constant dense<0x7F800000> : vector<256xf32>
    %79 = vector.multi_reduction <minimumf>, %78, %cst_28 [1] : vector<256x32xf32> to vector<256xf32>
    %80 = vector.shape_cast %79 : vector<256xf32> to vector<256x1xf32>
    %81 = vector.broadcast %80 : vector<256x1xf32> to vector<256x32xf32>
    %82 = arith.cmpf oeq, %78, %81 : vector<256x32xf32>
    %c32_i32_29 = arith.constant 32 : i32
    %83 = vector.broadcast %c32_i32_29 : i32 to vector<256x32xi32>
    %84 = arith.select %82, %30, %83 : vector<256x32xi1>, vector<256x32xi32>
    %cst_30 = arith.constant dense<2147483647> : vector<256xi32>
    %85 = vector.multi_reduction <minsi>, %84, %cst_30 [1] : vector<256x32xi32> to vector<256xi32>
    %86 = vector.shape_cast %85 : vector<256xi32> to vector<256x1xi32>
    %87 = vector.broadcast %86 : vector<256x1xi32> to vector<256x32xi32>
    %88 = arith.cmpi eq, %30, %87 : vector<256x32xi32>
    %89 = math.sqrt %80 : vector<256x1xf32>
    %cst_31 = arith.constant 9.99999993E-9 : f32
    %90 = vector.broadcast %cst_31 : f32 to vector<256x1xf32>
    %91 = arith.addf %89, %90 : vector<256x1xf32>
    %cst_32 = arith.constant 1.000000e+00 : f32
    %92 = vector.broadcast %cst_32 : f32 to vector<256x1xf32>
    %93 = arith.divf %92, %91 : vector<256x1xf32>
    %cst_33 = arith.constant 0.000000e+00 : f32
    %94 = vector.shape_cast %93 : vector<256x1xf32> to vector<256x1xf32>
    %95 = vector.broadcast %94 : vector<256x1xf32> to vector<256x32xf32>
    %96 = vector.broadcast %cst_33 : f32 to vector<256x32xf32>
    %97 = arith.select %88, %95, %96 : vector<256x32xi1>, vector<256x32xf32>
    %98 = arith.addf %75, %97 : vector<256x32xf32>
    %99 = arith.addf %76, %93 : vector<256x1xf32>
    %cst_34 = arith.constant 1.000000e+00 : f32
    %100 = vector.broadcast %cst_34 : f32 to vector<256x1xf32>
    %101 = arith.divf %100, %99 : vector<256x1xf32>
    %102 = vector.broadcast %101 : vector<256x1xf32> to vector<256x32xf32>
    %103 = arith.mulf %98, %102 : vector<256x32xf32>
    %104 = arith.truncf %103 : vector<256x32xf32> to vector<256x32xbf16>
    %cst_35 = arith.constant dense<0.000000e+00> : vector<10x256xf32>
    %105 = tpu.matmul %9, %104, %cst_35 {dimension_numbers = #tpu.dot_dimension_numbers<[1], [1], [0], [0], [0, 0, 1, 0], [], []>} : vector<10x32xbf16>, vector<256x32xbf16>, vector<10x256xf32> -> vector<10x256xf32>
    %106 = arith.truncf %105 : vector<10x256xf32> to vector<10x256xbf16>
    %c0_36 = arith.constant 0 : index
    %c0_37 = arith.constant 0 : index
    %107 = vector.load %arg7[%c0_36, %c0_37] : memref<32x10xbf16, #tpu.memory_space<vmem>>, vector<32x10xbf16>
    %cst_38 = arith.constant dense<0.000000e+00> : vector<32x256xf32>
    %108 = tpu.matmul %107, %106, %cst_38 {dimension_numbers = #tpu.dot_dimension_numbers<[1], [0], [0], [1], [0, 0, 1, 1], [], []>} : vector<32x10xbf16>, vector<10x256xbf16>, vector<32x256xf32> -> vector<32x256xf32>
    %c0_39 = arith.constant 0 : index
    %c0_40 = arith.constant 0 : index
    %109 = vector.load %arg8[%c0_39, %c0_40] : memref<32x6xbf16, #tpu.memory_space<vmem>>, vector<32x6xbf16>
    %cst_41 = arith.constant dense<0.000000e+00> : vector<32x256xf32>
    %110 = tpu.matmul %109, %7, %cst_41 {dimension_numbers = #tpu.dot_dimension_numbers<[1], [0], [0], [1], [0, 0, 1, 1], [], []>} : vector<32x6xbf16>, vector<6x256xbf16>, vector<32x256xf32> -> vector<32x256xf32>
    %111 = arith.addf %108, %110 : vector<32x256xf32>
    %cst_42 = arith.constant 0.000000e+00 : f32
    %112 = vector.broadcast %cst_42 : f32 to vector<32x256xf32>
    %113 = arith.maximumf %111, %112 : vector<32x256xf32>
    %114 = arith.truncf %113 : vector<32x256xf32> to vector<32x256xbf16>
    %c0_43 = arith.constant 0 : index
    %c0_44 = arith.constant 0 : index
    %115 = vector.load %arg9[%c0_43, %c0_44] : memref<64x32xbf16, #tpu.memory_space<vmem>>, vector<64x32xbf16>
    %cst_45 = arith.constant dense<0.000000e+00> : vector<64x256xf32>
    %116 = tpu.matmul %115, %114, %cst_45 {dimension_numbers = #tpu.dot_dimension_numbers<[1], [0], [0], [1], [0, 0, 1, 1], [], []>} : vector<64x32xbf16>, vector<32x256xbf16>, vector<64x256xf32> -> vector<64x256xf32>
    %cst_46 = arith.constant 0.000000e+00 : f32
    %117 = vector.broadcast %cst_46 : f32 to vector<64x256xf32>
    %118 = arith.maximumf %116, %117 : vector<64x256xf32>
    %119 = arith.truncf %118 : vector<64x256xf32> to vector<64x256xbf16>
    %120 = arith.truncf %3 : vector<3x256xf32> to vector<3x256xbf16>
    %c0_47 = arith.constant 0 : index
    %c0_48 = arith.constant 0 : index
    %121 = vector.load %arg10[%c0_47, %c0_48] : memref<64x3xbf16, #tpu.memory_space<vmem>>, vector<64x3xbf16>
    %cst_49 = arith.constant dense<0.000000e+00> : vector<64x256xf32>
    %122 = tpu.matmul %121, %120, %cst_49 {dimension_numbers = #tpu.dot_dimension_numbers<[1], [0], [0], [1], [0, 0, 1, 1], [], []>} : vector<64x3xbf16>, vector<3x256xbf16>, vector<64x256xf32> -> vector<64x256xf32>
    %cst_50 = arith.constant 0.000000e+00 : f32
    %123 = vector.broadcast %cst_50 : f32 to vector<64x256xf32>
    %124 = arith.maximumf %122, %123 : vector<64x256xf32>
    %c0_51 = arith.constant 0 : index
    %c0_52 = arith.constant 0 : index
    %125 = vector.load %arg11[%c0_51, %c0_52] : memref<64x64xbf16, #tpu.memory_space<vmem>>, vector<64x64xbf16>
    %cst_53 = arith.constant dense<0.000000e+00> : vector<64x256xf32>
    %126 = tpu.matmul %125, %119, %cst_53 {dimension_numbers = #tpu.dot_dimension_numbers<[1], [0], [0], [1], [0, 0, 1, 1], [], []>} : vector<64x64xbf16>, vector<64x256xbf16>, vector<64x256xf32> -> vector<64x256xf32>
    %cst_54 = arith.constant 0.000000e+00 : f32
    %127 = vector.broadcast %cst_54 : f32 to vector<64x256xf32>
    %128 = arith.maximumf %126, %127 : vector<64x256xf32>
    %c0_55 = arith.constant 0 : index
    %c0_56 = arith.constant 0 : index
    %129 = vector.load %arg12[%c0_55, %c0_56] : memref<32x64xbf16, #tpu.memory_space<vmem>>, vector<32x64xbf16>
    %cst_57 = arith.constant dense<0.000000e+00> : vector<32x256xf32>
    %130 = tpu.matmul %129, %119, %cst_57 {dimension_numbers = #tpu.dot_dimension_numbers<[1], [0], [0], [1], [0, 0, 1, 1], [], []>} : vector<32x64xbf16>, vector<64x256xbf16>, vector<32x256xf32> -> vector<32x256xf32>
    %cst_58 = arith.constant 0.000000e+00 : f32
    %131 = vector.broadcast %cst_58 : f32 to vector<32x256xf32>
    %132 = arith.maximumf %130, %131 : vector<32x256xf32>
    %133 = arith.truncf %132 : vector<32x256xf32> to vector<32x256xbf16>
    %c0_59 = arith.constant 0 : index
    %c0_60 = arith.constant 0 : index
    %134 = vector.load %arg13[%c0_59, %c0_60] : memref<64x32xbf16, #tpu.memory_space<vmem>>, vector<64x32xbf16>
    %cst_61 = arith.constant dense<0.000000e+00> : vector<64x256xf32>
    %135 = tpu.matmul %134, %133, %cst_61 {dimension_numbers = #tpu.dot_dimension_numbers<[1], [0], [0], [1], [0, 0, 1, 1], [], []>} : vector<64x32xbf16>, vector<32x256xbf16>, vector<64x256xf32> -> vector<64x256xf32>
    %cst_62 = arith.constant 0.000000e+00 : f32
    %136 = vector.broadcast %cst_62 : f32 to vector<64x256xf32>
    %137 = arith.maximumf %135, %136 : vector<64x256xf32>
    %138 = arith.truncf %124 : vector<64x256xf32> to vector<64x256xbf16>
    %c0_63 = arith.constant 0 : index
    %c0_64 = arith.constant 0 : index
    %139 = vector.load %arg15[%c0_63, %c0_64] : memref<2x64xbf16, #tpu.memory_space<vmem>>, vector<2x64xbf16>
    %cst_65 = arith.constant dense<0.000000e+00> : vector<2x256xf32>
    %140 = tpu.matmul %139, %138, %cst_65 {dimension_numbers = #tpu.dot_dimension_numbers<[1], [0], [0], [1], [0, 0, 1, 1], [], []>} : vector<2x64xbf16>, vector<64x256xbf16>, vector<2x256xf32> -> vector<2x256xf32>
    %cst_66 = arith.constant 0.000000e+00 : f32
    %141 = vector.broadcast %cst_66 : f32 to vector<2x256xf32>
    %142 = arith.subf %141, %140 : vector<2x256xf32>
    %143 = math.exp %142 : vector<2x256xf32>
    %cst_67 = arith.constant 1.000000e+00 : f32
    %144 = vector.broadcast %cst_67 : f32 to vector<2x256xf32>
    %145 = arith.addf %144, %143 : vector<2x256xf32>
    %cst_68 = arith.constant 1.000000e+00 : f32
    %146 = vector.broadcast %cst_68 : f32 to vector<2x256xf32>
    %147 = arith.divf %146, %145 : vector<2x256xf32>
    %148 = arith.truncf %128 : vector<64x256xf32> to vector<64x256xbf16>
    %c0_69 = arith.constant 0 : index
    %c0_70 = arith.constant 0 : index
    %149 = vector.load %arg16[%c0_69, %c0_70] : memref<1x64xbf16, #tpu.memory_space<vmem>>, vector<1x64xbf16>
    %cst_71 = arith.constant dense<0.000000e+00> : vector<1x256xf32>
    %150 = tpu.matmul %149, %148, %cst_71 {dimension_numbers = #tpu.dot_dimension_numbers<[1], [0], [0], [1], [0, 0, 1, 1], [], []>} : vector<1x64xbf16>, vector<64x256xbf16>, vector<1x256xf32> -> vector<1x256xf32>
    %cst_72 = arith.constant 0.000000e+00 : f32
    %151 = vector.broadcast %cst_72 : f32 to vector<1x256xf32>
    %152 = arith.subf %151, %150 : vector<1x256xf32>
    %153 = math.exp %152 : vector<1x256xf32>
    %cst_73 = arith.constant 1.000000e+00 : f32
    %154 = vector.broadcast %cst_73 : f32 to vector<1x256xf32>
    %155 = arith.addf %154, %153 : vector<1x256xf32>
    %cst_74 = arith.constant 1.000000e+00 : f32
    %156 = vector.broadcast %cst_74 : f32 to vector<1x256xf32>
    %157 = arith.divf %156, %155 : vector<1x256xf32>
    %158 = vector.extract_strided_slice %147 {offsets = [0, 0], sizes = [1, 256], strides = [1, 1]} : vector<2x256xf32> to vector<1x256xf32>
    %159 = vector.extract_strided_slice %147 {offsets = [1, 0], sizes = [1, 256], strides = [1, 1]} : vector<2x256xf32> to vector<1x256xf32>
    %160 = vector.broadcast %159 : vector<1x256xf32> to vector<64x256xf32>
    %161 = arith.mulf %124, %160 : vector<64x256xf32>
    %162 = arith.addf %137, %161 : vector<64x256xf32>
    %163 = vector.broadcast %158 : vector<1x256xf32> to vector<64x256xf32>
    %164 = arith.mulf %124, %163 : vector<64x256xf32>
    %165 = vector.broadcast %157 : vector<1x256xf32> to vector<64x256xf32>
    %166 = arith.mulf %128, %165 : vector<64x256xf32>
    %167 = arith.addf %164, %166 : vector<64x256xf32>
    %168 = arith.truncf %167 : vector<64x256xf32> to vector<64x256xbf16>
    %c0_75 = arith.constant 0 : index
    %c0_76 = arith.constant 0 : index
    %169 = vector.load %arg14[%c0_75, %c0_76] : memref<4x64xbf16, #tpu.memory_space<vmem>>, vector<4x64xbf16>
    %cst_77 = arith.constant dense<0.000000e+00> : vector<4x256xf32>
    %170 = tpu.matmul %169, %168, %cst_77 {dimension_numbers = #tpu.dot_dimension_numbers<[1], [0], [0], [1], [0, 0, 1, 1], [], []>} : vector<4x64xbf16>, vector<64x256xbf16>, vector<4x256xf32> -> vector<4x256xf32>
    %171 = arith.truncf %162 : vector<64x256xf32> to vector<64x256xbf16>
    %c0_78 = arith.constant 0 : index
    %c0_79 = arith.constant 0 : index
    %c0_80 = arith.constant 0 : index
    %172 = vector.load %arg17[%c0_78, %c0_79, %c0_80] : memref<1x64x256xbf16, #tpu.memory_space<vmem>>, vector<1x64x256xbf16>
    %173 = vector.shape_cast %172 : vector<1x64x256xbf16> to vector<64x256xbf16>
    %174 = vector.shape_cast %171 : vector<64x256xbf16> to vector<1x64x256xbf16>
    tpu.vector_store %arg17[%c0_78, %c0_79, %c0_80], %174 {strides = array<i32>} : memref<1x64x256xbf16, #tpu.memory_space<vmem>>, vector<1x64x256xbf16>,
    %c0_81 = arith.constant 0 : index
    %c0_82 = arith.constant 0 : index
    %c0_83 = arith.constant 0 : index
    %175 = vector.load %arg18[%c0_81, %c0_82, %c0_83] : memref<1x4x256xf32, #tpu.memory_space<vmem>>, vector<1x4x256xf32>
    %176 = vector.shape_cast %175 : vector<1x4x256xf32> to vector<4x256xf32>
    %177 = vector.shape_cast %170 : vector<4x256xf32> to vector<1x4x256xf32>
    tpu.vector_store %arg18[%c0_81, %c0_82, %c0_83], %177 {strides = array<i32>} : memref<1x4x256xf32, #tpu.memory_space<vmem>>, vector<1x4x256xf32>,
    return
  }
  func.func @transform_0(%arg0: i32, %arg1: i32) -> (i32, i32, i32) {
    %c0_i32 = arith.constant 0 : i32
    %c0_i32_0 = arith.constant 0 : i32
    return %arg0, %arg1, %c0_i32 : i32, i32, i32
  }
  func.func @transform_1(%arg0: i32, %arg1: i32) -> (i32, i32, i32) {
    %c0_i32 = arith.constant 0 : i32
    %c0_i32_0 = arith.constant 0 : i32
    return %arg0, %c0_i32, %arg1 : i32, i32, i32
  }
  func.func @transform_2(%arg0: i32, %arg1: i32) -> (i32, i32, i32) {
    %c0_i32 = arith.constant 0 : i32
    %c0_i32_0 = arith.constant 0 : i32
    return %arg0, %c0_i32, %arg1 : i32, i32, i32
  }
  func.func @transform_3(%arg0: i32, %arg1: i32) -> (i32, i32, i32) {
    %c0_i32 = arith.constant 0 : i32
    %c0_i32_0 = arith.constant 0 : i32
    %c0_i32_1 = arith.constant 0 : i32
    return %arg0, %c0_i32, %c0_i32_0 : i32, i32, i32
  }
  func.func @transform_4(%arg0: i32, %arg1: i32) -> (i32, i32, i32) {
    %c0_i32 = arith.constant 0 : i32
    %c0_i32_0 = arith.constant 0 : i32
    %c0_i32_1 = arith.constant 0 : i32
    return %arg0, %c0_i32, %c0_i32_0 : i32, i32, i32
  }
  func.func @transform_5(%arg0: i32, %arg1: i32) -> (i32, i32) {
    %c0_i32 = arith.constant 0 : i32
    %c0_i32_0 = arith.constant 0 : i32
    %c0_i32_1 = arith.constant 0 : i32
    return %c0_i32, %c0_i32_0 : i32, i32
  }
  func.func @transform_6(%arg0: i32, %arg1: i32) -> (i32, i32) {
    %c0_i32 = arith.constant 0 : i32
    %c0_i32_0 = arith.constant 0 : i32
    %c0_i32_1 = arith.constant 0 : i32
    return %c0_i32, %c0_i32_0 : i32, i32
  }
  func.func @transform_7(%arg0: i32, %arg1: i32) -> (i32, i32) {
    %c0_i32 = arith.constant 0 : i32
    %c0_i32_0 = arith.constant 0 : i32
    %c0_i32_1 = arith.constant 0 : i32
    return %c0_i32, %c0_i32_0 : i32, i32
  }
  func.func @transform_8(%arg0: i32, %arg1: i32) -> (i32, i32) {
    %c0_i32 = arith.constant 0 : i32
    %c0_i32_0 = arith.constant 0 : i32
    %c0_i32_1 = arith.constant 0 : i32
    return %c0_i32, %c0_i32_0 : i32, i32
  }
  func.func @transform_9(%arg0: i32, %arg1: i32) -> (i32, i32) {
    %c0_i32 = arith.constant 0 : i32
    %c0_i32_0 = arith.constant 0 : i32
    %c0_i32_1 = arith.constant 0 : i32
    return %c0_i32, %c0_i32_0 : i32, i32
  }
  func.func @transform_10(%arg0: i32, %arg1: i32) -> (i32, i32) {
    %c0_i32 = arith.constant 0 : i32
    %c0_i32_0 = arith.constant 0 : i32
    %c0_i32_1 = arith.constant 0 : i32
    return %c0_i32, %c0_i32_0 : i32, i32
  }
  func.func @transform_11(%arg0: i32, %arg1: i32) -> (i32, i32) {
    %c0_i32 = arith.constant 0 : i32
    %c0_i32_0 = arith.constant 0 : i32
    %c0_i32_1 = arith.constant 0 : i32
    return %c0_i32, %c0_i32_0 : i32, i32
  }
  func.func @transform_12(%arg0: i32, %arg1: i32) -> (i32, i32) {
    %c0_i32 = arith.constant 0 : i32
    %c0_i32_0 = arith.constant 0 : i32
    %c0_i32_1 = arith.constant 0 : i32
    return %c0_i32, %c0_i32_0 : i32, i32
  }
  func.func @transform_13(%arg0: i32, %arg1: i32) -> (i32, i32) {
    %c0_i32 = arith.constant 0 : i32
    %c0_i32_0 = arith.constant 0 : i32
    %c0_i32_1 = arith.constant 0 : i32
    return %c0_i32, %c0_i32_0 : i32, i32
  }
  func.func @transform_14(%arg0: i32, %arg1: i32) -> (i32, i32) {
    %c0_i32 = arith.constant 0 : i32
    %c0_i32_0 = arith.constant 0 : i32
    %c0_i32_1 = arith.constant 0 : i32
    return %c0_i32, %c0_i32_0 : i32, i32
  }
  func.func @transform_15(%arg0: i32, %arg1: i32) -> (i32, i32, i32) {
    %c0_i32 = arith.constant 0 : i32
    %c0_i32_0 = arith.constant 0 : i32
    return %arg0, %c0_i32, %arg1 : i32, i32, i32
  }
  func.func @transform_16(%arg0: i32, %arg1: i32) -> (i32, i32, i32) {
    %c0_i32 = arith.constant 0 : i32
    %c0_i32_0 = arith.constant 0 : i32
    return %arg0, %c0_i32, %arg1 : i32, i32, i32
  }
}

</mosaic_0001>

<llo_original>
// kernel: pointnet_fp_forward.1
$region0: #{pointnet_fp_forward.1}
  #allocation0 [shape = 'u32[]', space=smem, size = 0x4, offset = 0x4, fixed_abs, tag = 'smem constant byte address 0x4 - core index']
  #allocation1 [shape = 'u32[72,128]{1,0:T(1,128)}', space=vmem, size = 0x9000, scoped, tag = 'internal scratch']
  %s0 = inlined_call_operand.vmem [shape: f32[2,256,3], index: 0, kind: input, shape index: {}]
  %s1 = inlined_call_operand.vmem [shape: f32[2,3,256], index: 1, kind: input, shape index: {}]
  %s2 = inlined_call_operand.vmem [shape: bf16[2,6,256], index: 2, kind: input, shape index: {}]
  %s3 = inlined_call_operand.vmem [shape: f32[2,3,32], index: 3, kind: input, shape index: {}]
  %s4 = inlined_call_operand.vmem [shape: bf16[2,10,32], index: 4, kind: input, shape index: {}]
  %s5 = inlined_call_operand.vmem [shape: bf16[32,10], index: 5, kind: input, shape index: {}]
  %s6 = inlined_call_operand.vmem [shape: bf16[32,6], index: 6, kind: input, shape index: {}]
  %s7 = inlined_call_operand.vmem [shape: bf16[64,32], index: 7, kind: input, shape index: {}]
  %s8 = inlined_call_operand.vmem [shape: bf16[64,3], index: 8, kind: input, shape index: {}]
  %s9 = inlined_call_operand.vmem [shape: bf16[64,64], index: 9, kind: input, shape index: {}]
  %s10 = inlined_call_operand.vmem [shape: bf16[32,64], index: 10, kind: input, shape index: {}]
  %s11 = inlined_call_operand.vmem [shape: bf16[64,32], index: 11, kind: input, shape index: {}]
  %s12 = inlined_call_operand.vmem [shape: bf16[4,64], index: 12, kind: input, shape index: {}]
  %s13 = inlined_call_operand.vmem [shape: bf16[2,64], index: 13, kind: input, shape index: {}]
  %s14 = inlined_call_operand.vmem [shape: bf16[1,64], index: 14, kind: input, shape index: {}]
  %s15 = inlined_call_operand.vmem [shape: bf16[2,64,256], index: 15, kind: output, shape index: {0}]
  %s16 = inlined_call_operand.vmem [shape: f32[2,4,256], index: 16, kind: output, shape index: {1}]
  %17 = xla_tuple %s15, %s16
  %s18 = sld [smem:[#allocation0]]
  $region101: #{pointnet_fp_forward.1} parent=0
    _
  %s20 = ssub.s32 1, %s18
  %s21 = scalar_select 0, %s20, %s18
  loop: start=0, step=1, limit=4
  $region2: #{pointnet_fp_forward.1} parent=0 // loop_pre_header
    _
  $region3: #{pointnet_fp_forward.1} parent=0 // loop_header
    %s23 = sphi 0, %s27
    %p24 = scmp.ge.s32.totalorder %s23, 4
    %s30 = sphi 0, %s42
    %s31 = sphi 0, %s38
    %s32 = sphi 0, %s30
    %s33 = sphi 0, %s31
    %s34 = sphi 0, %s32
    %s35 = sphi 0, %s33
    %s47 = sphi 0, %s49
    %s50 = sphi 0, %s47
    %s51 = sphi 0, %s50
    %s67 = sphi 0, %s51
    %s75 = sphi 0, %s77
    %s78 = sphi 0, %s75
    %s79 = sphi 0, %s78
    %s95 = sphi 0, %s79
    %s103 = sphi 0, %s105
    %s106 = sphi 0, %s103
    %s107 = sphi 0, %s106
    %s123 = sphi 0, %s107
    %s129 = sphi 0, %s131
    %s132 = sphi 0, %s129
    %s133 = sphi 0, %s132
    %s149 = sphi 0, %s133
    %s155 = sphi 0, %s157
    %s158 = sphi 0, %s155
    %s159 = sphi 0, %s158
    %s175 = sphi 0, %s159
    %s179 = sphi 0, %s179
    %s181 = sphi 0, %s179
    %s182 = sphi 0, %s181
    %s196 = sphi 0, %s182
    %s200 = sphi 0, %s200
    %s202 = sphi 0, %s200
    %s203 = sphi 0, %s202
    %s217 = sphi 0, %s203
    %s221 = sphi 0, %s221
    %s223 = sphi 0, %s221
    %s224 = sphi 0, %s223
    %s238 = sphi 0, %s224
    %s242 = sphi 0, %s242
    %s244 = sphi 0, %s242
    %s245 = sphi 0, %s244
    %s259 = sphi 0, %s245
    %s263 = sphi 0, %s263
    %s265 = sphi 0, %s263
    %s266 = sphi 0, %s265
    %s280 = sphi 0, %s266
    %s284 = sphi 0, %s284
    %s286 = sphi 0, %s284
    %s287 = sphi 0, %s286
    %s301 = sphi 0, %s287
    %s305 = sphi 0, %s305
    %s307 = sphi 0, %s305
    %s308 = sphi 0, %s307
    %s322 = sphi 0, %s308
    %s326 = sphi 0, %s326
    %s328 = sphi 0, %s326
    %s329 = sphi 0, %s328
    %s343 = sphi 0, %s329
    %s347 = sphi 0, %s347
    %s349 = sphi 0, %s347
    %s350 = sphi 0, %s349
    %s364 = sphi 0, %s350
    %s368 = sphi 0, %s368
    %s370 = sphi 0, %s368
    %s371 = sphi 0, %s370
    %s385 = sphi 0, %s371
    %s393 = sphi 0, %s395
    %s396 = sphi 0, %s393
    %s397 = sphi 0, %s396
    %s413 = sphi 0, %s397
    %s421 = sphi 0, %s423
    %s424 = sphi 0, %s421
    %s425 = sphi 0, %s424
    %s441 = sphi 0, %s425
  $region4: #{pointnet_fp_forward.1} parent=0 // loop_header_branch
    %26 = sbr.rel (%p24) target = $region8
  $region5: #{pointnet_fp_forward.1} parent=0 // loop_body
    %s28 = ssub.s32 %s23, 1
    %s29 = ssub.s32 %s23, 2
    %s36 = sadd.s32 1, %s31
    %p37 = scmp.ge.s32.totalorder %s36, 1
    %s38 = scalar_select %p37, 0, %s36
    %s39 = sadd.s32 1, %s30
    %s40 = scalar_select %p37, %s39, %s30
    %p41 = scmp.ge.s32.totalorder %s40, 2
    %s42 = scalar_select %p41, 0, %s40
    %s43 = ssub.s32 %s30, %s42
    %s44 = ssub.s32 %s31, %s38
    %s45 = sor.u32 %s43, %s44
    %p46 = scmp.eq.s32.totalorder %s45, 0
    %s48 = sadd.s32 %s47, 1
    %s49 = scalar_select %p46, %s47, %s48
    %p52 = pneg %p46
    %p53 = scmp.eq.s32.totalorder %s23, 1
    %p54 = por %p52, %p53
    %p55 = scmp.ne.s32.totalorder %s47, %s50
    %p56 = scmp.eq.s32.totalorder %s23, 0
    %p57 = por %p55, %p56
    %p58 = scmp.ne.s32.totalorder %s47, %s50
    %p59 = scmp.eq.s32.totalorder %s28, 1
    %p60 = por %p58, %p59
    %p61 = scmp.ne.s32.totalorder %s50, %s51
    %p62 = scmp.eq.s32.totalorder %s28, 0
    %p63 = por %p61, %p62
    %p64 = scmp.ne.s32.totalorder %s50, %s51
    %p65 = scmp.eq.s32.totalorder %s29, 1
    %p66 = por %p64, %p65
    %p68 = scmp.ne.s32.totalorder %s51, %s67
    %p69 = scmp.eq.s32.totalorder %s29, 0
    %p70 = por %p68, %p69
    %s71 = ssub.s32 %s30, %s42
    %s72 = ssub.s32 %s31, %s38
    %s73 = sor.u32 %s71, %s72
    %p74 = scmp.eq.s32.totalorder %s73, 0
    %s76 = sadd.s32 %s75, 1
    %s77 = scalar_select %p74, %s75, %s76
    %p80 = pneg %p74
    %p81 = scmp.eq.s32.totalorder %s23, 1
    %p82 = por %p80, %p81
    %p83 = scmp.ne.s32.totalorder %s75, %s78
    %p84 = scmp.eq.s32.totalorder %s23, 0
    %p85 = por %p83, %p84
    %p86 = scmp.ne.s32.totalorder %s75, %s78
    %p87 = scmp.eq.s32.totalorder %s28, 1
    %p88 = por %p86, %p87
    %p89 = scmp.ne.s32.totalorder %s78, %s79
    %p90 = scmp.eq.s32.totalorder %s28, 0
    %p91 = por %p89, %p90
    %p92 = scmp.ne.s32.totalorder %s78, %s79
    %p93 = scmp.eq.s32.totalorder %s29, 1
    %p94 = por %p92, %p93
    %p96 = scmp.ne.s32.totalorder %s79, %s95
    %p97 = scmp.eq.s32.totalorder %s29, 0
    %p98 = por %p96, %p97
    %s99 = ssub.s32 %s30, %s42
    %s100 = ssub.s32 %s31, %s38
    %s101 = sor.u32 %s99, %s100
    %p102 = scmp.eq.s32.totalorder %s101, 0
    %s104 = sadd.s32 %s103, 1
    %s105 = scalar_select %p102, %s103, %s104
    %p108 = pneg %p102
    %p109 = scmp.eq.s32.totalorder %s23, 1
    %p110 = por %p108, %p109
    %p111 = scmp.ne.s32.totalorder %s103, %s106
    %p112 = scmp.eq.s32.totalorder %s23, 0
    %p113 = por %p111, %p112
    %p114 = scmp.ne.s32.totalorder %s103, %s106
    %p115 = scmp.eq.s32.totalorder %s28, 1
    %p116 = por %p114, %p115
    %p117 = scmp.ne.s32.totalorder %s106, %s107
    %p118 = scmp.eq.s32.totalorder %s28, 0
    %p119 = por %p117, %p118
    %p120 = scmp.ne.s32.totalorder %s106, %s107
    %p121 = scmp.eq.s32.totalorder %s29, 1
    %p122 = por %p120, %p121
    %p124 = scmp.ne.s32.totalorder %s107, %s123
    %p125 = scmp.eq.s32.totalorder %s29, 0
    %p126 = por %p124, %p125
    %s127 = ssub.s32 %s30, %s42
    %p128 = scmp.eq.s32.totalorder %s127, 0
    %s130 = sadd.s32 %s129, 1
    %s131 = scalar_select %p128, %s129, %s130
    %p134 = pneg %p128
    %p135 = scmp.eq.s32.totalorder %s23, 1
    %p136 = por %p134, %p135
    %p137 = scmp.ne.s32.totalorder %s129, %s132
    %p138 = scmp.eq.s32.totalorder %s23, 0
    %p139 = por %p137, %p138
    %p140 = scmp.ne.s32.totalorder %s129, %s132
    %p141 = scmp.eq.s32.totalorder %s28, 1
    %p142 = por %p140, %p141
    %p143 = scmp.ne.s32.totalorder %s132, %s133
    %p144 = scmp.eq.s32.totalorder %s28, 0
    %p145 = por %p143, %p144
    %p146 = scmp.ne.s32.totalorder %s132, %s133
    %p147 = scmp.eq.s32.totalorder %s29, 1
    %p148 = por %p146, %p147
    %p150 = scmp.ne.s32.totalorder %s133, %s149
    %p151 = scmp.eq.s32.totalorder %s29, 0
    %p152 = por %p150, %p151
    %s153 = ssub.s32 %s30, %s42
    %p154 = scmp.eq.s32.totalorder %s153, 0
    %s156 = sadd.s32 %s155, 1
    %s157 = scalar_select %p154, %s155, %s156
    %p160 = pneg %p154
    %p161 = scmp.eq.s32.totalorder %s23, 1
    %p162 = por %p160, %p161
    %p163 = scmp.ne.s32.totalorder %s155, %s158
    %p164 = scmp.eq.s32.totalorder %s23, 0
    %p165 = por %p163, %p164
    %p166 = scmp.ne.s32.totalorder %s155, %s158
    %p167 = scmp.eq.s32.totalorder %s28, 1
    %p168 = por %p166, %p167
    %p169 = scmp.ne.s32.totalorder %s158, %s159
    %p170 = scmp.eq.s32.totalorder %s28, 0
    %p171 = por %p169, %p170
    %p172 = scmp.ne.s32.totalorder %s158, %s159
    %p173 = scmp.eq.s32.totalorder %s29, 1
    %p174 = por %p172, %p173
    %p176 = scmp.ne.s32.totalorder %s159, %s175
    %p177 = scmp.eq.s32.totalorder %s29, 0
    %p178 = por %p176, %p177
    %s180 = sadd.s32 %s179, 1
    %p183 = scmp.eq.s32.totalorder %s23, 1
    %p184 = scmp.ne.s32.totalorder %s179, %s181
    %p185 = scmp.eq.s32.totalorder %s23, 0
    %p186 = por %p184, %p185
    %p187 = scmp.ne.s32.totalorder %s179, %s181
    %p188 = scmp.eq.s32.totalorder %s28, 1
    %p189 = por %p187, %p188
    %p190 = scmp.ne.s32.totalorder %s181, %s182
    %p191 = scmp.eq.s32.totalorder %s28, 0
    %p192 = por %p190, %p191
    %p193 = scmp.ne.s32.totalorder %s181, %s182
    %p194 = scmp.eq.s32.totalorder %s29, 1
    %p195 = por %p193, %p194
    %p197 = scmp.ne.s32.totalorder %s182, %s196
    %p198 = scmp.eq.s32.totalorder %s29, 0
    %p199 = por %p197, %p198
    %s201 = sadd.s32 %s200, 1
    %p204 = scmp.eq.s32.totalorder %s23, 1
    %p205 = scmp.ne.s32.totalorder %s200, %s202
    %p206 = scmp.eq.s32.totalorder %s23, 0
    %p207 = por %p205, %p206
    %p208 = scmp.ne.s32.totalorder %s200, %s202
    %p209 = scmp.eq.s32.totalorder %s28, 1
    %p210 = por %p208, %p209
    %p211 = scmp.ne.s32.totalorder %s202, %s203
    %p212 = scmp.eq.s32.totalorder %s28, 0
    %p213 = por %p211, %p212
    %p214 = scmp.ne.s32.totalorder %s202, %s203
    %p215 = scmp.eq.s32.totalorder %s29, 1
    %p216 = por %p214, %p215
    %p218 = scmp.ne.s32.totalorder %s203, %s217
    %p219 = scmp.eq.s32.totalorder %s29, 0
    %p220 = por %p218, %p219
    %s222 = sadd.s32 %s221, 1
    %p225 = scmp.eq.s32.totalorder %s23, 1
    %p226 = scmp.ne.s32.totalorder %s221, %s223
    %p227 = scmp.eq.s32.totalorder %s23, 0
    %p228 = por %p226, %p227
    %p229 = scmp.ne.s32.totalorder %s221, %s223
    %p230 = scmp.eq.s32.totalorder %s28, 1
    %p231 = por %p229, %p230
    %p232 = scmp.ne.s32.totalorder %s223, %s224
    %p233 = scmp.eq.s32.totalorder %s28, 0
    %p234 = por %p232, %p233
    %p235 = scmp.ne.s32.totalorder %s223, %s224
    %p236 = scmp.eq.s32.totalorder %s29, 1
    %p237 = por %p235, %p236
    %p239 = scmp.ne.s32.totalorder %s224, %s238
    %p240 = scmp.eq.s32.totalorder %s29, 0
    %p241 = por %p239, %p240
    %s243 = sadd.s32 %s242, 1
    %p246 = scmp.eq.s32.totalorder %s23, 1
    %p247 = scmp.ne.s32.totalorder %s242, %s244
    %p248 = scmp.eq.s32.totalorder %s23, 0
    %p249 = por %p247, %p248
    %p250 = scmp.ne.s32.totalorder %s242, %s244
    %p251 = scmp.eq.s32.totalorder %s28, 1
    %p252 = por %p250, %p251
    %p253 = scmp.ne.s32.totalorder %s244, %s245
    %p254 = scmp.eq.s32.totalorder %s28, 0
    %p255 = por %p253, %p254
    %p256 = scmp.ne.s32.totalorder %s244, %s245
    %p257 = scmp.eq.s32.totalorder %s29, 1
    %p258 = por %p256, %p257
    %p260 = scmp.ne.s32.totalorder %s245, %s259
    %p261 = scmp.eq.s32.totalorder %s29, 0
    %p262 = por %p260, %p261
    %s264 = sadd.s32 %s263, 1
    %p267 = scmp.eq.s32.totalorder %s23, 1
    %p268 = scmp.ne.s32.totalorder %s263, %s265
    %p269 = scmp.eq.s32.totalorder %s23, 0
    %p270 = por %p268, %p269
    %p271 = scmp.ne.s32.totalorder %s263, %s265
    %p272 = scmp.eq.s32.totalorder %s28, 1
    %p273 = por %p271, %p272
    %p274 = scmp.ne.s32.totalorder %s265, %s266
    %p275 = scmp.eq.s32.totalorder %s28, 0
    %p276 = por %p274, %p275
    %p277 = scmp.ne.s32.totalorder %s265, %s266
    %p278 = scmp.eq.s32.totalorder %s29, 1
    %p279 = por %p277, %p278
    %p281 = scmp.ne.s32.totalorder %s266, %s280
    %p282 = scmp.eq.s32.totalorder %s29, 0
    %p283 = por %p281, %p282
    %s285 = sadd.s32 %s284, 1
    %p288 = scmp.eq.s32.totalorder %s23, 1
    %p289 = scmp.ne.s32.totalorder %s284, %s286
    %p290 = scmp.eq.s32.totalorder %s23, 0
    %p291 = por %p289, %p290
    %p292 = scmp.ne.s32.totalorder %s284, %s286
    %p293 = scmp.eq.s32.totalorder %s28, 1
    %p294 = por %p292, %p293
    %p295 = scmp.ne.s32.totalorder %s286, %s287
    %p296 = scmp.eq.s32.totalorder %s28, 0
    %p297 = por %p295, %p296
    %p298 = scmp.ne.s32.totalorder %s286, %s287
    %p299 = scmp.eq.s32.totalorder %s29, 1
    %p300 = por %p298, %p299
    %p302 = scmp.ne.s32.totalorder %s287, %s301
    %p303 = scmp.eq.s32.totalorder %s29, 0
    %p304 = por %p302, %p303
    %s306 = sadd.s32 %s305, 1
    %p309 = scmp.eq.s32.totalorder %s23, 1
    %p310 = scmp.ne.s32.totalorder %s305, %s307
    %p311 = scmp.eq.s32.totalorder %s23, 0
    %p312 = por %p310, %p311
    %p313 = scmp.ne.s32.totalorder %s305, %s307
    %p314 = scmp.eq.s32.totalorder %s28, 1
    %p315 = por %p313, %p314
    %p316 = scmp.ne.s32.totalorder %s307, %s308
    %p317 = scmp.eq.s32.totalorder %s28, 0
    %p318 = por %p316, %p317
    %p319 = scmp.ne.s32.totalorder %s307, %s308
    %p320 = scmp.eq.s32.totalorder %s29, 1
    %p321 = por %p319, %p320
    %p323 = scmp.ne.s32.totalorder %s308, %s322
    %p324 = scmp.eq.s32.totalorder %s29, 0
    %p325 = por %p323, %p324
    %s327 = sadd.s32 %s326, 1
    %p330 = scmp.eq.s32.totalorder %s23, 1
    %p331 = scmp.ne.s32.totalorder %s326, %s328
    %p332 = scmp.eq.s32.totalorder %s23, 0
    %p333 = por %p331, %p332
    %p334 = scmp.ne.s32.totalorder %s326, %s328
    %p335 = scmp.eq.s32.totalorder %s28, 1
    %p336 = por %p334, %p335
    %p337 = scmp.ne.s32.totalorder %s328, %s329
    %p338 = scmp.eq.s32.totalorder %s28, 0
    %p339 = por %p337, %p338
    %p340 = scmp.ne.s32.totalorder %s328, %s329
    %p341 = scmp.eq.s32.totalorder %s29, 1
    %p342 = por %p340, %p341
    %p344 = scmp.ne.s32.totalorder %s329, %s343
    %p345 = scmp.eq.s32.totalorder %s29, 0
    %p346 = por %p344, %p345
    %s348 = sadd.s32 %s347, 1
    %p351 = scmp.eq.s32.totalorder %s23, 1
    %p352 = scmp.ne.s32.totalorder %s347, %s349
    %p353 = scmp.eq.s32.totalorder %s23, 0
    %p354 = por %p352, %p353
    %p355 = scmp.ne.s32.totalorder %s347, %s349
    %p356 = scmp.eq.s32.totalorder %s28, 1
    %p357 = por %p355, %p356
    %p358 = scmp.ne.s32.totalorder %s349, %s350
    %p359 = scmp.eq.s32.totalorder %s28, 0
    %p360 = por %p358, %p359
    %p361 = scmp.ne.s32.totalorder %s349, %s350
    %p362 = scmp.eq.s32.totalorder %s29, 1
    %p363 = por %p361, %p362
    %p365 = scmp.ne.s32.totalorder %s350, %s364
    %p366 = scmp.eq.s32.totalorder %s29, 0
    %p367 = por %p365, %p366
    %s369 = sadd.s32 %s368, 1
    %p372 = scmp.eq.s32.totalorder %s23, 1
    %p373 = scmp.ne.s32.totalorder %s368, %s370
    %p374 = scmp.eq.s32.totalorder %s23, 0
    %p375 = por %p373, %p374
    %p376 = scmp.ne.s32.totalorder %s368, %s370
    %p377 = scmp.eq.s32.totalorder %s28, 1
    %p378 = por %p376, %p377
    %p379 = scmp.ne.s32.totalorder %s370, %s371
    %p380 = scmp.eq.s32.totalorder %s28, 0
    %p381 = por %p379, %p380
    %p382 = scmp.ne.s32.totalorder %s370, %s371
    %p383 = scmp.eq.s32.totalorder %s29, 1
    %p384 = por %p382, %p383
    %p386 = scmp.ne.s32.totalorder %s371, %s385
    %p387 = scmp.eq.s32.totalorder %s29, 0
    %p388 = por %p386, %p387
    %s389 = ssub.s32 %s30, %s42
    %s390 = ssub.s32 %s31, %s38
    %s391 = sor.u32 %s389, %s390
    %p392 = scmp.eq.s32.totalorder %s391, 0
    %s394 = sadd.s32 %s393, 1
    %s395 = scalar_select %p392, %s393, %s394
    %p398 = pneg %p392
    %p399 = scmp.eq.s32.totalorder %s23, 1
    %p400 = por %p398, %p399
    %p401 = scmp.ne.s32.totalorder %s393, %s396
    %p402 = scmp.eq.s32.totalorder %s23, 0
    %p403 = por %p401, %p402
    %p404 = scmp.ne.s32.totalorder %s393, %s396
    %p405 = scmp.eq.s32.totalorder %s28, 1
    %p406 = por %p404, %p405
    %p407 = scmp.ne.s32.totalorder %s396, %s397
    %p408 = scmp.eq.s32.totalorder %s28, 0
    %p409 = por %p407, %p408
    %p410 = scmp.ne.s32.totalorder %s396, %s397
    %p411 = scmp.eq.s32.totalorder %s29, 1
    %p412 = por %p410, %p411
    %p414 = scmp.ne.s32.totalorder %s397, %s413
    %p415 = scmp.eq.s32.totalorder %s29, 0
    %p416 = por %p414, %p415
    %s417 = ssub.s32 %s30, %s42
    %s418 = ssub.s32 %s31, %s38
    %s419 = sor.u32 %s417, %s418
    %p420 = scmp.eq.s32.totalorder %s419, 0
    %s422 = sadd.s32 %s421, 1
    %s423 = scalar_select %p420, %s421, %s422
    %p426 = pneg %p420
    %p427 = scmp.eq.s32.totalorder %s23, 1
    %p428 = por %p426, %p427
    %p429 = scmp.ne.s32.totalorder %s421, %s424
    %p430 = scmp.eq.s32.totalorder %s23, 0
    %p431 = por %p429, %p430
    %p432 = scmp.ne.s32.totalorder %s421, %s424
    %p433 = scmp.eq.s32.totalorder %s28, 1
    %p434 = por %p432, %p433
    %p435 = scmp.ne.s32.totalorder %s424, %s425
    %p436 = scmp.eq.s32.totalorder %s28, 0
    %p437 = por %p435, %p436
    %p438 = scmp.ne.s32.totalorder %s424, %s425
    %p439 = scmp.eq.s32.totalorder %s29, 1
    %p440 = por %p438, %p439
    %p442 = scmp.ne.s32.totalorder %s425, %s441
    %p443 = scmp.eq.s32.totalorder %s29, 0
    %p444 = por %p442, %p443
    %p445 = scmp.le.s32.totalorder 1, %s23
    %p446 = scmp.lt.s32.totalorder %s23, 3
    %p447 = pnand %p445, %p446
    %p448 = pneg %p447
    // Predicated region
    $region9: #{pointnet_fp_forward.1} parent=5 // pred_check
      _
    $region10: #{pointnet_fp_forward.1} parent=5 // pred_check_branch
      %450 = sbr.rel (%p447) target = $region12
    $region11: #{pointnet_fp_forward.1} parent=5 // pred_region
      %s451 = ssub.s32 %s23, 1
      // Predicated region
      $region13: #{pointnet_fp_forward.1} parent=11 // pred_check
        %p452 = pneg %p192
      $region14: #{pointnet_fp_forward.1} parent=11 // pred_check_branch
        %454 = sbr.rel (%p452) target = $region16
      $region15: #{pointnet_fp_forward.1} parent=11 // pred_region
        _
      $region16: #{pointnet_fp_forward.1} parent=11 // pred_fallthru
        _
      // Predicated region
      $region17: #{pointnet_fp_forward.1} parent=11 // pred_check
        %p455 = pneg %p213
      $region18: #{pointnet_fp_forward.1} parent=11 // pred_check_branch
        %457 = sbr.rel (%p455) target = $region20
      $region19: #{pointnet_fp_forward.1} parent=11 // pred_region
        _
      $region20: #{pointnet_fp_forward.1} parent=11 // pred_fallthru
        _
      // Predicated region
      $region21: #{pointnet_fp_forward.1} parent=11 // pred_check
        %p458 = pneg %p234
      $region22: #{pointnet_fp_forward.1} parent=11 // pred_check_branch
        %460 = sbr.rel (%p458) target = $region24
      $region23: #{pointnet_fp_forward.1} parent=11 // pred_region
        _
      $region24: #{pointnet_fp_forward.1} parent=11 // pred_fallthru
        _
      // Predicated region
      $region25: #{pointnet_fp_forward.1} parent=11 // pred_check
        %p461 = pneg %p255
      $region26: #{pointnet_fp_forward.1} parent=11 // pred_check_branch
        %463 = sbr.rel (%p461) target = $region28
      $region27: #{pointnet_fp_forward.1} parent=11 // pred_region
        _
      $region28: #{pointnet_fp_forward.1} parent=11 // pred_fallthru
        _
      // Predicated region
      $region29: #{pointnet_fp_forward.1} parent=11 // pred_check
        %p464 = pneg %p276
      $region30: #{pointnet_fp_forward.1} parent=11 // pred_check_branch
        %466 = sbr.rel (%p464) target = $region32
      $region31: #{pointnet_fp_forward.1} parent=11 // pred_region
        _
      $region32: #{pointnet_fp_forward.1} parent=11 // pred_fallthru
        _
      // Predicated region
      $region33: #{pointnet_fp_forward.1} parent=11 // pred_check
        %p467 = pneg %p297
      $region34: #{pointnet_fp_forward.1} parent=11 // pred_check_branch
        %469 = sbr.rel (%p467) target = $region36
      $region35: #{pointnet_fp_forward.1} parent=11 // pred_region
        _
      $region36: #{pointnet_fp_forward.1} parent=11 // pred_fallthru
        _
      // Predicated region
      $region37: #{pointnet_fp_forward.1} parent=11 // pred_check
        %p470 = pneg %p318
      $region38: #{pointnet_fp_forward.1} parent=11 // pred_check_branch
        %472 = sbr.rel (%p470) target = $region40
      $region39: #{pointnet_fp_forward.1} parent=11 // pred_region
        _
      $region40: #{pointnet_fp_forward.1} parent=11 // pred_fallthru
        _
      // Predicated region
      $region41: #{pointnet_fp_forward.1} parent=11 // pred_check
        %p473 = pneg %p339
      $region42: #{pointnet_fp_forward.1} parent=11 // pred_check_branch
        %475 = sbr.rel (%p473) target = $region44
      $region43: #{pointnet_fp_forward.1} parent=11 // pred_region
        _
      $region44: #{pointnet_fp_forward.1} parent=11 // pred_fallthru
        _
      // Predicated region
      $region45: #{pointnet_fp_forward.1} parent=11 // pred_check
        %p476 = pneg %p360
      $region46: #{pointnet_fp_forward.1} parent=11 // pred_check_branch
        %478 = sbr.rel (%p476) target = $region48
      $region47: #{pointnet_fp_forward.1} parent=11 // pred_region
        _
      $region48: #{pointnet_fp_forward.1} parent=11 // pred_fallthru
        _
      // Predicated region
      $region49: #{pointnet_fp_forward.1} parent=11 // pred_check
        %p479 = pneg %p381
      $region50: #{pointnet_fp_forward.1} parent=11 // pred_check_branch
        %481 = sbr.rel (%p479) target = $region52
      $region51: #{pointnet_fp_forward.1} parent=11 // pred_region
        _
      $region52: #{pointnet_fp_forward.1} parent=11 // pred_fallthru
        _
    $region12: #{pointnet_fp_forward.1} parent=5 // pred_fallthru
      _
    %p482 = scmp.lt.s32.totalorder %s23, 2
    // Predicated region
    $region53: #{pointnet_fp_forward.1} parent=5 // pred_check
      %p483 = pneg %p482
    $region54: #{pointnet_fp_forward.1} parent=5 // pred_check_branch
      %485 = sbr.rel (%p483) target = $region56
    $region55: #{pointnet_fp_forward.1} parent=5 // pred_region
      // Predicated region
      $region57: #{pointnet_fp_forward.1} parent=55 // pred_check
        %p486 = pneg %p57
      $region58: #{pointnet_fp_forward.1} parent=55 // pred_check_branch
        %488 = sbr.rel (%p486) target = $region60
      $region59: #{pointnet_fp_forward.1} parent=55 // pred_region
        %s489 = smul.u32 32, %s31
        %p490 = scmp.lt.s32.totalorder %s30, 1
        %s491 = scalar_select %p490, %s30, 1
        %p492 = scmp.lt.s32.totalorder %s489, 31
        %s493 = scalar_select %p492, %s489, 31
        %s494 = smul.addr %s491, 32
        %s495 = sadd.s32 %s493, %s494
        %s496 = smul.addr %s495, 8
        %s497 = scalar_lea.vmem %s0, %s496
        %s498 = smul.u32 32, %s31
      $region60: #{pointnet_fp_forward.1} parent=55 // pred_fallthru
        _
      // Predicated region
      $region61: #{pointnet_fp_forward.1} parent=55 // pred_check
        %p499 = pneg %p85
      $region62: #{pointnet_fp_forward.1} parent=55 // pred_check_branch
        %501 = sbr.rel (%p499) target = $region64
      $region63: #{pointnet_fp_forward.1} parent=55 // pred_region
        %s502 = smul.u32 2, %s31
        %p503 = scmp.lt.s32.totalorder %s30, 1
        %s504 = scalar_select %p503, %s30, 1
        %p505 = scmp.lt.s32.totalorder %s502, 1
        %s506 = scalar_select %p505, %s502, 1
        %s507 = smul.addr %s504, 2
        %s508 = sadd.s32 %s506, %s507
        %s509 = smul.addr %s508, 4
        %s510 = scalar_lea.vmem %s1, %s509
        %s511 = smul.u32 2, %s31
      $region64: #{pointnet_fp_forward.1} parent=55 // pred_fallthru
        _
      // Predicated region
      $region65: #{pointnet_fp_forward.1} parent=55 // pred_check
        %p512 = pneg %p113
      $region66: #{pointnet_fp_forward.1} parent=55 // pred_check_branch
        %514 = sbr.rel (%p512) target = $region68
      $region67: #{pointnet_fp_forward.1} parent=55 // pred_region
        %s515 = smul.u32 2, %s31
        %p516 = scmp.lt.s32.totalorder %s30, 1
        %s517 = scalar_select %p516, %s30, 1
        %p518 = scmp.lt.s32.totalorder %s515, 1
        %s519 = scalar_select %p518, %s515, 1
        %s520 = smul.addr %s517, 2
        %s521 = sadd.s32 %s519, %s520
        %s522 = smul.addr %s521, 4
        %s523 = scalar_lea.vmem %s2, %s522
        %s524 = smul.u32 2, %s31
      $region68: #{pointnet_fp_forward.1} parent=55 // pred_fallthru
        _
      // Predicated region
      $region69: #{pointnet_fp_forward.1} parent=55 // pred_check
        %p525 = pneg %p139
      $region70: #{pointnet_fp_forward.1} parent=55 // pred_check_branch
        %527 = sbr.rel (%p525) target = $region72
      $region71: #{pointnet_fp_forward.1} parent=55 // pred_region
        %p528 = scmp.lt.s32.totalorder %s30, 1
        %s529 = scalar_select %p528, %s30, 1
        %s530 = smul.addr %s529, 4
        %s531 = scalar_lea.vmem %s3, %s530
      $region72: #{pointnet_fp_forward.1} parent=55 // pred_fallthru
        _
      // Predicated region
      $region73: #{pointnet_fp_forward.1} parent=55 // pred_check
        %p532 = pneg %p165
      $region74: #{pointnet_fp_forward.1} parent=55 // pred_check_branch
        %534 = sbr.rel (%p532) target = $region76
      $region75: #{pointnet_fp_forward.1} parent=55 // pred_region
        %p535 = scmp.lt.s32.totalorder %s30, 1
        %s536 = scalar_select %p535, %s30, 1
        %s537 = smul.addr %s536, 2
        %s538 = smul.addr %s537, 4
        %s539 = scalar_lea.vmem %s4, %s538
      $region76: #{pointnet_fp_forward.1} parent=55 // pred_fallthru
        _
    $region56: #{pointnet_fp_forward.1} parent=5 // pred_fallthru
      _
    %p540 = scmp.le.s32.totalorder 1, %s23
    %p541 = scmp.lt.s32.totalorder %s23, 3
    %p542 = pnand %p540, %p541
    %p543 = pneg %p542
    // Predicated region
    $region77: #{pointnet_fp_forward.1} parent=5 // pred_check
      _
    $region78: #{pointnet_fp_forward.1} parent=5 // pred_check_branch
      %545 = sbr.rel (%p542) target = $region80
    $region79: #{pointnet_fp_forward.1} parent=5 // pred_region
      %s546 = ssub.s32 %s23, 1
      %s547 = smul.u32 32, %s33
      %p548 = scmp.lt.s32.totalorder %s32, 1
      %s549 = scalar_select %p548, %s32, 1
      %p550 = scmp.lt.s32.totalorder %s547, 31
      %s551 = scalar_select %p550, %s547, 31
      %s552 = smul.addr %s549, 32
      %s553 = sadd.s32 %s551, %s552
      %s554 = smul.addr %s553, 8
      %s555 = scalar_lea.vmem %s0, %s554
      %p556 = pneg %p63
      %p557 = pneg %p60
      %s558 = smul.u32 2, %s33
      %p559 = scmp.lt.s32.totalorder %s32, 1
      %s560 = scalar_select %p559, %s32, 1
      %p561 = scmp.lt.s32.totalorder %s558, 1
      %s562 = scalar_select %p561, %s558, 1
      %s563 = smul.addr %s560, 2
      %s564 = sadd.s32 %s562, %s563
      %s565 = smul.addr %s564, 4
      %s566 = scalar_lea.vmem %s1, %s565
      %p567 = pneg %p91
      %p568 = pneg %p88
      %s569 = smul.u32 2, %s33
      %p570 = scmp.lt.s32.totalorder %s32, 1
      %s571 = scalar_select %p570, %s32, 1
      %p572 = scmp.lt.s32.totalorder %s569, 1
      %s573 = scalar_select %p572, %s569, 1
      %s574 = smul.addr %s571, 2
      %s575 = sadd.s32 %s573, %s574
      %s576 = smul.addr %s575, 4
      %s577 = scalar_lea.vmem %s2, %s576
      %p578 = pneg %p119
      %p579 = pneg %p116
      %p580 = scmp.lt.s32.totalorder %s32, 1
      %s581 = scalar_select %p580, %s32, 1
      %s582 = smul.addr %s581, 4
      %s583 = scalar_lea.vmem %s3, %s582
      %p584 = pneg %p145
      %p585 = pneg %p142
      %p586 = scmp.lt.s32.totalorder %s32, 1
      %s587 = scalar_select %p586, %s32, 1
      %s588 = smul.addr %s587, 2
      %s589 = smul.addr %s588, 4
      %s590 = scalar_lea.vmem %s4, %s589
      %p591 = pneg %p171
      %p592 = pneg %p168
      %p593 = pneg %p192
      %p594 = pneg %p189
      %p595 = pneg %p213
      %p596 = pneg %p210
      %p597 = pneg %p234
      %p598 = pneg %p231
      %p599 = pneg %p255
      %p600 = pneg %p252
      %p601 = pneg %p276
      %p602 = pneg %p273
      %p603 = pneg %p297
      %p604 = pneg %p294
      %p605 = pneg %p318
      %p606 = pneg %p315
      %p607 = pneg %p339
      %p608 = pneg %p336
      %p609 = pneg %p360
      %p610 = pneg %p357
      %p611 = pneg %p381
      %p612 = pneg %p378
      %p613 = pneg %p409
      %p614 = pneg %p406
      %s615 = smul.u32 2, %s33
      %p616 = scmp.lt.s32.totalorder %s32, 1
      %s617 = scalar_select %p616, %s32, 1
      %p618 = scmp.lt.s32.totalorder %s615, 1
      %s619 = scalar_select %p618, %s615, 1
      %s620 = smul.addr %s617, 16
      %s621 = sadd.s32 %s619, %s620
      %s622 = smul.addr %s621, 4
      %s623 = scalar_lea.vmem %s15, %s622
      %p624 = pneg %p437
      %p625 = pneg %p434
      %s626 = smul.u32 2, %s33
      %p627 = scmp.lt.s32.totalorder %s32, 1
      %s628 = scalar_select %p627, %s32, 1
      %p629 = scmp.lt.s32.totalorder %s626, 1
      %s630 = scalar_select %p629, %s626, 1
      %s631 = smul.addr %s628, 2
      %s632 = sadd.s32 %s630, %s631
      %s633 = smul.addr %s632, 4
      %s634 = scalar_lea.vmem %s16, %s633
      %s635 = smul.u32 32, %s33
      %p636 = scmp.lt.s32.totalorder %s32, 1
      %s637 = scalar_select %p636, %s32, 1
      %p638 = scmp.lt.s32.totalorder %s635, 31
      %s639 = scalar_select %p638, %s635, 31
      %s640 = smul.addr %s637, 32
      %s641 = sadd.s32 %s639, %s640
      %s642 = smul.addr %s641, 8
      %s643 = scalar_lea.vmem %s0, %s642
      %s644 = smul.u32 32, %s33
      %s645 = smul.u32 2, %s33
      %p646 = scmp.lt.s32.totalorder %s32, 1
      %s647 = scalar_select %p646, %s32, 1
      %p648 = scmp.lt.s32.totalorder %s645, 1
      %s649 = scalar_select %p648, %s645, 1
      %s650 = smul.addr %s647, 2
      %s651 = sadd.s32 %s649, %s650
      %s652 = smul.addr %s651, 4
      %s653 = scalar_lea.vmem %s1, %s652
      %s654 = smul.u32 2, %s33
      %s655 = smul.u32 2, %s33
      %p656 = scmp.lt.s32.totalorder %s32, 1
      %s657 = scalar_select %p656, %s32, 1
      %p658 = scmp.lt.s32.totalorder %s655, 1
      %s659 = scalar_select %p658, %s655, 1
      %s660 = smul.addr %s657, 2
      %s661 = sadd.s32 %s659, %s660
      %s662 = smul.addr %s661, 4
      %s663 = scalar_lea.vmem %s2, %s662
      %s664 = smul.u32 2, %s33
      %p665 = scmp.lt.s32.totalorder %s32, 1
      %s666 = scalar_select %p665, %s32, 1
      %s667 = smul.addr %s666, 4
      %s668 = scalar_lea.vmem %s3, %s667
      %p669 = scmp.lt.s32.totalorder %s32, 1
      %s670 = scalar_select %p669, %s32, 1
      %s671 = smul.addr %s670, 2
      %s672 = smul.addr %s671, 4
      %s673 = scalar_lea.vmem %s4, %s672
      %s674 = smul.u32 2, %s33
      %p675 = scmp.lt.s32.totalorder %s32, 1
      %s676 = scalar_select %p675, %s32, 1
      %p677 = scmp.lt.s32.totalorder %s674, 1
      %s678 = scalar_select %p677, %s674, 1
      %s679 = smul.addr %s676, 16
      %s680 = sadd.s32 %s678, %s679
      %s681 = smul.addr %s680, 4
      %s682 = scalar_lea.vmem %s15, %s681
      %s683 = smul.u32 2, %s33
      %s684 = smul.u32 2, %s33
      %p685 = scmp.lt.s32.totalorder %s32, 1
      %s686 = scalar_select %p685, %s32, 1
      %p687 = scmp.lt.s32.totalorder %s684, 1
      %s688 = scalar_select %p687, %s684, 1
      %s689 = smul.addr %s686, 2
      %s690 = sadd.s32 %s688, %s689
      %s691 = smul.addr %s690, 4
      %s692 = scalar_lea.vmem %s16, %s691
      %s693 = smul.u32 2, %s33
      %v695 = vld [vmem:[%s643] sm:$0xff]
      %v696 = vld [vmem:[%s643 + $0x8] sm:$0xff]
      %v697 = vld [vmem:[%s643 + $0x10] sm:$0xff]
      %v698 = vld [vmem:[%s643 + $0x18] sm:$0xff]
      %v699 = vld [vmem:[%s643 + $0x20] sm:$0xff]
      %v700 = vld [vmem:[%s643 + $0x28] sm:$0xff]
      %v701 = vld [vmem:[%s643 + $0x30] sm:$0xff]
      %v702 = vld [vmem:[%s643 + $0x38] sm:$0xff]
      %v703 = vld [vmem:[%s643 + $0x40] sm:$0xff]
      %v704 = vld [vmem:[%s643 + $0x48] sm:$0xff]
      %v705 = vld [vmem:[%s643 + $0x50] sm:$0xff]
      %v706 = vld [vmem:[%s643 + $0x58] sm:$0xff]
      %v707 = vld [vmem:[%s643 + $0x60] sm:$0xff]
      %v708 = vld [vmem:[%s643 + $0x68] sm:$0xff]
      %v709 = vld [vmem:[%s643 + $0x70] sm:$0xff]
      %v710 = vld [vmem:[%s643 + $0x78] sm:$0xff]
      %v711 = vld [vmem:[%s643 + $0x80] sm:$0xff]
      %v712 = vld [vmem:[%s643 + $0x88] sm:$0xff]
      %v713 = vld [vmem:[%s643 + $0x90] sm:$0xff]
      %v714 = vld [vmem:[%s643 + $0x98] sm:$0xff]
      %v715 = vld [vmem:[%s643 + $0xa0] sm:$0xff]
      %v716 = vld [vmem:[%s643 + $0xa8] sm:$0xff]
      %v717 = vld [vmem:[%s643 + $0xb0] sm:$0xff]
      %v718 = vld [vmem:[%s643 + $0xb8] sm:$0xff]
      %v719 = vld [vmem:[%s643 + $0xc0] sm:$0xff]
      %v720 = vld [vmem:[%s643 + $0xc8] sm:$0xff]
      %v721 = vld [vmem:[%s643 + $0xd0] sm:$0xff]
      %v722 = vld [vmem:[%s643 + $0xd8] sm:$0xff]
      %v723 = vld [vmem:[%s643 + $0xe0] sm:$0xff]
      %v724 = vld [vmem:[%s643 + $0xe8] sm:$0xff]
      %v725 = vld [vmem:[%s643 + $0xf0] sm:$0xff]
      %v726 = vld [vmem:[%s643 + $0xf8] sm:$0xff]
      %v727 = vld [vmem:[%s653] sm:$0x77]
      %v728 = vld [vmem:[%s668] sm:$0x7]
      %v729 = vld [vmem:[%s663] sm:$0x77]
      %v730 = vld [vmem:[%s673] sm:$0xf]
      %v731 = vld [vmem:[%s673 + $0x4] sm:$0x1]
      %733 = vset.pattern.permute.xlu0 0
      %734 = vperm.xlu0 %733, %v695
      %v735 = vpop.permute.xlu0 %734
      %738 = vset.pattern.permute.xlu0 0
      %739 = vperm.xlu0 %738, %v696
      %v740 = vpop.permute.xlu0 %739
      %743 = vset.pattern.permute.xlu0 0
      %744 = vperm.xlu0 %743, %v697
      %v745 = vpop.permute.xlu0 %744
      %748 = vset.pattern.permute.xlu0 0
      %749 = vperm.xlu0 %748, %v698
      %v750 = vpop.permute.xlu0 %749
      %753 = vset.pattern.permute.xlu0 0
      %754 = vperm.xlu0 %753, %v699
      %v755 = vpop.permute.xlu0 %754
      %758 = vset.pattern.permute.xlu0 0
      %759 = vperm.xlu0 %758, %v700
      %v760 = vpop.permute.xlu0 %759
      %763 = vset.pattern.permute.xlu0 0
      %764 = vperm.xlu0 %763, %v701
      %v765 = vpop.permute.xlu0 %764
      %768 = vset.pattern.permute.xlu0 0
      %769 = vperm.xlu0 %768, %v702
      %v770 = vpop.permute.xlu0 %769
      %773 = vset.pattern.permute.xlu0 0
      %774 = vperm.xlu0 %773, %v703
      %v775 = vpop.permute.xlu0 %774
      %778 = vset.pattern.permute.xlu0 0
      %779 = vperm.xlu0 %778, %v704
      %v780 = vpop.permute.xlu0 %779
      %783 = vset.pattern.permute.xlu0 0
      %784 = vperm.xlu0 %783, %v705
      %v785 = vpop.permute.xlu0 %784
      %788 = vset.pattern.permute.xlu0 0
      %789 = vperm.xlu0 %788, %v706
      %v790 = vpop.permute.xlu0 %789
      %793 = vset.pattern.permute.xlu0 0
      %794 = vperm.xlu0 %793, %v707
      %v795 = vpop.permute.xlu0 %794
      %798 = vset.pattern.permute.xlu0 0
      %799 = vperm.xlu0 %798, %v708
      %v800 = vpop.permute.xlu0 %799
      %803 = vset.pattern.permute.xlu0 0
      %804 = vperm.xlu0 %803, %v709
      %v805 = vpop.permute.xlu0 %804
      %808 = vset.pattern.permute.xlu0 0
      %809 = vperm.xlu0 %808, %v710
      %v810 = vpop.permute.xlu0 %809
      %813 = vset.pattern.permute.xlu0 0
      %814 = vperm.xlu0 %813, %v711
      %v815 = vpop.permute.xlu0 %814
      %818 = vset.pattern.permute.xlu0 0
      %819 = vperm.xlu0 %818, %v712
      %v820 = vpop.permute.xlu0 %819
      %823 = vset.pattern.permute.xlu0 0
      %824 = vperm.xlu0 %823, %v713
      %v825 = vpop.permute.xlu0 %824
      %828 = vset.pattern.permute.xlu0 0
      %829 = vperm.xlu0 %828, %v714
      %v830 = vpop.permute.xlu0 %829
      %833 = vset.pattern.permute.xlu0 0
      %834 = vperm.xlu0 %833, %v715
      %v835 = vpop.permute.xlu0 %834
      %838 = vset.pattern.permute.xlu0 0
      %839 = vperm.xlu0 %838, %v716
      %v840 = vpop.permute.xlu0 %839
      %843 = vset.pattern.permute.xlu0 0
      %844 = vperm.xlu0 %843, %v717
      %v845 = vpop.permute.xlu0 %844
      %848 = vset.pattern.permute.xlu0 0
      %849 = vperm.xlu0 %848, %v718
      %v850 = vpop.permute.xlu0 %849
      %853 = vset.pattern.permute.xlu0 0
      %854 = vperm.xlu0 %853, %v719
      %v855 = vpop.permute.xlu0 %854
      %858 = vset.pattern.permute.xlu0 0
      %859 = vperm.xlu0 %858, %v720
      %v860 = vpop.permute.xlu0 %859
      %863 = vset.pattern.permute.xlu0 0
      %864 = vperm.xlu0 %863, %v721
      %v865 = vpop.permute.xlu0 %864
      %868 = vset.pattern.permute.xlu0 0
      %869 = vperm.xlu0 %868, %v722
      %v870 = vpop.permute.xlu0 %869
      %873 = vset.pattern.permute.xlu0 0
      %874 = vperm.xlu0 %873, %v723
      %v875 = vpop.permute.xlu0 %874
      %878 = vset.pattern.permute.xlu0 0
      %879 = vperm.xlu0 %878, %v724
      %v880 = vpop.permute.xlu0 %879
      %883 = vset.pattern.permute.xlu0 0
      %884 = vperm.xlu0 %883, %v725
      %v885 = vpop.permute.xlu0 %884
      %888 = vset.pattern.permute.xlu0 0
      %889 = vperm.xlu0 %888, %v726
      %v890 = vpop.permute.xlu0 %889
      %v892 = vperm.slane %v728, 0
      %v893 = vsub.f32 %v735, %v892
      %v894 = vsub.f32 %v740, %v892
      %v895 = vsub.f32 %v745, %v892
      %v896 = vsub.f32 %v750, %v892
      %v897 = vsub.f32 %v755, %v892
      %v898 = vsub.f32 %v760, %v892
      %v899 = vsub.f32 %v765, %v892
      %v900 = vsub.f32 %v770, %v892
      %v901 = vsub.f32 %v775, %v892
      %v902 = vsub.f32 %v780, %v892
      %v903 = vsub.f32 %v785, %v892
      %v904 = vsub.f32 %v790, %v892
      %v905 = vsub.f32 %v795, %v892
      %v906 = vsub.f32 %v800, %v892
      %v907 = vsub.f32 %v805, %v892
      %v908 = vsub.f32 %v810, %v892
      %v909 = vsub.f32 %v815, %v892
      %v910 = vsub.f32 %v820, %v892
      %v911 = vsub.f32 %v825, %v892
      %v912 = vsub.f32 %v830, %v892
      %v913 = vsub.f32 %v835, %v892
      %v914 = vsub.f32 %v840, %v892
      %v915 = vsub.f32 %v845, %v892
      %v916 = vsub.f32 %v850, %v892
      %v917 = vsub.f32 %v855, %v892
      %v918 = vsub.f32 %v860, %v892
      %v919 = vsub.f32 %v865, %v892
      %v920 = vsub.f32 %v870, %v892
      %v921 = vsub.f32 %v875, %v892
      %v922 = vsub.f32 %v880, %v892
      %v923 = vsub.f32 %v885, %v892
      %v924 = vsub.f32 %v890, %v892
      %v925 = vmul.f32 %v893, %v893
      %v926 = vmul.f32 %v894, %v894
      %v927 = vmul.f32 %v895, %v895
      %v928 = vmul.f32 %v896, %v896
      %v929 = vmul.f32 %v897, %v897
      %v930 = vmul.f32 %v898, %v898
      %v931 = vmul.f32 %v899, %v899
      %v932 = vmul.f32 %v900, %v900
      %v933 = vmul.f32 %v901, %v901
      %v934 = vmul.f32 %v902, %v902
      %v935 = vmul.f32 %v903, %v903
      %v936 = vmul.f32 %v904, %v904
      %v937 = vmul.f32 %v905, %v905
      %v938 = vmul.f32 %v906, %v906
      %v939 = vmul.f32 %v907, %v907
      %v940 = vmul.f32 %v908, %v908
      %v941 = vmul.f32 %v909, %v909
      %v942 = vmul.f32 %v910, %v910
      %v943 = vmul.f32 %v911, %v911
      %v944 = vmul.f32 %v912, %v912
      %v945 = vmul.f32 %v913, %v913
      %v946 = vmul.f32 %v914, %v914
      %v947 = vmul.f32 %v915, %v915
      %v948 = vmul.f32 %v916, %v916
      %v949 = vmul.f32 %v917, %v917
      %v950 = vmul.f32 %v918, %v918
      %v951 = vmul.f32 %v919, %v919
      %v952 = vmul.f32 %v920, %v920
      %v953 = vmul.f32 %v921, %v921
      %v954 = vmul.f32 %v922, %v922
      %v955 = vmul.f32 %v923, %v923
      %v956 = vmul.f32 %v924, %v924
      %957 = vset.pattern.permute.xlu0 1
      %958 = vperm.xlu0 %957, %v695
      %v959 = vpop.permute.xlu0 %958
      %961 = vset.pattern.permute.xlu0 1
      %962 = vperm.xlu0 %961, %v696
      %v963 = vpop.permute.xlu0 %962
      %965 = vset.pattern.permute.xlu0 1
      %966 = vperm.xlu0 %965, %v697
      %v967 = vpop.permute.xlu0 %966
      %969 = vset.pattern.permute.xlu0 1
      %970 = vperm.xlu0 %969, %v698
      %v971 = vpop.permute.xlu0 %970
      %973 = vset.pattern.permute.xlu0 1
      %974 = vperm.xlu0 %973, %v699
      %v975 = vpop.permute.xlu0 %974
      %977 = vset.pattern.permute.xlu0 1
      %978 = vperm.xlu0 %977, %v700
      %v979 = vpop.permute.xlu0 %978
      %981 = vset.pattern.permute.xlu0 1
      %982 = vperm.xlu0 %981, %v701
      %v983 = vpop.permute.xlu0 %982
      %985 = vset.pattern.permute.xlu0 1
      %986 = vperm.xlu0 %985, %v702
      %v987 = vpop.permute.xlu0 %986
      %989 = vset.pattern.permute.xlu0 1
      %990 = vperm.xlu0 %989, %v703
      %v991 = vpop.permute.xlu0 %990
      %993 = vset.pattern.permute.xlu0 1
      %994 = vperm.xlu0 %993, %v704
      %v995 = vpop.permute.xlu0 %994
      %997 = vset.pattern.permute.xlu0 1
      %998 = vperm.xlu0 %997, %v705
      %v999 = vpop.permute.xlu0 %998
      %1001 = vset.pattern.permute.xlu0 1
      %1002 = vperm.xlu0 %1001, %v706
      %v1003 = vpop.permute.xlu0 %1002
      %1005 = vset.pattern.permute.xlu0 1
      %1006 = vperm.xlu0 %1005, %v707
      %v1007 = vpop.permute.xlu0 %1006
      %1009 = vset.pattern.permute.xlu0 1
      %1010 = vperm.xlu0 %1009, %v708
      %v1011 = vpop.permute.xlu0 %1010
      %1013 = vset.pattern.permute.xlu0 1
      %1014 = vperm.xlu0 %1013, %v709
      %v1015 = vpop.permute.xlu0 %1014
      %1017 = vset.pattern.permute.xlu0 1
      %1018 = vperm.xlu0 %1017, %v710
      %v1019 = vpop.permute.xlu0 %1018
      %1021 = vset.pattern.permute.xlu0 1
      %1022 = vperm.xlu0 %1021, %v711
      %v1023 = vpop.permute.xlu0 %1022
      %1025 = vset.pattern.permute.xlu0 1
      %1026 = vperm.xlu0 %1025, %v712
      %v1027 = vpop.permute.xlu0 %1026
      %1029 = vset.pattern.permute.xlu0 1
      %1030 = vperm.xlu0 %1029, %v713
      %v1031 = vpop.permute.xlu0 %1030
      %1033 = vset.pattern.permute.xlu0 1
      %1034 = vperm.xlu0 %1033, %v714
      %v1035 = vpop.permute.xlu0 %1034
      %1037 = vset.pattern.permute.xlu0 1
      %1038 = vperm.xlu0 %1037, %v715
      %v1039 = vpop.permute.xlu0 %1038
      %1041 = vset.pattern.permute.xlu0 1
      %1042 = vperm.xlu0 %1041, %v716
      %v1043 = vpop.permute.xlu0 %1042
      %1045 = vset.pattern.permute.xlu0 1
      %1046 = vperm.xlu0 %1045, %v717
      %v1047 = vpop.permute.xlu0 %1046
      %1049 = vset.pattern.permute.xlu0 1
      %1050 = vperm.xlu0 %1049, %v718
      %v1051 = vpop.permute.xlu0 %1050
      %1053 = vset.pattern.permute.xlu0 1
      %1054 = vperm.xlu0 %1053, %v719
      %v1055 = vpop.permute.xlu0 %1054
      %1057 = vset.pattern.permute.xlu0 1
      %1058 = vperm.xlu0 %1057, %v720
      %v1059 = vpop.permute.xlu0 %1058
      %1061 = vset.pattern.permute.xlu0 1
      %1062 = vperm.xlu0 %1061, %v721
      %v1063 = vpop.permute.xlu0 %1062
      %1065 = vset.pattern.permute.xlu0 1
      %1066 = vperm.xlu0 %1065, %v722
      %v1067 = vpop.permute.xlu0 %1066
      %1069 = vset.pattern.permute.xlu0 1
      %1070 = vperm.xlu0 %1069, %v723
      %v1071 = vpop.permute.xlu0 %1070
      %1073 = vset.pattern.permute.xlu0 1
      %1074 = vperm.xlu0 %1073, %v724
      %v1075 = vpop.permute.xlu0 %1074
      %1077 = vset.pattern.permute.xlu0 1
      %1078 = vperm.xlu0 %1077, %v725
      %v1079 = vpop.permute.xlu0 %1078
      %1081 = vset.pattern.permute.xlu0 1
      %1082 = vperm.xlu0 %1081, %v726
      %v1083 = vpop.permute.xlu0 %1082
      %v1085 = vperm.slane %v728, 1
      %v1086 = vsub.f32 %v959, %v1085
      %v1087 = vsub.f32 %v963, %v1085
      %v1088 = vsub.f32 %v967, %v1085
      %v1089 = vsub.f32 %v971, %v1085
      %v1090 = vsub.f32 %v975, %v1085
      %v1091 = vsub.f32 %v979, %v1085
      %v1092 = vsub.f32 %v983, %v1085
      %v1093 = vsub.f32 %v987, %v1085
      %v1094 = vsub.f32 %v991, %v1085
      %v1095 = vsub.f32 %v995, %v1085
      %v1096 = vsub.f32 %v999, %v1085
      %v1097 = vsub.f32 %v1003, %v1085
      %v1098 = vsub.f32 %v1007, %v1085
      %v1099 = vsub.f32 %v1011, %v1085
      %v1100 = vsub.f32 %v1015, %v1085
      %v1101 = vsub.f32 %v1019, %v1085
      %v1102 = vsub.f32 %v1023, %v1085
      %v1103 = vsub.f32 %v1027, %v1085
      %v1104 = vsub.f32 %v1031, %v1085
      %v1105 = vsub.f32 %v1035, %v1085
      %v1106 = vsub.f32 %v1039, %v1085
      %v1107 = vsub.f32 %v1043, %v1085
      %v1108 = vsub.f32 %v1047, %v1085
      %v1109 = vsub.f32 %v1051, %v1085
      %v1110 = vsub.f32 %v1055, %v1085
      %v1111 = vsub.f32 %v1059, %v1085
      %v1112 = vsub.f32 %v1063, %v1085
      %v1113 = vsub.f32 %v1067, %v1085
      %v1114 = vsub.f32 %v1071, %v1085
      %v1115 = vsub.f32 %v1075, %v1085
      %v1116 = vsub.f32 %v1079, %v1085
      %v1117 = vsub.f32 %v1083, %v1085
      %v1118 = vmul.f32 %v1086, %v1086
      %v1119 = vmul.f32 %v1087, %v1087
      %v1120 = vmul.f32 %v1088, %v1088
      %v1121 = vmul.f32 %v1089, %v1089
      %v1122 = vmul.f32 %v1090, %v1090
      %v1123 = vmul.f32 %v1091, %v1091
      %v1124 = vmul.f32 %v1092, %v1092
      %v1125 = vmul.f32 %v1093, %v1093
      %v1126 = vmul.f32 %v1094, %v1094
      %v1127 = vmul.f32 %v1095, %v1095
      %v1128 = vmul.f32 %v1096, %v1096
      %v1129 = vmul.f32 %v1097, %v1097
      %v1130 = vmul.f32 %v1098, %v1098
      %v1131 = vmul.f32 %v1099, %v1099
      %v1132 = vmul.f32 %v1100, %v1100
      %v1133 = vmul.f32 %v1101, %v1101
      %v1134 = vmul.f32 %v1102, %v1102
      %v1135 = vmul.f32 %v1103, %v1103
      %v1136 = vmul.f32 %v1104, %v1104
      %v1137 = vmul.f32 %v1105, %v1105
      %v1138 = vmul.f32 %v1106, %v1106
      %v1139 = vmul.f32 %v1107, %v1107
      %v1140 = vmul.f32 %v1108, %v1108
      %v1141 = vmul.f32 %v1109, %v1109
      %v1142 = vmul.f32 %v1110, %v1110
      %v1143 = vmul.f32 %v1111, %v1111
      %v1144 = vmul.f32 %v1112, %v1112
      %v1145 = vmul.f32 %v1113, %v1113
      %v1146 = vmul.f32 %v1114, %v1114
      %v1147 = vmul.f32 %v1115, %v1115
      %v1148 = vmul.f32 %v1116, %v1116
      %v1149 = vmul.f32 %v1117, %v1117
      %v1150 = vadd.f32 %v925, %v1118
      %v1151 = vadd.f32 %v926, %v1119
      %v1152 = vadd.f32 %v927, %v1120
      %v1153 = vadd.f32 %v928, %v1121
      %v1154 = vadd.f32 %v929, %v1122
      %v1155 = vadd.f32 %v930, %v1123
      %v1156 = vadd.f32 %v931, %v1124
      %v1157 = vadd.f32 %v932, %v1125
      %v1158 = vadd.f32 %v933, %v1126
      %v1159 = vadd.f32 %v934, %v1127
      %v1160 = vadd.f32 %v935, %v1128
      %v1161 = vadd.f32 %v936, %v1129
      %v1162 = vadd.f32 %v937, %v1130
      %v1163 = vadd.f32 %v938, %v1131
      %v1164 = vadd.f32 %v939, %v1132
      %v1165 = vadd.f32 %v940, %v1133
      %v1166 = vadd.f32 %v941, %v1134
      %v1167 = vadd.f32 %v942, %v1135
      %v1168 = vadd.f32 %v943, %v1136
      %v1169 = vadd.f32 %v944, %v1137
      %v1170 = vadd.f32 %v945, %v1138
      %v1171 = vadd.f32 %v946, %v1139
      %v1172 = vadd.f32 %v947, %v1140
      %v1173 = vadd.f32 %v948, %v1141
      %v1174 = vadd.f32 %v949, %v1142
      %v1175 = vadd.f32 %v950, %v1143
      %v1176 = vadd.f32 %v951, %v1144
      %v1177 = vadd.f32 %v952, %v1145
      %v1178 = vadd.f32 %v953, %v1146
      %v1179 = vadd.f32 %v954, %v1147
      %v1180 = vadd.f32 %v955, %v1148
      %v1181 = vadd.f32 %v956, %v1149
      %1182 = vset.pattern.permute.xlu0 2
      %1183 = vperm.xlu0 %1182, %v695
      %v1184 = vpop.permute.xlu0 %1183
      %1186 = vset.pattern.permute.xlu0 2
      %1187 = vperm.xlu0 %1186, %v696
      %v1188 = vpop.permute.xlu0 %1187
      %1190 = vset.pattern.permute.xlu0 2
      %1191 = vperm.xlu0 %1190, %v697
      %v1192 = vpop.permute.xlu0 %1191
      %1194 = vset.pattern.permute.xlu0 2
      %1195 = vperm.xlu0 %1194, %v698
      %v1196 = vpop.permute.xlu0 %1195
      %1198 = vset.pattern.permute.xlu0 2
      %1199 = vperm.xlu0 %1198, %v699
      %v1200 = vpop.permute.xlu0 %1199
      %1202 = vset.pattern.permute.xlu0 2
      %1203 = vperm.xlu0 %1202, %v700
      %v1204 = vpop.permute.xlu0 %1203
      %1206 = vset.pattern.permute.xlu0 2
      %1207 = vperm.xlu0 %1206, %v701
      %v1208 = vpop.permute.xlu0 %1207
      %1210 = vset.pattern.permute.xlu0 2
      %1211 = vperm.xlu0 %1210, %v702
      %v1212 = vpop.permute.xlu0 %1211
      %1214 = vset.pattern.permute.xlu0 2
      %1215 = vperm.xlu0 %1214, %v703
      %v1216 = vpop.permute.xlu0 %1215
      %1218 = vset.pattern.permute.xlu0 2
      %1219 = vperm.xlu0 %1218, %v704
      %v1220 = vpop.permute.xlu0 %1219
      %1222 = vset.pattern.permute.xlu0 2
      %1223 = vperm.xlu0 %1222, %v705
      %v1224 = vpop.permute.xlu0 %1223
      %1226 = vset.pattern.permute.xlu0 2
      %1227 = vperm.xlu0 %1226, %v706
      %v1228 = vpop.permute.xlu0 %1227
      %1230 = vset.pattern.permute.xlu0 2
      %1231 = vperm.xlu0 %1230, %v707
      %v1232 = vpop.permute.xlu0 %1231
      %1234 = vset.pattern.permute.xlu0 2
      %1235 = vperm.xlu0 %1234, %v708
      %v1236 = vpop.permute.xlu0 %1235
      %1238 = vset.pattern.permute.xlu0 2
      %1239 = vperm.xlu0 %1238, %v709
      %v1240 = vpop.permute.xlu0 %1239
      %1242 = vset.pattern.permute.xlu0 2
      %1243 = vperm.xlu0 %1242, %v710
      %v1244 = vpop.permute.xlu0 %1243
      %1246 = vset.pattern.permute.xlu0 2
      %1247 = vperm.xlu0 %1246, %v711
      %v1248 = vpop.permute.xlu0 %1247
      %1250 = vset.pattern.permute.xlu0 2
      %1251 = vperm.xlu0 %1250, %v712
      %v1252 = vpop.permute.xlu0 %1251
      %1254 = vset.pattern.permute.xlu0 2
      %1255 = vperm.xlu0 %1254, %v713
      %v1256 = vpop.permute.xlu0 %1255
      %1258 = vset.pattern.permute.xlu0 2
      %1259 = vperm.xlu0 %1258, %v714
      %v1260 = vpop.permute.xlu0 %1259
      %1262 = vset.pattern.permute.xlu0 2
      %1263 = vperm.xlu0 %1262, %v715
      %v1264 = vpop.permute.xlu0 %1263
      %1266 = vset.pattern.permute.xlu0 2
      %1267 = vperm.xlu0 %1266, %v716
      %v1268 = vpop.permute.xlu0 %1267
      %1270 = vset.pattern.permute.xlu0 2
      %1271 = vperm.xlu0 %1270, %v717
      %v1272 = vpop.permute.xlu0 %1271
      %1274 = vset.pattern.permute.xlu0 2
      %1275 = vperm.xlu0 %1274, %v718
      %v1276 = vpop.permute.xlu0 %1275
      %1278 = vset.pattern.permute.xlu0 2
      %1279 = vperm.xlu0 %1278, %v719
      %v1280 = vpop.permute.xlu0 %1279
      %1282 = vset.pattern.permute.xlu0 2
      %1283 = vperm.xlu0 %1282, %v720
      %v1284 = vpop.permute.xlu0 %1283
      %1286 = vset.pattern.permute.xlu0 2
      %1287 = vperm.xlu0 %1286, %v721
      %v1288 = vpop.permute.xlu0 %1287
      %1290 = vset.pattern.permute.xlu0 2
      %1291 = vperm.xlu0 %1290, %v722
      %v1292 = vpop.permute.xlu0 %1291
      %1294 = vset.pattern.permute.xlu0 2
      %1295 = vperm.xlu0 %1294, %v723
      %v1296 = vpop.permute.xlu0 %1295
      %1298 = vset.pattern.permute.xlu0 2
      %1299 = vperm.xlu0 %1298, %v724
      %v1300 = vpop.permute.xlu0 %1299
      %1302 = vset.pattern.permute.xlu0 2
      %1303 = vperm.xlu0 %1302, %v725
      %v1304 = vpop.permute.xlu0 %1303
      %1306 = vset.pattern.permute.xlu0 2
      %1307 = vperm.xlu0 %1306, %v726
      %v1308 = vpop.permute.xlu0 %1307
      %v1310 = vperm.slane %v728, 2
      %v1311 = vsub.f32 %v1184, %v1310
      %v1312 = vsub.f32 %v1188, %v1310
      %v1313 = vsub.f32 %v1192, %v1310
      %v1314 = vsub.f32 %v1196, %v1310
      %v1315 = vsub.f32 %v1200, %v1310
      %v1316 = vsub.f32 %v1204, %v1310
      %v1317 = vsub.f32 %v1208, %v1310
      %v1318 = vsub.f32 %v1212, %v1310
      %v1319 = vsub.f32 %v1216, %v1310
      %v1320 = vsub.f32 %v1220, %v1310
      %v1321 = vsub.f32 %v1224, %v1310
      %v1322 = vsub.f32 %v1228, %v1310
      %v1323 = vsub.f32 %v1232, %v1310
      %v1324 = vsub.f32 %v1236, %v1310
      %v1325 = vsub.f32 %v1240, %v1310
      %v1326 = vsub.f32 %v1244, %v1310
      %v1327 = vsub.f32 %v1248, %v1310
      %v1328 = vsub.f32 %v1252, %v1310
      %v1329 = vsub.f32 %v1256, %v1310
      %v1330 = vsub.f32 %v1260, %v1310
      %v1331 = vsub.f32 %v1264, %v1310
      %v1332 = vsub.f32 %v1268, %v1310
      %v1333 = vsub.f32 %v1272, %v1310
      %v1334 = vsub.f32 %v1276, %v1310
      %v1335 = vsub.f32 %v1280, %v1310
      %v1336 = vsub.f32 %v1284, %v1310
      %v1337 = vsub.f32 %v1288, %v1310
      %v1338 = vsub.f32 %v1292, %v1310
      %v1339 = vsub.f32 %v1296, %v1310
      %v1340 = vsub.f32 %v1300, %v1310
      %v1341 = vsub.f32 %v1304, %v1310
      %v1342 = vsub.f32 %v1308, %v1310
      %v1343 = vmul.f32 %v1311, %v1311
      %v1344 = vmul.f32 %v1312, %v1312
      %v1345 = vmul.f32 %v1313, %v1313
      %v1346 = vmul.f32 %v1314, %v1314
      %v1347 = vmul.f32 %v1315, %v1315
      %v1348 = vmul.f32 %v1316, %v1316
      %v1349 = vmul.f32 %v1317, %v1317
      %v1350 = vmul.f32 %v1318, %v1318
      %v1351 = vmul.f32 %v1319, %v1319
      %v1352 = vmul.f32 %v1320, %v1320
      %v1353 = vmul.f32 %v1321, %v1321
      %v1354 = vmul.f32 %v1322, %v1322
      %v1355 = vmul.f32 %v1323, %v1323
      %v1356 = vmul.f32 %v1324, %v1324
      %v1357 = vmul.f32 %v1325, %v1325
      %v1358 = vmul.f32 %v1326, %v1326
      %v1359 = vmul.f32 %v1327, %v1327
      %v1360 = vmul.f32 %v1328, %v1328
      %v1361 = vmul.f32 %v1329, %v1329
      %v1362 = vmul.f32 %v1330, %v1330
      %v1363 = vmul.f32 %v1331, %v1331
      %v1364 = vmul.f32 %v1332, %v1332
      %v1365 = vmul.f32 %v1333, %v1333
      %v1366 = vmul.f32 %v1334, %v1334
      %v1367 = vmul.f32 %v1335, %v1335
      %v1368 = vmul.f32 %v1336, %v1336
      %v1369 = vmul.f32 %v1337, %v1337
      %v1370 = vmul.f32 %v1338, %v1338
      %v1371 = vmul.f32 %v1339, %v1339
      %v1372 = vmul.f32 %v1340, %v1340
      %v1373 = vmul.f32 %v1341, %v1341
      %v1374 = vmul.f32 %v1342, %v1342
      %v1375 = vadd.f32 %v1150, %v1343
      %v1376 = vadd.f32 %v1151, %v1344
      %v1377 = vadd.f32 %v1152, %v1345
      %v1378 = vadd.f32 %v1153, %v1346
      %v1379 = vadd.f32 %v1154, %v1347
      %v1380 = vadd.f32 %v1155, %v1348
      %v1381 = vadd.f32 %v1156, %v1349
      %v1382 = vadd.f32 %v1157, %v1350
      %v1383 = vadd.f32 %v1158, %v1351
      %v1384 = vadd.f32 %v1159, %v1352
      %v1385 = vadd.f32 %v1160, %v1353
      %v1386 = vadd.f32 %v1161, %v1354
      %v1387 = vadd.f32 %v1162, %v1355
      %v1388 = vadd.f32 %v1163, %v1356
      %v1389 = vadd.f32 %v1164, %v1357
      %v1390 = vadd.f32 %v1165, %v1358
      %v1391 = vadd.f32 %v1166, %v1359
      %v1392 = vadd.f32 %v1167, %v1360
      %v1393 = vadd.f32 %v1168, %v1361
      %v1394 = vadd.f32 %v1169, %v1362
      %v1395 = vadd.f32 %v1170, %v1363
      %v1396 = vadd.f32 %v1171, %v1364
      %v1397 = vadd.f32 %v1172, %v1365
      %v1398 = vadd.f32 %v1173, %v1366
      %v1399 = vadd.f32 %v1174, %v1367
      %v1400 = vadd.f32 %v1175, %v1368
      %v1401 = vadd.f32 %v1176, %v1369
      %v1402 = vadd.f32 %v1177, %v1370
      %v1403 = vadd.f32 %v1178, %v1371
      %v1404 = vadd.f32 %v1179, %v1372
      %v1405 = vadd.f32 %v1180, %v1373
      %v1406 = vadd.f32 %v1181, %v1374
      %v1407 = vlaneseq
      %v1408 = vand.u32 %v1407, 127
      %vm1409 = vcmask 261120
      %v1410 = vsel %vm1409, %v1375, inf
      %1411 = vmin.xlane.f32.xlu0 %v1410
      %v1412 = vpop.xlane.xlu0 %1411
      %v1413 = vsel %vm1409, %v1376, inf
      %1414 = vmin.xlane.f32.xlu0 %v1413
      %v1415 = vpop.xlane.xlu0 %1414
      %v1416 = vsel %vm1409, %v1377, inf
      %1417 = vmin.xlane.f32.xlu0 %v1416
      %v1418 = vpop.xlane.xlu0 %1417
      %v1419 = vsel %vm1409, %v1378, inf
      %1420 = vmin.xlane.f32.xlu0 %v1419
      %v1421 = vpop.xlane.xlu0 %1420
      %v1422 = vsel %vm1409, %v1379, inf
      %1423 = vmin.xlane.f32.xlu0 %v1422
      %v1424 = vpop.xlane.xlu0 %1423
      %v1425 = vsel %vm1409, %v1380, inf
      %1426 = vmin.xlane.f32.xlu0 %v1425
      %v1427 = vpop.xlane.xlu0 %1426
      %v1428 = vsel %vm1409, %v1381, inf
      %1429 = vmin.xlane.f32.xlu0 %v1428
      %v1430 = vpop.xlane.xlu0 %1429
      %v1431 = vsel %vm1409, %v1382, inf
      %1432 = vmin.xlane.f32.xlu0 %v1431
      %v1433 = vpop.xlane.xlu0 %1432
      %v1434 = vsel %vm1409, %v1383, inf
      %1435 = vmin.xlane.f32.xlu0 %v1434
      %v1436 = vpop.xlane.xlu0 %1435
      %v1437 = vsel %vm1409, %v1384, inf
      %1438 = vmin.xlane.f32.xlu0 %v1437
      %v1439 = vpop.xlane.xlu0 %1438
      %v1440 = vsel %vm1409, %v1385, inf
      %1441 = vmin.xlane.f32.xlu0 %v1440
      %v1442 = vpop.xlane.xlu0 %1441
      %v1443 = vsel %vm1409, %v1386, inf
      %1444 = vmin.xlane.f32.xlu0 %v1443
      %v1445 = vpop.xlane.xlu0 %1444
      %v1446 = vsel %vm1409, %v1387, inf
      %1447 = vmin.xlane.f32.xlu0 %v1446
      %v1448 = vpop.xlane.xlu0 %1447
      %v1449 = vsel %vm1409, %v1388, inf
      %1450 = vmin.xlane.f32.xlu0 %v1449
      %v1451 = vpop.xlane.xlu0 %1450
      %v1452 = vsel %vm1409, %v1389, inf
      %1453 = vmin.xlane.f32.xlu0 %v1452
      %v1454 = vpop.xlane.xlu0 %1453
      %v1455 = vsel %vm1409, %v1390, inf
      %1456 = vmin.xlane.f32.xlu0 %v1455
      %v1457 = vpop.xlane.xlu0 %1456
      %v1458 = vsel %vm1409, %v1391, inf
      %1459 = vmin.xlane.f32.xlu0 %v1458
      %v1460 = vpop.xlane.xlu0 %1459
      %v1461 = vsel %vm1409, %v1392, inf
      %1462 = vmin.xlane.f32.xlu0 %v1461
      %v1463 = vpop.xlane.xlu0 %1462
      %v1464 = vsel %vm1409, %v1393, inf
      %1465 = vmin.xlane.f32.xlu0 %v1464
      %v1466 = vpop.xlane.xlu0 %1465
      %v1467 = vsel %vm1409, %v1394, inf
      %1468 = vmin.xlane.f32.xlu0 %v1467
      %v1469 = vpop.xlane.xlu0 %1468
      %v1470 = vsel %vm1409, %v1395, inf
      %1471 = vmin.xlane.f32.xlu0 %v1470
      %v1472 = vpop.xlane.xlu0 %1471
      %v1473 = vsel %vm1409, %v1396, inf
      %1474 = vmin.xlane.f32.xlu0 %v1473
      %v1475 = vpop.xlane.xlu0 %1474
      %v1476 = vsel %vm1409, %v1397, inf
      %1477 = vmin.xlane.f32.xlu0 %v1476
      %v1478 = vpop.xlane.xlu0 %1477
      %v1479 = vsel %vm1409, %v1398, inf
      %1480 = vmin.xlane.f32.xlu0 %v1479
      %v1481 = vpop.xlane.xlu0 %1480
      %v1482 = vsel %vm1409, %v1399, inf
      %1483 = vmin.xlane.f32.xlu0 %v1482
      %v1484 = vpop.xlane.xlu0 %1483
      %v1485 = vsel %vm1409, %v1400, inf
      %1486 = vmin.xlane.f32.xlu0 %v1485
      %v1487 = vpop.xlane.xlu0 %1486
      %v1488 = vsel %vm1409, %v1401, inf
      %1489 = vmin.xlane.f32.xlu0 %v1488
      %v1490 = vpop.xlane.xlu0 %1489
      %v1491 = vsel %vm1409, %v1402, inf
      %1492 = vmin.xlane.f32.xlu0 %v1491
      %v1493 = vpop.xlane.xlu0 %1492
      %v1494 = vsel %vm1409, %v1403, inf
      %1495 = vmin.xlane.f32.xlu0 %v1494
      %v1496 = vpop.xlane.xlu0 %1495
      %v1497 = vsel %vm1409, %v1404, inf
      %1498 = vmin.xlane.f32.xlu0 %v1497
      %v1499 = vpop.xlane.xlu0 %1498
      %v1500 = vsel %vm1409, %v1405, inf
      %1501 = vmin.xlane.f32.xlu0 %v1500
      %v1502 = vpop.xlane.xlu0 %1501
      %v1503 = vsel %vm1409, %v1406, inf
      %1504 = vmin.xlane.f32.xlu0 %v1503
      %v1505 = vpop.xlane.xlu0 %1504
      %vm1506 = vcmp.eq.f32.partialorder %v1375, %v1412
      %vm1507 = vcmp.eq.f32.partialorder %v1376, %v1415
      %vm1508 = vcmp.eq.f32.partialorder %v1377, %v1418
      %vm1509 = vcmp.eq.f32.partialorder %v1378, %v1421
      %vm1510 = vcmp.eq.f32.partialorder %v1379, %v1424
      %vm1511 = vcmp.eq.f32.partialorder %v1380, %v1427
      %vm1512 = vcmp.eq.f32.partialorder %v1381, %v1430
      %vm1513 = vcmp.eq.f32.partialorder %v1382, %v1433
      %vm1514 = vcmp.eq.f32.partialorder %v1383, %v1436
      %vm1515 = vcmp.eq.f32.partialorder %v1384, %v1439
      %vm1516 = vcmp.eq.f32.partialorder %v1385, %v1442
      %vm1517 = vcmp.eq.f32.partialorder %v1386, %v1445
      %vm1518 = vcmp.eq.f32.partialorder %v1387, %v1448
      %vm1519 = vcmp.eq.f32.partialorder %v1388, %v1451
      %vm1520 = vcmp.eq.f32.partialorder %v1389, %v1454
      %vm1521 = vcmp.eq.f32.partialorder %v1390, %v1457
      %vm1522 = vcmp.eq.f32.partialorder %v1391, %v1460
      %vm1523 = vcmp.eq.f32.partialorder %v1392, %v1463
      %vm1524 = vcmp.eq.f32.partialorder %v1393, %v1466
      %vm1525 = vcmp.eq.f32.partialorder %v1394, %v1469
      %vm1526 = vcmp.eq.f32.partialorder %v1395, %v1472
      %vm1527 = vcmp.eq.f32.partialorder %v1396, %v1475
      %vm1528 = vcmp.eq.f32.partialorder %v1397, %v1478
      %vm1529 = vcmp.eq.f32.partialorder %v1398, %v1481
      %vm1530 = vcmp.eq.f32.partialorder %v1399, %v1484
      %vm1531 = vcmp.eq.f32.partialorder %v1400, %v1487
      %vm1532 = vcmp.eq.f32.partialorder %v1401, %v1490
      %vm1533 = vcmp.eq.f32.partialorder %v1402, %v1493
      %vm1534 = vcmp.eq.f32.partialorder %v1403, %v1496
      %vm1535 = vcmp.eq.f32.partialorder %v1404, %v1499
      %vm1536 = vcmp.eq.f32.partialorder %v1405, %v1502
      %vm1537 = vcmp.eq.f32.partialorder %v1406, %v1505
      %v1538 = vsel %vm1506, %v1408, 32
      %v1539 = vsel %vm1507, %v1408, 32
      %v1540 = vsel %vm1508, %v1408, 32
      %v1541 = vsel %vm1509, %v1408, 32
      %v1542 = vsel %vm1510, %v1408, 32
      %v1543 = vsel %vm1511, %v1408, 32
      %v1544 = vsel %vm1512, %v1408, 32
      %v1545 = vsel %vm1513, %v1408, 32
      %v1546 = vsel %vm1514, %v1408, 32
      %v1547 = vsel %vm1515, %v1408, 32
      %v1548 = vsel %vm1516, %v1408, 32
      %v1549 = vsel %vm1517, %v1408, 32
      %v1550 = vsel %vm1518, %v1408, 32
      %v1551 = vsel %vm1519, %v1408, 32
      %v1552 = vsel %vm1520, %v1408, 32
      %v1553 = vsel %vm1521, %v1408, 32
      %v1554 = vsel %vm1522, %v1408, 32
      %v1555 = vsel %vm1523, %v1408, 32
      %v1556 = vsel %vm1524, %v1408, 32
      %v1557 = vsel %vm1525, %v1408, 32
      %v1558 = vsel %vm1526, %v1408, 32
      %v1559 = vsel %vm1527, %v1408, 32
      %v1560 = vsel %vm1528, %v1408, 32
      %v1561 = vsel %vm1529, %v1408, 32
      %v1562 = vsel %vm1530, %v1408, 32
      %v1563 = vsel %vm1531, %v1408, 32
      %v1564 = vsel %vm1532, %v1408, 32
      %v1565 = vsel %vm1533, %v1408, 32
      %v1566 = vsel %vm1534, %v1408, 32
      %v1567 = vsel %vm1535, %v1408, 32
      %v1568 = vsel %vm1536, %v1408, 32
      %v1569 = vsel %vm1537, %v1408, 32
      %v1570 = vsel %vm1409, %v1538, 2147483647
      %v1571 = vand.u32 %v1570, 65535
      %v1572 = vshra.s32 %v1570, 16
      %v1573 = vcvt.s32.f32 %v1571
      %v1574 = vcvt.s32.f32 %v1572
      %1575 = vmin.xlane.f32.xlu0 %v1574
      %v1576 = vpop.xlane.xlu0 %1575
      %vm1577 = vcmp.eq.f32.partialorder %v1574, %v1576
      %v1578 = vsel %vm1577, %v1573, inf
      %1579 = vmin.xlane.f32.xlu0 %v1578
      %v1580 = vpop.xlane.xlu0 %1579
      %v1581 = vcvt.f32.s32 %v1580
      %v1582 = vcvt.f32.s32 %v1576
      %v1583 = vshll.u32 %v1582, 16
      %v1584 = vadd.s32 %v1583, %v1581
      %v1585 = vsel %vm1409, %v1539, 2147483647
      %v1586 = vand.u32 %v1585, 65535
      %v1587 = vshra.s32 %v1585, 16
      %v1588 = vcvt.s32.f32 %v1586
      %v1589 = vcvt.s32.f32 %v1587
      %1590 = vmin.xlane.f32.xlu0 %v1589
      %v1591 = vpop.xlane.xlu0 %1590
      %vm1592 = vcmp.eq.f32.partialorder %v1589, %v1591
      %v1593 = vsel %vm1592, %v1588, inf
      %1594 = vmin.xlane.f32.xlu0 %v1593
      %v1595 = vpop.xlane.xlu0 %1594
      %v1596 = vcvt.f32.s32 %v1595
      %v1597 = vcvt.f32.s32 %v1591
      %v1598 = vshll.u32 %v1597, 16
      %v1599 = vadd.s32 %v1598, %v1596
      %v1600 = vsel %vm1409, %v1540, 2147483647
      %v1601 = vand.u32 %v1600, 65535
      %v1602 = vshra.s32 %v1600, 16
      %v1603 = vcvt.s32.f32 %v1601
      %v1604 = vcvt.s32.f32 %v1602
      %1605 = vmin.xlane.f32.xlu0 %v1604
      %v1606 = vpop.xlane.xlu0 %1605
      %vm1607 = vcmp.eq.f32.partialorder %v1604, %v1606
      %v1608 = vsel %vm1607, %v1603, inf
      %1609 = vmin.xlane.f32.xlu0 %v1608
      %v1610 = vpop.xlane.xlu0 %1609
      %v1611 = vcvt.f32.s32 %v1610
      %v1612 = vcvt.f32.s32 %v1606
      %v1613 = vshll.u32 %v1612, 16
      %v1614 = vadd.s32 %v1613, %v1611
      %v1615 = vsel %vm1409, %v1541, 2147483647
      %v1616 = vand.u32 %v1615, 65535
      %v1617 = vshra.s32 %v1615, 16
      %v1618 = vcvt.s32.f32 %v1616
      %v1619 = vcvt.s32.f32 %v1617
      %1620 = vmin.xlane.f32.xlu0 %v1619
      %v1621 = vpop.xlane.xlu0 %1620
      %vm1622 = vcmp.eq.f32.partialorder %v1619, %v1621
      %v1623 = vsel %vm1622, %v1618, inf
      %1624 = vmin.xlane.f32.xlu0 %v1623
      %v1625 = vpop.xlane.xlu0 %1624
      %v1626 = vcvt.f32.s32 %v1625
      %v1627 = vcvt.f32.s32 %v1621
      %v1628 = vshll.u32 %v1627, 16
      %v1629 = vadd.s32 %v1628, %v1626
      %v1630 = vsel %vm1409, %v1542, 2147483647
      %v1631 = vand.u32 %v1630, 65535
      %v1632 = vshra.s32 %v1630, 16
      %v1633 = vcvt.s32.f32 %v1631
      %v1634 = vcvt.s32.f32 %v1632
      %1635 = vmin.xlane.f32.xlu0 %v1634
      %v1636 = vpop.xlane.xlu0 %1635
      %vm1637 = vcmp.eq.f32.partialorder %v1634, %v1636
      %v1638 = vsel %vm1637, %v1633, inf
      %1639 = vmin.xlane.f32.xlu0 %v1638
      %v1640 = vpop.xlane.xlu0 %1639
      %v1641 = vcvt.f32.s32 %v1640
      %v1642 = vcvt.f32.s32 %v1636
      %v1643 = vshll.u32 %v1642, 16
      %v1644 = vadd.s32 %v1643, %v1641
      %v1645 = vsel %vm1409, %v1543, 2147483647
      %v1646 = vand.u32 %v1645, 65535
      %v1647 = vshra.s32 %v1645, 16
      %v1648 = vcvt.s32.f32 %v1646
      %v1649 = vcvt.s32.f32 %v1647
      %1650 = vmin.xlane.f32.xlu0 %v1649
      %v1651 = vpop.xlane.xlu0 %1650
      %vm1652 = vcmp.eq.f32.partialorder %v1649, %v1651
      %v1653 = vsel %vm1652, %v1648, inf
      %1654 = vmin.xlane.f32.xlu0 %v1653
      %v1655 = vpop.xlane.xlu0 %1654
      %v1656 = vcvt.f32.s32 %v1655
      %v1657 = vcvt.f32.s32 %v1651
      %v1658 = vshll.u32 %v1657, 16
      %v1659 = vadd.s32 %v1658, %v1656
      %v1660 = vsel %vm1409, %v1544, 2147483647
      %v1661 = vand.u32 %v1660, 65535
      %v1662 = vshra.s32 %v1660, 16
      %v1663 = vcvt.s32.f32 %v1661
      %v1664 = vcvt.s32.f32 %v1662
      %1665 = vmin.xlane.f32.xlu0 %v1664
      %v1666 = vpop.xlane.xlu0 %1665
      %vm1667 = vcmp.eq.f32.partialorder %v1664, %v1666
      %v1668 = vsel %vm1667, %v1663, inf
      %1669 = vmin.xlane.f32.xlu0 %v1668
      %v1670 = vpop.xlane.xlu0 %1669
      %v1671 = vcvt.f32.s32 %v1670
      %v1672 = vcvt.f32.s32 %v1666
      %v1673 = vshll.u32 %v1672, 16
      %v1674 = vadd.s32 %v1673, %v1671
      %v1675 = vsel %vm1409, %v1545, 2147483647
      %v1676 = vand.u32 %v1675, 65535
      %v1677 = vshra.s32 %v1675, 16
      %v1678 = vcvt.s32.f32 %v1676
      %v1679 = vcvt.s32.f32 %v1677
      %1680 = vmin.xlane.f32.xlu0 %v1679
      %v1681 = vpop.xlane.xlu0 %1680
      %vm1682 = vcmp.eq.f32.partialorder %v1679, %v1681
      %v1683 = vsel %vm1682, %v1678, inf
      %1684 = vmin.xlane.f32.xlu0 %v1683
      %v1685 = vpop.xlane.xlu0 %1684
      %v1686 = vcvt.f32.s32 %v1685
      %v1687 = vcvt.f32.s32 %v1681
      %v1688 = vshll.u32 %v1687, 16
      %v1689 = vadd.s32 %v1688, %v1686
      %v1690 = vsel %vm1409, %v1546, 2147483647
      %v1691 = vand.u32 %v1690, 65535
      %v1692 = vshra.s32 %v1690, 16
      %v1693 = vcvt.s32.f32 %v1691
      %v1694 = vcvt.s32.f32 %v1692
      %1695 = vmin.xlane.f32.xlu0 %v1694
      %v1696 = vpop.xlane.xlu0 %1695
      %vm1697 = vcmp.eq.f32.partialorder %v1694, %v1696
      %v1698 = vsel %vm1697, %v1693, inf
      %1699 = vmin.xlane.f32.xlu0 %v1698
      %v1700 = vpop.xlane.xlu0 %1699
      %v1701 = vcvt.f32.s32 %v1700
      %v1702 = vcvt.f32.s32 %v1696
      %v1703 = vshll.u32 %v1702, 16
      %v1704 = vadd.s32 %v1703, %v1701
      %v1705 = vsel %vm1409, %v1547, 2147483647
      %v1706 = vand.u32 %v1705, 65535
      %v1707 = vshra.s32 %v1705, 16
      %v1708 = vcvt.s32.f32 %v1706
      %v1709 = vcvt.s32.f32 %v1707
      %1710 = vmin.xlane.f32.xlu0 %v1709
      %v1711 = vpop.xlane.xlu0 %1710
      %vm1712 = vcmp.eq.f32.partialorder %v1709, %v1711
      %v1713 = vsel %vm1712, %v1708, inf
      %1714 = vmin.xlane.f32.xlu0 %v1713
      %v1715 = vpop.xlane.xlu0 %1714
      %v1716 = vcvt.f32.s32 %v1715
      %v1717 = vcvt.f32.s32 %v1711
      %v1718 = vshll.u32 %v1717, 16
      %v1719 = vadd.s32 %v1718, %v1716
      %v1720 = vsel %vm1409, %v1548, 2147483647
      %v1721 = vand.u32 %v1720, 65535
      %v1722 = vshra.s32 %v1720, 16
      %v1723 = vcvt.s32.f32 %v1721
      %v1724 = vcvt.s32.f32 %v1722
      %1725 = vmin.xlane.f32.xlu0 %v1724
      %v1726 = vpop.xlane.xlu0 %1725
      %vm1727 = vcmp.eq.f32.partialorder %v1724, %v1726
      %v1728 = vsel %vm1727, %v1723, inf
      %1729 = vmin.xlane.f32.xlu0 %v1728
      %v1730 = vpop.xlane.xlu0 %1729
      %v1731 = vcvt.f32.s32 %v1730
      %v1732 = vcvt.f32.s32 %v1726
      %v1733 = vshll.u32 %v1732, 16
      %v1734 = vadd.s32 %v1733, %v1731
      %v1735 = vsel %vm1409, %v1549, 2147483647
      %v1736 = vand.u32 %v1735, 65535
      %v1737 = vshra.s32 %v1735, 16
      %v1738 = vcvt.s32.f32 %v1736
      %v1739 = vcvt.s32.f32 %v1737
      %1740 = vmin.xlane.f32.xlu0 %v1739
      %v1741 = vpop.xlane.xlu0 %1740
      %vm1742 = vcmp.eq.f32.partialorder %v1739, %v1741
      %v1743 = vsel %vm1742, %v1738, inf
      %1744 = vmin.xlane.f32.xlu0 %v1743
      %v1745 = vpop.xlane.xlu0 %1744
      %v1746 = vcvt.f32.s32 %v1745
      %v1747 = vcvt.f32.s32 %v1741
      %v1748 = vshll.u32 %v1747, 16
      %v1749 = vadd.s32 %v1748, %v1746
      %v1750 = vsel %vm1409, %v1550, 2147483647
      %v1751 = vand.u32 %v1750, 65535
      %v1752 = vshra.s32 %v1750, 16
      %v1753 = vcvt.s32.f32 %v1751
      %v1754 = vcvt.s32.f32 %v1752
      %1755 = vmin.xlane.f32.xlu0 %v1754
      %v1756 = vpop.xlane.xlu0 %1755
      %vm1757 = vcmp.eq.f32.partialorder %v1754, %v1756
      %v1758 = vsel %vm1757, %v1753, inf
      %1759 = vmin.xlane.f32.xlu0 %v1758
      %v1760 = vpop.xlane.xlu0 %1759
      %v1761 = vcvt.f32.s32 %v1760
      %v1762 = vcvt.f32.s32 %v1756
      %v1763 = vshll.u32 %v1762, 16
      %v1764 = vadd.s32 %v1763, %v1761
      %v1765 = vsel %vm1409, %v1551, 2147483647
      %v1766 = vand.u32 %v1765, 65535
      %v1767 = vshra.s32 %v1765, 16
      %v1768 = vcvt.s32.f32 %v1766
      %v1769 = vcvt.s32.f32 %v1767
      %1770 = vmin.xlane.f32.xlu0 %v1769
      %v1771 = vpop.xlane.xlu0 %1770
      %vm1772 = vcmp.eq.f32.partialorder %v1769, %v1771
      %v1773 = vsel %vm1772, %v1768, inf
      %1774 = vmin.xlane.f32.xlu0 %v1773
      %v1775 = vpop.xlane.xlu0 %1774
      %v1776 = vcvt.f32.s32 %v1775
      %v1777 = vcvt.f32.s32 %v1771
      %v1778 = vshll.u32 %v1777, 16
      %v1779 = vadd.s32 %v1778, %v1776
      %v1780 = vsel %vm1409, %v1552, 2147483647
      %v1781 = vand.u32 %v1780, 65535
      %v1782 = vshra.s32 %v1780, 16
      %v1783 = vcvt.s32.f32 %v1781
      %v1784 = vcvt.s32.f32 %v1782
      %1785 = vmin.xlane.f32.xlu0 %v1784
      %v1786 = vpop.xlane.xlu0 %1785
      %vm1787 = vcmp.eq.f32.partialorder %v1784, %v1786
      %v1788 = vsel %vm1787, %v1783, inf
      %1789 = vmin.xlane.f32.xlu0 %v1788
      %v1790 = vpop.xlane.xlu0 %1789
      %v1791 = vcvt.f32.s32 %v1790
      %v1792 = vcvt.f32.s32 %v1786
      %v1793 = vshll.u32 %v1792, 16
      %v1794 = vadd.s32 %v1793, %v1791
      %v1795 = vsel %vm1409, %v1553, 2147483647
      %v1796 = vand.u32 %v1795, 65535
      %v1797 = vshra.s32 %v1795, 16
      %v1798 = vcvt.s32.f32 %v1796
      %v1799 = vcvt.s32.f32 %v1797
      %1800 = vmin.xlane.f32.xlu0 %v1799
      %v1801 = vpop.xlane.xlu0 %1800
      %vm1802 = vcmp.eq.f32.partialorder %v1799, %v1801
      %v1803 = vsel %vm1802, %v1798, inf
      %1804 = vmin.xlane.f32.xlu0 %v1803
      %v1805 = vpop.xlane.xlu0 %1804
      %v1806 = vcvt.f32.s32 %v1805
      %v1807 = vcvt.f32.s32 %v1801
      %v1808 = vshll.u32 %v1807, 16
      %v1809 = vadd.s32 %v1808, %v1806
      %v1810 = vsel %vm1409, %v1554, 2147483647
      %v1811 = vand.u32 %v1810, 65535
      %v1812 = vshra.s32 %v1810, 16
      %v1813 = vcvt.s32.f32 %v1811
      %v1814 = vcvt.s32.f32 %v1812
      %1815 = vmin.xlane.f32.xlu0 %v1814
      %v1816 = vpop.xlane.xlu0 %1815
      %vm1817 = vcmp.eq.f32.partialorder %v1814, %v1816
      %v1818 = vsel %vm1817, %v1813, inf
      %1819 = vmin.xlane.f32.xlu0 %v1818
      %v1820 = vpop.xlane.xlu0 %1819
      %v1821 = vcvt.f32.s32 %v1820
      %v1822 = vcvt.f32.s32 %v1816
      %v1823 = vshll.u32 %v1822, 16
      %v1824 = vadd.s32 %v1823, %v1821
      %v1825 = vsel %vm1409, %v1555, 2147483647
      %v1826 = vand.u32 %v1825, 65535
      %v1827 = vshra.s32 %v1825, 16
      %v1828 = vcvt.s32.f32 %v1826
      %v1829 = vcvt.s32.f32 %v1827
      %1830 = vmin.xlane.f32.xlu0 %v1829
      %v1831 = vpop.xlane.xlu0 %1830
      %vm1832 = vcmp.eq.f32.partialorder %v1829, %v1831
      %v1833 = vsel %vm1832, %v1828, inf
      %1834 = vmin.xlane.f32.xlu0 %v1833
      %v1835 = vpop.xlane.xlu0 %1834
      %v1836 = vcvt.f32.s32 %v1835
      %v1837 = vcvt.f32.s32 %v1831
      %v1838 = vshll.u32 %v1837, 16
      %v1839 = vadd.s32 %v1838, %v1836
      %v1840 = vsel %vm1409, %v1556, 2147483647
      %v1841 = vand.u32 %v1840, 65535
      %v1842 = vshra.s32 %v1840, 16
      %v1843 = vcvt.s32.f32 %v1841
      %v1844 = vcvt.s32.f32 %v1842
      %1845 = vmin.xlane.f32.xlu0 %v1844
      %v1846 = vpop.xlane.xlu0 %1845
      %vm1847 = vcmp.eq.f32.partialorder %v1844, %v1846
      %v1848 = vsel %vm1847, %v1843, inf
      %1849 = vmin.xlane.f32.xlu0 %v1848
      %v1850 = vpop.xlane.xlu0 %1849
      %v1851 = vcvt.f32.s32 %v1850
      %v1852 = vcvt.f32.s32 %v1846
      %v1853 = vshll.u32 %v1852, 16
      %v1854 = vadd.s32 %v1853, %v1851
      %v1855 = vsel %vm1409, %v1557, 2147483647
      %v1856 = vand.u32 %v1855, 65535
      %v1857 = vshra.s32 %v1855, 16
      %v1858 = vcvt.s32.f32 %v1856
      %v1859 = vcvt.s32.f32 %v1857
      %1860 = vmin.xlane.f32.xlu0 %v1859
      %v1861 = vpop.xlane.xlu0 %1860
      %vm1862 = vcmp.eq.f32.partialorder %v1859, %v1861
      %v1863 = vsel %vm1862, %v1858, inf
      %1864 = vmin.xlane.f32.xlu0 %v1863
      %v1865 = vpop.xlane.xlu0 %1864
      %v1866 = vcvt.f32.s32 %v1865
      %v1867 = vcvt.f32.s32 %v1861
      %v1868 = vshll.u32 %v1867, 16
      %v1869 = vadd.s32 %v1868, %v1866
      %v1870 = vsel %vm1409, %v1558, 2147483647
      %v1871 = vand.u32 %v1870, 65535
      %v1872 = vshra.s32 %v1870, 16
      %v1873 = vcvt.s32.f32 %v1871
      %v1874 = vcvt.s32.f32 %v1872
      %1875 = vmin.xlane.f32.xlu0 %v1874
      %v1876 = vpop.xlane.xlu0 %1875
      %vm1877 = vcmp.eq.f32.partialorder %v1874, %v1876
      %v1878 = vsel %vm1877, %v1873, inf
      %1879 = vmin.xlane.f32.xlu0 %v1878
      %v1880 = vpop.xlane.xlu0 %1879
      %v1881 = vcvt.f32.s32 %v1880
      %v1882 = vcvt.f32.s32 %v1876
      %v1883 = vshll.u32 %v1882, 16
      %v1884 = vadd.s32 %v1883, %v1881
      %v1885 = vsel %vm1409, %v1559, 2147483647
      %v1886 = vand.u32 %v1885, 65535
      %v1887 = vshra.s32 %v1885, 16
      %v1888 = vcvt.s32.f32 %v1886
      %v1889 = vcvt.s32.f32 %v1887
      %1890 = vmin.xlane.f32.xlu0 %v1889
      %v1891 = vpop.xlane.xlu0 %1890
      %vm1892 = vcmp.eq.f32.partialorder %v1889, %v1891
      %v1893 = vsel %vm1892, %v1888, inf
      %1894 = vmin.xlane.f32.xlu0 %v1893
      %v1895 = vpop.xlane.xlu0 %1894
      %v1896 = vcvt.f32.s32 %v1895
      %v1897 = vcvt.f32.s32 %v1891
      %v1898 = vshll.u32 %v1897, 16
      %v1899 = vadd.s32 %v1898, %v1896
      %v1900 = vsel %vm1409, %v1560, 2147483647
      %v1901 = vand.u32 %v1900, 65535
      %v1902 = vshra.s32 %v1900, 16
      %v1903 = vcvt.s32.f32 %v1901
      %v1904 = vcvt.s32.f32 %v1902
      %1905 = vmin.xlane.f32.xlu0 %v1904
      %v1906 = vpop.xlane.xlu0 %1905
      %vm1907 = vcmp.eq.f32.partialorder %v1904, %v1906
      %v1908 = vsel %vm1907, %v1903, inf
      %1909 = vmin.xlane.f32.xlu0 %v1908
      %v1910 = vpop.xlane.xlu0 %1909
      %v1911 = vcvt.f32.s32 %v1910
      %v1912 = vcvt.f32.s32 %v1906
      %v1913 = vshll.u32 %v1912, 16
      %v1914 = vadd.s32 %v1913, %v1911
      %v1915 = vsel %vm1409, %v1561, 2147483647
      %v1916 = vand.u32 %v1915, 65535
      %v1917 = vshra.s32 %v1915, 16
      %v1918 = vcvt.s32.f32 %v1916
      %v1919 = vcvt.s32.f32 %v1917
      %1920 = vmin.xlane.f32.xlu0 %v1919
      %v1921 = vpop.xlane.xlu0 %1920
      %vm1922 = vcmp.eq.f32.partialorder %v1919, %v1921
      %v1923 = vsel %vm1922, %v1918, inf
      %1924 = vmin.xlane.f32.xlu0 %v1923
      %v1925 = vpop.xlane.xlu0 %1924
      %v1926 = vcvt.f32.s32 %v1925
      %v1927 = vcvt.f32.s32 %v1921
      %v1928 = vshll.u32 %v1927, 16
      %v1929 = vadd.s32 %v1928, %v1926
      %v1930 = vsel %vm1409, %v1562, 2147483647
      %v1931 = vand.u32 %v1930, 65535
      %v1932 = vshra.s32 %v1930, 16
      %v1933 = vcvt.s32.f32 %v1931
      %v1934 = vcvt.s32.f32 %v1932
      %1935 = vmin.xlane.f32.xlu0 %v1934
      %v1936 = vpop.xlane.xlu0 %1935
      %vm1937 = vcmp.eq.f32.partialorder %v1934, %v1936
      %v1938 = vsel %vm1937, %v1933, inf
      %1939 = vmin.xlane.f32.xlu0 %v1938
      %v1940 = vpop.xlane.xlu0 %1939
      %v1941 = vcvt.f32.s32 %v1940
      %v1942 = vcvt.f32.s32 %v1936
      %v1943 = vshll.u32 %v1942, 16
      %v1944 = vadd.s32 %v1943, %v1941
      %v1945 = vsel %vm1409, %v1563, 2147483647
      %v1946 = vand.u32 %v1945, 65535
      %v1947 = vshra.s32 %v1945, 16
      %v1948 = vcvt.s32.f32 %v1946
      %v1949 = vcvt.s32.f32 %v1947
      %1950 = vmin.xlane.f32.xlu0 %v1949
      %v1951 = vpop.xlane.xlu0 %1950
      %vm1952 = vcmp.eq.f32.partialorder %v1949, %v1951
      %v1953 = vsel %vm1952, %v1948, inf
      %1954 = vmin.xlane.f32.xlu0 %v1953
      %v1955 = vpop.xlane.xlu0 %1954
      %v1956 = vcvt.f32.s32 %v1955
      %v1957 = vcvt.f32.s32 %v1951
      %v1958 = vshll.u32 %v1957, 16
      %v1959 = vadd.s32 %v1958, %v1956
      %v1960 = vsel %vm1409, %v1564, 2147483647
      %v1961 = vand.u32 %v1960, 65535
      %v1962 = vshra.s32 %v1960, 16
      %v1963 = vcvt.s32.f32 %v1961
      %v1964 = vcvt.s32.f32 %v1962
      %1965 = vmin.xlane.f32.xlu0 %v1964
      %v1966 = vpop.xlane.xlu0 %1965
      %vm1967 = vcmp.eq.f32.partialorder %v1964, %v1966
      %v1968 = vsel %vm1967, %v1963, inf
      %1969 = vmin.xlane.f32.xlu0 %v1968
      %v1970 = vpop.xlane.xlu0 %1969
      %v1971 = vcvt.f32.s32 %v1970
      %v1972 = vcvt.f32.s32 %v1966
      %v1973 = vshll.u32 %v1972, 16
      %v1974 = vadd.s32 %v1973, %v1971
      %v1975 = vsel %vm1409, %v1565, 2147483647
      %v1976 = vand.u32 %v1975, 65535
      %v1977 = vshra.s32 %v1975, 16
      %v1978 = vcvt.s32.f32 %v1976
      %v1979 = vcvt.s32.f32 %v1977
      %1980 = vmin.xlane.f32.xlu0 %v1979
      %v1981 = vpop.xlane.xlu0 %1980
      %vm1982 = vcmp.eq.f32.partialorder %v1979, %v1981
      %v1983 = vsel %vm1982, %v1978, inf
      %1984 = vmin.xlane.f32.xlu0 %v1983
      %v1985 = vpop.xlane.xlu0 %1984
      %v1986 = vcvt.f32.s32 %v1985
      %v1987 = vcvt.f32.s32 %v1981
      %v1988 = vshll.u32 %v1987, 16
      %v1989 = vadd.s32 %v1988, %v1986
      %v1990 = vsel %vm1409, %v1566, 2147483647
      %v1991 = vand.u32 %v1990, 65535
      %v1992 = vshra.s32 %v1990, 16
      %v1993 = vcvt.s32.f32 %v1991
      %v1994 = vcvt.s32.f32 %v1992
      %1995 = vmin.xlane.f32.xlu0 %v1994
      %v1996 = vpop.xlane.xlu0 %1995
      %vm1997 = vcmp.eq.f32.partialorder %v1994, %v1996
      %v1998 = vsel %vm1997, %v1993, inf
      %1999 = vmin.xlane.f32.xlu0 %v1998
      %v2000 = vpop.xlane.xlu0 %1999
      %v2001 = vcvt.f32.s32 %v2000
      %v2002 = vcvt.f32.s32 %v1996
      %v2003 = vshll.u32 %v2002, 16
      %v2004 = vadd.s32 %v2003, %v2001
      %v2005 = vsel %vm1409, %v1567, 2147483647
      %v2006 = vand.u32 %v2005, 65535
      %v2007 = vshra.s32 %v2005, 16
      %v2008 = vcvt.s32.f32 %v2006
      %v2009 = vcvt.s32.f32 %v2007
      %2010 = vmin.xlane.f32.xlu0 %v2009
      %v2011 = vpop.xlane.xlu0 %2010
      %vm2012 = vcmp.eq.f32.partialorder %v2009, %v2011
      %v2013 = vsel %vm2012, %v2008, inf
      %2014 = vmin.xlane.f32.xlu0 %v2013
      %v2015 = vpop.xlane.xlu0 %2014
      %v2016 = vcvt.f32.s32 %v2015
      %v2017 = vcvt.f32.s32 %v2011
      %v2018 = vshll.u32 %v2017, 16
      %v2019 = vadd.s32 %v2018, %v2016
      %v2020 = vsel %vm1409, %v1568, 2147483647
      %v2021 = vand.u32 %v2020, 65535
      %v2022 = vshra.s32 %v2020, 16
      %v2023 = vcvt.s32.f32 %v2021
      %v2024 = vcvt.s32.f32 %v2022
      %2025 = vmin.xlane.f32.xlu0 %v2024
      %v2026 = vpop.xlane.xlu0 %2025
      %vm2027 = vcmp.eq.f32.partialorder %v2024, %v2026
      %v2028 = vsel %vm2027, %v2023, inf
      %2029 = vmin.xlane.f32.xlu0 %v2028
      %v2030 = vpop.xlane.xlu0 %2029
      %v2031 = vcvt.f32.s32 %v2030
      %v2032 = vcvt.f32.s32 %v2026
      %v2033 = vshll.u32 %v2032, 16
      %v2034 = vadd.s32 %v2033, %v2031
      %v2035 = vsel %vm1409, %v1569, 2147483647
      %v2036 = vand.u32 %v2035, 65535
      %v2037 = vshra.s32 %v2035, 16
      %v2038 = vcvt.s32.f32 %v2036
      %v2039 = vcvt.s32.f32 %v2037
      %2040 = vmin.xlane.f32.xlu0 %v2039
      %v2041 = vpop.xlane.xlu0 %2040
      %vm2042 = vcmp.eq.f32.partialorder %v2039, %v2041
      %v2043 = vsel %vm2042, %v2038, inf
      %2044 = vmin.xlane.f32.xlu0 %v2043
      %v2045 = vpop.xlane.xlu0 %2044
      %v2046 = vcvt.f32.s32 %v2045
      %v2047 = vcvt.f32.s32 %v2041
      %v2048 = vshll.u32 %v2047, 16
      %v2049 = vadd.s32 %v2048, %v2046
      %vm2050 = vcmp.eq.s32.totalorder %v1408, %v1584
      %vm2051 = vcmp.eq.s32.totalorder %v1408, %v1599
      %vm2052 = vcmp.eq.s32.totalorder %v1408, %v1614
      %vm2053 = vcmp.eq.s32.totalorder %v1408, %v1629
      %vm2054 = vcmp.eq.s32.totalorder %v1408, %v1644
      %vm2055 = vcmp.eq.s32.totalorder %v1408, %v1659
      %vm2056 = vcmp.eq.s32.totalorder %v1408, %v1674
      %vm2057 = vcmp.eq.s32.totalorder %v1408, %v1689
      %vm2058 = vcmp.eq.s32.totalorder %v1408, %v1704
      %vm2059 = vcmp.eq.s32.totalorder %v1408, %v1719
      %vm2060 = vcmp.eq.s32.totalorder %v1408, %v1734
      %vm2061 = vcmp.eq.s32.totalorder %v1408, %v1749
      %vm2062 = vcmp.eq.s32.totalorder %v1408, %v1764
      %vm2063 = vcmp.eq.s32.totalorder %v1408, %v1779
      %vm2064 = vcmp.eq.s32.totalorder %v1408, %v1794
      %vm2065 = vcmp.eq.s32.totalorder %v1408, %v1809
      %vm2066 = vcmp.eq.s32.totalorder %v1408, %v1824
      %vm2067 = vcmp.eq.s32.totalorder %v1408, %v1839
      %vm2068 = vcmp.eq.s32.totalorder %v1408, %v1854
      %vm2069 = vcmp.eq.s32.totalorder %v1408, %v1869
      %vm2070 = vcmp.eq.s32.totalorder %v1408, %v1884
      %vm2071 = vcmp.eq.s32.totalorder %v1408, %v1899
      %vm2072 = vcmp.eq.s32.totalorder %v1408, %v1914
      %vm2073 = vcmp.eq.s32.totalorder %v1408, %v1929
      %vm2074 = vcmp.eq.s32.totalorder %v1408, %v1944
      %vm2075 = vcmp.eq.s32.totalorder %v1408, %v1959
      %vm2076 = vcmp.eq.s32.totalorder %v1408, %v1974
      %vm2077 = vcmp.eq.s32.totalorder %v1408, %v1989
      %vm2078 = vcmp.eq.s32.totalorder %v1408, %v2004
      %vm2079 = vcmp.eq.s32.totalorder %v1408, %v2019
      %vm2080 = vcmp.eq.s32.totalorder %v1408, %v2034
      %vm2081 = vcmp.eq.s32.totalorder %v1408, %v2049
      %v2082 = vrsqrt.pop %v1412
      %v2083 = vmul.f32 %v2082, %v1412
      %v2084 = vmul.f32 %v2083, %v2082
      %v2085 = vmul.f32 0.5, %v2084
      %v2086 = vsub.f32 1.5, %v2085
      %v2087 = vmul.f32 %v2082, %v2086
      %v2088 = vmul.f32 %v1412, %v2087
      %vm2089 = vcmp.eq.f32.partialorder %v1412, inf
      %v2090 = vsel %vm2089, %v1412, %v2088
      %vm2091 = vcmp.eq.f32.partialorder %v1412, 0.0
      %v2092 = vand.u32 %v1412, 2147483648
      %v2093 = vsel %vm2091, %v2092, %v2090
      %v2094 = vrsqrt.pop %v1415
      %v2095 = vmul.f32 %v2094, %v1415
      %v2096 = vmul.f32 %v2095, %v2094
      %v2097 = vmul.f32 0.5, %v2096
      %v2098 = vsub.f32 1.5, %v2097
      %v2099 = vmul.f32 %v2094, %v2098
      %v2100 = vmul.f32 %v1415, %v2099
      %vm2101 = vcmp.eq.f32.partialorder %v1415, inf
      %v2102 = vsel %vm2101, %v1415, %v2100
      %vm2103 = vcmp.eq.f32.partialorder %v1415, 0.0
      %v2104 = vand.u32 %v1415, 2147483648
      %v2105 = vsel %vm2103, %v2104, %v2102
      %v2106 = vrsqrt.pop %v1418
      %v2107 = vmul.f32 %v2106, %v1418
      %v2108 = vmul.f32 %v2107, %v2106
      %v2109 = vmul.f32 0.5, %v2108
      %v2110 = vsub.f32 1.5, %v2109
      %v2111 = vmul.f32 %v2106, %v2110
      %v2112 = vmul.f32 %v1418, %v2111
      %vm2113 = vcmp.eq.f32.partialorder %v1418, inf
      %v2114 = vsel %vm2113, %v1418, %v2112
      %vm2115 = vcmp.eq.f32.partialorder %v1418, 0.0
      %v2116 = vand.u32 %v1418, 2147483648
      %v2117 = vsel %vm2115, %v2116, %v2114
      %v2118 = vrsqrt.pop %v1421
      %v2119 = vmul.f32 %v2118, %v1421
      %v2120 = vmul.f32 %v2119, %v2118
      %v2121 = vmul.f32 0.5, %v2120
      %v2122 = vsub.f32 1.5, %v2121
      %v2123 = vmul.f32 %v2118, %v2122
      %v2124 = vmul.f32 %v1421, %v2123
      %vm2125 = vcmp.eq.f32.partialorder %v1421, inf
      %v2126 = vsel %vm2125, %v1421, %v2124
      %vm2127 = vcmp.eq.f32.partialorder %v1421, 0.0
      %v2128 = vand.u32 %v1421, 2147483648
      %v2129 = vsel %vm2127, %v2128, %v2126
      %v2130 = vrsqrt.pop %v1424
      %v2131 = vmul.f32 %v2130, %v1424
      %v2132 = vmul.f32 %v2131, %v2130
      %v2133 = vmul.f32 0.5, %v2132
      %v2134 = vsub.f32 1.5, %v2133
      %v2135 = vmul.f32 %v2130, %v2134
      %v2136 = vmul.f32 %v1424, %v2135
      %vm2137 = vcmp.eq.f32.partialorder %v1424, inf
      %v2138 = vsel %vm2137, %v1424, %v2136
      %vm2139 = vcmp.eq.f32.partialorder %v1424, 0.0
      %v2140 = vand.u32 %v1424, 2147483648
      %v2141 = vsel %vm2139, %v2140, %v2138
      %v2142 = vrsqrt.pop %v1427
      %v2143 = vmul.f32 %v2142, %v1427
      %v2144 = vmul.f32 %v2143, %v2142
      %v2145 = vmul.f32 0.5, %v2144
      %v2146 = vsub.f32 1.5, %v2145
      %v2147 = vmul.f32 %v2142, %v2146
      %v2148 = vmul.f32 %v1427, %v2147
      %vm2149 = vcmp.eq.f32.partialorder %v1427, inf
      %v2150 = vsel %vm2149, %v1427, %v2148
      %vm2151 = vcmp.eq.f32.partialorder %v1427, 0.0
      %v2152 = vand.u32 %v1427, 2147483648
      %v2153 = vsel %vm2151, %v2152, %v2150
      %v2154 = vrsqrt.pop %v1430
      %v2155 = vmul.f32 %v2154, %v1430
      %v2156 = vmul.f32 %v2155, %v2154
      %v2157 = vmul.f32 0.5, %v2156
      %v2158 = vsub.f32 1.5, %v2157
      %v2159 = vmul.f32 %v2154, %v2158
      %v2160 = vmul.f32 %v1430, %v2159
      %vm2161 = vcmp.eq.f32.partialorder %v1430, inf
      %v2162 = vsel %vm2161, %v1430, %v2160
      %vm2163 = vcmp.eq.f32.partialorder %v1430, 0.0
      %v2164 = vand.u32 %v1430, 2147483648
      %v2165 = vsel %vm2163, %v2164, %v2162
      %v2166 = vrsqrt.pop %v1433
      %v2167 = vmul.f32 %v2166, %v1433
      %v2168 = vmul.f32 %v2167, %v2166
      %v2169 = vmul.f32 0.5, %v2168
      %v2170 = vsub.f32 1.5, %v2169
      %v2171 = vmul.f32 %v2166, %v2170
      %v2172 = vmul.f32 %v1433, %v2171
      %vm2173 = vcmp.eq.f32.partialorder %v1433, inf
      %v2174 = vsel %vm2173, %v1433, %v2172
      %vm2175 = vcmp.eq.f32.partialorder %v1433, 0.0
      %v2176 = vand.u32 %v1433, 2147483648
      %v2177 = vsel %vm2175, %v2176, %v2174
      %v2178 = vrsqrt.pop %v1436
      %v2179 = vmul.f32 %v2178, %v1436
      %v2180 = vmul.f32 %v2179, %v2178
      %v2181 = vmul.f32 0.5, %v2180
      %v2182 = vsub.f32 1.5, %v2181
      %v2183 = vmul.f32 %v2178, %v2182
      %v2184 = vmul.f32 %v1436, %v2183
      %vm2185 = vcmp.eq.f32.partialorder %v1436, inf
      %v2186 = vsel %vm2185, %v1436, %v2184
      %vm2187 = vcmp.eq.f32.partialorder %v1436, 0.0
      %v2188 = vand.u32 %v1436, 2147483648
      %v2189 = vsel %vm2187, %v2188, %v2186
      %v2190 = vrsqrt.pop %v1439
      %v2191 = vmul.f32 %v2190, %v1439
      %v2192 = vmul.f32 %v2191, %v2190
      %v2193 = vmul.f32 0.5, %v2192
      %v2194 = vsub.f32 1.5, %v2193
      %v2195 = vmul.f32 %v2190, %v2194
      %v2196 = vmul.f32 %v1439, %v2195
      %vm2197 = vcmp.eq.f32.partialorder %v1439, inf
      %v2198 = vsel %vm2197, %v1439, %v2196
      %vm2199 = vcmp.eq.f32.partialorder %v1439, 0.0
      %v2200 = vand.u32 %v1439, 2147483648
      %v2201 = vsel %vm2199, %v2200, %v2198
      %v2202 = vrsqrt.pop %v1442
      %v2203 = vmul.f32 %v2202, %v1442
      %v2204 = vmul.f32 %v2203, %v2202
      %v2205 = vmul.f32 0.5, %v2204
      %v2206 = vsub.f32 1.5, %v2205
      %v2207 = vmul.f32 %v2202, %v2206
      %v2208 = vmul.f32 %v1442, %v2207
      %vm2209 = vcmp.eq.f32.partialorder %v1442, inf
      %v2210 = vsel %vm2209, %v1442, %v2208
      %vm2211 = vcmp.eq.f32.partialorder %v1442, 0.0
      %v2212 = vand.u32 %v1442, 2147483648
      %v2213 = vsel %vm2211, %v2212, %v2210
      %v2214 = vrsqrt.pop %v1445
      %v2215 = vmul.f32 %v2214, %v1445
      %v2216 = vmul.f32 %v2215, %v2214
      %v2217 = vmul.f32 0.5, %v2216
      %v2218 = vsub.f32 1.5, %v2217
      %v2219 = vmul.f32 %v2214, %v2218
      %v2220 = vmul.f32 %v1445, %v2219
      %vm2221 = vcmp.eq.f32.partialorder %v1445, inf
      %v2222 = vsel %vm2221, %v1445, %v2220
      %vm2223 = vcmp.eq.f32.partialorder %v1445, 0.0
      %v2224 = vand.u32 %v1445, 2147483648
      %v2225 = vsel %vm2223, %v2224, %v2222
      %v2226 = vrsqrt.pop %v1448
      %v2227 = vmul.f32 %v2226, %v1448
      %v2228 = vmul.f32 %v2227, %v2226
      %v2229 = vmul.f32 0.5, %v2228
      %v2230 = vsub.f32 1.5, %v2229
      %v2231 = vmul.f32 %v2226, %v2230
      %v2232 = vmul.f32 %v1448, %v2231
      %vm2233 = vcmp.eq.f32.partialorder %v1448, inf
      %v2234 = vsel %vm2233, %v1448, %v2232
      %vm2235 = vcmp.eq.f32.partialorder %v1448, 0.0
      %v2236 = vand.u32 %v1448, 2147483648
      %v2237 = vsel %vm2235, %v2236, %v2234
      %v2238 = vrsqrt.pop %v1451
      %v2239 = vmul.f32 %v2238, %v1451
      %v2240 = vmul.f32 %v2239, %v2238
      %v2241 = vmul.f32 0.5, %v2240
      %v2242 = vsub.f32 1.5, %v2241
      %v2243 = vmul.f32 %v2238, %v2242
      %v2244 = vmul.f32 %v1451, %v2243
      %vm2245 = vcmp.eq.f32.partialorder %v1451, inf
      %v2246 = vsel %vm2245, %v1451, %v2244
      %vm2247 = vcmp.eq.f32.partialorder %v1451, 0.0
      %v2248 = vand.u32 %v1451, 2147483648
      %v2249 = vsel %vm2247, %v2248, %v2246
      %v2250 = vrsqrt.pop %v1454
      %v2251 = vmul.f32 %v2250, %v1454
      %v2252 = vmul.f32 %v2251, %v2250
      %v2253 = vmul.f32 0.5, %v2252
      %v2254 = vsub.f32 1.5, %v2253
      %v2255 = vmul.f32 %v2250, %v2254
      %v2256 = vmul.f32 %v1454, %v2255
      %vm2257 = vcmp.eq.f32.partialorder %v1454, inf
      %v2258 = vsel %vm2257, %v1454, %v2256
      %vm2259 = vcmp.eq.f32.partialorder %v1454, 0.0
      %v2260 = vand.u32 %v1454, 2147483648
      %v2261 = vsel %vm2259, %v2260, %v2258
      %v2262 = vrsqrt.pop %v1457
      %v2263 = vmul.f32 %v2262, %v1457
      %v2264 = vmul.f32 %v2263, %v2262
      %v2265 = vmul.f32 0.5, %v2264
      %v2266 = vsub.f32 1.5, %v2265
      %v2267 = vmul.f32 %v2262, %v2266
      %v2268 = vmul.f32 %v1457, %v2267
      %vm2269 = vcmp.eq.f32.partialorder %v1457, inf
      %v2270 = vsel %vm2269, %v1457, %v2268
      %vm2271 = vcmp.eq.f32.partialorder %v1457, 0.0
      %v2272 = vand.u32 %v1457, 2147483648
      %v2273 = vsel %vm2271, %v2272, %v2270
      %v2274 = vrsqrt.pop %v1460
      %v2275 = vmul.f32 %v2274, %v1460
      %v2276 = vmul.f32 %v2275, %v2274
      %v2277 = vmul.f32 0.5, %v2276
      %v2278 = vsub.f32 1.5, %v2277
      %v2279 = vmul.f32 %v2274, %v2278
      %v2280 = vmul.f32 %v1460, %v2279
      %vm2281 = vcmp.eq.f32.partialorder %v1460, inf
      %v2282 = vsel %vm2281, %v1460, %v2280
      %vm2283 = vcmp.eq.f32.partialorder %v1460, 0.0
      %v2284 = vand.u32 %v1460, 2147483648
      %v2285 = vsel %vm2283, %v2284, %v2282
      %v2286 = vrsqrt.pop %v1463
      %v2287 = vmul.f32 %v2286, %v1463
      %v2288 = vmul.f32 %v2287, %v2286
      %v2289 = vmul.f32 0.5, %v2288
      %v2290 = vsub.f32 1.5, %v2289
      %v2291 = vmul.f32 %v2286, %v2290
      %v2292 = vmul.f32 %v1463, %v2291
      %vm2293 = vcmp.eq.f32.partialorder %v1463, inf
      %v2294 = vsel %vm2293, %v1463, %v2292
      %vm2295 = vcmp.eq.f32.partialorder %v1463, 0.0
      %v2296 = vand.u32 %v1463, 2147483648
      %v2297 = vsel %vm2295, %v2296, %v2294
      %v2298 = vrsqrt.pop %v1466
      %v2299 = vmul.f32 %v2298, %v1466
      %v2300 = vmul.f32 %v2299, %v2298
      %v2301 = vmul.f32 0.5, %v2300
      %v2302 = vsub.f32 1.5, %v2301
      %v2303 = vmul.f32 %v2298, %v2302
      %v2304 = vmul.f32 %v1466, %v2303
      %vm2305 = vcmp.eq.f32.partialorder %v1466, inf
      %v2306 = vsel %vm2305, %v1466, %v2304
      %vm2307 = vcmp.eq.f32.partialorder %v1466, 0.0
      %v2308 = vand.u32 %v1466, 2147483648
      %v2309 = vsel %vm2307, %v2308, %v2306
      %v2310 = vrsqrt.pop %v1469
      %v2311 = vmul.f32 %v2310, %v1469
      %v2312 = vmul.f32 %v2311, %v2310
      %v2313 = vmul.f32 0.5, %v2312
      %v2314 = vsub.f32 1.5, %v2313
      %v2315 = vmul.f32 %v2310, %v2314
      %v2316 = vmul.f32 %v1469, %v2315
      %vm2317 = vcmp.eq.f32.partialorder %v1469, inf
      %v2318 = vsel %vm2317, %v1469, %v2316
      %vm2319 = vcmp.eq.f32.partialorder %v1469, 0.0
      %v2320 = vand.u32 %v1469, 2147483648
      %v2321 = vsel %vm2319, %v2320, %v2318
      %v2322 = vrsqrt.pop %v1472
      %v2323 = vmul.f32 %v2322, %v1472
      %v2324 = vmul.f32 %v2323, %v2322
      %v2325 = vmul.f32 0.5, %v2324
      %v2326 = vsub.f32 1.5, %v2325
      %v2327 = vmul.f32 %v2322, %v2326
      %v2328 = vmul.f32 %v1472, %v2327
      %vm2329 = vcmp.eq.f32.partialorder %v1472, inf
      %v2330 = vsel %vm2329, %v1472, %v2328
      %vm2331 = vcmp.eq.f32.partialorder %v1472, 0.0
      %v2332 = vand.u32 %v1472, 2147483648
      %v2333 = vsel %vm2331, %v2332, %v2330
      %v2334 = vrsqrt.pop %v1475
      %v2335 = vmul.f32 %v2334, %v1475
      %v2336 = vmul.f32 %v2335, %v2334
      %v2337 = vmul.f32 0.5, %v2336
      %v2338 = vsub.f32 1.5, %v2337
      %v2339 = vmul.f32 %v2334, %v2338
      %v2340 = vmul.f32 %v1475, %v2339
      %vm2341 = vcmp.eq.f32.partialorder %v1475, inf
      %v2342 = vsel %vm2341, %v1475, %v2340
      %vm2343 = vcmp.eq.f32.partialorder %v1475, 0.0
      %v2344 = vand.u32 %v1475, 2147483648
      %v2345 = vsel %vm2343, %v2344, %v2342
      %v2346 = vrsqrt.pop %v1478
      %v2347 = vmul.f32 %v2346, %v1478
      %v2348 = vmul.f32 %v2347, %v2346
      %v2349 = vmul.f32 0.5, %v2348
      %v2350 = vsub.f32 1.5, %v2349
      %v2351 = vmul.f32 %v2346, %v2350
      %v2352 = vmul.f32 %v1478, %v2351
      %vm2353 = vcmp.eq.f32.partialorder %v1478, inf
      %v2354 = vsel %vm2353, %v1478, %v2352
      %vm2355 = vcmp.eq.f32.partialorder %v1478, 0.0
      %v2356 = vand.u32 %v1478, 2147483648
      %v2357 = vsel %vm2355, %v2356, %v2354
      %v2358 = vrsqrt.pop %v1481
      %v2359 = vmul.f32 %v2358, %v1481
      %v2360 = vmul.f32 %v2359, %v2358
      %v2361 = vmul.f32 0.5, %v2360
      %v2362 = vsub.f32 1.5, %v2361
      %v2363 = vmul.f32 %v2358, %v2362
      %v2364 = vmul.f32 %v1481, %v2363
      %vm2365 = vcmp.eq.f32.partialorder %v1481, inf
      %v2366 = vsel %vm2365, %v1481, %v2364
      %vm2367 = vcmp.eq.f32.partialorder %v1481, 0.0
      %v2368 = vand.u32 %v1481, 2147483648
      %v2369 = vsel %vm2367, %v2368, %v2366
      %v2370 = vrsqrt.pop %v1484
      %v2371 = vmul.f32 %v2370, %v1484
      %v2372 = vmul.f32 %v2371, %v2370
      %v2373 = vmul.f32 0.5, %v2372
      %v2374 = vsub.f32 1.5, %v2373
      %v2375 = vmul.f32 %v2370, %v2374
      %v2376 = vmul.f32 %v1484, %v2375
      %vm2377 = vcmp.eq.f32.partialorder %v1484, inf
      %v2378 = vsel %vm2377, %v1484, %v2376
      %vm2379 = vcmp.eq.f32.partialorder %v1484, 0.0
      %v2380 = vand.u32 %v1484, 2147483648
      %v2381 = vsel %vm2379, %v2380, %v2378
      %v2382 = vrsqrt.pop %v1487
      %v2383 = vmul.f32 %v2382, %v1487
      %v2384 = vmul.f32 %v2383, %v2382
      %v2385 = vmul.f32 0.5, %v2384
      %v2386 = vsub.f32 1.5, %v2385
      %v2387 = vmul.f32 %v2382, %v2386
      %v2388 = vmul.f32 %v1487, %v2387
      %vm2389 = vcmp.eq.f32.partialorder %v1487, inf
      %v2390 = vsel %vm2389, %v1487, %v2388
      %vm2391 = vcmp.eq.f32.partialorder %v1487, 0.0
      %v2392 = vand.u32 %v1487, 2147483648
      %v2393 = vsel %vm2391, %v2392, %v2390
      %v2394 = vrsqrt.pop %v1490
      %v2395 = vmul.f32 %v2394, %v1490
      %v2396 = vmul.f32 %v2395, %v2394
      %v2397 = vmul.f32 0.5, %v2396
      %v2398 = vsub.f32 1.5, %v2397
      %v2399 = vmul.f32 %v2394, %v2398
      %v2400 = vmul.f32 %v1490, %v2399
      %vm2401 = vcmp.eq.f32.partialorder %v1490, inf
      %v2402 = vsel %vm2401, %v1490, %v2400
      %vm2403 = vcmp.eq.f32.partialorder %v1490, 0.0
      %v2404 = vand.u32 %v1490, 2147483648
      %v2405 = vsel %vm2403, %v2404, %v2402
      %v2406 = vrsqrt.pop %v1493
      %v2407 = vmul.f32 %v2406, %v1493
      %v2408 = vmul.f32 %v2407, %v2406
      %v2409 = vmul.f32 0.5, %v2408
      %v2410 = vsub.f32 1.5, %v2409
      %v2411 = vmul.f32 %v2406, %v2410
      %v2412 = vmul.f32 %v1493, %v2411
      %vm2413 = vcmp.eq.f32.partialorder %v1493, inf
      %v2414 = vsel %vm2413, %v1493, %v2412
      %vm2415 = vcmp.eq.f32.partialorder %v1493, 0.0
      %v2416 = vand.u32 %v1493, 2147483648
      %v2417 = vsel %vm2415, %v2416, %v2414
      %v2418 = vrsqrt.pop %v1496
      %v2419 = vmul.f32 %v2418, %v1496
      %v2420 = vmul.f32 %v2419, %v2418
      %v2421 = vmul.f32 0.5, %v2420
      %v2422 = vsub.f32 1.5, %v2421
      %v2423 = vmul.f32 %v2418, %v2422
      %v2424 = vmul.f32 %v1496, %v2423
      %vm2425 = vcmp.eq.f32.partialorder %v1496, inf
      %v2426 = vsel %vm2425, %v1496, %v2424
      %vm2427 = vcmp.eq.f32.partialorder %v1496, 0.0
      %v2428 = vand.u32 %v1496, 2147483648
      %v2429 = vsel %vm2427, %v2428, %v2426
      %v2430 = vrsqrt.pop %v1499
      %v2431 = vmul.f32 %v2430, %v1499
      %v2432 = vmul.f32 %v2431, %v2430
      %v2433 = vmul.f32 0.5, %v2432
      %v2434 = vsub.f32 1.5, %v2433
      %v2435 = vmul.f32 %v2430, %v2434
      %v2436 = vmul.f32 %v1499, %v2435
      %vm2437 = vcmp.eq.f32.partialorder %v1499, inf
      %v2438 = vsel %vm2437, %v1499, %v2436
      %vm2439 = vcmp.eq.f32.partialorder %v1499, 0.0
      %v2440 = vand.u32 %v1499, 2147483648
      %v2441 = vsel %vm2439, %v2440, %v2438
      %v2442 = vrsqrt.pop %v1502
      %v2443 = vmul.f32 %v2442, %v1502
      %v2444 = vmul.f32 %v2443, %v2442
      %v2445 = vmul.f32 0.5, %v2444
      %v2446 = vsub.f32 1.5, %v2445
      %v2447 = vmul.f32 %v2442, %v2446
      %v2448 = vmul.f32 %v1502, %v2447
      %vm2449 = vcmp.eq.f32.partialorder %v1502, inf
      %v2450 = vsel %vm2449, %v1502, %v2448
      %vm2451 = vcmp.eq.f32.partialorder %v1502, 0.0
      %v2452 = vand.u32 %v1502, 2147483648
      %v2453 = vsel %vm2451, %v2452, %v2450
      %v2454 = vrsqrt.pop %v1505
      %v2455 = vmul.f32 %v2454, %v1505
      %v2456 = vmul.f32 %v2455, %v2454
      %v2457 = vmul.f32 0.5, %v2456
      %v2458 = vsub.f32 1.5, %v2457
      %v2459 = vmul.f32 %v2454, %v2458
      %v2460 = vmul.f32 %v1505, %v2459
      %vm2461 = vcmp.eq.f32.partialorder %v1505, inf
      %v2462 = vsel %vm2461, %v1505, %v2460
      %vm2463 = vcmp.eq.f32.partialorder %v1505, 0.0
      %v2464 = vand.u32 %v1505, 2147483648
      %v2465 = vsel %vm2463, %v2464, %v2462
      %v2466 = vadd.f32 %v2093, 1e-08
      %v2467 = vadd.f32 %v2105, 1e-08
      %v2468 = vadd.f32 %v2117, 1e-08
      %v2469 = vadd.f32 %v2129, 1e-08
      %v2470 = vadd.f32 %v2141, 1e-08
      %v2471 = vadd.f32 %v2153, 1e-08
      %v2472 = vadd.f32 %v2165, 1e-08
      %v2473 = vadd.f32 %v2177, 1e-08
      %v2474 = vadd.f32 %v2189, 1e-08
      %v2475 = vadd.f32 %v2201, 1e-08
      %v2476 = vadd.f32 %v2213, 1e-08
      %v2477 = vadd.f32 %v2225, 1e-08
      %v2478 = vadd.f32 %v2237, 1e-08
      %v2479 = vadd.f32 %v2249, 1e-08
      %v2480 = vadd.f32 %v2261, 1e-08
      %v2481 = vadd.f32 %v2273, 1e-08
      %v2482 = vadd.f32 %v2285, 1e-08
      %v2483 = vadd.f32 %v2297, 1e-08
      %v2484 = vadd.f32 %v2309, 1e-08
      %v2485 = vadd.f32 %v2321, 1e-08
      %v2486 = vadd.f32 %v2333, 1e-08
      %v2487 = vadd.f32 %v2345, 1e-08
      %v2488 = vadd.f32 %v2357, 1e-08
      %v2489 = vadd.f32 %v2369, 1e-08
      %v2490 = vadd.f32 %v2381, 1e-08
      %v2491 = vadd.f32 %v2393, 1e-08
      %v2492 = vadd.f32 %v2405, 1e-08
      %v2493 = vadd.f32 %v2417, 1e-08
      %v2494 = vadd.f32 %v2429, 1e-08
      %v2495 = vadd.f32 %v2441, 1e-08
      %v2496 = vadd.f32 %v2453, 1e-08
      %v2497 = vadd.f32 %v2465, 1e-08
      %v2498 = vrcp.pop %v2466
      %v2499 = vmul.f32 %v2466, %v2498
      %v2500 = vsub.f32 1.0, %v2499
      %v2501 = vmul.f32 %v2498, %v2500
      %v2502 = vadd.f32 %v2498, %v2501
      %vm2503 = vweird.f32 %v2466
      %vm2504 = vweird.f32 %v2498
      %vm2505 = vmor %vm2503, %vm2504
      %v2506 = vsel %vm2505, %v2498, %v2502
      %v2507 = vand.u32 2147483647, %v2466
      %vm2508 = vcmp.eq.f32.partialorder %v2507, 8.507059e+37
      %v2509 = vand.u32 %v2466, 2147483648
      %v2510 = vor.u32 1.1754944e-38, %v2509
      %v2511 = vsel %vm2508, %v2510, %v2506
      %v2512 = vmul.f32 1.0, %v2511
      %v2513 = vrcp.pop %v2467
      %v2514 = vmul.f32 %v2467, %v2513
      %v2515 = vsub.f32 1.0, %v2514
      %v2516 = vmul.f32 %v2513, %v2515
      %v2517 = vadd.f32 %v2513, %v2516
      %vm2518 = vweird.f32 %v2467
      %vm2519 = vweird.f32 %v2513
      %vm2520 = vmor %vm2518, %vm2519
      %v2521 = vsel %vm2520, %v2513, %v2517
      %v2522 = vand.u32 2147483647, %v2467
      %vm2523 = vcmp.eq.f32.partialorder %v2522, 8.507059e+37
      %v2524 = vand.u32 %v2467, 2147483648
      %v2525 = vor.u32 1.1754944e-38, %v2524
      %v2526 = vsel %vm2523, %v2525, %v2521
      %v2527 = vmul.f32 1.0, %v2526
      %v2528 = vrcp.pop %v2468
      %v2529 = vmul.f32 %v2468, %v2528
      %v2530 = vsub.f32 1.0, %v2529
      %v2531 = vmul.f32 %v2528, %v2530
      %v2532 = vadd.f32 %v2528, %v2531
      %vm2533 = vweird.f32 %v2468
      %vm2534 = vweird.f32 %v2528
      %vm2535 = vmor %vm2533, %vm2534
      %v2536 = vsel %vm2535, %v2528, %v2532
      %v2537 = vand.u32 2147483647, %v2468
      %vm2538 = vcmp.eq.f32.partialorder %v2537, 8.507059e+37
      %v2539 = vand.u32 %v2468, 2147483648
      %v2540 = vor.u32 1.1754944e-38, %v2539
      %v2541 = vsel %vm2538, %v2540, %v2536
      %v2542 = vmul.f32 1.0, %v2541
      %v2543 = vrcp.pop %v2469
      %v2544 = vmul.f32 %v2469, %v2543
      %v2545 = vsub.f32 1.0, %v2544
      %v2546 = vmul.f32 %v2543, %v2545
      %v2547 = vadd.f32 %v2543, %v2546
      %vm2548 = vweird.f32 %v2469
      %vm2549 = vweird.f32 %v2543
      %vm2550 = vmor %vm2548, %vm2549
      %v2551 = vsel %vm2550, %v2543, %v2547
      %v2552 = vand.u32 2147483647, %v2469
      %vm2553 = vcmp.eq.f32.partialorder %v2552, 8.507059e+37
      %v2554 = vand.u32 %v2469, 2147483648
      %v2555 = vor.u32 1.1754944e-38, %v2554
      %v2556 = vsel %vm2553, %v2555, %v2551
      %v2557 = vmul.f32 1.0, %v2556
      %v2558 = vrcp.pop %v2470
      %v2559 = vmul.f32 %v2470, %v2558
      %v2560 = vsub.f32 1.0, %v2559
      %v2561 = vmul.f32 %v2558, %v2560
      %v2562 = vadd.f32 %v2558, %v2561
      %vm2563 = vweird.f32 %v2470
      %vm2564 = vweird.f32 %v2558
      %vm2565 = vmor %vm2563, %vm2564
      %v2566 = vsel %vm2565, %v2558, %v2562
      %v2567 = vand.u32 2147483647, %v2470
      %vm2568 = vcmp.eq.f32.partialorder %v2567, 8.507059e+37
      %v2569 = vand.u32 %v2470, 2147483648
      %v2570 = vor.u32 1.1754944e-38, %v2569
      %v2571 = vsel %vm2568, %v2570, %v2566
      %v2572 = vmul.f32 1.0, %v2571
      %v2573 = vrcp.pop %v2471
      %v2574 = vmul.f32 %v2471, %v2573
      %v2575 = vsub.f32 1.0, %v2574
      %v2576 = vmul.f32 %v2573, %v2575
      %v2577 = vadd.f32 %v2573, %v2576
      %vm2578 = vweird.f32 %v2471
      %vm2579 = vweird.f32 %v2573
      %vm2580 = vmor %vm2578, %vm2579
      %v2581 = vsel %vm2580, %v2573, %v2577
      %v2582 = vand.u32 2147483647, %v2471
      %vm2583 = vcmp.eq.f32.partialorder %v2582, 8.507059e+37
      %v2584 = vand.u32 %v2471, 2147483648
      %v2585 = vor.u32 1.1754944e-38, %v2584
      %v2586 = vsel %vm2583, %v2585, %v2581
      %v2587 = vmul.f32 1.0, %v2586
      %v2588 = vrcp.pop %v2472
      %v2589 = vmul.f32 %v2472, %v2588
      %v2590 = vsub.f32 1.0, %v2589
      %v2591 = vmul.f32 %v2588, %v2590
      %v2592 = vadd.f32 %v2588, %v2591
      %vm2593 = vweird.f32 %v2472
      %vm2594 = vweird.f32 %v2588
      %vm2595 = vmor %vm2593, %vm2594
      %v2596 = vsel %vm2595, %v2588, %v2592
      %v2597 = vand.u32 2147483647, %v2472
      %vm2598 = vcmp.eq.f32.partialorder %v2597, 8.507059e+37
      %v2599 = vand.u32 %v2472, 2147483648
      %v2600 = vor.u32 1.1754944e-38, %v2599
      %v2601 = vsel %vm2598, %v2600, %v2596
      %v2602 = vmul.f32 1.0, %v2601
      %v2603 = vrcp.pop %v2473
      %v2604 = vmul.f32 %v2473, %v2603
      %v2605 = vsub.f32 1.0, %v2604
      %v2606 = vmul.f32 %v2603, %v2605
      %v2607 = vadd.f32 %v2603, %v2606
      %vm2608 = vweird.f32 %v2473
      %vm2609 = vweird.f32 %v2603
      %vm2610 = vmor %vm2608, %vm2609
      %v2611 = vsel %vm2610, %v2603, %v2607
      %v2612 = vand.u32 2147483647, %v2473
      %vm2613 = vcmp.eq.f32.partialorder %v2612, 8.507059e+37
      %v2614 = vand.u32 %v2473, 2147483648
      %v2615 = vor.u32 1.1754944e-38, %v2614
      %v2616 = vsel %vm2613, %v2615, %v2611
      %v2617 = vmul.f32 1.0, %v2616
      %v2618 = vrcp.pop %v2474
      %v2619 = vmul.f32 %v2474, %v2618
      %v2620 = vsub.f32 1.0, %v2619
      %v2621 = vmul.f32 %v2618, %v2620
      %v2622 = vadd.f32 %v2618, %v2621
      %vm2623 = vweird.f32 %v2474
      %vm2624 = vweird.f32 %v2618
      %vm2625 = vmor %vm2623, %vm2624
      %v2626 = vsel %vm2625, %v2618, %v2622
      %v2627 = vand.u32 2147483647, %v2474
      %vm2628 = vcmp.eq.f32.partialorder %v2627, 8.507059e+37
      %v2629 = vand.u32 %v2474, 2147483648
      %v2630 = vor.u32 1.1754944e-38, %v2629
      %v2631 = vsel %vm2628, %v2630, %v2626
      %v2632 = vmul.f32 1.0, %v2631
      %v2633 = vrcp.pop %v2475
      %v2634 = vmul.f32 %v2475, %v2633
      %v2635 = vsub.f32 1.0, %v2634
      %v2636 = vmul.f32 %v2633, %v2635
      %v2637 = vadd.f32 %v2633, %v2636
      %vm2638 = vweird.f32 %v2475
      %vm2639 = vweird.f32 %v2633
      %vm2640 = vmor %vm2638, %vm2639
      %v2641 = vsel %vm2640, %v2633, %v2637
      %v2642 = vand.u32 2147483647, %v2475
      %vm2643 = vcmp.eq.f32.partialorder %v2642, 8.507059e+37
      %v2644 = vand.u32 %v2475, 2147483648
      %v2645 = vor.u32 1.1754944e-38, %v2644
      %v2646 = vsel %vm2643, %v2645, %v2641
      %v2647 = vmul.f32 1.0, %v2646
      %v2648 = vrcp.pop %v2476
      %v2649 = vmul.f32 %v2476, %v2648
      %v2650 = vsub.f32 1.0, %v2649
      %v2651 = vmul.f32 %v2648, %v2650
      %v2652 = vadd.f32 %v2648, %v2651
      %vm2653 = vweird.f32 %v2476
      %vm2654 = vweird.f32 %v2648
      %vm2655 = vmor %vm2653, %vm2654
      %v2656 = vsel %vm2655, %v2648, %v2652
      %v2657 = vand.u32 2147483647, %v2476
      %vm2658 = vcmp.eq.f32.partialorder %v2657, 8.507059e+37
      %v2659 = vand.u32 %v2476, 2147483648
      %v2660 = vor.u32 1.1754944e-38, %v2659
      %v2661 = vsel %vm2658, %v2660, %v2656
      %v2662 = vmul.f32 1.0, %v2661
      %v2663 = vrcp.pop %v2477
      %v2664 = vmul.f32 %v2477, %v2663
      %v2665 = vsub.f32 1.0, %v2664
      %v2666 = vmul.f32 %v2663, %v2665
      %v2667 = vadd.f32 %v2663, %v2666
      %vm2668 = vweird.f32 %v2477
      %vm2669 = vweird.f32 %v2663
      %vm2670 = vmor %vm2668, %vm2669
      %v2671 = vsel %vm2670, %v2663, %v2667
      %v2672 = vand.u32 2147483647, %v2477
      %vm2673 = vcmp.eq.f32.partialorder %v2672, 8.507059e+37
      %v2674 = vand.u32 %v2477, 2147483648
      %v2675 = vor.u32 1.1754944e-38, %v2674
      %v2676 = vsel %vm2673, %v2675, %v2671
      %v2677 = vmul.f32 1.0, %v2676
      %v2678 = vrcp.pop %v2478
      %v2679 = vmul.f32 %v2478, %v2678
      %v2680 = vsub.f32 1.0, %v2679
      %v2681 = vmul.f32 %v2678, %v2680
      %v2682 = vadd.f32 %v2678, %v2681
      %vm2683 = vweird.f32 %v2478
      %vm2684 = vweird.f32 %v2678
      %vm2685 = vmor %vm2683, %vm2684
      %v2686 = vsel %vm2685, %v2678, %v2682
      %v2687 = vand.u32 2147483647, %v2478
      %vm2688 = vcmp.eq.f32.partialorder %v2687, 8.507059e+37
      %v2689 = vand.u32 %v2478, 2147483648
      %v2690 = vor.u32 1.1754944e-38, %v2689
      %v2691 = vsel %vm2688, %v2690, %v2686
      %v2692 = vmul.f32 1.0, %v2691
      %v2693 = vrcp.pop %v2479
      %v2694 = vmul.f32 %v2479, %v2693
      %v2695 = vsub.f32 1.0, %v2694
      %v2696 = vmul.f32 %v2693, %v2695
      %v2697 = vadd.f32 %v2693, %v2696
      %vm2698 = vweird.f32 %v2479
      %vm2699 = vweird.f32 %v2693
      %vm2700 = vmor %vm2698, %vm2699
      %v2701 = vsel %vm2700, %v2693, %v2697
      %v2702 = vand.u32 2147483647, %v2479
      %vm2703 = vcmp.eq.f32.partialorder %v2702, 8.507059e+37
      %v2704 = vand.u32 %v2479, 2147483648
      %v2705 = vor.u32 1.1754944e-38, %v2704
      %v2706 = vsel %vm2703, %v2705, %v2701
      %v2707 = vmul.f32 1.0, %v2706
      %v2708 = vrcp.pop %v2480
      %v2709 = vmul.f32 %v2480, %v2708
      %v2710 = vsub.f32 1.0, %v2709
      %v2711 = vmul.f32 %v2708, %v2710
      %v2712 = vadd.f32 %v2708, %v2711
      %vm2713 = vweird.f32 %v2480
      %vm2714 = vweird.f32 %v2708
      %vm2715 = vmor %vm2713, %vm2714
      %v2716 = vsel %vm2715, %v2708, %v2712
      %v2717 = vand.u32 2147483647, %v2480
      %vm2718 = vcmp.eq.f32.partialorder %v2717, 8.507059e+37
      %v2719 = vand.u32 %v2480, 2147483648
      %v2720 = vor.u32 1.1754944e-38, %v2719
      %v2721 = vsel %vm2718, %v2720, %v2716
      %v2722 = vmul.f32 1.0, %v2721
      %v2723 = vrcp.pop %v2481
      %v2724 = vmul.f32 %v2481, %v2723
      %v2725 = vsub.f32 1.0, %v2724
      %v2726 = vmul.f32 %v2723, %v2725
      %v2727 = vadd.f32 %v2723, %v2726
      %vm2728 = vweird.f32 %v2481
      %vm2729 = vweird.f32 %v2723
      %vm2730 = vmor %vm2728, %vm2729
      %v2731 = vsel %vm2730, %v2723, %v2727
      %v2732 = vand.u32 2147483647, %v2481
      %vm2733 = vcmp.eq.f32.partialorder %v2732, 8.507059e+37
      %v2734 = vand.u32 %v2481, 2147483648
      %v2735 = vor.u32 1.1754944e-38, %v2734
      %v2736 = vsel %vm2733, %v2735, %v2731
      %v2737 = vmul.f32 1.0, %v2736
      %v2738 = vrcp.pop %v2482
      %v2739 = vmul.f32 %v2482, %v2738
      %v2740 = vsub.f32 1.0, %v2739
      %v2741 = vmul.f32 %v2738, %v2740
      %v2742 = vadd.f32 %v2738, %v2741
      %vm2743 = vweird.f32 %v2482
      %vm2744 = vweird.f32 %v2738
      %vm2745 = vmor %vm2743, %vm2744
      %v2746 = vsel %vm2745, %v2738, %v2742
      %v2747 = vand.u32 2147483647, %v2482
      %vm2748 = vcmp.eq.f32.partialorder %v2747, 8.507059e+37
      %v2749 = vand.u32 %v2482, 2147483648
      %v2750 = vor.u32 1.1754944e-38, %v2749
      %v2751 = vsel %vm2748, %v2750, %v2746
      %v2752 = vmul.f32 1.0, %v2751
      %v2753 = vrcp.pop %v2483
      %v2754 = vmul.f32 %v2483, %v2753
      %v2755 = vsub.f32 1.0, %v2754
      %v2756 = vmul.f32 %v2753, %v2755
      %v2757 = vadd.f32 %v2753, %v2756
      %vm2758 = vweird.f32 %v2483
      %vm2759 = vweird.f32 %v2753
      %vm2760 = vmor %vm2758, %vm2759
      %v2761 = vsel %vm2760, %v2753, %v2757
      %v2762 = vand.u32 2147483647, %v2483
      %vm2763 = vcmp.eq.f32.partialorder %v2762, 8.507059e+37
      %v2764 = vand.u32 %v2483, 2147483648
      %v2765 = vor.u32 1.1754944e-38, %v2764
      %v2766 = vsel %vm2763, %v2765, %v2761
      %v2767 = vmul.f32 1.0, %v2766
      %v2768 = vrcp.pop %v2484
      %v2769 = vmul.f32 %v2484, %v2768
      %v2770 = vsub.f32 1.0, %v2769
      %v2771 = vmul.f32 %v2768, %v2770
      %v2772 = vadd.f32 %v2768, %v2771
      %vm2773 = vweird.f32 %v2484
      %vm2774 = vweird.f32 %v2768
      %vm2775 = vmor %vm2773, %vm2774
      %v2776 = vsel %vm2775, %v2768, %v2772
      %v2777 = vand.u32 2147483647, %v2484
      %vm2778 = vcmp.eq.f32.partialorder %v2777, 8.507059e+37
      %v2779 = vand.u32 %v2484, 2147483648
      %v2780 = vor.u32 1.1754944e-38, %v2779
      %v2781 = vsel %vm2778, %v2780, %v2776
      %v2782 = vmul.f32 1.0, %v2781
      %v2783 = vrcp.pop %v2485
      %v2784 = vmul.f32 %v2485, %v2783
      %v2785 = vsub.f32 1.0, %v2784
      %v2786 = vmul.f32 %v2783, %v2785
      %v2787 = vadd.f32 %v2783, %v2786
      %vm2788 = vweird.f32 %v2485
      %vm2789 = vweird.f32 %v2783
      %vm2790 = vmor %vm2788, %vm2789
      %v2791 = vsel %vm2790, %v2783, %v2787
      %v2792 = vand.u32 2147483647, %v2485
      %vm2793 = vcmp.eq.f32.partialorder %v2792, 8.507059e+37
      %v2794 = vand.u32 %v2485, 2147483648
      %v2795 = vor.u32 1.1754944e-38, %v2794
      %v2796 = vsel %vm2793, %v2795, %v2791
      %v2797 = vmul.f32 1.0, %v2796
      %v2798 = vrcp.pop %v2486
      %v2799 = vmul.f32 %v2486, %v2798
      %v2800 = vsub.f32 1.0, %v2799
      %v2801 = vmul.f32 %v2798, %v2800
      %v2802 = vadd.f32 %v2798, %v2801
      %vm2803 = vweird.f32 %v2486
      %vm2804 = vweird.f32 %v2798
      %vm2805 = vmor %vm2803, %vm2804
      %v2806 = vsel %vm2805, %v2798, %v2802
      %v2807 = vand.u32 2147483647, %v2486
      %vm2808 = vcmp.eq.f32.partialorder %v2807, 8.507059e+37
      %v2809 = vand.u32 %v2486, 2147483648
      %v2810 = vor.u32 1.1754944e-38, %v2809
      %v2811 = vsel %vm2808, %v2810, %v2806
      %v2812 = vmul.f32 1.0, %v2811
      %v2813 = vrcp.pop %v2487
      %v2814 = vmul.f32 %v2487, %v2813
      %v2815 = vsub.f32 1.0, %v2814
      %v2816 = vmul.f32 %v2813, %v2815
      %v2817 = vadd.f32 %v2813, %v2816
      %vm2818 = vweird.f32 %v2487
      %vm2819 = vweird.f32 %v2813
      %vm2820 = vmor %vm2818, %vm2819
      %v2821 = vsel %vm2820, %v2813, %v2817
      %v2822 = vand.u32 2147483647, %v2487
      %vm2823 = vcmp.eq.f32.partialorder %v2822, 8.507059e+37
      %v2824 = vand.u32 %v2487, 2147483648
      %v2825 = vor.u32 1.1754944e-38, %v2824
      %v2826 = vsel %vm2823, %v2825, %v2821
      %v2827 = vmul.f32 1.0, %v2826
      %v2828 = vrcp.pop %v2488
      %v2829 = vmul.f32 %v2488, %v2828
      %v2830 = vsub.f32 1.0, %v2829
      %v2831 = vmul.f32 %v2828, %v2830
      %v2832 = vadd.f32 %v2828, %v2831
      %vm2833 = vweird.f32 %v2488
      %vm2834 = vweird.f32 %v2828
      %vm2835 = vmor %vm2833, %vm2834
      %v2836 = vsel %vm2835, %v2828, %v2832
      %v2837 = vand.u32 2147483647, %v2488
      %vm2838 = vcmp.eq.f32.partialorder %v2837, 8.507059e+37
      %v2839 = vand.u32 %v2488, 2147483648
      %v2840 = vor.u32 1.1754944e-38, %v2839
      %v2841 = vsel %vm2838, %v2840, %v2836
      %v2842 = vmul.f32 1.0, %v2841
      %v2843 = vrcp.pop %v2489
      %v2844 = vmul.f32 %v2489, %v2843
      %v2845 = vsub.f32 1.0, %v2844
      %v2846 = vmul.f32 %v2843, %v2845
      %v2847 = vadd.f32 %v2843, %v2846
      %vm2848 = vweird.f32 %v2489
      %vm2849 = vweird.f32 %v2843
      %vm2850 = vmor %vm2848, %vm2849
      %v2851 = vsel %vm2850, %v2843, %v2847
      %v2852 = vand.u32 2147483647, %v2489
      %vm2853 = vcmp.eq.f32.partialorder %v2852, 8.507059e+37
      %v2854 = vand.u32 %v2489, 2147483648
      %v2855 = vor.u32 1.1754944e-38, %v2854
      %v2856 = vsel %vm2853, %v2855, %v2851
      %v2857 = vmul.f32 1.0, %v2856
      %v2858 = vrcp.pop %v2490
      %v2859 = vmul.f32 %v2490, %v2858
      %v2860 = vsub.f32 1.0, %v2859
      %v2861 = vmul.f32 %v2858, %v2860
      %v2862 = vadd.f32 %v2858, %v2861
      %vm2863 = vweird.f32 %v2490
      %vm2864 = vweird.f32 %v2858
      %vm2865 = vmor %vm2863, %vm2864
      %v2866 = vsel %vm2865, %v2858, %v2862
      %v2867 = vand.u32 2147483647, %v2490
      %vm2868 = vcmp.eq.f32.partialorder %v2867, 8.507059e+37
      %v2869 = vand.u32 %v2490, 2147483648
      %v2870 = vor.u32 1.1754944e-38, %v2869
      %v2871 = vsel %vm2868, %v2870, %v2866
      %v2872 = vmul.f32 1.0, %v2871
      %v2873 = vrcp.pop %v2491
      %v2874 = vmul.f32 %v2491, %v2873
      %v2875 = vsub.f32 1.0, %v2874
      %v2876 = vmul.f32 %v2873, %v2875
      %v2877 = vadd.f32 %v2873, %v2876
      %vm2878 = vweird.f32 %v2491
      %vm2879 = vweird.f32 %v2873
      %vm2880 = vmor %vm2878, %vm2879
      %v2881 = vsel %vm2880, %v2873, %v2877
      %v2882 = vand.u32 2147483647, %v2491
      %vm2883 = vcmp.eq.f32.partialorder %v2882, 8.507059e+37
      %v2884 = vand.u32 %v2491, 2147483648
      %v2885 = vor.u32 1.1754944e-38, %v2884
      %v2886 = vsel %vm2883, %v2885, %v2881
      %v2887 = vmul.f32 1.0, %v2886
      %v2888 = vrcp.pop %v2492
      %v2889 = vmul.f32 %v2492, %v2888
      %v2890 = vsub.f32 1.0, %v2889
      %v2891 = vmul.f32 %v2888, %v2890
      %v2892 = vadd.f32 %v2888, %v2891
      %vm2893 = vweird.f32 %v2492
      %vm2894 = vweird.f32 %v2888
      %vm2895 = vmor %vm2893, %vm2894
      %v2896 = vsel %vm2895, %v2888, %v2892
      %v2897 = vand.u32 2147483647, %v2492
      %vm2898 = vcmp.eq.f32.partialorder %v2897, 8.507059e+37
      %v2899 = vand.u32 %v2492, 2147483648
      %v2900 = vor.u32 1.1754944e-38, %v2899
      %v2901 = vsel %vm2898, %v2900, %v2896
      %v2902 = vmul.f32 1.0, %v2901
      %v2903 = vrcp.pop %v2493
      %v2904 = vmul.f32 %v2493, %v2903
      %v2905 = vsub.f32 1.0, %v2904
      %v2906 = vmul.f32 %v2903, %v2905
      %v2907 = vadd.f32 %v2903, %v2906
      %vm2908 = vweird.f32 %v2493
      %vm2909 = vweird.f32 %v2903
      %vm2910 = vmor %vm2908, %vm2909
      %v2911 = vsel %vm2910, %v2903, %v2907
      %v2912 = vand.u32 2147483647, %v2493
      %vm2913 = vcmp.eq.f32.partialorder %v2912, 8.507059e+37
      %v2914 = vand.u32 %v2493, 2147483648
      %v2915 = vor.u32 1.1754944e-38, %v2914
      %v2916 = vsel %vm2913, %v2915, %v2911
      %v2917 = vmul.f32 1.0, %v2916
      %v2918 = vrcp.pop %v2494
      %v2919 = vmul.f32 %v2494, %v2918
      %v2920 = vsub.f32 1.0, %v2919
      %v2921 = vmul.f32 %v2918, %v2920
      %v2922 = vadd.f32 %v2918, %v2921
      %vm2923 = vweird.f32 %v2494
      %vm2924 = vweird.f32 %v2918
      %vm2925 = vmor %vm2923, %vm2924
      %v2926 = vsel %vm2925, %v2918, %v2922
      %v2927 = vand.u32 2147483647, %v2494
      %vm2928 = vcmp.eq.f32.partialorder %v2927, 8.507059e+37
      %v2929 = vand.u32 %v2494, 2147483648
      %v2930 = vor.u32 1.1754944e-38, %v2929
      %v2931 = vsel %vm2928, %v2930, %v2926
      %v2932 = vmul.f32 1.0, %v2931
      %v2933 = vrcp.pop %v2495
      %v2934 = vmul.f32 %v2495, %v2933
      %v2935 = vsub.f32 1.0, %v2934
      %v2936 = vmul.f32 %v2933, %v2935
      %v2937 = vadd.f32 %v2933, %v2936
      %vm2938 = vweird.f32 %v2495
      %vm2939 = vweird.f32 %v2933
      %vm2940 = vmor %vm2938, %vm2939
      %v2941 = vsel %vm2940, %v2933, %v2937
      %v2942 = vand.u32 2147483647, %v2495
      %vm2943 = vcmp.eq.f32.partialorder %v2942, 8.507059e+37
      %v2944 = vand.u32 %v2495, 2147483648
      %v2945 = vor.u32 1.1754944e-38, %v2944
      %v2946 = vsel %vm2943, %v2945, %v2941
      %v2947 = vmul.f32 1.0, %v2946
      %v2948 = vrcp.pop %v2496
      %v2949 = vmul.f32 %v2496, %v2948
      %v2950 = vsub.f32 1.0, %v2949
      %v2951 = vmul.f32 %v2948, %v2950
      %v2952 = vadd.f32 %v2948, %v2951
      %vm2953 = vweird.f32 %v2496
      %vm2954 = vweird.f32 %v2948
      %vm2955 = vmor %vm2953, %vm2954
      %v2956 = vsel %vm2955, %v2948, %v2952
      %v2957 = vand.u32 2147483647, %v2496
      %vm2958 = vcmp.eq.f32.partialorder %v2957, 8.507059e+37
      %v2959 = vand.u32 %v2496, 2147483648
      %v2960 = vor.u32 1.1754944e-38, %v2959
      %v2961 = vsel %vm2958, %v2960, %v2956
      %v2962 = vmul.f32 1.0, %v2961
      %v2963 = vrcp.pop %v2497
      %v2964 = vmul.f32 %v2497, %v2963
      %v2965 = vsub.f32 1.0, %v2964
      %v2966 = vmul.f32 %v2963, %v2965
      %v2967 = vadd.f32 %v2963, %v2966
      %vm2968 = vweird.f32 %v2497
      %vm2969 = vweird.f32 %v2963
      %vm2970 = vmor %vm2968, %vm2969
      %v2971 = vsel %vm2970, %v2963, %v2967
      %v2972 = vand.u32 2147483647, %v2497
      %vm2973 = vcmp.eq.f32.partialorder %v2972, 8.507059e+37
      %v2974 = vand.u32 %v2497, 2147483648
      %v2975 = vor.u32 1.1754944e-38, %v2974
      %v2976 = vsel %vm2973, %v2975, %v2971
      %v2977 = vmul.f32 1.0, %v2976
      %v2978 = vsel %vm2050, %v2512, 0.0
      %v2979 = vsel %vm2051, %v2527, 0.0
      %v2980 = vsel %vm2052, %v2542, 0.0
      %v2981 = vsel %vm2053, %v2557, 0.0
      %v2982 = vsel %vm2054, %v2572, 0.0
      %v2983 = vsel %vm2055, %v2587, 0.0
      %v2984 = vsel %vm2056, %v2602, 0.0
      %v2985 = vsel %vm2057, %v2617, 0.0
      %v2986 = vsel %vm2058, %v2632, 0.0
      %v2987 = vsel %vm2059, %v2647, 0.0
      %v2988 = vsel %vm2060, %v2662, 0.0
      %v2989 = vsel %vm2061, %v2677, 0.0
      %v2990 = vsel %vm2062, %v2692, 0.0
      %v2991 = vsel %vm2063, %v2707, 0.0
      %v2992 = vsel %vm2064, %v2722, 0.0
      %v2993 = vsel %vm2065, %v2737, 0.0
      %v2994 = vsel %vm2066, %v2752, 0.0
      %v2995 = vsel %vm2067, %v2767, 0.0
      %v2996 = vsel %vm2068, %v2782, 0.0
      %v2997 = vsel %vm2069, %v2797, 0.0
      %v2998 = vsel %vm2070, %v2812, 0.0
      %v2999 = vsel %vm2071, %v2827, 0.0
      %v3000 = vsel %vm2072, %v2842, 0.0
      %v3001 = vsel %vm2073, %v2857, 0.0
      %v3002 = vsel %vm2074, %v2872, 0.0
      %v3003 = vsel %vm2075, %v2887, 0.0
      %v3004 = vsel %vm2076, %v2902, 0.0
      %v3005 = vsel %vm2077, %v2917, 0.0
      %v3006 = vsel %vm2078, %v2932, 0.0
      %v3007 = vsel %vm2079, %v2947, 0.0
      %v3008 = vsel %vm2080, %v2962, 0.0
      %v3009 = vsel %vm2081, %v2977, 0.0
      %v3010 = vadd.f32 %v2978, 0.0
      %v3011 = vadd.f32 %v2979, 0.0
      %v3012 = vadd.f32 %v2980, 0.0
      %v3013 = vadd.f32 %v2981, 0.0
      %v3014 = vadd.f32 %v2982, 0.0
      %v3015 = vadd.f32 %v2983, 0.0
      %v3016 = vadd.f32 %v2984, 0.0
      %v3017 = vadd.f32 %v2985, 0.0
      %v3018 = vadd.f32 %v2986, 0.0
      %v3019 = vadd.f32 %v2987, 0.0
      %v3020 = vadd.f32 %v2988, 0.0
      %v3021 = vadd.f32 %v2989, 0.0
      %v3022 = vadd.f32 %v2990, 0.0
      %v3023 = vadd.f32 %v2991, 0.0
      %v3024 = vadd.f32 %v2992, 0.0
      %v3025 = vadd.f32 %v2993, 0.0
      %v3026 = vadd.f32 %v2994, 0.0
      %v3027 = vadd.f32 %v2995, 0.0
      %v3028 = vadd.f32 %v2996, 0.0
      %v3029 = vadd.f32 %v2997, 0.0
      %v3030 = vadd.f32 %v2998, 0.0
      %v3031 = vadd.f32 %v2999, 0.0
      %v3032 = vadd.f32 %v3000, 0.0
      %v3033 = vadd.f32 %v3001, 0.0
      %v3034 = vadd.f32 %v3002, 0.0
      %v3035 = vadd.f32 %v3003, 0.0
      %v3036 = vadd.f32 %v3004, 0.0
      %v3037 = vadd.f32 %v3005, 0.0
      %v3038 = vadd.f32 %v3006, 0.0
      %v3039 = vadd.f32 %v3007, 0.0
      %v3040 = vadd.f32 %v3008, 0.0
      %v3041 = vadd.f32 %v3009, 0.0
      %v3042 = vadd.f32 %v2512, 0.0
      %v3043 = vadd.f32 %v2527, 0.0
      %v3044 = vadd.f32 %v2542, 0.0
      %v3045 = vadd.f32 %v2557, 0.0
      %v3046 = vadd.f32 %v2572, 0.0
      %v3047 = vadd.f32 %v2587, 0.0
      %v3048 = vadd.f32 %v2602, 0.0
      %v3049 = vadd.f32 %v2617, 0.0
      %v3050 = vadd.f32 %v2632, 0.0
      %v3051 = vadd.f32 %v2647, 0.0
      %v3052 = vadd.f32 %v2662, 0.0
      %v3053 = vadd.f32 %v2677, 0.0
      %v3054 = vadd.f32 %v2692, 0.0
      %v3055 = vadd.f32 %v2707, 0.0
      %v3056 = vadd.f32 %v2722, 0.0
      %v3057 = vadd.f32 %v2737, 0.0
      %v3058 = vadd.f32 %v2752, 0.0
      %v3059 = vadd.f32 %v2767, 0.0
      %v3060 = vadd.f32 %v2782, 0.0
      %v3061 = vadd.f32 %v2797, 0.0
      %v3062 = vadd.f32 %v2812, 0.0
      %v3063 = vadd.f32 %v2827, 0.0
      %v3064 = vadd.f32 %v2842, 0.0
      %v3065 = vadd.f32 %v2857, 0.0
      %v3066 = vadd.f32 %v2872, 0.0
      %v3067 = vadd.f32 %v2887, 0.0
      %v3068 = vadd.f32 %v2902, 0.0
      %v3069 = vadd.f32 %v2917, 0.0
      %v3070 = vadd.f32 %v2932, 0.0
      %v3071 = vadd.f32 %v2947, 0.0
      %v3072 = vadd.f32 %v2962, 0.0
      %v3073 = vadd.f32 %v2977, 0.0
      %v3074 = vsel %vm2050, 1e+30, %v1375
      %v3075 = vsel %vm2051, 1e+30, %v1376
      %v3076 = vsel %vm2052, 1e+30, %v1377
      %v3077 = vsel %vm2053, 1e+30, %v1378
      %v3078 = vsel %vm2054, 1e+30, %v1379
      %v3079 = vsel %vm2055, 1e+30, %v1380
      %v3080 = vsel %vm2056, 1e+30, %v1381
      %v3081 = vsel %vm2057, 1e+30, %v1382
      %v3082 = vsel %vm2058, 1e+30, %v1383
      %v3083 = vsel %vm2059, 1e+30, %v1384
      %v3084 = vsel %vm2060, 1e+30, %v1385
      %v3085 = vsel %vm2061, 1e+30, %v1386
      %v3086 = vsel %vm2062, 1e+30, %v1387
      %v3087 = vsel %vm2063, 1e+30, %v1388
      %v3088 = vsel %vm2064, 1e+30, %v1389
      %v3089 = vsel %vm2065, 1e+30, %v1390
      %v3090 = vsel %vm2066, 1e+30, %v1391
      %v3091 = vsel %vm2067, 1e+30, %v1392
      %v3092 = vsel %vm2068, 1e+30, %v1393
      %v3093 = vsel %vm2069, 1e+30, %v1394
      %v3094 = vsel %vm2070, 1e+30, %v1395
      %v3095 = vsel %vm2071, 1e+30, %v1396
      %v3096 = vsel %vm2072, 1e+30, %v1397
      %v3097 = vsel %vm2073, 1e+30, %v1398
      %v3098 = vsel %vm2074, 1e+30, %v1399
      %v3099 = vsel %vm2075, 1e+30, %v1400
      %v3100 = vsel %vm2076, 1e+30, %v1401
      %v3101 = vsel %vm2077, 1e+30, %v1402
      %v3102 = vsel %vm2078, 1e+30, %v1403
      %v3103 = vsel %vm2079, 1e+30, %v1404
      %v3104 = vsel %vm2080, 1e+30, %v1405
      %v3105 = vsel %vm2081, 1e+30, %v1406
      %v3106 = vsel %vm1409, %v3074, inf
      %3107 = vmin.xlane.f32.xlu0 %v3106
      %v3108 = vpop.xlane.xlu0 %3107
      %v3109 = vsel %vm1409, %v3075, inf
      %3110 = vmin.xlane.f32.xlu0 %v3109
      %v3111 = vpop.xlane.xlu0 %3110
      %v3112 = vsel %vm1409, %v3076, inf
      %3113 = vmin.xlane.f32.xlu0 %v3112
      %v3114 = vpop.xlane.xlu0 %3113
      %v3115 = vsel %vm1409, %v3077, inf
      %3116 = vmin.xlane.f32.xlu0 %v3115
      %v3117 = vpop.xlane.xlu0 %3116
      %v3118 = vsel %vm1409, %v3078, inf
      %3119 = vmin.xlane.f32.xlu0 %v3118
      %v3120 = vpop.xlane.xlu0 %3119
      %v3121 = vsel %vm1409, %v3079, inf
      %3122 = vmin.xlane.f32.xlu0 %v3121
      %v3123 = vpop.xlane.xlu0 %3122
      %v3124 = vsel %vm1409, %v3080, inf
      %3125 = vmin.xlane.f32.xlu0 %v3124
      %v3126 = vpop.xlane.xlu0 %3125
      %v3127 = vsel %vm1409, %v3081, inf
      %3128 = vmin.xlane.f32.xlu0 %v3127
      %v3129 = vpop.xlane.xlu0 %3128
      %v3130 = vsel %vm1409, %v3082, inf
      %3131 = vmin.xlane.f32.xlu0 %v3130
      %v3132 = vpop.xlane.xlu0 %3131
      %v3133 = vsel %vm1409, %v3083, inf
      %3134 = vmin.xlane.f32.xlu0 %v3133
      %v3135 = vpop.xlane.xlu0 %3134
      %v3136 = vsel %vm1409, %v3084, inf
      %3137 = vmin.xlane.f32.xlu0 %v3136
      %v3138 = vpop.xlane.xlu0 %3137
      %v3139 = vsel %vm1409, %v3085, inf
      %3140 = vmin.xlane.f32.xlu0 %v3139
      %v3141 = vpop.xlane.xlu0 %3140
      %v3142 = vsel %vm1409, %v3086, inf
      %3143 = vmin.xlane.f32.xlu0 %v3142
      %v3144 = vpop.xlane.xlu0 %3143
      %v3145 = vsel %vm1409, %v3087, inf
      %3146 = vmin.xlane.f32.xlu0 %v3145
      %v3147 = vpop.xlane.xlu0 %3146
      %v3148 = vsel %vm1409, %v3088, inf
      %3149 = vmin.xlane.f32.xlu0 %v3148
      %v3150 = vpop.xlane.xlu0 %3149
      %v3151 = vsel %vm1409, %v3089, inf
      %3152 = vmin.xlane.f32.xlu0 %v3151
      %v3153 = vpop.xlane.xlu0 %3152
      %v3154 = vsel %vm1409, %v3090, inf
      %3155 = vmin.xlane.f32.xlu0 %v3154
      %v3156 = vpop.xlane.xlu0 %3155
      %v3157 = vsel %vm1409, %v3091, inf
      %3158 = vmin.xlane.f32.xlu0 %v3157
      %v3159 = vpop.xlane.xlu0 %3158
      %v3160 = vsel %vm1409, %v3092, inf
      %3161 = vmin.xlane.f32.xlu0 %v3160
      %v3162 = vpop.xlane.xlu0 %3161
      %v3163 = vsel %vm1409, %v3093, inf
      %3164 = vmin.xlane.f32.xlu0 %v3163
      %v3165 = vpop.xlane.xlu0 %3164
      %v3166 = vsel %vm1409, %v3094, inf
      %3167 = vmin.xlane.f32.xlu0 %v3166
      %v3168 = vpop.xlane.xlu0 %3167
      %v3169 = vsel %vm1409, %v3095, inf
      %3170 = vmin.xlane.f32.xlu0 %v3169
      %v3171 = vpop.xlane.xlu0 %3170
      %v3172 = vsel %vm1409, %v3096, inf
      %3173 = vmin.xlane.f32.xlu0 %v3172
      %v3174 = vpop.xlane.xlu0 %3173
      %v3175 = vsel %vm1409, %v3097, inf
      %3176 = vmin.xlane.f32.xlu0 %v3175
      %v3177 = vpop.xlane.xlu0 %3176
      %v3178 = vsel %vm1409, %v3098, inf
      %3179 = vmin.xlane.f32.xlu0 %v3178
      %v3180 = vpop.xlane.xlu0 %3179
      %v3181 = vsel %vm1409, %v3099, inf
      %3182 = vmin.xlane.f32.xlu0 %v3181
      %v3183 = vpop.xlane.xlu0 %3182
      %v3184 = vsel %vm1409, %v3100, inf
      %3185 = vmin.xlane.f32.xlu0 %v3184
      %v3186 = vpop.xlane.xlu0 %3185
      %v3187 = vsel %vm1409, %v3101, inf
      %3188 = vmin.xlane.f32.xlu0 %v3187
      %v3189 = vpop.xlane.xlu0 %3188
      %v3190 = vsel %vm1409, %v3102, inf
      %3191 = vmin.xlane.f32.xlu0 %v3190
      %v3192 = vpop.xlane.xlu0 %3191
      %v3193 = vsel %vm1409, %v3103, inf
      %3194 = vmin.xlane.f32.xlu0 %v3193
      %v3195 = vpop.xlane.xlu0 %3194
      %v3196 = vsel %vm1409, %v3104, inf
      %3197 = vmin.xlane.f32.xlu0 %v3196
      %v3198 = vpop.xlane.xlu0 %3197
      %v3199 = vsel %vm1409, %v3105, inf
      %3200 = vmin.xlane.f32.xlu0 %v3199
      %v3201 = vpop.xlane.xlu0 %3200
      %vm3202 = vcmp.eq.f32.partialorder %v3074, %v3108
      %vm3203 = vcmp.eq.f32.partialorder %v3075, %v3111
      %vm3204 = vcmp.eq.f32.partialorder %v3076, %v3114
      %vm3205 = vcmp.eq.f32.partialorder %v3077, %v3117
      %vm3206 = vcmp.eq.f32.partialorder %v3078, %v3120
      %vm3207 = vcmp.eq.f32.partialorder %v3079, %v3123
      %vm3208 = vcmp.eq.f32.partialorder %v3080, %v3126
      %vm3209 = vcmp.eq.f32.partialorder %v3081, %v3129
      %vm3210 = vcmp.eq.f32.partialorder %v3082, %v3132
      %vm3211 = vcmp.eq.f32.partialorder %v3083, %v3135
      %vm3212 = vcmp.eq.f32.partialorder %v3084, %v3138
      %vm3213 = vcmp.eq.f32.partialorder %v3085, %v3141
      %vm3214 = vcmp.eq.f32.partialorder %v3086, %v3144
      %vm3215 = vcmp.eq.f32.partialorder %v3087, %v3147
      %vm3216 = vcmp.eq.f32.partialorder %v3088, %v3150
      %vm3217 = vcmp.eq.f32.partialorder %v3089, %v3153
      %vm3218 = vcmp.eq.f32.partialorder %v3090, %v3156
      %vm3219 = vcmp.eq.f32.partialorder %v3091, %v3159
      %vm3220 = vcmp.eq.f32.partialorder %v3092, %v3162
      %vm3221 = vcmp.eq.f32.partialorder %v3093, %v3165
      %vm3222 = vcmp.eq.f32.partialorder %v3094, %v3168
      %vm3223 = vcmp.eq.f32.partialorder %v3095, %v3171
      %vm3224 = vcmp.eq.f32.partialorder %v3096, %v3174
      %vm3225 = vcmp.eq.f32.partialorder %v3097, %v3177
      %vm3226 = vcmp.eq.f32.partialorder %v3098, %v3180
      %vm3227 = vcmp.eq.f32.partialorder %v3099, %v3183
      %vm3228 = vcmp.eq.f32.partialorder %v3100, %v3186
      %vm3229 = vcmp.eq.f32.partialorder %v3101, %v3189
      %vm3230 = vcmp.eq.f32.partialorder %v3102, %v3192
      %vm3231 = vcmp.eq.f32.partialorder %v3103, %v3195
      %vm3232 = vcmp.eq.f32.partialorder %v3104, %v3198
      %vm3233 = vcmp.eq.f32.partialorder %v3105, %v3201
      %v3234 = vsel %vm3202, %v1408, 32
      %v3235 = vsel %vm3203, %v1408, 32
      %v3236 = vsel %vm3204, %v1408, 32
      %v3237 = vsel %vm3205, %v1408, 32
      %v3238 = vsel %vm3206, %v1408, 32
      %v3239 = vsel %vm3207, %v1408, 32
      %v3240 = vsel %vm3208, %v1408, 32
      %v3241 = vsel %vm3209, %v1408, 32
      %v3242 = vsel %vm3210, %v1408, 32
      %v3243 = vsel %vm3211, %v1408, 32
      %v3244 = vsel %vm3212, %v1408, 32
      %v3245 = vsel %vm3213, %v1408, 32
      %v3246 = vsel %vm3214, %v1408, 32
      %v3247 = vsel %vm3215, %v1408, 32
      %v3248 = vsel %vm3216, %v1408, 32
      %v3249 = vsel %vm3217, %v1408, 32
      %v3250 = vsel %vm3218, %v1408, 32
      %v3251 = vsel %vm3219, %v1408, 32
      %v3252 = vsel %vm3220, %v1408, 32
      %v3253 = vsel %vm3221, %v1408, 32
      %v3254 = vsel %vm3222, %v1408, 32
      %v3255 = vsel %vm3223, %v1408, 32
      %v3256 = vsel %vm3224, %v1408, 32
      %v3257 = vsel %vm3225, %v1408, 32
      %v3258 = vsel %vm3226, %v1408, 32
      %v3259 = vsel %vm3227, %v1408, 32
      %v3260 = vsel %vm3228, %v1408, 32
      %v3261 = vsel %vm3229, %v1408, 32
      %v3262 = vsel %vm3230, %v1408, 32
      %v3263 = vsel %vm3231, %v1408, 32
      %v3264 = vsel %vm3232, %v1408, 32
      %v3265 = vsel %vm3233, %v1408, 32
      %v3266 = vsel %vm1409, %v3234, 2147483647
      %v3267 = vand.u32 %v3266, 65535
      %v3268 = vshra.s32 %v3266, 16
      %v3269 = vcvt.s32.f32 %v3267
      %v3270 = vcvt.s32.f32 %v3268
      %3271 = vmin.xlane.f32.xlu0 %v3270
      %v3272 = vpop.xlane.xlu0 %3271
      %vm3273 = vcmp.eq.f32.partialorder %v3270, %v3272
      %v3274 = vsel %vm3273, %v3269, inf
      %3275 = vmin.xlane.f32.xlu0 %v3274
      %v3276 = vpop.xlane.xlu0 %3275
      %v3277 = vcvt.f32.s32 %v3276
      %v3278 = vcvt.f32.s32 %v3272
      %v3279 = vshll.u32 %v3278, 16
      %v3280 = vadd.s32 %v3279, %v3277
      %v3281 = vsel %vm1409, %v3235, 2147483647
      %v3282 = vand.u32 %v3281, 65535
      %v3283 = vshra.s32 %v3281, 16
      %v3284 = vcvt.s32.f32 %v3282
      %v3285 = vcvt.s32.f32 %v3283
      %3286 = vmin.xlane.f32.xlu0 %v3285
      %v3287 = vpop.xlane.xlu0 %3286
      %vm3288 = vcmp.eq.f32.partialorder %v3285, %v3287
      %v3289 = vsel %vm3288, %v3284, inf
      %3290 = vmin.xlane.f32.xlu0 %v3289
      %v3291 = vpop.xlane.xlu0 %3290
      %v3292 = vcvt.f32.s32 %v3291
      %v3293 = vcvt.f32.s32 %v3287
      %v3294 = vshll.u32 %v3293, 16
      %v3295 = vadd.s32 %v3294, %v3292
      %v3296 = vsel %vm1409, %v3236, 2147483647
      %v3297 = vand.u32 %v3296, 65535
      %v3298 = vshra.s32 %v3296, 16
      %v3299 = vcvt.s32.f32 %v3297
      %v3300 = vcvt.s32.f32 %v3298
      %3301 = vmin.xlane.f32.xlu0 %v3300
      %v3302 = vpop.xlane.xlu0 %3301
      %vm3303 = vcmp.eq.f32.partialorder %v3300, %v3302
      %v3304 = vsel %vm3303, %v3299, inf
      %3305 = vmin.xlane.f32.xlu0 %v3304
      %v3306 = vpop.xlane.xlu0 %3305
      %v3307 = vcvt.f32.s32 %v3306
      %v3308 = vcvt.f32.s32 %v3302
      %v3309 = vshll.u32 %v3308, 16
      %v3310 = vadd.s32 %v3309, %v3307
      %v3311 = vsel %vm1409, %v3237, 2147483647
      %v3312 = vand.u32 %v3311, 65535
      %v3313 = vshra.s32 %v3311, 16
      %v3314 = vcvt.s32.f32 %v3312
      %v3315 = vcvt.s32.f32 %v3313
      %3316 = vmin.xlane.f32.xlu0 %v3315
      %v3317 = vpop.xlane.xlu0 %3316
      %vm3318 = vcmp.eq.f32.partialorder %v3315, %v3317
      %v3319 = vsel %vm3318, %v3314, inf
      %3320 = vmin.xlane.f32.xlu0 %v3319
      %v3321 = vpop.xlane.xlu0 %3320
      %v3322 = vcvt.f32.s32 %v3321
      %v3323 = vcvt.f32.s32 %v3317
      %v3324 = vshll.u32 %v3323, 16
      %v3325 = vadd.s32 %v3324, %v3322
      %v3326 = vsel %vm1409, %v3238, 2147483647
      %v3327 = vand.u32 %v3326, 65535
      %v3328 = vshra.s32 %v3326, 16
      %v3329 = vcvt.s32.f32 %v3327
      %v3330 = vcvt.s32.f32 %v3328
      %3331 = vmin.xlane.f32.xlu0 %v3330
      %v3332 = vpop.xlane.xlu0 %3331
      %vm3333 = vcmp.eq.f32.partialorder %v3330, %v3332
      %v3334 = vsel %vm3333, %v3329, inf
      %3335 = vmin.xlane.f32.xlu0 %v3334
      %v3336 = vpop.xlane.xlu0 %3335
      %v3337 = vcvt.f32.s32 %v3336
      %v3338 = vcvt.f32.s32 %v3332
      %v3339 = vshll.u32 %v3338, 16
      %v3340 = vadd.s32 %v3339, %v3337
      %v3341 = vsel %vm1409, %v3239, 2147483647
      %v3342 = vand.u32 %v3341, 65535
      %v3343 = vshra.s32 %v3341, 16
      %v3344 = vcvt.s32.f32 %v3342
      %v3345 = vcvt.s32.f32 %v3343
      %3346 = vmin.xlane.f32.xlu0 %v3345
      %v3347 = vpop.xlane.xlu0 %3346
      %vm3348 = vcmp.eq.f32.partialorder %v3345, %v3347
      %v3349 = vsel %vm3348, %v3344, inf
      %3350 = vmin.xlane.f32.xlu0 %v3349
      %v3351 = vpop.xlane.xlu0 %3350
      %v3352 = vcvt.f32.s32 %v3351
      %v3353 = vcvt.f32.s32 %v3347
      %v3354 = vshll.u32 %v3353, 16
      %v3355 = vadd.s32 %v3354, %v3352
      %v3356 = vsel %vm1409, %v3240, 2147483647
      %v3357 = vand.u32 %v3356, 65535
      %v3358 = vshra.s32 %v3356, 16
      %v3359 = vcvt.s32.f32 %v3357
      %v3360 = vcvt.s32.f32 %v3358
      %3361 = vmin.xlane.f32.xlu0 %v3360
      %v3362 = vpop.xlane.xlu0 %3361
      %vm3363 = vcmp.eq.f32.partialorder %v3360, %v3362
      %v3364 = vsel %vm3363, %v3359, inf
      %3365 = vmin.xlane.f32.xlu0 %v3364
      %v3366 = vpop.xlane.xlu0 %3365
      %v3367 = vcvt.f32.s32 %v3366
      %v3368 = vcvt.f32.s32 %v3362
      %v3369 = vshll.u32 %v3368, 16
      %v3370 = vadd.s32 %v3369, %v3367
      %v3371 = vsel %vm1409, %v3241, 2147483647
      %v3372 = vand.u32 %v3371, 65535
      %v3373 = vshra.s32 %v3371, 16
      %v3374 = vcvt.s32.f32 %v3372
      %v3375 = vcvt.s32.f32 %v3373
      %3376 = vmin.xlane.f32.xlu0 %v3375
      %v3377 = vpop.xlane.xlu0 %3376
      %vm3378 = vcmp.eq.f32.partialorder %v3375, %v3377
      %v3379 = vsel %vm3378, %v3374, inf
      %3380 = vmin.xlane.f32.xlu0 %v3379
      %v3381 = vpop.xlane.xlu0 %3380
      %v3382 = vcvt.f32.s32 %v3381
      %v3383 = vcvt.f32.s32 %v3377
      %v3384 = vshll.u32 %v3383, 16
      %v3385 = vadd.s32 %v3384, %v3382
      %v3386 = vsel %vm1409, %v3242, 2147483647
      %v3387 = vand.u32 %v3386, 65535
      %v3388 = vshra.s32 %v3386, 16
      %v3389 = vcvt.s32.f32 %v3387
      %v3390 = vcvt.s32.f32 %v3388
      %3391 = vmin.xlane.f32.xlu0 %v3390
      %v3392 = vpop.xlane.xlu0 %3391
      %vm3393 = vcmp.eq.f32.partialorder %v3390, %v3392
      %v3394 = vsel %vm3393, %v3389, inf
      %3395 = vmin.xlane.f32.xlu0 %v3394
      %v3396 = vpop.xlane.xlu0 %3395
      %v3397 = vcvt.f32.s32 %v3396
      %v3398 = vcvt.f32.s32 %v3392
      %v3399 = vshll.u32 %v3398, 16
      %v3400 = vadd.s32 %v3399, %v3397
      %v3401 = vsel %vm1409, %v3243, 2147483647
      %v3402 = vand.u32 %v3401, 65535
      %v3403 = vshra.s32 %v3401, 16
      %v3404 = vcvt.s32.f32 %v3402
      %v3405 = vcvt.s32.f32 %v3403
      %3406 = vmin.xlane.f32.xlu0 %v3405
      %v3407 = vpop.xlane.xlu0 %3406
      %vm3408 = vcmp.eq.f32.partialorder %v3405, %v3407
      %v3409 = vsel %vm3408, %v3404, inf
      %3410 = vmin.xlane.f32.xlu0 %v3409
      %v3411 = vpop.xlane.xlu0 %3410
      %v3412 = vcvt.f32.s32 %v3411
      %v3413 = vcvt.f32.s32 %v3407
      %v3414 = vshll.u32 %v3413, 16
      %v3415 = vadd.s32 %v3414, %v3412
      %v3416 = vsel %vm1409, %v3244, 2147483647
      %v3417 = vand.u32 %v3416, 65535
      %v3418 = vshra.s32 %v3416, 16
      %v3419 = vcvt.s32.f32 %v3417
      %v3420 = vcvt.s32.f32 %v3418
      %3421 = vmin.xlane.f32.xlu0 %v3420
      %v3422 = vpop.xlane.xlu0 %3421
      %vm3423 = vcmp.eq.f32.partialorder %v3420, %v3422
      %v3424 = vsel %vm3423, %v3419, inf
      %3425 = vmin.xlane.f32.xlu0 %v3424
      %v3426 = vpop.xlane.xlu0 %3425
      %v3427 = vcvt.f32.s32 %v3426
      %v3428 = vcvt.f32.s32 %v3422
      %v3429 = vshll.u32 %v3428, 16
      %v3430 = vadd.s32 %v3429, %v3427
      %v3431 = vsel %vm1409, %v3245, 2147483647
      %v3432 = vand.u32 %v3431, 65535
      %v3433 = vshra.s32 %v3431, 16
      %v3434 = vcvt.s32.f32 %v3432
      %v3435 = vcvt.s32.f32 %v3433
      %3436 = vmin.xlane.f32.xlu0 %v3435
      %v3437 = vpop.xlane.xlu0 %3436
      %vm3438 = vcmp.eq.f32.partialorder %v3435, %v3437
      %v3439 = vsel %vm3438, %v3434, inf
      %3440 = vmin.xlane.f32.xlu0 %v3439
      %v3441 = vpop.xlane.xlu0 %3440
      %v3442 = vcvt.f32.s32 %v3441
      %v3443 = vcvt.f32.s32 %v3437
      %v3444 = vshll.u32 %v3443, 16
      %v3445 = vadd.s32 %v3444, %v3442
      %v3446 = vsel %vm1409, %v3246, 2147483647
      %v3447 = vand.u32 %v3446, 65535
      %v3448 = vshra.s32 %v3446, 16
      %v3449 = vcvt.s32.f32 %v3447
      %v3450 = vcvt.s32.f32 %v3448
      %3451 = vmin.xlane.f32.xlu0 %v3450
      %v3452 = vpop.xlane.xlu0 %3451
      %vm3453 = vcmp.eq.f32.partialorder %v3450, %v3452
      %v3454 = vsel %vm3453, %v3449, inf
      %3455 = vmin.xlane.f32.xlu0 %v3454
      %v3456 = vpop.xlane.xlu0 %3455
      %v3457 = vcvt.f32.s32 %v3456
      %v3458 = vcvt.f32.s32 %v3452
      %v3459 = vshll.u32 %v3458, 16
      %v3460 = vadd.s32 %v3459, %v3457
      %v3461 = vsel %vm1409, %v3247, 2147483647
      %v3462 = vand.u32 %v3461, 65535
      %v3463 = vshra.s32 %v3461, 16
      %v3464 = vcvt.s32.f32 %v3462
      %v3465 = vcvt.s32.f32 %v3463
      %3466 = vmin.xlane.f32.xlu0 %v3465
      %v3467 = vpop.xlane.xlu0 %3466
      %vm3468 = vcmp.eq.f32.partialorder %v3465, %v3467
      %v3469 = vsel %vm3468, %v3464, inf
      %3470 = vmin.xlane.f32.xlu0 %v3469
      %v3471 = vpop.xlane.xlu0 %3470
      %v3472 = vcvt.f32.s32 %v3471
      %v3473 = vcvt.f32.s32 %v3467
      %v3474 = vshll.u32 %v3473, 16
      %v3475 = vadd.s32 %v3474, %v3472
      %v3476 = vsel %vm1409, %v3248, 2147483647
      %v3477 = vand.u32 %v3476, 65535
      %v3478 = vshra.s32 %v3476, 16
      %v3479 = vcvt.s32.f32 %v3477
      %v3480 = vcvt.s32.f32 %v3478
      %3481 = vmin.xlane.f32.xlu0 %v3480
      %v3482 = vpop.xlane.xlu0 %3481
      %vm3483 = vcmp.eq.f32.partialorder %v3480, %v3482
      %v3484 = vsel %vm3483, %v3479, inf
      %3485 = vmin.xlane.f32.xlu0 %v3484
      %v3486 = vpop.xlane.xlu0 %3485
      %v3487 = vcvt.f32.s32 %v3486
      %v3488 = vcvt.f32.s32 %v3482
      %v3489 = vshll.u32 %v3488, 16
      %v3490 = vadd.s32 %v3489, %v3487
      %v3491 = vsel %vm1409, %v3249, 2147483647
      %v3492 = vand.u32 %v3491, 65535
      %v3493 = vshra.s32 %v3491, 16
      %v3494 = vcvt.s32.f32 %v3492
      %v3495 = vcvt.s32.f32 %v3493
      %3496 = vmin.xlane.f32.xlu0 %v3495
      %v3497 = vpop.xlane.xlu0 %3496
      %vm3498 = vcmp.eq.f32.partialorder %v3495, %v3497
      %v3499 = vsel %vm3498, %v3494, inf
      %3500 = vmin.xlane.f32.xlu0 %v3499
      %v3501 = vpop.xlane.xlu0 %3500
      %v3502 = vcvt.f32.s32 %v3501
      %v3503 = vcvt.f32.s32 %v3497
      %v3504 = vshll.u32 %v3503, 16
      %v3505 = vadd.s32 %v3504, %v3502
      %v3506 = vsel %vm1409, %v3250, 2147483647
      %v3507 = vand.u32 %v3506, 65535
      %v3508 = vshra.s32 %v3506, 16
      %v3509 = vcvt.s32.f32 %v3507
      %v3510 = vcvt.s32.f32 %v3508
      %3511 = vmin.xlane.f32.xlu0 %v3510
      %v3512 = vpop.xlane.xlu0 %3511
      %vm3513 = vcmp.eq.f32.partialorder %v3510, %v3512
      %v3514 = vsel %vm3513, %v3509, inf
      %3515 = vmin.xlane.f32.xlu0 %v3514
      %v3516 = vpop.xlane.xlu0 %3515
      %v3517 = vcvt.f32.s32 %v3516
      %v3518 = vcvt.f32.s32 %v3512
      %v3519 = vshll.u32 %v3518, 16
      %v3520 = vadd.s32 %v3519, %v3517
      %v3521 = vsel %vm1409, %v3251, 2147483647
      %v3522 = vand.u32 %v3521, 65535
      %v3523 = vshra.s32 %v3521, 16
      %v3524 = vcvt.s32.f32 %v3522
      %v3525 = vcvt.s32.f32 %v3523
      %3526 = vmin.xlane.f32.xlu0 %v3525
      %v3527 = vpop.xlane.xlu0 %3526
      %vm3528 = vcmp.eq.f32.partialorder %v3525, %v3527
      %v3529 = vsel %vm3528, %v3524, inf
      %3530 = vmin.xlane.f32.xlu0 %v3529
      %v3531 = vpop.xlane.xlu0 %3530
      %v3532 = vcvt.f32.s32 %v3531
      %v3533 = vcvt.f32.s32 %v3527
      %v3534 = vshll.u32 %v3533, 16
      %v3535 = vadd.s32 %v3534, %v3532
      %v3536 = vsel %vm1409, %v3252, 2147483647
      %v3537 = vand.u32 %v3536, 65535
      %v3538 = vshra.s32 %v3536, 16
      %v3539 = vcvt.s32.f32 %v3537
      %v3540 = vcvt.s32.f32 %v3538
      %3541 = vmin.xlane.f32.xlu0 %v3540
      %v3542 = vpop.xlane.xlu0 %3541
      %vm3543 = vcmp.eq.f32.partialorder %v3540, %v3542
      %v3544 = vsel %vm3543, %v3539, inf
      %3545 = vmin.xlane.f32.xlu0 %v3544
      %v3546 = vpop.xlane.xlu0 %3545
      %v3547 = vcvt.f32.s32 %v3546
      %v3548 = vcvt.f32.s32 %v3542
      %v3549 = vshll.u32 %v3548, 16
      %v3550 = vadd.s32 %v3549, %v3547
      %v3551 = vsel %vm1409, %v3253, 2147483647
      %v3552 = vand.u32 %v3551, 65535
      %v3553 = vshra.s32 %v3551, 16
      %v3554 = vcvt.s32.f32 %v3552
      %v3555 = vcvt.s32.f32 %v3553
      %3556 = vmin.xlane.f32.xlu0 %v3555
      %v3557 = vpop.xlane.xlu0 %3556
      %vm3558 = vcmp.eq.f32.partialorder %v3555, %v3557
      %v3559 = vsel %vm3558, %v3554, inf
      %3560 = vmin.xlane.f32.xlu0 %v3559
      %v3561 = vpop.xlane.xlu0 %3560
      %v3562 = vcvt.f32.s32 %v3561
      %v3563 = vcvt.f32.s32 %v3557
      %v3564 = vshll.u32 %v3563, 16
      %v3565 = vadd.s32 %v3564, %v3562
      %v3566 = vsel %vm1409, %v3254, 2147483647
      %v3567 = vand.u32 %v3566, 65535
      %v3568 = vshra.s32 %v3566, 16
      %v3569 = vcvt.s32.f32 %v3567
      %v3570 = vcvt.s32.f32 %v3568
      %3571 = vmin.xlane.f32.xlu0 %v3570
      %v3572 = vpop.xlane.xlu0 %3571
      %vm3573 = vcmp.eq.f32.partialorder %v3570, %v3572
      %v3574 = vsel %vm3573, %v3569, inf
      %3575 = vmin.xlane.f32.xlu0 %v3574
      %v3576 = vpop.xlane.xlu0 %3575
      %v3577 = vcvt.f32.s32 %v3576
      %v3578 = vcvt.f32.s32 %v3572
      %v3579 = vshll.u32 %v3578, 16
      %v3580 = vadd.s32 %v3579, %v3577
      %v3581 = vsel %vm1409, %v3255, 2147483647
      %v3582 = vand.u32 %v3581, 65535
      %v3583 = vshra.s32 %v3581, 16
      %v3584 = vcvt.s32.f32 %v3582
      %v3585 = vcvt.s32.f32 %v3583
      %3586 = vmin.xlane.f32.xlu0 %v3585
      %v3587 = vpop.xlane.xlu0 %3586
      %vm3588 = vcmp.eq.f32.partialorder %v3585, %v3587
      %v3589 = vsel %vm3588, %v3584, inf
      %3590 = vmin.xlane.f32.xlu0 %v3589
      %v3591 = vpop.xlane.xlu0 %3590
      %v3592 = vcvt.f32.s32 %v3591
      %v3593 = vcvt.f32.s32 %v3587
      %v3594 = vshll.u32 %v3593, 16
      %v3595 = vadd.s32 %v3594, %v3592
      %v3596 = vsel %vm1409, %v3256, 2147483647
      %v3597 = vand.u32 %v3596, 65535
      %v3598 = vshra.s32 %v3596, 16
      %v3599 = vcvt.s32.f32 %v3597
      %v3600 = vcvt.s32.f32 %v3598
      %3601 = vmin.xlane.f32.xlu0 %v3600
      %v3602 = vpop.xlane.xlu0 %3601
      %vm3603 = vcmp.eq.f32.partialorder %v3600, %v3602
      %v3604 = vsel %vm3603, %v3599, inf
      %3605 = vmin.xlane.f32.xlu0 %v3604
      %v3606 = vpop.xlane.xlu0 %3605
      %v3607 = vcvt.f32.s32 %v3606
      %v3608 = vcvt.f32.s32 %v3602
      %v3609 = vshll.u32 %v3608, 16
      %v3610 = vadd.s32 %v3609, %v3607
      %v3611 = vsel %vm1409, %v3257, 2147483647
      %v3612 = vand.u32 %v3611, 65535
      %v3613 = vshra.s32 %v3611, 16
      %v3614 = vcvt.s32.f32 %v3612
      %v3615 = vcvt.s32.f32 %v3613
      %3616 = vmin.xlane.f32.xlu0 %v3615
      %v3617 = vpop.xlane.xlu0 %3616
      %vm3618 = vcmp.eq.f32.partialorder %v3615, %v3617
      %v3619 = vsel %vm3618, %v3614, inf
      %3620 = vmin.xlane.f32.xlu0 %v3619
      %v3621 = vpop.xlane.xlu0 %3620
      %v3622 = vcvt.f32.s32 %v3621
      %v3623 = vcvt.f32.s32 %v3617
      %v3624 = vshll.u32 %v3623, 16
      %v3625 = vadd.s32 %v3624, %v3622
      %v3626 = vsel %vm1409, %v3258, 2147483647
      %v3627 = vand.u32 %v3626, 65535
      %v3628 = vshra.s32 %v3626, 16
      %v3629 = vcvt.s32.f32 %v3627
      %v3630 = vcvt.s32.f32 %v3628
      %3631 = vmin.xlane.f32.xlu0 %v3630
      %v3632 = vpop.xlane.xlu0 %3631
      %vm3633 = vcmp.eq.f32.partialorder %v3630, %v3632
      %v3634 = vsel %vm3633, %v3629, inf
      %3635 = vmin.xlane.f32.xlu0 %v3634
      %v3636 = vpop.xlane.xlu0 %3635
      %v3637 = vcvt.f32.s32 %v3636
      %v3638 = vcvt.f32.s32 %v3632
      %v3639 = vshll.u32 %v3638, 16
      %v3640 = vadd.s32 %v3639, %v3637
      %v3641 = vsel %vm1409, %v3259, 2147483647
      %v3642 = vand.u32 %v3641, 65535
      %v3643 = vshra.s32 %v3641, 16
      %v3644 = vcvt.s32.f32 %v3642
      %v3645 = vcvt.s32.f32 %v3643
      %3646 = vmin.xlane.f32.xlu0 %v3645
      %v3647 = vpop.xlane.xlu0 %3646
      %vm3648 = vcmp.eq.f32.partialorder %v3645, %v3647
      %v3649 = vsel %vm3648, %v3644, inf
      %3650 = vmin.xlane.f32.xlu0 %v3649
      %v3651 = vpop.xlane.xlu0 %3650
      %v3652 = vcvt.f32.s32 %v3651
      %v3653 = vcvt.f32.s32 %v3647
      %v3654 = vshll.u32 %v3653, 16
      %v3655 = vadd.s32 %v3654, %v3652
      %v3656 = vsel %vm1409, %v3260, 2147483647
      %v3657 = vand.u32 %v3656, 65535
      %v3658 = vshra.s32 %v3656, 16
      %v3659 = vcvt.s32.f32 %v3657
      %v3660 = vcvt.s32.f32 %v3658
      %3661 = vmin.xlane.f32.xlu0 %v3660
      %v3662 = vpop.xlane.xlu0 %3661
      %vm3663 = vcmp.eq.f32.partialorder %v3660, %v3662
      %v3664 = vsel %vm3663, %v3659, inf
      %3665 = vmin.xlane.f32.xlu0 %v3664
      %v3666 = vpop.xlane.xlu0 %3665
      %v3667 = vcvt.f32.s32 %v3666
      %v3668 = vcvt.f32.s32 %v3662
      %v3669 = vshll.u32 %v3668, 16
      %v3670 = vadd.s32 %v3669, %v3667
      %v3671 = vsel %vm1409, %v3261, 2147483647
      %v3672 = vand.u32 %v3671, 65535
      %v3673 = vshra.s32 %v3671, 16
      %v3674 = vcvt.s32.f32 %v3672
      %v3675 = vcvt.s32.f32 %v3673
      %3676 = vmin.xlane.f32.xlu0 %v3675
      %v3677 = vpop.xlane.xlu0 %3676
      %vm3678 = vcmp.eq.f32.partialorder %v3675, %v3677
      %v3679 = vsel %vm3678, %v3674, inf
      %3680 = vmin.xlane.f32.xlu0 %v3679
      %v3681 = vpop.xlane.xlu0 %3680
      %v3682 = vcvt.f32.s32 %v3681
      %v3683 = vcvt.f32.s32 %v3677
      %v3684 = vshll.u32 %v3683, 16
      %v3685 = vadd.s32 %v3684, %v3682
      %v3686 = vsel %vm1409, %v3262, 2147483647
      %v3687 = vand.u32 %v3686, 65535
      %v3688 = vshra.s32 %v3686, 16
      %v3689 = vcvt.s32.f32 %v3687
      %v3690 = vcvt.s32.f32 %v3688
      %3691 = vmin.xlane.f32.xlu0 %v3690
      %v3692 = vpop.xlane.xlu0 %3691
      %vm3693 = vcmp.eq.f32.partialorder %v3690, %v3692
      %v3694 = vsel %vm3693, %v3689, inf
      %3695 = vmin.xlane.f32.xlu0 %v3694
      %v3696 = vpop.xlane.xlu0 %3695
      %v3697 = vcvt.f32.s32 %v3696
      %v3698 = vcvt.f32.s32 %v3692
      %v3699 = vshll.u32 %v3698, 16
      %v3700 = vadd.s32 %v3699, %v3697
      %v3701 = vsel %vm1409, %v3263, 2147483647
      %v3702 = vand.u32 %v3701, 65535
      %v3703 = vshra.s32 %v3701, 16
      %v3704 = vcvt.s32.f32 %v3702
      %v3705 = vcvt.s32.f32 %v3703
      %3706 = vmin.xlane.f32.xlu0 %v3705
      %v3707 = vpop.xlane.xlu0 %3706
      %vm3708 = vcmp.eq.f32.partialorder %v3705, %v3707
      %v3709 = vsel %vm3708, %v3704, inf
      %3710 = vmin.xlane.f32.xlu0 %v3709
      %v3711 = vpop.xlane.xlu0 %3710
      %v3712 = vcvt.f32.s32 %v3711
      %v3713 = vcvt.f32.s32 %v3707
      %v3714 = vshll.u32 %v3713, 16
      %v3715 = vadd.s32 %v3714, %v3712
      %v3716 = vsel %vm1409, %v3264, 2147483647
      %v3717 = vand.u32 %v3716, 65535
      %v3718 = vshra.s32 %v3716, 16
      %v3719 = vcvt.s32.f32 %v3717
      %v3720 = vcvt.s32.f32 %v3718
      %3721 = vmin.xlane.f32.xlu0 %v3720
      %v3722 = vpop.xlane.xlu0 %3721
      %vm3723 = vcmp.eq.f32.partialorder %v3720, %v3722
      %v3724 = vsel %vm3723, %v3719, inf
      %3725 = vmin.xlane.f32.xlu0 %v3724
      %v3726 = vpop.xlane.xlu0 %3725
      %v3727 = vcvt.f32.s32 %v3726
      %v3728 = vcvt.f32.s32 %v3722
      %v3729 = vshll.u32 %v3728, 16
      %v3730 = vadd.s32 %v3729, %v3727
      %v3731 = vsel %vm1409, %v3265, 2147483647
      %v3732 = vand.u32 %v3731, 65535
      %v3733 = vshra.s32 %v3731, 16
      %v3734 = vcvt.s32.f32 %v3732
      %v3735 = vcvt.s32.f32 %v3733
      %3736 = vmin.xlane.f32.xlu0 %v3735
      %v3737 = vpop.xlane.xlu0 %3736
      %vm3738 = vcmp.eq.f32.partialorder %v3735, %v3737
      %v3739 = vsel %vm3738, %v3734, inf
      %3740 = vmin.xlane.f32.xlu0 %v3739
      %v3741 = vpop.xlane.xlu0 %3740
      %v3742 = vcvt.f32.s32 %v3741
      %v3743 = vcvt.f32.s32 %v3737
      %v3744 = vshll.u32 %v3743, 16
      %v3745 = vadd.s32 %v3744, %v3742
      %vm3746 = vcmp.eq.s32.totalorder %v1408, %v3280
      %vm3747 = vcmp.eq.s32.totalorder %v1408, %v3295
      %vm3748 = vcmp.eq.s32.totalorder %v1408, %v3310
      %vm3749 = vcmp.eq.s32.totalorder %v1408, %v3325
      %vm3750 = vcmp.eq.s32.totalorder %v1408, %v3340
      %vm3751 = vcmp.eq.s32.totalorder %v1408, %v3355
      %vm3752 = vcmp.eq.s32.totalorder %v1408, %v3370
      %vm3753 = vcmp.eq.s32.totalorder %v1408, %v3385
      %vm3754 = vcmp.eq.s32.totalorder %v1408, %v3400
      %vm3755 = vcmp.eq.s32.totalorder %v1408, %v3415
      %vm3756 = vcmp.eq.s32.totalorder %v1408, %v3430
      %vm3757 = vcmp.eq.s32.totalorder %v1408, %v3445
      %vm3758 = vcmp.eq.s32.totalorder %v1408, %v3460
      %vm3759 = vcmp.eq.s32.totalorder %v1408, %v3475
      %vm3760 = vcmp.eq.s32.totalorder %v1408, %v3490
      %vm3761 = vcmp.eq.s32.totalorder %v1408, %v3505
      %vm3762 = vcmp.eq.s32.totalorder %v1408, %v3520
      %vm3763 = vcmp.eq.s32.totalorder %v1408, %v3535
      %vm3764 = vcmp.eq.s32.totalorder %v1408, %v3550
      %vm3765 = vcmp.eq.s32.totalorder %v1408, %v3565
      %vm3766 = vcmp.eq.s32.totalorder %v1408, %v3580
      %vm3767 = vcmp.eq.s32.totalorder %v1408, %v3595
      %vm3768 = vcmp.eq.s32.totalorder %v1408, %v3610
      %vm3769 = vcmp.eq.s32.totalorder %v1408, %v3625
      %vm3770 = vcmp.eq.s32.totalorder %v1408, %v3640
      %vm3771 = vcmp.eq.s32.totalorder %v1408, %v3655
      %vm3772 = vcmp.eq.s32.totalorder %v1408, %v3670
      %vm3773 = vcmp.eq.s32.totalorder %v1408, %v3685
      %vm3774 = vcmp.eq.s32.totalorder %v1408, %v3700
      %vm3775 = vcmp.eq.s32.totalorder %v1408, %v3715
      %vm3776 = vcmp.eq.s32.totalorder %v1408, %v3730
      %vm3777 = vcmp.eq.s32.totalorder %v1408, %v3745
      %v3778 = vrsqrt.pop %v3108
      %v3779 = vmul.f32 %v3778, %v3108
      %v3780 = vmul.f32 %v3779, %v3778
      %v3781 = vmul.f32 0.5, %v3780
      %v3782 = vsub.f32 1.5, %v3781
      %v3783 = vmul.f32 %v3778, %v3782
      %v3784 = vmul.f32 %v3108, %v3783
      %vm3785 = vcmp.eq.f32.partialorder %v3108, inf
      %v3786 = vsel %vm3785, %v3108, %v3784
      %vm3787 = vcmp.eq.f32.partialorder %v3108, 0.0
      %v3788 = vand.u32 %v3108, 2147483648
      %v3789 = vsel %vm3787, %v3788, %v3786
      %v3790 = vrsqrt.pop %v3111
      %v3791 = vmul.f32 %v3790, %v3111
      %v3792 = vmul.f32 %v3791, %v3790
      %v3793 = vmul.f32 0.5, %v3792
      %v3794 = vsub.f32 1.5, %v3793
      %v3795 = vmul.f32 %v3790, %v3794
      %v3796 = vmul.f32 %v3111, %v3795
      %vm3797 = vcmp.eq.f32.partialorder %v3111, inf
      %v3798 = vsel %vm3797, %v3111, %v3796
      %vm3799 = vcmp.eq.f32.partialorder %v3111, 0.0
      %v3800 = vand.u32 %v3111, 2147483648
      %v3801 = vsel %vm3799, %v3800, %v3798
      %v3802 = vrsqrt.pop %v3114
      %v3803 = vmul.f32 %v3802, %v3114
      %v3804 = vmul.f32 %v3803, %v3802
      %v3805 = vmul.f32 0.5, %v3804
      %v3806 = vsub.f32 1.5, %v3805
      %v3807 = vmul.f32 %v3802, %v3806
      %v3808 = vmul.f32 %v3114, %v3807
      %vm3809 = vcmp.eq.f32.partialorder %v3114, inf
      %v3810 = vsel %vm3809, %v3114, %v3808
      %vm3811 = vcmp.eq.f32.partialorder %v3114, 0.0
      %v3812 = vand.u32 %v3114, 2147483648
      %v3813 = vsel %vm3811, %v3812, %v3810
      %v3814 = vrsqrt.pop %v3117
      %v3815 = vmul.f32 %v3814, %v3117
      %v3816 = vmul.f32 %v3815, %v3814
      %v3817 = vmul.f32 0.5, %v3816
      %v3818 = vsub.f32 1.5, %v3817
      %v3819 = vmul.f32 %v3814, %v3818
      %v3820 = vmul.f32 %v3117, %v3819
      %vm3821 = vcmp.eq.f32.partialorder %v3117, inf
      %v3822 = vsel %vm3821, %v3117, %v3820
      %vm3823 = vcmp.eq.f32.partialorder %v3117, 0.0
      %v3824 = vand.u32 %v3117, 2147483648
      %v3825 = vsel %vm3823, %v3824, %v3822
      %v3826 = vrsqrt.pop %v3120
      %v3827 = vmul.f32 %v3826, %v3120
      %v3828 = vmul.f32 %v3827, %v3826
      %v3829 = vmul.f32 0.5, %v3828
      %v3830 = vsub.f32 1.5, %v3829
      %v3831 = vmul.f32 %v3826, %v3830
      %v3832 = vmul.f32 %v3120, %v3831
      %vm3833 = vcmp.eq.f32.partialorder %v3120, inf
      %v3834 = vsel %vm3833, %v3120, %v3832
      %vm3835 = vcmp.eq.f32.partialorder %v3120, 0.0
      %v3836 = vand.u32 %v3120, 2147483648
      %v3837 = vsel %vm3835, %v3836, %v3834
      %v3838 = vrsqrt.pop %v3123
      %v3839 = vmul.f32 %v3838, %v3123
      %v3840 = vmul.f32 %v3839, %v3838
      %v3841 = vmul.f32 0.5, %v3840
      %v3842 = vsub.f32 1.5, %v3841
      %v3843 = vmul.f32 %v3838, %v3842
      %v3844 = vmul.f32 %v3123, %v3843
      %vm3845 = vcmp.eq.f32.partialorder %v3123, inf
      %v3846 = vsel %vm3845, %v3123, %v3844
      %vm3847 = vcmp.eq.f32.partialorder %v3123, 0.0
      %v3848 = vand.u32 %v3123, 2147483648
      %v3849 = vsel %vm3847, %v3848, %v3846
      %v3850 = vrsqrt.pop %v3126
      %v3851 = vmul.f32 %v3850, %v3126
      %v3852 = vmul.f32 %v3851, %v3850
      %v3853 = vmul.f32 0.5, %v3852
      %v3854 = vsub.f32 1.5, %v3853
      %v3855 = vmul.f32 %v3850, %v3854
      %v3856 = vmul.f32 %v3126, %v3855
      %vm3857 = vcmp.eq.f32.partialorder %v3126, inf
      %v3858 = vsel %vm3857, %v3126, %v3856
      %vm3859 = vcmp.eq.f32.partialorder %v3126, 0.0
      %v3860 = vand.u32 %v3126, 2147483648
      %v3861 = vsel %vm3859, %v3860, %v3858
      %v3862 = vrsqrt.pop %v3129
      %v3863 = vmul.f32 %v3862, %v3129
      %v3864 = vmul.f32 %v3863, %v3862
      %v3865 = vmul.f32 0.5, %v3864
      %v3866 = vsub.f32 1.5, %v3865
      %v3867 = vmul.f32 %v3862, %v3866
      %v3868 = vmul.f32 %v3129, %v3867
      %vm3869 = vcmp.eq.f32.partialorder %v3129, inf
      %v3870 = vsel %vm3869, %v3129, %v3868
      %vm3871 = vcmp.eq.f32.partialorder %v3129, 0.0
      %v3872 = vand.u32 %v3129, 2147483648
      %v3873 = vsel %vm3871, %v3872, %v3870
      %v3874 = vrsqrt.pop %v3132
      %v3875 = vmul.f32 %v3874, %v3132
      %v3876 = vmul.f32 %v3875, %v3874
      %v3877 = vmul.f32 0.5, %v3876
      %v3878 = vsub.f32 1.5, %v3877
      %v3879 = vmul.f32 %v3874, %v3878
      %v3880 = vmul.f32 %v3132, %v3879
      %vm3881 = vcmp.eq.f32.partialorder %v3132, inf
      %v3882 = vsel %vm3881, %v3132, %v3880
      %vm3883 = vcmp.eq.f32.partialorder %v3132, 0.0
      %v3884 = vand.u32 %v3132, 2147483648
      %v3885 = vsel %vm3883, %v3884, %v3882
      %v3886 = vrsqrt.pop %v3135
      %v3887 = vmul.f32 %v3886, %v3135
      %v3888 = vmul.f32 %v3887, %v3886
      %v3889 = vmul.f32 0.5, %v3888
      %v3890 = vsub.f32 1.5, %v3889
      %v3891 = vmul.f32 %v3886, %v3890
      %v3892 = vmul.f32 %v3135, %v3891
      %vm3893 = vcmp.eq.f32.partialorder %v3135, inf
      %v3894 = vsel %vm3893, %v3135, %v3892
      %vm3895 = vcmp.eq.f32.partialorder %v3135, 0.0
      %v3896 = vand.u32 %v3135, 2147483648
      %v3897 = vsel %vm3895, %v3896, %v3894
      %v3898 = vrsqrt.pop %v3138
      %v3899 = vmul.f32 %v3898, %v3138
      %v3900 = vmul.f32 %v3899, %v3898
      %v3901 = vmul.f32 0.5, %v3900
      %v3902 = vsub.f32 1.5, %v3901
      %v3903 = vmul.f32 %v3898, %v3902
      %v3904 = vmul.f32 %v3138, %v3903
      %vm3905 = vcmp.eq.f32.partialorder %v3138, inf
      %v3906 = vsel %vm3905, %v3138, %v3904
      %vm3907 = vcmp.eq.f32.partialorder %v3138, 0.0
      %v3908 = vand.u32 %v3138, 2147483648
      %v3909 = vsel %vm3907, %v3908, %v3906
      %v3910 = vrsqrt.pop %v3141
      %v3911 = vmul.f32 %v3910, %v3141
      %v3912 = vmul.f32 %v3911, %v3910
      %v3913 = vmul.f32 0.5, %v3912
      %v3914 = vsub.f32 1.5, %v3913
      %v3915 = vmul.f32 %v3910, %v3914
      %v3916 = vmul.f32 %v3141, %v3915
      %vm3917 = vcmp.eq.f32.partialorder %v3141, inf
      %v3918 = vsel %vm3917, %v3141, %v3916
      %vm3919 = vcmp.eq.f32.partialorder %v3141, 0.0
      %v3920 = vand.u32 %v3141, 2147483648
      %v3921 = vsel %vm3919, %v3920, %v3918
      %v3922 = vrsqrt.pop %v3144
      %v3923 = vmul.f32 %v3922, %v3144
      %v3924 = vmul.f32 %v3923, %v3922
      %v3925 = vmul.f32 0.5, %v3924
      %v3926 = vsub.f32 1.5, %v3925
      %v3927 = vmul.f32 %v3922, %v3926
      %v3928 = vmul.f32 %v3144, %v3927
      %vm3929 = vcmp.eq.f32.partialorder %v3144, inf
      %v3930 = vsel %vm3929, %v3144, %v3928
      %vm3931 = vcmp.eq.f32.partialorder %v3144, 0.0
      %v3932 = vand.u32 %v3144, 2147483648
      %v3933 = vsel %vm3931, %v3932, %v3930
      %v3934 = vrsqrt.pop %v3147
      %v3935 = vmul.f32 %v3934, %v3147
      %v3936 = vmul.f32 %v3935, %v3934
      %v3937 = vmul.f32 0.5, %v3936
      %v3938 = vsub.f32 1.5, %v3937
      %v3939 = vmul.f32 %v3934, %v3938
      %v3940 = vmul.f32 %v3147, %v3939
      %vm3941 = vcmp.eq.f32.partialorder %v3147, inf
      %v3942 = vsel %vm3941, %v3147, %v3940
      %vm3943 = vcmp.eq.f32.partialorder %v3147, 0.0
      %v3944 = vand.u32 %v3147, 2147483648
      %v3945 = vsel %vm3943, %v3944, %v3942
      %v3946 = vrsqrt.pop %v3150
      %v3947 = vmul.f32 %v3946, %v3150
      %v3948 = vmul.f32 %v3947, %v3946
      %v3949 = vmul.f32 0.5, %v3948
      %v3950 = vsub.f32 1.5, %v3949
      %v3951 = vmul.f32 %v3946, %v3950
      %v3952 = vmul.f32 %v3150, %v3951
      %vm3953 = vcmp.eq.f32.partialorder %v3150, inf
      %v3954 = vsel %vm3953, %v3150, %v3952
      %vm3955 = vcmp.eq.f32.partialorder %v3150, 0.0
      %v3956 = vand.u32 %v3150, 2147483648
      %v3957 = vsel %vm3955, %v3956, %v3954
      %v3958 = vrsqrt.pop %v3153
      %v3959 = vmul.f32 %v3958, %v3153
      %v3960 = vmul.f32 %v3959, %v3958
      %v3961 = vmul.f32 0.5, %v3960
      %v3962 = vsub.f32 1.5, %v3961
      %v3963 = vmul.f32 %v3958, %v3962
      %v3964 = vmul.f32 %v3153, %v3963
      %vm3965 = vcmp.eq.f32.partialorder %v3153, inf
      %v3966 = vsel %vm3965, %v3153, %v3964
      %vm3967 = vcmp.eq.f32.partialorder %v3153, 0.0
      %v3968 = vand.u32 %v3153, 2147483648
      %v3969 = vsel %vm3967, %v3968, %v3966
      %v3970 = vrsqrt.pop %v3156
      %v3971 = vmul.f32 %v3970, %v3156
      %v3972 = vmul.f32 %v3971, %v3970
      %v3973 = vmul.f32 0.5, %v3972
      %v3974 = vsub.f32 1.5, %v3973
      %v3975 = vmul.f32 %v3970, %v3974
      %v3976 = vmul.f32 %v3156, %v3975
      %vm3977 = vcmp.eq.f32.partialorder %v3156, inf
      %v3978 = vsel %vm3977, %v3156, %v3976
      %vm3979 = vcmp.eq.f32.partialorder %v3156, 0.0
      %v3980 = vand.u32 %v3156, 2147483648
      %v3981 = vsel %vm3979, %v3980, %v3978
      %v3982 = vrsqrt.pop %v3159
      %v3983 = vmul.f32 %v3982, %v3159
      %v3984 = vmul.f32 %v3983, %v3982
      %v3985 = vmul.f32 0.5, %v3984
      %v3986 = vsub.f32 1.5, %v3985
      %v3987 = vmul.f32 %v3982, %v3986
      %v3988 = vmul.f32 %v3159, %v3987
      %vm3989 = vcmp.eq.f32.partialorder %v3159, inf
      %v3990 = vsel %vm3989, %v3159, %v3988
      %vm3991 = vcmp.eq.f32.partialorder %v3159, 0.0
      %v3992 = vand.u32 %v3159, 2147483648
      %v3993 = vsel %vm3991, %v3992, %v3990
      %v3994 = vrsqrt.pop %v3162
      %v3995 = vmul.f32 %v3994, %v3162
      %v3996 = vmul.f32 %v3995, %v3994
      %v3997 = vmul.f32 0.5, %v3996
      %v3998 = vsub.f32 1.5, %v3997
      %v3999 = vmul.f32 %v3994, %v3998
      %v4000 = vmul.f32 %v3162, %v3999
      %vm4001 = vcmp.eq.f32.partialorder %v3162, inf
      %v4002 = vsel %vm4001, %v3162, %v4000
      %vm4003 = vcmp.eq.f32.partialorder %v3162, 0.0
      %v4004 = vand.u32 %v3162, 2147483648
      %v4005 = vsel %vm4003, %v4004, %v4002
      %v4006 = vrsqrt.pop %v3165
      %v4007 = vmul.f32 %v4006, %v3165
      %v4008 = vmul.f32 %v4007, %v4006
      %v4009 = vmul.f32 0.5, %v4008
      %v4010 = vsub.f32 1.5, %v4009
      %v4011 = vmul.f32 %v4006, %v4010
      %v4012 = vmul.f32 %v3165, %v4011
      %vm4013 = vcmp.eq.f32.partialorder %v3165, inf
      %v4014 = vsel %vm4013, %v3165, %v4012
      %vm4015 = vcmp.eq.f32.partialorder %v3165, 0.0
      %v4016 = vand.u32 %v3165, 2147483648
      %v4017 = vsel %vm4015, %v4016, %v4014
      %v4018 = vrsqrt.pop %v3168
      %v4019 = vmul.f32 %v4018, %v3168
      %v4020 = vmul.f32 %v4019, %v4018
      %v4021 = vmul.f32 0.5, %v4020
      %v4022 = vsub.f32 1.5, %v4021
      %v4023 = vmul.f32 %v4018, %v4022
      %v4024 = vmul.f32 %v3168, %v4023
      %vm4025 = vcmp.eq.f32.partialorder %v3168, inf
      %v4026 = vsel %vm4025, %v3168, %v4024
      %vm4027 = vcmp.eq.f32.partialorder %v3168, 0.0
      %v4028 = vand.u32 %v3168, 2147483648
      %v4029 = vsel %vm4027, %v4028, %v4026
      %v4030 = vrsqrt.pop %v3171
      %v4031 = vmul.f32 %v4030, %v3171
      %v4032 = vmul.f32 %v4031, %v4030
      %v4033 = vmul.f32 0.5, %v4032
      %v4034 = vsub.f32 1.5, %v4033
      %v4035 = vmul.f32 %v4030, %v4034
      %v4036 = vmul.f32 %v3171, %v4035
      %vm4037 = vcmp.eq.f32.partialorder %v3171, inf
      %v4038 = vsel %vm4037, %v3171, %v4036
      %vm4039 = vcmp.eq.f32.partialorder %v3171, 0.0
      %v4040 = vand.u32 %v3171, 2147483648
      %v4041 = vsel %vm4039, %v4040, %v4038
      %v4042 = vrsqrt.pop %v3174
      %v4043 = vmul.f32 %v4042, %v3174
      %v4044 = vmul.f32 %v4043, %v4042
      %v4045 = vmul.f32 0.5, %v4044
      %v4046 = vsub.f32 1.5, %v4045
      %v4047 = vmul.f32 %v4042, %v4046
      %v4048 = vmul.f32 %v3174, %v4047
      %vm4049 = vcmp.eq.f32.partialorder %v3174, inf
      %v4050 = vsel %vm4049, %v3174, %v4048
      %vm4051 = vcmp.eq.f32.partialorder %v3174, 0.0
      %v4052 = vand.u32 %v3174, 2147483648
      %v4053 = vsel %vm4051, %v4052, %v4050
      %v4054 = vrsqrt.pop %v3177
      %v4055 = vmul.f32 %v4054, %v3177
      %v4056 = vmul.f32 %v4055, %v4054
      %v4057 = vmul.f32 0.5, %v4056
      %v4058 = vsub.f32 1.5, %v4057
      %v4059 = vmul.f32 %v4054, %v4058
      %v4060 = vmul.f32 %v3177, %v4059
      %vm4061 = vcmp.eq.f32.partialorder %v3177, inf
      %v4062 = vsel %vm4061, %v3177, %v4060
      %vm4063 = vcmp.eq.f32.partialorder %v3177, 0.0
      %v4064 = vand.u32 %v3177, 2147483648
      %v4065 = vsel %vm4063, %v4064, %v4062
      %v4066 = vrsqrt.pop %v3180
      %v4067 = vmul.f32 %v4066, %v3180
      %v4068 = vmul.f32 %v4067, %v4066
      %v4069 = vmul.f32 0.5, %v4068
      %v4070 = vsub.f32 1.5, %v4069
      %v4071 = vmul.f32 %v4066, %v4070
      %v4072 = vmul.f32 %v3180, %v4071
      %vm4073 = vcmp.eq.f32.partialorder %v3180, inf
      %v4074 = vsel %vm4073, %v3180, %v4072
      %vm4075 = vcmp.eq.f32.partialorder %v3180, 0.0
      %v4076 = vand.u32 %v3180, 2147483648
      %v4077 = vsel %vm4075, %v4076, %v4074
      %v4078 = vrsqrt.pop %v3183
      %v4079 = vmul.f32 %v4078, %v3183
      %v4080 = vmul.f32 %v4079, %v4078
      %v4081 = vmul.f32 0.5, %v4080
      %v4082 = vsub.f32 1.5, %v4081
      %v4083 = vmul.f32 %v4078, %v4082
      %v4084 = vmul.f32 %v3183, %v4083
      %vm4085 = vcmp.eq.f32.partialorder %v3183, inf
      %v4086 = vsel %vm4085, %v3183, %v4084
      %vm4087 = vcmp.eq.f32.partialorder %v3183, 0.0
      %v4088 = vand.u32 %v3183, 2147483648
      %v4089 = vsel %vm4087, %v4088, %v4086
      %v4090 = vrsqrt.pop %v3186
      %v4091 = vmul.f32 %v4090, %v3186
      %v4092 = vmul.f32 %v4091, %v4090
      %v4093 = vmul.f32 0.5, %v4092
      %v4094 = vsub.f32 1.5, %v4093
      %v4095 = vmul.f32 %v4090, %v4094
      %v4096 = vmul.f32 %v3186, %v4095
      %vm4097 = vcmp.eq.f32.partialorder %v3186, inf
      %v4098 = vsel %vm4097, %v3186, %v4096
      %vm4099 = vcmp.eq.f32.partialorder %v3186, 0.0
      %v4100 = vand.u32 %v3186, 2147483648
      %v4101 = vsel %vm4099, %v4100, %v4098
      %v4102 = vrsqrt.pop %v3189
      %v4103 = vmul.f32 %v4102, %v3189
      %v4104 = vmul.f32 %v4103, %v4102
      %v4105 = vmul.f32 0.5, %v4104
      %v4106 = vsub.f32 1.5, %v4105
      %v4107 = vmul.f32 %v4102, %v4106
      %v4108 = vmul.f32 %v3189, %v4107
      %vm4109 = vcmp.eq.f32.partialorder %v3189, inf
      %v4110 = vsel %vm4109, %v3189, %v4108
      %vm4111 = vcmp.eq.f32.partialorder %v3189, 0.0
      %v4112 = vand.u32 %v3189, 2147483648
      %v4113 = vsel %vm4111, %v4112, %v4110
      %v4114 = vrsqrt.pop %v3192
      %v4115 = vmul.f32 %v4114, %v3192
      %v4116 = vmul.f32 %v4115, %v4114
      %v4117 = vmul.f32 0.5, %v4116
      %v4118 = vsub.f32 1.5, %v4117
      %v4119 = vmul.f32 %v4114, %v4118
      %v4120 = vmul.f32 %v3192, %v4119
      %vm4121 = vcmp.eq.f32.partialorder %v3192, inf
      %v4122 = vsel %vm4121, %v3192, %v4120
      %vm4123 = vcmp.eq.f32.partialorder %v3192, 0.0
      %v4124 = vand.u32 %v3192, 2147483648
      %v4125 = vsel %vm4123, %v4124, %v4122
      %v4126 = vrsqrt.pop %v3195
      %v4127 = vmul.f32 %v4126, %v3195
      %v4128 = vmul.f32 %v4127, %v4126
      %v4129 = vmul.f32 0.5, %v4128
      %v4130 = vsub.f32 1.5, %v4129
      %v4131 = vmul.f32 %v4126, %v4130
      %v4132 = vmul.f32 %v3195, %v4131
      %vm4133 = vcmp.eq.f32.partialorder %v3195, inf
      %v4134 = vsel %vm4133, %v3195, %v4132
      %vm4135 = vcmp.eq.f32.partialorder %v3195, 0.0
      %v4136 = vand.u32 %v3195, 2147483648
      %v4137 = vsel %vm4135, %v4136, %v4134
      %v4138 = vrsqrt.pop %v3198
      %v4139 = vmul.f32 %v4138, %v3198
      %v4140 = vmul.f32 %v4139, %v4138
      %v4141 = vmul.f32 0.5, %v4140
      %v4142 = vsub.f32 1.5, %v4141
      %v4143 = vmul.f32 %v4138, %v4142
      %v4144 = vmul.f32 %v3198, %v4143
      %vm4145 = vcmp.eq.f32.partialorder %v3198, inf
      %v4146 = vsel %vm4145, %v3198, %v4144
      %vm4147 = vcmp.eq.f32.partialorder %v3198, 0.0
      %v4148 = vand.u32 %v3198, 2147483648
      %v4149 = vsel %vm4147, %v4148, %v4146
      %v4150 = vrsqrt.pop %v3201
      %v4151 = vmul.f32 %v4150, %v3201
      %v4152 = vmul.f32 %v4151, %v4150
      %v4153 = vmul.f32 0.5, %v4152
      %v4154 = vsub.f32 1.5, %v4153
      %v4155 = vmul.f32 %v4150, %v4154
      %v4156 = vmul.f32 %v3201, %v4155
      %vm4157 = vcmp.eq.f32.partialorder %v3201, inf
      %v4158 = vsel %vm4157, %v3201, %v4156
      %vm4159 = vcmp.eq.f32.partialorder %v3201, 0.0
      %v4160 = vand.u32 %v3201, 2147483648
      %v4161 = vsel %vm4159, %v4160, %v4158
      %v4162 = vadd.f32 %v3789, 1e-08
      %v4163 = vadd.f32 %v3801, 1e-08
      %v4164 = vadd.f32 %v3813, 1e-08
      %v4165 = vadd.f32 %v3825, 1e-08
      %v4166 = vadd.f32 %v3837, 1e-08
      %v4167 = vadd.f32 %v3849, 1e-08
      %v4168 = vadd.f32 %v3861, 1e-08
      %v4169 = vadd.f32 %v3873, 1e-08
      %v4170 = vadd.f32 %v3885, 1e-08
      %v4171 = vadd.f32 %v3897, 1e-08
      %v4172 = vadd.f32 %v3909, 1e-08
      %v4173 = vadd.f32 %v3921, 1e-08
      %v4174 = vadd.f32 %v3933, 1e-08
      %v4175 = vadd.f32 %v3945, 1e-08
      %v4176 = vadd.f32 %v3957, 1e-08
      %v4177 = vadd.f32 %v3969, 1e-08
      %v4178 = vadd.f32 %v3981, 1e-08
      %v4179 = vadd.f32 %v3993, 1e-08
      %v4180 = vadd.f32 %v4005, 1e-08
      %v4181 = vadd.f32 %v4017, 1e-08
      %v4182 = vadd.f32 %v4029, 1e-08
      %v4183 = vadd.f32 %v4041, 1e-08
      %v4184 = vadd.f32 %v4053, 1e-08
      %v4185 = vadd.f32 %v4065, 1e-08
      %v4186 = vadd.f32 %v4077, 1e-08
      %v4187 = vadd.f32 %v4089, 1e-08
      %v4188 = vadd.f32 %v4101, 1e-08
      %v4189 = vadd.f32 %v4113, 1e-08
      %v4190 = vadd.f32 %v4125, 1e-08
      %v4191 = vadd.f32 %v4137, 1e-08
      %v4192 = vadd.f32 %v4149, 1e-08
      %v4193 = vadd.f32 %v4161, 1e-08
      %v4194 = vrcp.pop %v4162
      %v4195 = vmul.f32 %v4162, %v4194
      %v4196 = vsub.f32 1.0, %v4195
      %v4197 = vmul.f32 %v4194, %v4196
      %v4198 = vadd.f32 %v4194, %v4197
      %vm4199 = vweird.f32 %v4162
      %vm4200 = vweird.f32 %v4194
      %vm4201 = vmor %vm4199, %vm4200
      %v4202 = vsel %vm4201, %v4194, %v4198
      %v4203 = vand.u32 2147483647, %v4162
      %vm4204 = vcmp.eq.f32.partialorder %v4203, 8.507059e+37
      %v4205 = vand.u32 %v4162, 2147483648
      %v4206 = vor.u32 1.1754944e-38, %v4205
      %v4207 = vsel %vm4204, %v4206, %v4202
      %v4208 = vmul.f32 1.0, %v4207
      %v4209 = vrcp.pop %v4163
      %v4210 = vmul.f32 %v4163, %v4209
      %v4211 = vsub.f32 1.0, %v4210
      %v4212 = vmul.f32 %v4209, %v4211
      %v4213 = vadd.f32 %v4209, %v4212
      %vm4214 = vweird.f32 %v4163
      %vm4215 = vweird.f32 %v4209
      %vm4216 = vmor %vm4214, %vm4215
      %v4217 = vsel %vm4216, %v4209, %v4213
      %v4218 = vand.u32 2147483647, %v4163
      %vm4219 = vcmp.eq.f32.partialorder %v4218, 8.507059e+37
      %v4220 = vand.u32 %v4163, 2147483648
      %v4221 = vor.u32 1.1754944e-38, %v4220
      %v4222 = vsel %vm4219, %v4221, %v4217
      %v4223 = vmul.f32 1.0, %v4222
      %v4224 = vrcp.pop %v4164
      %v4225 = vmul.f32 %v4164, %v4224
      %v4226 = vsub.f32 1.0, %v4225
      %v4227 = vmul.f32 %v4224, %v4226
      %v4228 = vadd.f32 %v4224, %v4227
      %vm4229 = vweird.f32 %v4164
      %vm4230 = vweird.f32 %v4224
      %vm4231 = vmor %vm4229, %vm4230
      %v4232 = vsel %vm4231, %v4224, %v4228
      %v4233 = vand.u32 2147483647, %v4164
      %vm4234 = vcmp.eq.f32.partialorder %v4233, 8.507059e+37
      %v4235 = vand.u32 %v4164, 2147483648
      %v4236 = vor.u32 1.1754944e-38, %v4235
      %v4237 = vsel %vm4234, %v4236, %v4232
      %v4238 = vmul.f32 1.0, %v4237
      %v4239 = vrcp.pop %v4165
      %v4240 = vmul.f32 %v4165, %v4239
      %v4241 = vsub.f32 1.0, %v4240
      %v4242 = vmul.f32 %v4239, %v4241
      %v4243 = vadd.f32 %v4239, %v4242
      %vm4244 = vweird.f32 %v4165
      %vm4245 = vweird.f32 %v4239
      %vm4246 = vmor %vm4244, %vm4245
      %v4247 = vsel %vm4246, %v4239, %v4243
      %v4248 = vand.u32 2147483647, %v4165
      %vm4249 = vcmp.eq.f32.partialorder %v4248, 8.507059e+37
      %v4250 = vand.u32 %v4165, 2147483648
      %v4251 = vor.u32 1.1754944e-38, %v4250
      %v4252 = vsel %vm4249, %v4251, %v4247
      %v4253 = vmul.f32 1.0, %v4252
      %v4254 = vrcp.pop %v4166
      %v4255 = vmul.f32 %v4166, %v4254
      %v4256 = vsub.f32 1.0, %v4255
      %v4257 = vmul.f32 %v4254, %v4256
      %v4258 = vadd.f32 %v4254, %v4257
      %vm4259 = vweird.f32 %v4166
      %vm4260 = vweird.f32 %v4254
      %vm4261 = vmor %vm4259, %vm4260
      %v4262 = vsel %vm4261, %v4254, %v4258
      %v4263 = vand.u32 2147483647, %v4166
      %vm4264 = vcmp.eq.f32.partialorder %v4263, 8.507059e+37
      %v4265 = vand.u32 %v4166, 2147483648
      %v4266 = vor.u32 1.1754944e-38, %v4265
      %v4267 = vsel %vm4264, %v4266, %v4262
      %v4268 = vmul.f32 1.0, %v4267
      %v4269 = vrcp.pop %v4167
      %v4270 = vmul.f32 %v4167, %v4269
      %v4271 = vsub.f32 1.0, %v4270
      %v4272 = vmul.f32 %v4269, %v4271
      %v4273 = vadd.f32 %v4269, %v4272
      %vm4274 = vweird.f32 %v4167
      %vm4275 = vweird.f32 %v4269
      %vm4276 = vmor %vm4274, %vm4275
      %v4277 = vsel %vm4276, %v4269, %v4273
      %v4278 = vand.u32 2147483647, %v4167
      %vm4279 = vcmp.eq.f32.partialorder %v4278, 8.507059e+37
      %v4280 = vand.u32 %v4167, 2147483648
      %v4281 = vor.u32 1.1754944e-38, %v4280
      %v4282 = vsel %vm4279, %v4281, %v4277
      %v4283 = vmul.f32 1.0, %v4282
      %v4284 = vrcp.pop %v4168
      %v4285 = vmul.f32 %v4168, %v4284
      %v4286 = vsub.f32 1.0, %v4285
      %v4287 = vmul.f32 %v4284, %v4286
      %v4288 = vadd.f32 %v4284, %v4287
      %vm4289 = vweird.f32 %v4168
      %vm4290 = vweird.f32 %v4284
      %vm4291 = vmor %vm4289, %vm4290
      %v4292 = vsel %vm4291, %v4284, %v4288
      %v4293 = vand.u32 2147483647, %v4168
      %vm4294 = vcmp.eq.f32.partialorder %v4293, 8.507059e+37
      %v4295 = vand.u32 %v4168, 2147483648
      %v4296 = vor.u32 1.1754944e-38, %v4295
      %v4297 = vsel %vm4294, %v4296, %v4292
      %v4298 = vmul.f32 1.0, %v4297
      %v4299 = vrcp.pop %v4169
      %v4300 = vmul.f32 %v4169, %v4299
      %v4301 = vsub.f32 1.0, %v4300
      %v4302 = vmul.f32 %v4299, %v4301
      %v4303 = vadd.f32 %v4299, %v4302
      %vm4304 = vweird.f32 %v4169
      %vm4305 = vweird.f32 %v4299
      %vm4306 = vmor %vm4304, %vm4305
      %v4307 = vsel %vm4306, %v4299, %v4303
      %v4308 = vand.u32 2147483647, %v4169
      %vm4309 = vcmp.eq.f32.partialorder %v4308, 8.507059e+37
      %v4310 = vand.u32 %v4169, 2147483648
      %v4311 = vor.u32 1.1754944e-38, %v4310
      %v4312 = vsel %vm4309, %v4311, %v4307
      %v4313 = vmul.f32 1.0, %v4312
      %v4314 = vrcp.pop %v4170
      %v4315 = vmul.f32 %v4170, %v4314
      %v4316 = vsub.f32 1.0, %v4315
      %v4317 = vmul.f32 %v4314, %v4316
      %v4318 = vadd.f32 %v4314, %v4317
      %vm4319 = vweird.f32 %v4170
      %vm4320 = vweird.f32 %v4314
      %vm4321 = vmor %vm4319, %vm4320
      %v4322 = vsel %vm4321, %v4314, %v4318
      %v4323 = vand.u32 2147483647, %v4170
      %vm4324 = vcmp.eq.f32.partialorder %v4323, 8.507059e+37
      %v4325 = vand.u32 %v4170, 2147483648
      %v4326 = vor.u32 1.1754944e-38, %v4325
      %v4327 = vsel %vm4324, %v4326, %v4322
      %v4328 = vmul.f32 1.0, %v4327
      %v4329 = vrcp.pop %v4171
      %v4330 = vmul.f32 %v4171, %v4329
      %v4331 = vsub.f32 1.0, %v4330
      %v4332 = vmul.f32 %v4329, %v4331
      %v4333 = vadd.f32 %v4329, %v4332
      %vm4334 = vweird.f32 %v4171
      %vm4335 = vweird.f32 %v4329
      %vm4336 = vmor %vm4334, %vm4335
      %v4337 = vsel %vm4336, %v4329, %v4333
      %v4338 = vand.u32 2147483647, %v4171
      %vm4339 = vcmp.eq.f32.partialorder %v4338, 8.507059e+37
      %v4340 = vand.u32 %v4171, 2147483648
      %v4341 = vor.u32 1.1754944e-38, %v4340
      %v4342 = vsel %vm4339, %v4341, %v4337
      %v4343 = vmul.f32 1.0, %v4342
      %v4344 = vrcp.pop %v4172
      %v4345 = vmul.f32 %v4172, %v4344
      %v4346 = vsub.f32 1.0, %v4345
      %v4347 = vmul.f32 %v4344, %v4346
      %v4348 = vadd.f32 %v4344, %v4347
      %vm4349 = vweird.f32 %v4172
      %vm4350 = vweird.f32 %v4344
      %vm4351 = vmor %vm4349, %vm4350
      %v4352 = vsel %vm4351, %v4344, %v4348
      %v4353 = vand.u32 2147483647, %v4172
      %vm4354 = vcmp.eq.f32.partialorder %v4353, 8.507059e+37
      %v4355 = vand.u32 %v4172, 2147483648
      %v4356 = vor.u32 1.1754944e-38, %v4355
      %v4357 = vsel %vm4354, %v4356, %v4352
      %v4358 = vmul.f32 1.0, %v4357
      %v4359 = vrcp.pop %v4173
      %v4360 = vmul.f32 %v4173, %v4359
      %v4361 = vsub.f32 1.0, %v4360
      %v4362 = vmul.f32 %v4359, %v4361
      %v4363 = vadd.f32 %v4359, %v4362
      %vm4364 = vweird.f32 %v4173
      %vm4365 = vweird.f32 %v4359
      %vm4366 = vmor %vm4364, %vm4365
      %v4367 = vsel %vm4366, %v4359, %v4363
      %v4368 = vand.u32 2147483647, %v4173
      %vm4369 = vcmp.eq.f32.partialorder %v4368, 8.507059e+37
      %v4370 = vand.u32 %v4173, 2147483648
      %v4371 = vor.u32 1.1754944e-38, %v4370
      %v4372 = vsel %vm4369, %v4371, %v4367
      %v4373 = vmul.f32 1.0, %v4372
      %v4374 = vrcp.pop %v4174
      %v4375 = vmul.f32 %v4174, %v4374
      %v4376 = vsub.f32 1.0, %v4375
      %v4377 = vmul.f32 %v4374, %v4376
      %v4378 = vadd.f32 %v4374, %v4377
      %vm4379 = vweird.f32 %v4174
      %vm4380 = vweird.f32 %v4374
      %vm4381 = vmor %vm4379, %vm4380
      %v4382 = vsel %vm4381, %v4374, %v4378
      %v4383 = vand.u32 2147483647, %v4174
      %vm4384 = vcmp.eq.f32.partialorder %v4383, 8.507059e+37
      %v4385 = vand.u32 %v4174, 2147483648
      %v4386 = vor.u32 1.1754944e-38, %v4385
      %v4387 = vsel %vm4384, %v4386, %v4382
      %v4388 = vmul.f32 1.0, %v4387
      %v4389 = vrcp.pop %v4175
      %v4390 = vmul.f32 %v4175, %v4389
      %v4391 = vsub.f32 1.0, %v4390
      %v4392 = vmul.f32 %v4389, %v4391
      %v4393 = vadd.f32 %v4389, %v4392
      %vm4394 = vweird.f32 %v4175
      %vm4395 = vweird.f32 %v4389
      %vm4396 = vmor %vm4394, %vm4395
      %v4397 = vsel %vm4396, %v4389, %v4393
      %v4398 = vand.u32 2147483647, %v4175
      %vm4399 = vcmp.eq.f32.partialorder %v4398, 8.507059e+37
      %v4400 = vand.u32 %v4175, 2147483648
      %v4401 = vor.u32 1.1754944e-38, %v4400
      %v4402 = vsel %vm4399, %v4401, %v4397
      %v4403 = vmul.f32 1.0, %v4402
      %v4404 = vrcp.pop %v4176
      %v4405 = vmul.f32 %v4176, %v4404
      %v4406 = vsub.f32 1.0, %v4405
      %v4407 = vmul.f32 %v4404, %v4406
      %v4408 = vadd.f32 %v4404, %v4407
      %vm4409 = vweird.f32 %v4176
      %vm4410 = vweird.f32 %v4404
      %vm4411 = vmor %vm4409, %vm4410
      %v4412 = vsel %vm4411, %v4404, %v4408
      %v4413 = vand.u32 2147483647, %v4176
      %vm4414 = vcmp.eq.f32.partialorder %v4413, 8.507059e+37
      %v4415 = vand.u32 %v4176, 2147483648
      %v4416 = vor.u32 1.1754944e-38, %v4415
      %v4417 = vsel %vm4414, %v4416, %v4412
      %v4418 = vmul.f32 1.0, %v4417
      %v4419 = vrcp.pop %v4177
      %v4420 = vmul.f32 %v4177, %v4419
      %v4421 = vsub.f32 1.0, %v4420
      %v4422 = vmul.f32 %v4419, %v4421
      %v4423 = vadd.f32 %v4419, %v4422
      %vm4424 = vweird.f32 %v4177
      %vm4425 = vweird.f32 %v4419
      %vm4426 = vmor %vm4424, %vm4425
      %v4427 = vsel %vm4426, %v4419, %v4423
      %v4428 = vand.u32 2147483647, %v4177
      %vm4429 = vcmp.eq.f32.partialorder %v4428, 8.507059e+37
      %v4430 = vand.u32 %v4177, 2147483648
      %v4431 = vor.u32 1.1754944e-38, %v4430
      %v4432 = vsel %vm4429, %v4431, %v4427
      %v4433 = vmul.f32 1.0, %v4432
      %v4434 = vrcp.pop %v4178
      %v4435 = vmul.f32 %v4178, %v4434
      %v4436 = vsub.f32 1.0, %v4435
      %v4437 = vmul.f32 %v4434, %v4436
      %v4438 = vadd.f32 %v4434, %v4437
      %vm4439 = vweird.f32 %v4178
      %vm4440 = vweird.f32 %v4434
      %vm4441 = vmor %vm4439, %vm4440
      %v4442 = vsel %vm4441, %v4434, %v4438
      %v4443 = vand.u32 2147483647, %v4178
      %vm4444 = vcmp.eq.f32.partialorder %v4443, 8.507059e+37
      %v4445 = vand.u32 %v4178, 2147483648
      %v4446 = vor.u32 1.1754944e-38, %v4445
      %v4447 = vsel %vm4444, %v4446, %v4442
      %v4448 = vmul.f32 1.0, %v4447
      %v4449 = vrcp.pop %v4179
      %v4450 = vmul.f32 %v4179, %v4449
      %v4451 = vsub.f32 1.0, %v4450
      %v4452 = vmul.f32 %v4449, %v4451
      %v4453 = vadd.f32 %v4449, %v4452
      %vm4454 = vweird.f32 %v4179
      %vm4455 = vweird.f32 %v4449
      %vm4456 = vmor %vm4454, %vm4455
      %v4457 = vsel %vm4456, %v4449, %v4453
      %v4458 = vand.u32 2147483647, %v4179
      %vm4459 = vcmp.eq.f32.partialorder %v4458, 8.507059e+37
      %v4460 = vand.u32 %v4179, 2147483648
      %v4461 = vor.u32 1.1754944e-38, %v4460
      %v4462 = vsel %vm4459, %v4461, %v4457
      %v4463 = vmul.f32 1.0, %v4462
      %v4464 = vrcp.pop %v4180
      %v4465 = vmul.f32 %v4180, %v4464
      %v4466 = vsub.f32 1.0, %v4465
      %v4467 = vmul.f32 %v4464, %v4466
      %v4468 = vadd.f32 %v4464, %v4467
      %vm4469 = vweird.f32 %v4180
      %vm4470 = vweird.f32 %v4464
      %vm4471 = vmor %vm4469, %vm4470
      %v4472 = vsel %vm4471, %v4464, %v4468
      %v4473 = vand.u32 2147483647, %v4180
      %vm4474 = vcmp.eq.f32.partialorder %v4473, 8.507059e+37
      %v4475 = vand.u32 %v4180, 2147483648
      %v4476 = vor.u32 1.1754944e-38, %v4475
      %v4477 = vsel %vm4474, %v4476, %v4472
      %v4478 = vmul.f32 1.0, %v4477
      %v4479 = vrcp.pop %v4181
      %v4480 = vmul.f32 %v4181, %v4479
      %v4481 = vsub.f32 1.0, %v4480
      %v4482 = vmul.f32 %v4479, %v4481
      %v4483 = vadd.f32 %v4479, %v4482
      %vm4484 = vweird.f32 %v4181
      %vm4485 = vweird.f32 %v4479
      %vm4486 = vmor %vm4484, %vm4485
      %v4487 = vsel %vm4486, %v4479, %v4483
      %v4488 = vand.u32 2147483647, %v4181
      %vm4489 = vcmp.eq.f32.partialorder %v4488, 8.507059e+37
      %v4490 = vand.u32 %v4181, 2147483648
      %v4491 = vor.u32 1.1754944e-38, %v4490
      %v4492 = vsel %vm4489, %v4491, %v4487
      %v4493 = vmul.f32 1.0, %v4492
      %v4494 = vrcp.pop %v4182
      %v4495 = vmul.f32 %v4182, %v4494
      %v4496 = vsub.f32 1.0, %v4495
      %v4497 = vmul.f32 %v4494, %v4496
      %v4498 = vadd.f32 %v4494, %v4497
      %vm4499 = vweird.f32 %v4182
      %vm4500 = vweird.f32 %v4494
      %vm4501 = vmor %vm4499, %vm4500
      %v4502 = vsel %vm4501, %v4494, %v4498
      %v4503 = vand.u32 2147483647, %v4182
      %vm4504 = vcmp.eq.f32.partialorder %v4503, 8.507059e+37
      %v4505 = vand.u32 %v4182, 2147483648
      %v4506 = vor.u32 1.1754944e-38, %v4505
      %v4507 = vsel %vm4504, %v4506, %v4502
      %v4508 = vmul.f32 1.0, %v4507
      %v4509 = vrcp.pop %v4183
      %v4510 = vmul.f32 %v4183, %v4509
      %v4511 = vsub.f32 1.0, %v4510
      %v4512 = vmul.f32 %v4509, %v4511
      %v4513 = vadd.f32 %v4509, %v4512
      %vm4514 = vweird.f32 %v4183
      %vm4515 = vweird.f32 %v4509
      %vm4516 = vmor %vm4514, %vm4515
      %v4517 = vsel %vm4516, %v4509, %v4513
      %v4518 = vand.u32 2147483647, %v4183
      %vm4519 = vcmp.eq.f32.partialorder %v4518, 8.507059e+37
      %v4520 = vand.u32 %v4183, 2147483648
      %v4521 = vor.u32 1.1754944e-38, %v4520
      %v4522 = vsel %vm4519, %v4521, %v4517
      %v4523 = vmul.f32 1.0, %v4522
      %v4524 = vrcp.pop %v4184
      %v4525 = vmul.f32 %v4184, %v4524
      %v4526 = vsub.f32 1.0, %v4525
      %v4527 = vmul.f32 %v4524, %v4526
      %v4528 = vadd.f32 %v4524, %v4527
      %vm4529 = vweird.f32 %v4184
      %vm4530 = vweird.f32 %v4524
      %vm4531 = vmor %vm4529, %vm4530
      %v4532 = vsel %vm4531, %v4524, %v4528
      %v4533 = vand.u32 2147483647, %v4184
      %vm4534 = vcmp.eq.f32.partialorder %v4533, 8.507059e+37
      %v4535 = vand.u32 %v4184, 2147483648
      %v4536 = vor.u32 1.1754944e-38, %v4535
      %v4537 = vsel %vm4534, %v4536, %v4532
      %v4538 = vmul.f32 1.0, %v4537
      %v4539 = vrcp.pop %v4185
      %v4540 = vmul.f32 %v4185, %v4539
      %v4541 = vsub.f32 1.0, %v4540
      %v4542 = vmul.f32 %v4539, %v4541
      %v4543 = vadd.f32 %v4539, %v4542
      %vm4544 = vweird.f32 %v4185
      %vm4545 = vweird.f32 %v4539
      %vm4546 = vmor %vm4544, %vm4545
      %v4547 = vsel %vm4546, %v4539, %v4543
      %v4548 = vand.u32 2147483647, %v4185
      %vm4549 = vcmp.eq.f32.partialorder %v4548, 8.507059e+37
      %v4550 = vand.u32 %v4185, 2147483648
      %v4551 = vor.u32 1.1754944e-38, %v4550
      %v4552 = vsel %vm4549, %v4551, %v4547
      %v4553 = vmul.f32 1.0, %v4552
      %v4554 = vrcp.pop %v4186
      %v4555 = vmul.f32 %v4186, %v4554
      %v4556 = vsub.f32 1.0, %v4555
      %v4557 = vmul.f32 %v4554, %v4556
      %v4558 = vadd.f32 %v4554, %v4557
      %vm4559 = vweird.f32 %v4186
      %vm4560 = vweird.f32 %v4554
      %vm4561 = vmor %vm4559, %vm4560
      %v4562 = vsel %vm4561, %v4554, %v4558
      %v4563 = vand.u32 2147483647, %v4186
      %vm4564 = vcmp.eq.f32.partialorder %v4563, 8.507059e+37
      %v4565 = vand.u32 %v4186, 2147483648
      %v4566 = vor.u32 1.1754944e-38, %v4565
      %v4567 = vsel %vm4564, %v4566, %v4562
      %v4568 = vmul.f32 1.0, %v4567
      %v4569 = vrcp.pop %v4187
      %v4570 = vmul.f32 %v4187, %v4569
      %v4571 = vsub.f32 1.0, %v4570
      %v4572 = vmul.f32 %v4569, %v4571
      %v4573 = vadd.f32 %v4569, %v4572
      %vm4574 = vweird.f32 %v4187
      %vm4575 = vweird.f32 %v4569
      %vm4576 = vmor %vm4574, %vm4575
      %v4577 = vsel %vm4576, %v4569, %v4573
      %v4578 = vand.u32 2147483647, %v4187
      %vm4579 = vcmp.eq.f32.partialorder %v4578, 8.507059e+37
      %v4580 = vand.u32 %v4187, 2147483648
      %v4581 = vor.u32 1.1754944e-38, %v4580
      %v4582 = vsel %vm4579, %v4581, %v4577
      %v4583 = vmul.f32 1.0, %v4582
      %v4584 = vrcp.pop %v4188
      %v4585 = vmul.f32 %v4188, %v4584
      %v4586 = vsub.f32 1.0, %v4585
      %v4587 = vmul.f32 %v4584, %v4586
      %v4588 = vadd.f32 %v4584, %v4587
      %vm4589 = vweird.f32 %v4188
      %vm4590 = vweird.f32 %v4584
      %vm4591 = vmor %vm4589, %vm4590
      %v4592 = vsel %vm4591, %v4584, %v4588
      %v4593 = vand.u32 2147483647, %v4188
      %vm4594 = vcmp.eq.f32.partialorder %v4593, 8.507059e+37
      %v4595 = vand.u32 %v4188, 2147483648
      %v4596 = vor.u32 1.1754944e-38, %v4595
      %v4597 = vsel %vm4594, %v4596, %v4592
      %v4598 = vmul.f32 1.0, %v4597
      %v4599 = vrcp.pop %v4189
      %v4600 = vmul.f32 %v4189, %v4599
      %v4601 = vsub.f32 1.0, %v4600
      %v4602 = vmul.f32 %v4599, %v4601
      %v4603 = vadd.f32 %v4599, %v4602
      %vm4604 = vweird.f32 %v4189
      %vm4605 = vweird.f32 %v4599
      %vm4606 = vmor %vm4604, %vm4605
      %v4607 = vsel %vm4606, %v4599, %v4603
      %v4608 = vand.u32 2147483647, %v4189
      %vm4609 = vcmp.eq.f32.partialorder %v4608, 8.507059e+37
      %v4610 = vand.u32 %v4189, 2147483648
      %v4611 = vor.u32 1.1754944e-38, %v4610
      %v4612 = vsel %vm4609, %v4611, %v4607
      %v4613 = vmul.f32 1.0, %v4612
      %v4614 = vrcp.pop %v4190
      %v4615 = vmul.f32 %v4190, %v4614
      %v4616 = vsub.f32 1.0, %v4615
      %v4617 = vmul.f32 %v4614, %v4616
      %v4618 = vadd.f32 %v4614, %v4617
      %vm4619 = vweird.f32 %v4190
      %vm4620 = vweird.f32 %v4614
      %vm4621 = vmor %vm4619, %vm4620
      %v4622 = vsel %vm4621, %v4614, %v4618
      %v4623 = vand.u32 2147483647, %v4190
      %vm4624 = vcmp.eq.f32.partialorder %v4623, 8.507059e+37
      %v4625 = vand.u32 %v4190, 2147483648
      %v4626 = vor.u32 1.1754944e-38, %v4625
      %v4627 = vsel %vm4624, %v4626, %v4622
      %v4628 = vmul.f32 1.0, %v4627
      %v4629 = vrcp.pop %v4191
      %v4630 = vmul.f32 %v4191, %v4629
      %v4631 = vsub.f32 1.0, %v4630
      %v4632 = vmul.f32 %v4629, %v4631
      %v4633 = vadd.f32 %v4629, %v4632
      %vm4634 = vweird.f32 %v4191
      %vm4635 = vweird.f32 %v4629
      %vm4636 = vmor %vm4634, %vm4635
      %v4637 = vsel %vm4636, %v4629, %v4633
      %v4638 = vand.u32 2147483647, %v4191
      %vm4639 = vcmp.eq.f32.partialorder %v4638, 8.507059e+37
      %v4640 = vand.u32 %v4191, 2147483648
      %v4641 = vor.u32 1.1754944e-38, %v4640
      %v4642 = vsel %vm4639, %v4641, %v4637
      %v4643 = vmul.f32 1.0, %v4642
      %v4644 = vrcp.pop %v4192
      %v4645 = vmul.f32 %v4192, %v4644
      %v4646 = vsub.f32 1.0, %v4645
      %v4647 = vmul.f32 %v4644, %v4646
      %v4648 = vadd.f32 %v4644, %v4647
      %vm4649 = vweird.f32 %v4192
      %vm4650 = vweird.f32 %v4644
      %vm4651 = vmor %vm4649, %vm4650
      %v4652 = vsel %vm4651, %v4644, %v4648
      %v4653 = vand.u32 2147483647, %v4192
      %vm4654 = vcmp.eq.f32.partialorder %v4653, 8.507059e+37
      %v4655 = vand.u32 %v4192, 2147483648
      %v4656 = vor.u32 1.1754944e-38, %v4655
      %v4657 = vsel %vm4654, %v4656, %v4652
      %v4658 = vmul.f32 1.0, %v4657
      %v4659 = vrcp.pop %v4193
      %v4660 = vmul.f32 %v4193, %v4659
      %v4661 = vsub.f32 1.0, %v4660
      %v4662 = vmul.f32 %v4659, %v4661
      %v4663 = vadd.f32 %v4659, %v4662
      %vm4664 = vweird.f32 %v4193
      %vm4665 = vweird.f32 %v4659
      %vm4666 = vmor %vm4664, %vm4665
      %v4667 = vsel %vm4666, %v4659, %v4663
      %v4668 = vand.u32 2147483647, %v4193
      %vm4669 = vcmp.eq.f32.partialorder %v4668, 8.507059e+37
      %v4670 = vand.u32 %v4193, 2147483648
      %v4671 = vor.u32 1.1754944e-38, %v4670
      %v4672 = vsel %vm4669, %v4671, %v4667
      %v4673 = vmul.f32 1.0, %v4672
      %v4674 = vsel %vm3746, %v4208, 0.0
      %v4675 = vsel %vm3747, %v4223, 0.0
      %v4676 = vsel %vm3748, %v4238, 0.0
      %v4677 = vsel %vm3749, %v4253, 0.0
      %v4678 = vsel %vm3750, %v4268, 0.0
      %v4679 = vsel %vm3751, %v4283, 0.0
      %v4680 = vsel %vm3752, %v4298, 0.0
      %v4681 = vsel %vm3753, %v4313, 0.0
      %v4682 = vsel %vm3754, %v4328, 0.0
      %v4683 = vsel %vm3755, %v4343, 0.0
      %v4684 = vsel %vm3756, %v4358, 0.0
      %v4685 = vsel %vm3757, %v4373, 0.0
      %v4686 = vsel %vm3758, %v4388, 0.0
      %v4687 = vsel %vm3759, %v4403, 0.0
      %v4688 = vsel %vm3760, %v4418, 0.0
      %v4689 = vsel %vm3761, %v4433, 0.0
      %v4690 = vsel %vm3762, %v4448, 0.0
      %v4691 = vsel %vm3763, %v4463, 0.0
      %v4692 = vsel %vm3764, %v4478, 0.0
      %v4693 = vsel %vm3765, %v4493, 0.0
      %v4694 = vsel %vm3766, %v4508, 0.0
      %v4695 = vsel %vm3767, %v4523, 0.0
      %v4696 = vsel %vm3768, %v4538, 0.0
      %v4697 = vsel %vm3769, %v4553, 0.0
      %v4698 = vsel %vm3770, %v4568, 0.0
      %v4699 = vsel %vm3771, %v4583, 0.0
      %v4700 = vsel %vm3772, %v4598, 0.0
      %v4701 = vsel %vm3773, %v4613, 0.0
      %v4702 = vsel %vm3774, %v4628, 0.0
      %v4703 = vsel %vm3775, %v4643, 0.0
      %v4704 = vsel %vm3776, %v4658, 0.0
      %v4705 = vsel %vm3777, %v4673, 0.0
      %v4706 = vadd.f32 %v3010, %v4674
      %v4707 = vadd.f32 %v3011, %v4675
      %v4708 = vadd.f32 %v3012, %v4676
      %v4709 = vadd.f32 %v3013, %v4677
      %v4710 = vadd.f32 %v3014, %v4678
      %v4711 = vadd.f32 %v3015, %v4679
      %v4712 = vadd.f32 %v3016, %v4680
      %v4713 = vadd.f32 %v3017, %v4681
      %v4714 = vadd.f32 %v3018, %v4682
      %v4715 = vadd.f32 %v3019, %v4683
      %v4716 = vadd.f32 %v3020, %v4684
      %v4717 = vadd.f32 %v3021, %v4685
      %v4718 = vadd.f32 %v3022, %v4686
      %v4719 = vadd.f32 %v3023, %v4687
      %v4720 = vadd.f32 %v3024, %v4688
      %v4721 = vadd.f32 %v3025, %v4689
      %v4722 = vadd.f32 %v3026, %v4690
      %v4723 = vadd.f32 %v3027, %v4691
      %v4724 = vadd.f32 %v3028, %v4692
      %v4725 = vadd.f32 %v3029, %v4693
      %v4726 = vadd.f32 %v3030, %v4694
      %v4727 = vadd.f32 %v3031, %v4695
      %v4728 = vadd.f32 %v3032, %v4696
      %v4729 = vadd.f32 %v3033, %v4697
      %v4730 = vadd.f32 %v3034, %v4698
      %v4731 = vadd.f32 %v3035, %v4699
      %v4732 = vadd.f32 %v3036, %v4700
      %v4733 = vadd.f32 %v3037, %v4701
      %v4734 = vadd.f32 %v3038, %v4702
      %v4735 = vadd.f32 %v3039, %v4703
      %v4736 = vadd.f32 %v3040, %v4704
      %v4737 = vadd.f32 %v3041, %v4705
      %v4738 = vadd.f32 %v3042, %v4208
      %v4739 = vadd.f32 %v3043, %v4223
      %v4740 = vadd.f32 %v3044, %v4238
      %v4741 = vadd.f32 %v3045, %v4253
      %v4742 = vadd.f32 %v3046, %v4268
      %v4743 = vadd.f32 %v3047, %v4283
      %v4744 = vadd.f32 %v3048, %v4298
      %v4745 = vadd.f32 %v3049, %v4313
      %v4746 = vadd.f32 %v3050, %v4328
      %v4747 = vadd.f32 %v3051, %v4343
      %v4748 = vadd.f32 %v3052, %v4358
      %v4749 = vadd.f32 %v3053, %v4373
      %v4750 = vadd.f32 %v3054, %v4388
      %v4751 = vadd.f32 %v3055, %v4403
      %v4752 = vadd.f32 %v3056, %v4418
      %v4753 = vadd.f32 %v3057, %v4433
      %v4754 = vadd.f32 %v3058, %v4448
      %v4755 = vadd.f32 %v3059, %v4463
      %v4756 = vadd.f32 %v3060, %v4478
      %v4757 = vadd.f32 %v3061, %v4493
      %v4758 = vadd.f32 %v3062, %v4508
      %v4759 = vadd.f32 %v3063, %v4523
      %v4760 = vadd.f32 %v3064, %v4538
      %v4761 = vadd.f32 %v3065, %v4553
      %v4762 = vadd.f32 %v3066, %v4568
      %v4763 = vadd.f32 %v3067, %v4583
      %v4764 = vadd.f32 %v3068, %v4598
      %v4765 = vadd.f32 %v3069, %v4613
      %v4766 = vadd.f32 %v3070, %v4628
      %v4767 = vadd.f32 %v3071, %v4643
      %v4768 = vadd.f32 %v3072, %v4658
      %v4769 = vadd.f32 %v3073, %v4673
      %v4770 = vsel %vm3746, 1e+30, %v3074
      %v4771 = vsel %vm3747, 1e+30, %v3075
      %v4772 = vsel %vm3748, 1e+30, %v3076
      %v4773 = vsel %vm3749, 1e+30, %v3077
      %v4774 = vsel %vm3750, 1e+30, %v3078
      %v4775 = vsel %vm3751, 1e+30, %v3079
      %v4776 = vsel %vm3752, 1e+30, %v3080
      %v4777 = vsel %vm3753, 1e+30, %v3081
      %v4778 = vsel %vm3754, 1e+30, %v3082
      %v4779 = vsel %vm3755, 1e+30, %v3083
      %v4780 = vsel %vm3756, 1e+30, %v3084
      %v4781 = vsel %vm3757, 1e+30, %v3085
      %v4782 = vsel %vm3758, 1e+30, %v3086
      %v4783 = vsel %vm3759, 1e+30, %v3087
      %v4784 = vsel %vm3760, 1e+30, %v3088
      %v4785 = vsel %vm3761, 1e+30, %v3089
      %v4786 = vsel %vm3762, 1e+30, %v3090
      %v4787 = vsel %vm3763, 1e+30, %v3091
      %v4788 = vsel %vm3764, 1e+30, %v3092
      %v4789 = vsel %vm3765, 1e+30, %v3093
      %v4790 = vsel %vm3766, 1e+30, %v3094
      %v4791 = vsel %vm3767, 1e+30, %v3095
      %v4792 = vsel %vm3768, 1e+30, %v3096
      %v4793 = vsel %vm3769, 1e+30, %v3097
      %v4794 = vsel %vm3770, 1e+30, %v3098
      %v4795 = vsel %vm3771, 1e+30, %v3099
      %v4796 = vsel %vm3772, 1e+30, %v3100
      %v4797 = vsel %vm3773, 1e+30, %v3101
      %v4798 = vsel %vm3774, 1e+30, %v3102
      %v4799 = vsel %vm3775, 1e+30, %v3103
      %v4800 = vsel %vm3776, 1e+30, %v3104
      %v4801 = vsel %vm3777, 1e+30, %v3105
      %v4802 = vsel %vm1409, %v4770, inf
      %4803 = vmin.xlane.f32.xlu0 %v4802
      %v4804 = vpop.xlane.xlu0 %4803
      %v4805 = vsel %vm1409, %v4771, inf
      %4806 = vmin.xlane.f32.xlu0 %v4805
      %v4807 = vpop.xlane.xlu0 %4806
      %v4808 = vsel %vm1409, %v4772, inf
      %4809 = vmin.xlane.f32.xlu0 %v4808
      %v4810 = vpop.xlane.xlu0 %4809
      %v4811 = vsel %vm1409, %v4773, inf
      %4812 = vmin.xlane.f32.xlu0 %v4811
      %v4813 = vpop.xlane.xlu0 %4812
      %v4814 = vsel %vm1409, %v4774, inf
      %4815 = vmin.xlane.f32.xlu0 %v4814
      %v4816 = vpop.xlane.xlu0 %4815
      %v4817 = vsel %vm1409, %v4775, inf
      %4818 = vmin.xlane.f32.xlu0 %v4817
      %v4819 = vpop.xlane.xlu0 %4818
      %v4820 = vsel %vm1409, %v4776, inf
      %4821 = vmin.xlane.f32.xlu0 %v4820
      %v4822 = vpop.xlane.xlu0 %4821
      %v4823 = vsel %vm1409, %v4777, inf
      %4824 = vmin.xlane.f32.xlu0 %v4823
      %v4825 = vpop.xlane.xlu0 %4824
      %v4826 = vsel %vm1409, %v4778, inf
      %4827 = vmin.xlane.f32.xlu0 %v4826
      %v4828 = vpop.xlane.xlu0 %4827
      %v4829 = vsel %vm1409, %v4779, inf
      %4830 = vmin.xlane.f32.xlu0 %v4829
      %v4831 = vpop.xlane.xlu0 %4830
      %v4832 = vsel %vm1409, %v4780, inf
      %4833 = vmin.xlane.f32.xlu0 %v4832
      %v4834 = vpop.xlane.xlu0 %4833
      %v4835 = vsel %vm1409, %v4781, inf
      %4836 = vmin.xlane.f32.xlu0 %v4835
      %v4837 = vpop.xlane.xlu0 %4836
      %v4838 = vsel %vm1409, %v4782, inf
      %4839 = vmin.xlane.f32.xlu0 %v4838
      %v4840 = vpop.xlane.xlu0 %4839
      %v4841 = vsel %vm1409, %v4783, inf
      %4842 = vmin.xlane.f32.xlu0 %v4841
      %v4843 = vpop.xlane.xlu0 %4842
      %v4844 = vsel %vm1409, %v4784, inf
      %4845 = vmin.xlane.f32.xlu0 %v4844
      %v4846 = vpop.xlane.xlu0 %4845
      %v4847 = vsel %vm1409, %v4785, inf
      %4848 = vmin.xlane.f32.xlu0 %v4847
      %v4849 = vpop.xlane.xlu0 %4848
      %v4850 = vsel %vm1409, %v4786, inf
      %4851 = vmin.xlane.f32.xlu0 %v4850
      %v4852 = vpop.xlane.xlu0 %4851
      %v4853 = vsel %vm1409, %v4787, inf
      %4854 = vmin.xlane.f32.xlu0 %v4853
      %v4855 = vpop.xlane.xlu0 %4854
      %v4856 = vsel %vm1409, %v4788, inf
      %4857 = vmin.xlane.f32.xlu0 %v4856
      %v4858 = vpop.xlane.xlu0 %4857
      %v4859 = vsel %vm1409, %v4789, inf
      %4860 = vmin.xlane.f32.xlu0 %v4859
      %v4861 = vpop.xlane.xlu0 %4860
      %v4862 = vsel %vm1409, %v4790, inf
      %4863 = vmin.xlane.f32.xlu0 %v4862
      %v4864 = vpop.xlane.xlu0 %4863
      %v4865 = vsel %vm1409, %v4791, inf
      %4866 = vmin.xlane.f32.xlu0 %v4865
      %v4867 = vpop.xlane.xlu0 %4866
      %v4868 = vsel %vm1409, %v4792, inf
      %4869 = vmin.xlane.f32.xlu0 %v4868
      %v4870 = vpop.xlane.xlu0 %4869
      %v4871 = vsel %vm1409, %v4793, inf
      %4872 = vmin.xlane.f32.xlu0 %v4871
      %v4873 = vpop.xlane.xlu0 %4872
      %v4874 = vsel %vm1409, %v4794, inf
      %4875 = vmin.xlane.f32.xlu0 %v4874
      %v4876 = vpop.xlane.xlu0 %4875
      %v4877 = vsel %vm1409, %v4795, inf
      %4878 = vmin.xlane.f32.xlu0 %v4877
      %v4879 = vpop.xlane.xlu0 %4878
      %v4880 = vsel %vm1409, %v4796, inf
      %4881 = vmin.xlane.f32.xlu0 %v4880
      %v4882 = vpop.xlane.xlu0 %4881
      %v4883 = vsel %vm1409, %v4797, inf
      %4884 = vmin.xlane.f32.xlu0 %v4883
      %v4885 = vpop.xlane.xlu0 %4884
      %v4886 = vsel %vm1409, %v4798, inf
      %4887 = vmin.xlane.f32.xlu0 %v4886
      %v4888 = vpop.xlane.xlu0 %4887
      %v4889 = vsel %vm1409, %v4799, inf
      %4890 = vmin.xlane.f32.xlu0 %v4889
      %v4891 = vpop.xlane.xlu0 %4890
      %v4892 = vsel %vm1409, %v4800, inf
      %4893 = vmin.xlane.f32.xlu0 %v4892
      %v4894 = vpop.xlane.xlu0 %4893
      %v4895 = vsel %vm1409, %v4801, inf
      %4896 = vmin.xlane.f32.xlu0 %v4895
      %v4897 = vpop.xlane.xlu0 %4896
      %vm4898 = vcmp.eq.f32.partialorder %v4770, %v4804
      %vm4899 = vcmp.eq.f32.partialorder %v4771, %v4807
      %vm4900 = vcmp.eq.f32.partialorder %v4772, %v4810
      %vm4901 = vcmp.eq.f32.partialorder %v4773, %v4813
      %vm4902 = vcmp.eq.f32.partialorder %v4774, %v4816
      %vm4903 = vcmp.eq.f32.partialorder %v4775, %v4819
      %vm4904 = vcmp.eq.f32.partialorder %v4776, %v4822
      %vm4905 = vcmp.eq.f32.partialorder %v4777, %v4825
      %vm4906 = vcmp.eq.f32.partialorder %v4778, %v4828
      %vm4907 = vcmp.eq.f32.partialorder %v4779, %v4831
      %vm4908 = vcmp.eq.f32.partialorder %v4780, %v4834
      %vm4909 = vcmp.eq.f32.partialorder %v4781, %v4837
      %vm4910 = vcmp.eq.f32.partialorder %v4782, %v4840
      %vm4911 = vcmp.eq.f32.partialorder %v4783, %v4843
      %vm4912 = vcmp.eq.f32.partialorder %v4784, %v4846
      %vm4913 = vcmp.eq.f32.partialorder %v4785, %v4849
      %vm4914 = vcmp.eq.f32.partialorder %v4786, %v4852
      %vm4915 = vcmp.eq.f32.partialorder %v4787, %v4855
      %vm4916 = vcmp.eq.f32.partialorder %v4788, %v4858
      %vm4917 = vcmp.eq.f32.partialorder %v4789, %v4861
      %vm4918 = vcmp.eq.f32.partialorder %v4790, %v4864
      %vm4919 = vcmp.eq.f32.partialorder %v4791, %v4867
      %vm4920 = vcmp.eq.f32.partialorder %v4792, %v4870
      %vm4921 = vcmp.eq.f32.partialorder %v4793, %v4873
      %vm4922 = vcmp.eq.f32.partialorder %v4794, %v4876
      %vm4923 = vcmp.eq.f32.partialorder %v4795, %v4879
      %vm4924 = vcmp.eq.f32.partialorder %v4796, %v4882
      %vm4925 = vcmp.eq.f32.partialorder %v4797, %v4885
      %vm4926 = vcmp.eq.f32.partialorder %v4798, %v4888
      %vm4927 = vcmp.eq.f32.partialorder %v4799, %v4891
      %vm4928 = vcmp.eq.f32.partialorder %v4800, %v4894
      %vm4929 = vcmp.eq.f32.partialorder %v4801, %v4897
      %v4930 = vsel %vm4898, %v1408, 32
      %v4931 = vsel %vm4899, %v1408, 32
      %v4932 = vsel %vm4900, %v1408, 32
      %v4933 = vsel %vm4901, %v1408, 32
      %v4934 = vsel %vm4902, %v1408, 32
      %v4935 = vsel %vm4903, %v1408, 32
      %v4936 = vsel %vm4904, %v1408, 32
      %v4937 = vsel %vm4905, %v1408, 32
      %v4938 = vsel %vm4906, %v1408, 32
      %v4939 = vsel %vm4907, %v1408, 32
      %v4940 = vsel %vm4908, %v1408, 32
      %v4941 = vsel %vm4909, %v1408, 32
      %v4942 = vsel %vm4910, %v1408, 32
      %v4943 = vsel %vm4911, %v1408, 32
      %v4944 = vsel %vm4912, %v1408, 32
      %v4945 = vsel %vm4913, %v1408, 32
      %v4946 = vsel %vm4914, %v1408, 32
      %v4947 = vsel %vm4915, %v1408, 32
      %v4948 = vsel %vm4916, %v1408, 32
      %v4949 = vsel %vm4917, %v1408, 32
      %v4950 = vsel %vm4918, %v1408, 32
      %v4951 = vsel %vm4919, %v1408, 32
      %v4952 = vsel %vm4920, %v1408, 32
      %v4953 = vsel %vm4921, %v1408, 32
      %v4954 = vsel %vm4922, %v1408, 32
      %v4955 = vsel %vm4923, %v1408, 32
      %v4956 = vsel %vm4924, %v1408, 32
      %v4957 = vsel %vm4925, %v1408, 32
      %v4958 = vsel %vm4926, %v1408, 32
      %v4959 = vsel %vm4927, %v1408, 32
      %v4960 = vsel %vm4928, %v1408, 32
      %v4961 = vsel %vm4929, %v1408, 32
      %v4962 = vsel %vm1409, %v4930, 2147483647
      %v4963 = vand.u32 %v4962, 65535
      %v4964 = vshra.s32 %v4962, 16
      %v4965 = vcvt.s32.f32 %v4963
      %v4966 = vcvt.s32.f32 %v4964
      %4967 = vmin.xlane.f32.xlu0 %v4966
      %v4968 = vpop.xlane.xlu0 %4967
      %vm4969 = vcmp.eq.f32.partialorder %v4966, %v4968
      %v4970 = vsel %vm4969, %v4965, inf
      %4971 = vmin.xlane.f32.xlu0 %v4970
      %v4972 = vpop.xlane.xlu0 %4971
      %v4973 = vcvt.f32.s32 %v4972
      %v4974 = vcvt.f32.s32 %v4968
      %v4975 = vshll.u32 %v4974, 16
      %v4976 = vadd.s32 %v4975, %v4973
      %v4977 = vsel %vm1409, %v4931, 2147483647
      %v4978 = vand.u32 %v4977, 65535
      %v4979 = vshra.s32 %v4977, 16
      %v4980 = vcvt.s32.f32 %v4978
      %v4981 = vcvt.s32.f32 %v4979
      %4982 = vmin.xlane.f32.xlu0 %v4981
      %v4983 = vpop.xlane.xlu0 %4982
      %vm4984 = vcmp.eq.f32.partialorder %v4981, %v4983
      %v4985 = vsel %vm4984, %v4980, inf
      %4986 = vmin.xlane.f32.xlu0 %v4985
      %v4987 = vpop.xlane.xlu0 %4986
      %v4988 = vcvt.f32.s32 %v4987
      %v4989 = vcvt.f32.s32 %v4983
      %v4990 = vshll.u32 %v4989, 16
      %v4991 = vadd.s32 %v4990, %v4988
      %v4992 = vsel %vm1409, %v4932, 2147483647
      %v4993 = vand.u32 %v4992, 65535
      %v4994 = vshra.s32 %v4992, 16
      %v4995 = vcvt.s32.f32 %v4993
      %v4996 = vcvt.s32.f32 %v4994
      %4997 = vmin.xlane.f32.xlu0 %v4996
      %v4998 = vpop.xlane.xlu0 %4997
      %vm4999 = vcmp.eq.f32.partialorder %v4996, %v4998
      %v5000 = vsel %vm4999, %v4995, inf
      %5001 = vmin.xlane.f32.xlu0 %v5000
      %v5002 = vpop.xlane.xlu0 %5001
      %v5003 = vcvt.f32.s32 %v5002
      %v5004 = vcvt.f32.s32 %v4998
      %v5005 = vshll.u32 %v5004, 16
      %v5006 = vadd.s32 %v5005, %v5003
      %v5007 = vsel %vm1409, %v4933, 2147483647
      %v5008 = vand.u32 %v5007, 65535
      %v5009 = vshra.s32 %v5007, 16
      %v5010 = vcvt.s32.f32 %v5008
      %v5011 = vcvt.s32.f32 %v5009
      %5012 = vmin.xlane.f32.xlu0 %v5011
      %v5013 = vpop.xlane.xlu0 %5012
      %vm5014 = vcmp.eq.f32.partialorder %v5011, %v5013
      %v5015 = vsel %vm5014, %v5010, inf
      %5016 = vmin.xlane.f32.xlu0 %v5015
      %v5017 = vpop.xlane.xlu0 %5016
      %v5018 = vcvt.f32.s32 %v5017
      %v5019 = vcvt.f32.s32 %v5013
      %v5020 = vshll.u32 %v5019, 16
      %v5021 = vadd.s32 %v5020, %v5018
      %v5022 = vsel %vm1409, %v4934, 2147483647
      %v5023 = vand.u32 %v5022, 65535
      %v5024 = vshra.s32 %v5022, 16
      %v5025 = vcvt.s32.f32 %v5023
      %v5026 = vcvt.s32.f32 %v5024
      %5027 = vmin.xlane.f32.xlu0 %v5026
      %v5028 = vpop.xlane.xlu0 %5027
      %vm5029 = vcmp.eq.f32.partialorder %v5026, %v5028
      %v5030 = vsel %vm5029, %v5025, inf
      %5031 = vmin.xlane.f32.xlu0 %v5030
      %v5032 = vpop.xlane.xlu0 %5031
      %v5033 = vcvt.f32.s32 %v5032
      %v5034 = vcvt.f32.s32 %v5028
      %v5035 = vshll.u32 %v5034, 16
      %v5036 = vadd.s32 %v5035, %v5033
      %v5037 = vsel %vm1409, %v4935, 2147483647
      %v5038 = vand.u32 %v5037, 65535
      %v5039 = vshra.s32 %v5037, 16
      %v5040 = vcvt.s32.f32 %v5038
      %v5041 = vcvt.s32.f32 %v5039
      %5042 = vmin.xlane.f32.xlu0 %v5041
      %v5043 = vpop.xlane.xlu0 %5042
      %vm5044 = vcmp.eq.f32.partialorder %v5041, %v5043
      %v5045 = vsel %vm5044, %v5040, inf
      %5046 = vmin.xlane.f32.xlu0 %v5045
      %v5047 = vpop.xlane.xlu0 %5046
      %v5048 = vcvt.f32.s32 %v5047
      %v5049 = vcvt.f32.s32 %v5043
      %v5050 = vshll.u32 %v5049, 16
      %v5051 = vadd.s32 %v5050, %v5048
      %v5052 = vsel %vm1409, %v4936, 2147483647
      %v5053 = vand.u32 %v5052, 65535
      %v5054 = vshra.s32 %v5052, 16
      %v5055 = vcvt.s32.f32 %v5053
      %v5056 = vcvt.s32.f32 %v5054
      %5057 = vmin.xlane.f32.xlu0 %v5056
      %v5058 = vpop.xlane.xlu0 %5057
      %vm5059 = vcmp.eq.f32.partialorder %v5056, %v5058
      %v5060 = vsel %vm5059, %v5055, inf
      %5061 = vmin.xlane.f32.xlu0 %v5060
      %v5062 = vpop.xlane.xlu0 %5061
      %v5063 = vcvt.f32.s32 %v5062
      %v5064 = vcvt.f32.s32 %v5058
      %v5065 = vshll.u32 %v5064, 16
      %v5066 = vadd.s32 %v5065, %v5063
      %v5067 = vsel %vm1409, %v4937, 2147483647
      %v5068 = vand.u32 %v5067, 65535
      %v5069 = vshra.s32 %v5067, 16
      %v5070 = vcvt.s32.f32 %v5068
      %v5071 = vcvt.s32.f32 %v5069
      %5072 = vmin.xlane.f32.xlu0 %v5071
      %v5073 = vpop.xlane.xlu0 %5072
      %vm5074 = vcmp.eq.f32.partialorder %v5071, %v5073
      %v5075 = vsel %vm5074, %v5070, inf
      %5076 = vmin.xlane.f32.xlu0 %v5075
      %v5077 = vpop.xlane.xlu0 %5076
      %v5078 = vcvt.f32.s32 %v5077
      %v5079 = vcvt.f32.s32 %v5073
      %v5080 = vshll.u32 %v5079, 16
      %v5081 = vadd.s32 %v5080, %v5078
      %v5082 = vsel %vm1409, %v4938, 2147483647
      %v5083 = vand.u32 %v5082, 65535
      %v5084 = vshra.s32 %v5082, 16
      %v5085 = vcvt.s32.f32 %v5083
      %v5086 = vcvt.s32.f32 %v5084
      %5087 = vmin.xlane.f32.xlu0 %v5086
      %v5088 = vpop.xlane.xlu0 %5087
      %vm5089 = vcmp.eq.f32.partialorder %v5086, %v5088
      %v5090 = vsel %vm5089, %v5085, inf
      %5091 = vmin.xlane.f32.xlu0 %v5090
      %v5092 = vpop.xlane.xlu0 %5091
      %v5093 = vcvt.f32.s32 %v5092
      %v5094 = vcvt.f32.s32 %v5088
      %v5095 = vshll.u32 %v5094, 16
      %v5096 = vadd.s32 %v5095, %v5093
      %v5097 = vsel %vm1409, %v4939, 2147483647
      %v5098 = vand.u32 %v5097, 65535
      %v5099 = vshra.s32 %v5097, 16
      %v5100 = vcvt.s32.f32 %v5098
      %v5101 = vcvt.s32.f32 %v5099
      %5102 = vmin.xlane.f32.xlu0 %v5101
      %v5103 = vpop.xlane.xlu0 %5102
      %vm5104 = vcmp.eq.f32.partialorder %v5101, %v5103
      %v5105 = vsel %vm5104, %v5100, inf
      %5106 = vmin.xlane.f32.xlu0 %v5105
      %v5107 = vpop.xlane.xlu0 %5106
      %v5108 = vcvt.f32.s32 %v5107
      %v5109 = vcvt.f32.s32 %v5103
      %v5110 = vshll.u32 %v5109, 16
      %v5111 = vadd.s32 %v5110, %v5108
      %v5112 = vsel %vm1409, %v4940, 2147483647
      %v5113 = vand.u32 %v5112, 65535
      %v5114 = vshra.s32 %v5112, 16
      %v5115 = vcvt.s32.f32 %v5113
      %v5116 = vcvt.s32.f32 %v5114
      %5117 = vmin.xlane.f32.xlu0 %v5116
      %v5118 = vpop.xlane.xlu0 %5117
      %vm5119 = vcmp.eq.f32.partialorder %v5116, %v5118
      %v5120 = vsel %vm5119, %v5115, inf
      %5121 = vmin.xlane.f32.xlu0 %v5120
      %v5122 = vpop.xlane.xlu0 %5121
      %v5123 = vcvt.f32.s32 %v5122
      %v5124 = vcvt.f32.s32 %v5118
      %v5125 = vshll.u32 %v5124, 16
      %v5126 = vadd.s32 %v5125, %v5123
      %v5127 = vsel %vm1409, %v4941, 2147483647
      %v5128 = vand.u32 %v5127, 65535
      %v5129 = vshra.s32 %v5127, 16
      %v5130 = vcvt.s32.f32 %v5128
      %v5131 = vcvt.s32.f32 %v5129
      %5132 = vmin.xlane.f32.xlu0 %v5131
      %v5133 = vpop.xlane.xlu0 %5132
      %vm5134 = vcmp.eq.f32.partialorder %v5131, %v5133
      %v5135 = vsel %vm5134, %v5130, inf
      %5136 = vmin.xlane.f32.xlu0 %v5135
      %v5137 = vpop.xlane.xlu0 %5136
      %v5138 = vcvt.f32.s32 %v5137
      %v5139 = vcvt.f32.s32 %v5133
      %v5140 = vshll.u32 %v5139, 16
      %v5141 = vadd.s32 %v5140, %v5138
      %v5142 = vsel %vm1409, %v4942, 2147483647
      %v5143 = vand.u32 %v5142, 65535
      %v5144 = vshra.s32 %v5142, 16
      %v5145 = vcvt.s32.f32 %v5143
      %v5146 = vcvt.s32.f32 %v5144
      %5147 = vmin.xlane.f32.xlu0 %v5146
      %v5148 = vpop.xlane.xlu0 %5147
      %vm5149 = vcmp.eq.f32.partialorder %v5146, %v5148
      %v5150 = vsel %vm5149, %v5145, inf
      %5151 = vmin.xlane.f32.xlu0 %v5150
      %v5152 = vpop.xlane.xlu0 %5151
      %v5153 = vcvt.f32.s32 %v5152
      %v5154 = vcvt.f32.s32 %v5148
      %v5155 = vshll.u32 %v5154, 16
      %v5156 = vadd.s32 %v5155, %v5153
      %v5157 = vsel %vm1409, %v4943, 2147483647
      %v5158 = vand.u32 %v5157, 65535
      %v5159 = vshra.s32 %v5157, 16
      %v5160 = vcvt.s32.f32 %v5158
      %v5161 = vcvt.s32.f32 %v5159
      %5162 = vmin.xlane.f32.xlu0 %v5161
      %v5163 = vpop.xlane.xlu0 %5162
      %vm5164 = vcmp.eq.f32.partialorder %v5161, %v5163
      %v5165 = vsel %vm5164, %v5160, inf
      %5166 = vmin.xlane.f32.xlu0 %v5165
      %v5167 = vpop.xlane.xlu0 %5166
      %v5168 = vcvt.f32.s32 %v5167
      %v5169 = vcvt.f32.s32 %v5163
      %v5170 = vshll.u32 %v5169, 16
      %v5171 = vadd.s32 %v5170, %v5168
      %v5172 = vsel %vm1409, %v4944, 2147483647
      %v5173 = vand.u32 %v5172, 65535
      %v5174 = vshra.s32 %v5172, 16
      %v5175 = vcvt.s32.f32 %v5173
      %v5176 = vcvt.s32.f32 %v5174
      %5177 = vmin.xlane.f32.xlu0 %v5176
      %v5178 = vpop.xlane.xlu0 %5177
      %vm5179 = vcmp.eq.f32.partialorder %v5176, %v5178
      %v5180 = vsel %vm5179, %v5175, inf
      %5181 = vmin.xlane.f32.xlu0 %v5180
      %v5182 = vpop.xlane.xlu0 %5181
      %v5183 = vcvt.f32.s32 %v5182
      %v5184 = vcvt.f32.s32 %v5178
      %v5185 = vshll.u32 %v5184, 16
      %v5186 = vadd.s32 %v5185, %v5183
      %v5187 = vsel %vm1409, %v4945, 2147483647
      %v5188 = vand.u32 %v5187, 65535
      %v5189 = vshra.s32 %v5187, 16
      %v5190 = vcvt.s32.f32 %v5188
      %v5191 = vcvt.s32.f32 %v5189
      %5192 = vmin.xlane.f32.xlu0 %v5191
      %v5193 = vpop.xlane.xlu0 %5192
      %vm5194 = vcmp.eq.f32.partialorder %v5191, %v5193
      %v5195 = vsel %vm5194, %v5190, inf
      %5196 = vmin.xlane.f32.xlu0 %v5195
      %v5197 = vpop.xlane.xlu0 %5196
      %v5198 = vcvt.f32.s32 %v5197
      %v5199 = vcvt.f32.s32 %v5193
      %v5200 = vshll.u32 %v5199, 16
      %v5201 = vadd.s32 %v5200, %v5198
      %v5202 = vsel %vm1409, %v4946, 2147483647
      %v5203 = vand.u32 %v5202, 65535
      %v5204 = vshra.s32 %v5202, 16
      %v5205 = vcvt.s32.f32 %v5203
      %v5206 = vcvt.s32.f32 %v5204
      %5207 = vmin.xlane.f32.xlu0 %v5206
      %v5208 = vpop.xlane.xlu0 %5207
      %vm5209 = vcmp.eq.f32.partialorder %v5206, %v5208
      %v5210 = vsel %vm5209, %v5205, inf
      %5211 = vmin.xlane.f32.xlu0 %v5210
      %v5212 = vpop.xlane.xlu0 %5211
      %v5213 = vcvt.f32.s32 %v5212
      %v5214 = vcvt.f32.s32 %v5208
      %v5215 = vshll.u32 %v5214, 16
      %v5216 = vadd.s32 %v5215, %v5213
      %v5217 = vsel %vm1409, %v4947, 2147483647
      %v5218 = vand.u32 %v5217, 65535
      %v5219 = vshra.s32 %v5217, 16
      %v5220 = vcvt.s32.f32 %v5218
      %v5221 = vcvt.s32.f32 %v5219
      %5222 = vmin.xlane.f32.xlu0 %v5221
      %v5223 = vpop.xlane.xlu0 %5222
      %vm5224 = vcmp.eq.f32.partialorder %v5221, %v5223
      %v5225 = vsel %vm5224, %v5220, inf
      %5226 = vmin.xlane.f32.xlu0 %v5225
      %v5227 = vpop.xlane.xlu0 %5226
      %v5228 = vcvt.f32.s32 %v5227
      %v5229 = vcvt.f32.s32 %v5223
      %v5230 = vshll.u32 %v5229, 16
      %v5231 = vadd.s32 %v5230, %v5228
      %v5232 = vsel %vm1409, %v4948, 2147483647
      %v5233 = vand.u32 %v5232, 65535
      %v5234 = vshra.s32 %v5232, 16
      %v5235 = vcvt.s32.f32 %v5233
      %v5236 = vcvt.s32.f32 %v5234
      %5237 = vmin.xlane.f32.xlu0 %v5236
      %v5238 = vpop.xlane.xlu0 %5237
      %vm5239 = vcmp.eq.f32.partialorder %v5236, %v5238
      %v5240 = vsel %vm5239, %v5235, inf
      %5241 = vmin.xlane.f32.xlu0 %v5240
      %v5242 = vpop.xlane.xlu0 %5241
      %v5243 = vcvt.f32.s32 %v5242
      %v5244 = vcvt.f32.s32 %v5238
      %v5245 = vshll.u32 %v5244, 16
      %v5246 = vadd.s32 %v5245, %v5243
      %v5247 = vsel %vm1409, %v4949, 2147483647
      %v5248 = vand.u32 %v5247, 65535
      %v5249 = vshra.s32 %v5247, 16
      %v5250 = vcvt.s32.f32 %v5248
      %v5251 = vcvt.s32.f32 %v5249
      %5252 = vmin.xlane.f32.xlu0 %v5251
      %v5253 = vpop.xlane.xlu0 %5252
      %vm5254 = vcmp.eq.f32.partialorder %v5251, %v5253
      %v5255 = vsel %vm5254, %v5250, inf
      %5256 = vmin.xlane.f32.xlu0 %v5255
      %v5257 = vpop.xlane.xlu0 %5256
      %v5258 = vcvt.f32.s32 %v5257
      %v5259 = vcvt.f32.s32 %v5253
      %v5260 = vshll.u32 %v5259, 16
      %v5261 = vadd.s32 %v5260, %v5258
      %v5262 = vsel %vm1409, %v4950, 2147483647
      %v5263 = vand.u32 %v5262, 65535
      %v5264 = vshra.s32 %v5262, 16
      %v5265 = vcvt.s32.f32 %v5263
      %v5266 = vcvt.s32.f32 %v5264
      %5267 = vmin.xlane.f32.xlu0 %v5266
      %v5268 = vpop.xlane.xlu0 %5267
      %vm5269 = vcmp.eq.f32.partialorder %v5266, %v5268
      %v5270 = vsel %vm5269, %v5265, inf
      %5271 = vmin.xlane.f32.xlu0 %v5270
      %v5272 = vpop.xlane.xlu0 %5271
      %v5273 = vcvt.f32.s32 %v5272
      %v5274 = vcvt.f32.s32 %v5268
      %v5275 = vshll.u32 %v5274, 16
      %v5276 = vadd.s32 %v5275, %v5273
      %v5277 = vsel %vm1409, %v4951, 2147483647
      %v5278 = vand.u32 %v5277, 65535
      %v5279 = vshra.s32 %v5277, 16
      %v5280 = vcvt.s32.f32 %v5278
      %v5281 = vcvt.s32.f32 %v5279
      %5282 = vmin.xlane.f32.xlu0 %v5281
      %v5283 = vpop.xlane.xlu0 %5282
      %vm5284 = vcmp.eq.f32.partialorder %v5281, %v5283
      %v5285 = vsel %vm5284, %v5280, inf
      %5286 = vmin.xlane.f32.xlu0 %v5285
      %v5287 = vpop.xlane.xlu0 %5286
      %v5288 = vcvt.f32.s32 %v5287
      %v5289 = vcvt.f32.s32 %v5283
      %v5290 = vshll.u32 %v5289, 16
      %v5291 = vadd.s32 %v5290, %v5288
      %v5292 = vsel %vm1409, %v4952, 2147483647
      %v5293 = vand.u32 %v5292, 65535
      %v5294 = vshra.s32 %v5292, 16
      %v5295 = vcvt.s32.f32 %v5293
      %v5296 = vcvt.s32.f32 %v5294
      %5297 = vmin.xlane.f32.xlu0 %v5296
      %v5298 = vpop.xlane.xlu0 %5297
      %vm5299 = vcmp.eq.f32.partialorder %v5296, %v5298
      %v5300 = vsel %vm5299, %v5295, inf
      %5301 = vmin.xlane.f32.xlu0 %v5300
      %v5302 = vpop.xlane.xlu0 %5301
      %v5303 = vcvt.f32.s32 %v5302
      %v5304 = vcvt.f32.s32 %v5298
      %v5305 = vshll.u32 %v5304, 16
      %v5306 = vadd.s32 %v5305, %v5303
      %v5307 = vsel %vm1409, %v4953, 2147483647
      %v5308 = vand.u32 %v5307, 65535
      %v5309 = vshra.s32 %v5307, 16
      %v5310 = vcvt.s32.f32 %v5308
      %v5311 = vcvt.s32.f32 %v5309
      %5312 = vmin.xlane.f32.xlu0 %v5311
      %v5313 = vpop.xlane.xlu0 %5312
      %vm5314 = vcmp.eq.f32.partialorder %v5311, %v5313
      %v5315 = vsel %vm5314, %v5310, inf
      %5316 = vmin.xlane.f32.xlu0 %v5315
      %v5317 = vpop.xlane.xlu0 %5316
      %v5318 = vcvt.f32.s32 %v5317
      %v5319 = vcvt.f32.s32 %v5313
      %v5320 = vshll.u32 %v5319, 16
      %v5321 = vadd.s32 %v5320, %v5318
      %v5322 = vsel %vm1409, %v4954, 2147483647
      %v5323 = vand.u32 %v5322, 65535
      %v5324 = vshra.s32 %v5322, 16
      %v5325 = vcvt.s32.f32 %v5323
      %v5326 = vcvt.s32.f32 %v5324
      %5327 = vmin.xlane.f32.xlu0 %v5326
      %v5328 = vpop.xlane.xlu0 %5327
      %vm5329 = vcmp.eq.f32.partialorder %v5326, %v5328
      %v5330 = vsel %vm5329, %v5325, inf
      %5331 = vmin.xlane.f32.xlu0 %v5330
      %v5332 = vpop.xlane.xlu0 %5331
      %v5333 = vcvt.f32.s32 %v5332
      %v5334 = vcvt.f32.s32 %v5328
      %v5335 = vshll.u32 %v5334, 16
      %v5336 = vadd.s32 %v5335, %v5333
      %v5337 = vsel %vm1409, %v4955, 2147483647
      %v5338 = vand.u32 %v5337, 65535
      %v5339 = vshra.s32 %v5337, 16
      %v5340 = vcvt.s32.f32 %v5338
      %v5341 = vcvt.s32.f32 %v5339
      %5342 = vmin.xlane.f32.xlu0 %v5341
      %v5343 = vpop.xlane.xlu0 %5342
      %vm5344 = vcmp.eq.f32.partialorder %v5341, %v5343
      %v5345 = vsel %vm5344, %v5340, inf
      %5346 = vmin.xlane.f32.xlu0 %v5345
      %v5347 = vpop.xlane.xlu0 %5346
      %v5348 = vcvt.f32.s32 %v5347
      %v5349 = vcvt.f32.s32 %v5343
      %v5350 = vshll.u32 %v5349, 16
      %v5351 = vadd.s32 %v5350, %v5348
      %v5352 = vsel %vm1409, %v4956, 2147483647
      %v5353 = vand.u32 %v5352, 65535
      %v5354 = vshra.s32 %v5352, 16
      %v5355 = vcvt.s32.f32 %v5353
      %v5356 = vcvt.s32.f32 %v5354
      %5357 = vmin.xlane.f32.xlu0 %v5356
      %v5358 = vpop.xlane.xlu0 %5357
      %vm5359 = vcmp.eq.f32.partialorder %v5356, %v5358
      %v5360 = vsel %vm5359, %v5355, inf
      %5361 = vmin.xlane.f32.xlu0 %v5360
      %v5362 = vpop.xlane.xlu0 %5361
      %v5363 = vcvt.f32.s32 %v5362
      %v5364 = vcvt.f32.s32 %v5358
      %v5365 = vshll.u32 %v5364, 16
      %v5366 = vadd.s32 %v5365, %v5363
      %v5367 = vsel %vm1409, %v4957, 2147483647
      %v5368 = vand.u32 %v5367, 65535
      %v5369 = vshra.s32 %v5367, 16
      %v5370 = vcvt.s32.f32 %v5368
      %v5371 = vcvt.s32.f32 %v5369
      %5372 = vmin.xlane.f32.xlu0 %v5371
      %v5373 = vpop.xlane.xlu0 %5372
      %vm5374 = vcmp.eq.f32.partialorder %v5371, %v5373
      %v5375 = vsel %vm5374, %v5370, inf
      %5376 = vmin.xlane.f32.xlu0 %v5375
      %v5377 = vpop.xlane.xlu0 %5376
      %v5378 = vcvt.f32.s32 %v5377
      %v5379 = vcvt.f32.s32 %v5373
      %v5380 = vshll.u32 %v5379, 16
      %v5381 = vadd.s32 %v5380, %v5378
      %v5382 = vsel %vm1409, %v4958, 2147483647
      %v5383 = vand.u32 %v5382, 65535
      %v5384 = vshra.s32 %v5382, 16
      %v5385 = vcvt.s32.f32 %v5383
      %v5386 = vcvt.s32.f32 %v5384
      %5387 = vmin.xlane.f32.xlu0 %v5386
      %v5388 = vpop.xlane.xlu0 %5387
      %vm5389 = vcmp.eq.f32.partialorder %v5386, %v5388
      %v5390 = vsel %vm5389, %v5385, inf
      %5391 = vmin.xlane.f32.xlu0 %v5390
      %v5392 = vpop.xlane.xlu0 %5391
      %v5393 = vcvt.f32.s32 %v5392
      %v5394 = vcvt.f32.s32 %v5388
      %v5395 = vshll.u32 %v5394, 16
      %v5396 = vadd.s32 %v5395, %v5393
      %v5397 = vsel %vm1409, %v4959, 2147483647
      %v5398 = vand.u32 %v5397, 65535
      %v5399 = vshra.s32 %v5397, 16
      %v5400 = vcvt.s32.f32 %v5398
      %v5401 = vcvt.s32.f32 %v5399
      %5402 = vmin.xlane.f32.xlu0 %v5401
      %v5403 = vpop.xlane.xlu0 %5402
      %vm5404 = vcmp.eq.f32.partialorder %v5401, %v5403
      %v5405 = vsel %vm5404, %v5400, inf
      %5406 = vmin.xlane.f32.xlu0 %v5405
      %v5407 = vpop.xlane.xlu0 %5406
      %v5408 = vcvt.f32.s32 %v5407
      %v5409 = vcvt.f32.s32 %v5403
      %v5410 = vshll.u32 %v5409, 16
      %v5411 = vadd.s32 %v5410, %v5408
      %v5412 = vsel %vm1409, %v4960, 2147483647
      %v5413 = vand.u32 %v5412, 65535
      %v5414 = vshra.s32 %v5412, 16
      %v5415 = vcvt.s32.f32 %v5413
      %v5416 = vcvt.s32.f32 %v5414
      %5417 = vmin.xlane.f32.xlu0 %v5416
      %v5418 = vpop.xlane.xlu0 %5417
      %vm5419 = vcmp.eq.f32.partialorder %v5416, %v5418
      %v5420 = vsel %vm5419, %v5415, inf
      %5421 = vmin.xlane.f32.xlu0 %v5420
      %v5422 = vpop.xlane.xlu0 %5421
      %v5423 = vcvt.f32.s32 %v5422
      %v5424 = vcvt.f32.s32 %v5418
      %v5425 = vshll.u32 %v5424, 16
      %v5426 = vadd.s32 %v5425, %v5423
      %v5427 = vsel %vm1409, %v4961, 2147483647
      %v5428 = vand.u32 %v5427, 65535
      %v5429 = vshra.s32 %v5427, 16
      %v5430 = vcvt.s32.f32 %v5428
      %v5431 = vcvt.s32.f32 %v5429
      %5432 = vmin.xlane.f32.xlu0 %v5431
      %v5433 = vpop.xlane.xlu0 %5432
      %vm5434 = vcmp.eq.f32.partialorder %v5431, %v5433
      %v5435 = vsel %vm5434, %v5430, inf
      %5436 = vmin.xlane.f32.xlu0 %v5435
      %v5437 = vpop.xlane.xlu0 %5436
      %v5438 = vcvt.f32.s32 %v5437
      %v5439 = vcvt.f32.s32 %v5433
      %v5440 = vshll.u32 %v5439, 16
      %v5441 = vadd.s32 %v5440, %v5438
      %vm5442 = vcmp.eq.s32.totalorder %v1408, %v4976
      %vm5443 = vcmp.eq.s32.totalorder %v1408, %v4991
      %vm5444 = vcmp.eq.s32.totalorder %v1408, %v5006
      %vm5445 = vcmp.eq.s32.totalorder %v1408, %v5021
      %vm5446 = vcmp.eq.s32.totalorder %v1408, %v5036
      %vm5447 = vcmp.eq.s32.totalorder %v1408, %v5051
      %vm5448 = vcmp.eq.s32.totalorder %v1408, %v5066
      %vm5449 = vcmp.eq.s32.totalorder %v1408, %v5081
      %vm5450 = vcmp.eq.s32.totalorder %v1408, %v5096
      %vm5451 = vcmp.eq.s32.totalorder %v1408, %v5111
      %vm5452 = vcmp.eq.s32.totalorder %v1408, %v5126
      %vm5453 = vcmp.eq.s32.totalorder %v1408, %v5141
      %vm5454 = vcmp.eq.s32.totalorder %v1408, %v5156
      %vm5455 = vcmp.eq.s32.totalorder %v1408, %v5171
      %vm5456 = vcmp.eq.s32.totalorder %v1408, %v5186
      %vm5457 = vcmp.eq.s32.totalorder %v1408, %v5201
      %vm5458 = vcmp.eq.s32.totalorder %v1408, %v5216
      %vm5459 = vcmp.eq.s32.totalorder %v1408, %v5231
      %vm5460 = vcmp.eq.s32.totalorder %v1408, %v5246
      %vm5461 = vcmp.eq.s32.totalorder %v1408, %v5261
      %vm5462 = vcmp.eq.s32.totalorder %v1408, %v5276
      %vm5463 = vcmp.eq.s32.totalorder %v1408, %v5291
      %vm5464 = vcmp.eq.s32.totalorder %v1408, %v5306
      %vm5465 = vcmp.eq.s32.totalorder %v1408, %v5321
      %vm5466 = vcmp.eq.s32.totalorder %v1408, %v5336
      %vm5467 = vcmp.eq.s32.totalorder %v1408, %v5351
      %vm5468 = vcmp.eq.s32.totalorder %v1408, %v5366
      %vm5469 = vcmp.eq.s32.totalorder %v1408, %v5381
      %vm5470 = vcmp.eq.s32.totalorder %v1408, %v5396
      %vm5471 = vcmp.eq.s32.totalorder %v1408, %v5411
      %vm5472 = vcmp.eq.s32.totalorder %v1408, %v5426
      %vm5473 = vcmp.eq.s32.totalorder %v1408, %v5441
      %v5474 = vrsqrt.pop %v4804
      %v5475 = vmul.f32 %v5474, %v4804
      %v5476 = vmul.f32 %v5475, %v5474
      %v5477 = vmul.f32 0.5, %v5476
      %v5478 = vsub.f32 1.5, %v5477
      %v5479 = vmul.f32 %v5474, %v5478
      %v5480 = vmul.f32 %v4804, %v5479
      %vm5481 = vcmp.eq.f32.partialorder %v4804, inf
      %v5482 = vsel %vm5481, %v4804, %v5480
      %vm5483 = vcmp.eq.f32.partialorder %v4804, 0.0
      %v5484 = vand.u32 %v4804, 2147483648
      %v5485 = vsel %vm5483, %v5484, %v5482
      %v5486 = vrsqrt.pop %v4807
      %v5487 = vmul.f32 %v5486, %v4807
      %v5488 = vmul.f32 %v5487, %v5486
      %v5489 = vmul.f32 0.5, %v5488
      %v5490 = vsub.f32 1.5, %v5489
      %v5491 = vmul.f32 %v5486, %v5490
      %v5492 = vmul.f32 %v4807, %v5491
      %vm5493 = vcmp.eq.f32.partialorder %v4807, inf
      %v5494 = vsel %vm5493, %v4807, %v5492
      %vm5495 = vcmp.eq.f32.partialorder %v4807, 0.0
      %v5496 = vand.u32 %v4807, 2147483648
      %v5497 = vsel %vm5495, %v5496, %v5494
      %v5498 = vrsqrt.pop %v4810
      %v5499 = vmul.f32 %v5498, %v4810
      %v5500 = vmul.f32 %v5499, %v5498
      %v5501 = vmul.f32 0.5, %v5500
      %v5502 = vsub.f32 1.5, %v5501
      %v5503 = vmul.f32 %v5498, %v5502
      %v5504 = vmul.f32 %v4810, %v5503
      %vm5505 = vcmp.eq.f32.partialorder %v4810, inf
      %v5506 = vsel %vm5505, %v4810, %v5504
      %vm5507 = vcmp.eq.f32.partialorder %v4810, 0.0
      %v5508 = vand.u32 %v4810, 2147483648
      %v5509 = vsel %vm5507, %v5508, %v5506
      %v5510 = vrsqrt.pop %v4813
      %v5511 = vmul.f32 %v5510, %v4813
      %v5512 = vmul.f32 %v5511, %v5510
      %v5513 = vmul.f32 0.5, %v5512
      %v5514 = vsub.f32 1.5, %v5513
      %v5515 = vmul.f32 %v5510, %v5514
      %v5516 = vmul.f32 %v4813, %v5515
      %vm5517 = vcmp.eq.f32.partialorder %v4813, inf
      %v5518 = vsel %vm5517, %v4813, %v5516
      %vm5519 = vcmp.eq.f32.partialorder %v4813, 0.0
      %v5520 = vand.u32 %v4813, 2147483648
      %v5521 = vsel %vm5519, %v5520, %v5518
      %v5522 = vrsqrt.pop %v4816
      %v5523 = vmul.f32 %v5522, %v4816
      %v5524 = vmul.f32 %v5523, %v5522
      %v5525 = vmul.f32 0.5, %v5524
      %v5526 = vsub.f32 1.5, %v5525
      %v5527 = vmul.f32 %v5522, %v5526
      %v5528 = vmul.f32 %v4816, %v5527
      %vm5529 = vcmp.eq.f32.partialorder %v4816, inf
      %v5530 = vsel %vm5529, %v4816, %v5528
      %vm5531 = vcmp.eq.f32.partialorder %v4816, 0.0
      %v5532 = vand.u32 %v4816, 2147483648
      %v5533 = vsel %vm5531, %v5532, %v5530
      %v5534 = vrsqrt.pop %v4819
      %v5535 = vmul.f32 %v5534, %v4819
      %v5536 = vmul.f32 %v5535, %v5534
      %v5537 = vmul.f32 0.5, %v5536
      %v5538 = vsub.f32 1.5, %v5537
      %v5539 = vmul.f32 %v5534, %v5538
      %v5540 = vmul.f32 %v4819, %v5539
      %vm5541 = vcmp.eq.f32.partialorder %v4819, inf
      %v5542 = vsel %vm5541, %v4819, %v5540
      %vm5543 = vcmp.eq.f32.partialorder %v4819, 0.0
      %v5544 = vand.u32 %v4819, 2147483648
      %v5545 = vsel %vm5543, %v5544, %v5542
      %v5546 = vrsqrt.pop %v4822
      %v5547 = vmul.f32 %v5546, %v4822
      %v5548 = vmul.f32 %v5547, %v5546
      %v5549 = vmul.f32 0.5, %v5548
      %v5550 = vsub.f32 1.5, %v5549
      %v5551 = vmul.f32 %v5546, %v5550
      %v5552 = vmul.f32 %v4822, %v5551
      %vm5553 = vcmp.eq.f32.partialorder %v4822, inf
      %v5554 = vsel %vm5553, %v4822, %v5552
      %vm5555 = vcmp.eq.f32.partialorder %v4822, 0.0
      %v5556 = vand.u32 %v4822, 2147483648
      %v5557 = vsel %vm5555, %v5556, %v5554
      %v5558 = vrsqrt.pop %v4825
      %v5559 = vmul.f32 %v5558, %v4825
      %v5560 = vmul.f32 %v5559, %v5558
      %v5561 = vmul.f32 0.5, %v5560
      %v5562 = vsub.f32 1.5, %v5561
      %v5563 = vmul.f32 %v5558, %v5562
      %v5564 = vmul.f32 %v4825, %v5563
      %vm5565 = vcmp.eq.f32.partialorder %v4825, inf
      %v5566 = vsel %vm5565, %v4825, %v5564
      %vm5567 = vcmp.eq.f32.partialorder %v4825, 0.0
      %v5568 = vand.u32 %v4825, 2147483648
      %v5569 = vsel %vm5567, %v5568, %v5566
      %v5570 = vrsqrt.pop %v4828
      %v5571 = vmul.f32 %v5570, %v4828
      %v5572 = vmul.f32 %v5571, %v5570
      %v5573 = vmul.f32 0.5, %v5572
      %v5574 = vsub.f32 1.5, %v5573
      %v5575 = vmul.f32 %v5570, %v5574
      %v5576 = vmul.f32 %v4828, %v5575
      %vm5577 = vcmp.eq.f32.partialorder %v4828, inf
      %v5578 = vsel %vm5577, %v4828, %v5576
      %vm5579 = vcmp.eq.f32.partialorder %v4828, 0.0
      %v5580 = vand.u32 %v4828, 2147483648
      %v5581 = vsel %vm5579, %v5580, %v5578
      %v5582 = vrsqrt.pop %v4831
      %v5583 = vmul.f32 %v5582, %v4831
      %v5584 = vmul.f32 %v5583, %v5582
      %v5585 = vmul.f32 0.5, %v5584
      %v5586 = vsub.f32 1.5, %v5585
      %v5587 = vmul.f32 %v5582, %v5586
      %v5588 = vmul.f32 %v4831, %v5587
      %vm5589 = vcmp.eq.f32.partialorder %v4831, inf
      %v5590 = vsel %vm5589, %v4831, %v5588
      %vm5591 = vcmp.eq.f32.partialorder %v4831, 0.0
      %v5592 = vand.u32 %v4831, 2147483648
      %v5593 = vsel %vm5591, %v5592, %v5590
      %v5594 = vrsqrt.pop %v4834
      %v5595 = vmul.f32 %v5594, %v4834
      %v5596 = vmul.f32 %v5595, %v5594
      %v5597 = vmul.f32 0.5, %v5596
      %v5598 = vsub.f32 1.5, %v5597
      %v5599 = vmul.f32 %v5594, %v5598
      %v5600 = vmul.f32 %v4834, %v5599
      %vm5601 = vcmp.eq.f32.partialorder %v4834, inf
      %v5602 = vsel %vm5601, %v4834, %v5600
      %vm5603 = vcmp.eq.f32.partialorder %v4834, 0.0
      %v5604 = vand.u32 %v4834, 2147483648
      %v5605 = vsel %vm5603, %v5604, %v5602
      %v5606 = vrsqrt.pop %v4837
      %v5607 = vmul.f32 %v5606, %v4837
      %v5608 = vmul.f32 %v5607, %v5606
      %v5609 = vmul.f32 0.5, %v5608
      %v5610 = vsub.f32 1.5, %v5609
      %v5611 = vmul.f32 %v5606, %v5610
      %v5612 = vmul.f32 %v4837, %v5611
      %vm5613 = vcmp.eq.f32.partialorder %v4837, inf
      %v5614 = vsel %vm5613, %v4837, %v5612
      %vm5615 = vcmp.eq.f32.partialorder %v4837, 0.0
      %v5616 = vand.u32 %v4837, 2147483648
      %v5617 = vsel %vm5615, %v5616, %v5614
      %v5618 = vrsqrt.pop %v4840
      %v5619 = vmul.f32 %v5618, %v4840
      %v5620 = vmul.f32 %v5619, %v5618
      %v5621 = vmul.f32 0.5, %v5620
      %v5622 = vsub.f32 1.5, %v5621
      %v5623 = vmul.f32 %v5618, %v5622
      %v5624 = vmul.f32 %v4840, %v5623
      %vm5625 = vcmp.eq.f32.partialorder %v4840, inf
      %v5626 = vsel %vm5625, %v4840, %v5624
      %vm5627 = vcmp.eq.f32.partialorder %v4840, 0.0
      %v5628 = vand.u32 %v4840, 2147483648
      %v5629 = vsel %vm5627, %v5628, %v5626
      %v5630 = vrsqrt.pop %v4843
      %v5631 = vmul.f32 %v5630, %v4843
      %v5632 = vmul.f32 %v5631, %v5630
      %v5633 = vmul.f32 0.5, %v5632
      %v5634 = vsub.f32 1.5, %v5633
      %v5635 = vmul.f32 %v5630, %v5634
      %v5636 = vmul.f32 %v4843, %v5635
      %vm5637 = vcmp.eq.f32.partialorder %v4843, inf
      %v5638 = vsel %vm5637, %v4843, %v5636
      %vm5639 = vcmp.eq.f32.partialorder %v4843, 0.0
      %v5640 = vand.u32 %v4843, 2147483648
      %v5641 = vsel %vm5639, %v5640, %v5638
      %v5642 = vrsqrt.pop %v4846
      %v5643 = vmul.f32 %v5642, %v4846
      %v5644 = vmul.f32 %v5643, %v5642
      %v5645 = vmul.f32 0.5, %v5644
      %v5646 = vsub.f32 1.5, %v5645
      %v5647 = vmul.f32 %v5642, %v5646
      %v5648 = vmul.f32 %v4846, %v5647
      %vm5649 = vcmp.eq.f32.partialorder %v4846, inf
      %v5650 = vsel %vm5649, %v4846, %v5648
      %vm5651 = vcmp.eq.f32.partialorder %v4846, 0.0
      %v5652 = vand.u32 %v4846, 2147483648
      %v5653 = vsel %vm5651, %v5652, %v5650
      %v5654 = vrsqrt.pop %v4849
      %v5655 = vmul.f32 %v5654, %v4849
      %v5656 = vmul.f32 %v5655, %v5654
      %v5657 = vmul.f32 0.5, %v5656
      %v5658 = vsub.f32 1.5, %v5657
      %v5659 = vmul.f32 %v5654, %v5658
      %v5660 = vmul.f32 %v4849, %v5659
      %vm5661 = vcmp.eq.f32.partialorder %v4849, inf
      %v5662 = vsel %vm5661, %v4849, %v5660
      %vm5663 = vcmp.eq.f32.partialorder %v4849, 0.0
      %v5664 = vand.u32 %v4849, 2147483648
      %v5665 = vsel %vm5663, %v5664, %v5662
      %v5666 = vrsqrt.pop %v4852
      %v5667 = vmul.f32 %v5666, %v4852
      %v5668 = vmul.f32 %v5667, %v5666
      %v5669 = vmul.f32 0.5, %v5668
      %v5670 = vsub.f32 1.5, %v5669
      %v5671 = vmul.f32 %v5666, %v5670
      %v5672 = vmul.f32 %v4852, %v5671
      %vm5673 = vcmp.eq.f32.partialorder %v4852, inf
      %v5674 = vsel %vm5673, %v4852, %v5672
      %vm5675 = vcmp.eq.f32.partialorder %v4852, 0.0
      %v5676 = vand.u32 %v4852, 2147483648
      %v5677 = vsel %vm5675, %v5676, %v5674
      %v5678 = vrsqrt.pop %v4855
      %v5679 = vmul.f32 %v5678, %v4855
      %v5680 = vmul.f32 %v5679, %v5678
      %v5681 = vmul.f32 0.5, %v5680
      %v5682 = vsub.f32 1.5, %v5681
      %v5683 = vmul.f32 %v5678, %v5682
      %v5684 = vmul.f32 %v4855, %v5683
      %vm5685 = vcmp.eq.f32.partialorder %v4855, inf
      %v5686 = vsel %vm5685, %v4855, %v5684
      %vm5687 = vcmp.eq.f32.partialorder %v4855, 0.0
      %v5688 = vand.u32 %v4855, 2147483648
      %v5689 = vsel %vm5687, %v5688, %v5686
      %v5690 = vrsqrt.pop %v4858
      %v5691 = vmul.f32 %v5690, %v4858
      %v5692 = vmul.f32 %v5691, %v5690
      %v5693 = vmul.f32 0.5, %v5692
      %v5694 = vsub.f32 1.5, %v5693
      %v5695 = vmul.f32 %v5690, %v5694
      %v5696 = vmul.f32 %v4858, %v5695
      %vm5697 = vcmp.eq.f32.partialorder %v4858, inf
      %v5698 = vsel %vm5697, %v4858, %v5696
      %vm5699 = vcmp.eq.f32.partialorder %v4858, 0.0
      %v5700 = vand.u32 %v4858, 2147483648
      %v5701 = vsel %vm5699, %v5700, %v5698
      %v5702 = vrsqrt.pop %v4861
      %v5703 = vmul.f32 %v5702, %v4861
      %v5704 = vmul.f32 %v5703, %v5702
      %v5705 = vmul.f32 0.5, %v5704
      %v5706 = vsub.f32 1.5, %v5705
      %v5707 = vmul.f32 %v5702, %v5706
      %v5708 = vmul.f32 %v4861, %v5707
      %vm5709 = vcmp.eq.f32.partialorder %v4861, inf
      %v5710 = vsel %vm5709, %v4861, %v5708
      %vm5711 = vcmp.eq.f32.partialorder %v4861, 0.0
      %v5712 = vand.u32 %v4861, 2147483648
      %v5713 = vsel %vm5711, %v5712, %v5710
      %v5714 = vrsqrt.pop %v4864
      %v5715 = vmul.f32 %v5714, %v4864
      %v5716 = vmul.f32 %v5715, %v5714
      %v5717 = vmul.f32 0.5, %v5716
      %v5718 = vsub.f32 1.5, %v5717
      %v5719 = vmul.f32 %v5714, %v5718
      %v5720 = vmul.f32 %v4864, %v5719
      %vm5721 = vcmp.eq.f32.partialorder %v4864, inf
      %v5722 = vsel %vm5721, %v4864, %v5720
      %vm5723 = vcmp.eq.f32.partialorder %v4864, 0.0
      %v5724 = vand.u32 %v4864, 2147483648
      %v5725 = vsel %vm5723, %v5724, %v5722
      %v5726 = vrsqrt.pop %v4867
      %v5727 = vmul.f32 %v5726, %v4867
      %v5728 = vmul.f32 %v5727, %v5726
      %v5729 = vmul.f32 0.5, %v5728
      %v5730 = vsub.f32 1.5, %v5729
      %v5731 = vmul.f32 %v5726, %v5730
      %v5732 = vmul.f32 %v4867, %v5731
      %vm5733 = vcmp.eq.f32.partialorder %v4867, inf
      %v5734 = vsel %vm5733, %v4867, %v5732
      %vm5735 = vcmp.eq.f32.partialorder %v4867, 0.0
      %v5736 = vand.u32 %v4867, 2147483648
      %v5737 = vsel %vm5735, %v5736, %v5734
      %v5738 = vrsqrt.pop %v4870
      %v5739 = vmul.f32 %v5738, %v4870
      %v5740 = vmul.f32 %v5739, %v5738
      %v5741 = vmul.f32 0.5, %v5740
      %v5742 = vsub.f32 1.5, %v5741
      %v5743 = vmul.f32 %v5738, %v5742
      %v5744 = vmul.f32 %v4870, %v5743
      %vm5745 = vcmp.eq.f32.partialorder %v4870, inf
      %v5746 = vsel %vm5745, %v4870, %v5744
      %vm5747 = vcmp.eq.f32.partialorder %v4870, 0.0
      %v5748 = vand.u32 %v4870, 2147483648
      %v5749 = vsel %vm5747, %v5748, %v5746
      %v5750 = vrsqrt.pop %v4873
      %v5751 = vmul.f32 %v5750, %v4873
      %v5752 = vmul.f32 %v5751, %v5750
      %v5753 = vmul.f32 0.5, %v5752
      %v5754 = vsub.f32 1.5, %v5753
      %v5755 = vmul.f32 %v5750, %v5754
      %v5756 = vmul.f32 %v4873, %v5755
      %vm5757 = vcmp.eq.f32.partialorder %v4873, inf
      %v5758 = vsel %vm5757, %v4873, %v5756
      %vm5759 = vcmp.eq.f32.partialorder %v4873, 0.0
      %v5760 = vand.u32 %v4873, 2147483648
      %v5761 = vsel %vm5759, %v5760, %v5758
      %v5762 = vrsqrt.pop %v4876
      %v5763 = vmul.f32 %v5762, %v4876
      %v5764 = vmul.f32 %v5763, %v5762
      %v5765 = vmul.f32 0.5, %v5764
      %v5766 = vsub.f32 1.5, %v5765
      %v5767 = vmul.f32 %v5762, %v5766
      %v5768 = vmul.f32 %v4876, %v5767
      %vm5769 = vcmp.eq.f32.partialorder %v4876, inf
      %v5770 = vsel %vm5769, %v4876, %v5768
      %vm5771 = vcmp.eq.f32.partialorder %v4876, 0.0
      %v5772 = vand.u32 %v4876, 2147483648
      %v5773 = vsel %vm5771, %v5772, %v5770
      %v5774 = vrsqrt.pop %v4879
      %v5775 = vmul.f32 %v5774, %v4879
      %v5776 = vmul.f32 %v5775, %v5774
      %v5777 = vmul.f32 0.5, %v5776
      %v5778 = vsub.f32 1.5, %v5777
      %v5779 = vmul.f32 %v5774, %v5778
      %v5780 = vmul.f32 %v4879, %v5779
      %vm5781 = vcmp.eq.f32.partialorder %v4879, inf
      %v5782 = vsel %vm5781, %v4879, %v5780
      %vm5783 = vcmp.eq.f32.partialorder %v4879, 0.0
      %v5784 = vand.u32 %v4879, 2147483648
      %v5785 = vsel %vm5783, %v5784, %v5782
      %v5786 = vrsqrt.pop %v4882
      %v5787 = vmul.f32 %v5786, %v4882
      %v5788 = vmul.f32 %v5787, %v5786
      %v5789 = vmul.f32 0.5, %v5788
      %v5790 = vsub.f32 1.5, %v5789
      %v5791 = vmul.f32 %v5786, %v5790
      %v5792 = vmul.f32 %v4882, %v5791
      %vm5793 = vcmp.eq.f32.partialorder %v4882, inf
      %v5794 = vsel %vm5793, %v4882, %v5792
      %vm5795 = vcmp.eq.f32.partialorder %v4882, 0.0
      %v5796 = vand.u32 %v4882, 2147483648
      %v5797 = vsel %vm5795, %v5796, %v5794
      %v5798 = vrsqrt.pop %v4885
      %v5799 = vmul.f32 %v5798, %v4885
      %v5800 = vmul.f32 %v5799, %v5798
      %v5801 = vmul.f32 0.5, %v5800
      %v5802 = vsub.f32 1.5, %v5801
      %v5803 = vmul.f32 %v5798, %v5802
      %v5804 = vmul.f32 %v4885, %v5803
      %vm5805 = vcmp.eq.f32.partialorder %v4885, inf
      %v5806 = vsel %vm5805, %v4885, %v5804
      %vm5807 = vcmp.eq.f32.partialorder %v4885, 0.0
      %v5808 = vand.u32 %v4885, 2147483648
      %v5809 = vsel %vm5807, %v5808, %v5806
      %v5810 = vrsqrt.pop %v4888
      %v5811 = vmul.f32 %v5810, %v4888
      %v5812 = vmul.f32 %v5811, %v5810
      %v5813 = vmul.f32 0.5, %v5812
      %v5814 = vsub.f32 1.5, %v5813
      %v5815 = vmul.f32 %v5810, %v5814
      %v5816 = vmul.f32 %v4888, %v5815
      %vm5817 = vcmp.eq.f32.partialorder %v4888, inf
      %v5818 = vsel %vm5817, %v4888, %v5816
      %vm5819 = vcmp.eq.f32.partialorder %v4888, 0.0
      %v5820 = vand.u32 %v4888, 2147483648
      %v5821 = vsel %vm5819, %v5820, %v5818
      %v5822 = vrsqrt.pop %v4891
      %v5823 = vmul.f32 %v5822, %v4891
      %v5824 = vmul.f32 %v5823, %v5822
      %v5825 = vmul.f32 0.5, %v5824
      %v5826 = vsub.f32 1.5, %v5825
      %v5827 = vmul.f32 %v5822, %v5826
      %v5828 = vmul.f32 %v4891, %v5827
      %vm5829 = vcmp.eq.f32.partialorder %v4891, inf
      %v5830 = vsel %vm5829, %v4891, %v5828
      %vm5831 = vcmp.eq.f32.partialorder %v4891, 0.0
      %v5832 = vand.u32 %v4891, 2147483648
      %v5833 = vsel %vm5831, %v5832, %v5830
      %v5834 = vrsqrt.pop %v4894
      %v5835 = vmul.f32 %v5834, %v4894
      %v5836 = vmul.f32 %v5835, %v5834
      %v5837 = vmul.f32 0.5, %v5836
      %v5838 = vsub.f32 1.5, %v5837
      %v5839 = vmul.f32 %v5834, %v5838
      %v5840 = vmul.f32 %v4894, %v5839
      %vm5841 = vcmp.eq.f32.partialorder %v4894, inf
      %v5842 = vsel %vm5841, %v4894, %v5840
      %vm5843 = vcmp.eq.f32.partialorder %v4894, 0.0
      %v5844 = vand.u32 %v4894, 2147483648
      %v5845 = vsel %vm5843, %v5844, %v5842
      %v5846 = vrsqrt.pop %v4897
      %v5847 = vmul.f32 %v5846, %v4897
      %v5848 = vmul.f32 %v5847, %v5846
      %v5849 = vmul.f32 0.5, %v5848
      %v5850 = vsub.f32 1.5, %v5849
      %v5851 = vmul.f32 %v5846, %v5850
      %v5852 = vmul.f32 %v4897, %v5851
      %vm5853 = vcmp.eq.f32.partialorder %v4897, inf
      %v5854 = vsel %vm5853, %v4897, %v5852
      %vm5855 = vcmp.eq.f32.partialorder %v4897, 0.0
      %v5856 = vand.u32 %v4897, 2147483648
      %v5857 = vsel %vm5855, %v5856, %v5854
      %v5858 = vadd.f32 %v5485, 1e-08
      %v5859 = vadd.f32 %v5497, 1e-08
      %v5860 = vadd.f32 %v5509, 1e-08
      %v5861 = vadd.f32 %v5521, 1e-08
      %v5862 = vadd.f32 %v5533, 1e-08
      %v5863 = vadd.f32 %v5545, 1e-08
      %v5864 = vadd.f32 %v5557, 1e-08
      %v5865 = vadd.f32 %v5569, 1e-08
      %v5866 = vadd.f32 %v5581, 1e-08
      %v5867 = vadd.f32 %v5593, 1e-08
      %v5868 = vadd.f32 %v5605, 1e-08
      %v5869 = vadd.f32 %v5617, 1e-08
      %v5870 = vadd.f32 %v5629, 1e-08
      %v5871 = vadd.f32 %v5641, 1e-08
      %v5872 = vadd.f32 %v5653, 1e-08
      %v5873 = vadd.f32 %v5665, 1e-08
      %v5874 = vadd.f32 %v5677, 1e-08
      %v5875 = vadd.f32 %v5689, 1e-08
      %v5876 = vadd.f32 %v5701, 1e-08
      %v5877 = vadd.f32 %v5713, 1e-08
      %v5878 = vadd.f32 %v5725, 1e-08
      %v5879 = vadd.f32 %v5737, 1e-08
      %v5880 = vadd.f32 %v5749, 1e-08
      %v5881 = vadd.f32 %v5761, 1e-08
      %v5882 = vadd.f32 %v5773, 1e-08
      %v5883 = vadd.f32 %v5785, 1e-08
      %v5884 = vadd.f32 %v5797, 1e-08
      %v5885 = vadd.f32 %v5809, 1e-08
      %v5886 = vadd.f32 %v5821, 1e-08
      %v5887 = vadd.f32 %v5833, 1e-08
      %v5888 = vadd.f32 %v5845, 1e-08
      %v5889 = vadd.f32 %v5857, 1e-08
      %v5890 = vrcp.pop %v5858
      %v5891 = vmul.f32 %v5858, %v5890
      %v5892 = vsub.f32 1.0, %v5891
      %v5893 = vmul.f32 %v5890, %v5892
      %v5894 = vadd.f32 %v5890, %v5893
      %vm5895 = vweird.f32 %v5858
      %vm5896 = vweird.f32 %v5890
      %vm5897 = vmor %vm5895, %vm5896
      %v5898 = vsel %vm5897, %v5890, %v5894
      %v5899 = vand.u32 2147483647, %v5858
      %vm5900 = vcmp.eq.f32.partialorder %v5899, 8.507059e+37
      %v5901 = vand.u32 %v5858, 2147483648
      %v5902 = vor.u32 1.1754944e-38, %v5901
      %v5903 = vsel %vm5900, %v5902, %v5898
      %v5904 = vmul.f32 1.0, %v5903
      %v5905 = vrcp.pop %v5859
      %v5906 = vmul.f32 %v5859, %v5905
      %v5907 = vsub.f32 1.0, %v5906
      %v5908 = vmul.f32 %v5905, %v5907
      %v5909 = vadd.f32 %v5905, %v5908
      %vm5910 = vweird.f32 %v5859
      %vm5911 = vweird.f32 %v5905
      %vm5912 = vmor %vm5910, %vm5911
      %v5913 = vsel %vm5912, %v5905, %v5909
      %v5914 = vand.u32 2147483647, %v5859
      %vm5915 = vcmp.eq.f32.partialorder %v5914, 8.507059e+37
      %v5916 = vand.u32 %v5859, 2147483648
      %v5917 = vor.u32 1.1754944e-38, %v5916
      %v5918 = vsel %vm5915, %v5917, %v5913
      %v5919 = vmul.f32 1.0, %v5918
      %v5920 = vrcp.pop %v5860
      %v5921 = vmul.f32 %v5860, %v5920
      %v5922 = vsub.f32 1.0, %v5921
      %v5923 = vmul.f32 %v5920, %v5922
      %v5924 = vadd.f32 %v5920, %v5923
      %vm5925 = vweird.f32 %v5860
      %vm5926 = vweird.f32 %v5920
      %vm5927 = vmor %vm5925, %vm5926
      %v5928 = vsel %vm5927, %v5920, %v5924
      %v5929 = vand.u32 2147483647, %v5860
      %vm5930 = vcmp.eq.f32.partialorder %v5929, 8.507059e+37
      %v5931 = vand.u32 %v5860, 2147483648
      %v5932 = vor.u32 1.1754944e-38, %v5931
      %v5933 = vsel %vm5930, %v5932, %v5928
      %v5934 = vmul.f32 1.0, %v5933
      %v5935 = vrcp.pop %v5861
      %v5936 = vmul.f32 %v5861, %v5935
      %v5937 = vsub.f32 1.0, %v5936
      %v5938 = vmul.f32 %v5935, %v5937
      %v5939 = vadd.f32 %v5935, %v5938
      %vm5940 = vweird.f32 %v5861
      %vm5941 = vweird.f32 %v5935
      %vm5942 = vmor %vm5940, %vm5941
      %v5943 = vsel %vm5942, %v5935, %v5939
      %v5944 = vand.u32 2147483647, %v5861
      %vm5945 = vcmp.eq.f32.partialorder %v5944, 8.507059e+37
      %v5946 = vand.u32 %v5861, 2147483648
      %v5947 = vor.u32 1.1754944e-38, %v5946
      %v5948 = vsel %vm5945, %v5947, %v5943
      %v5949 = vmul.f32 1.0, %v5948
      %v5950 = vrcp.pop %v5862
      %v5951 = vmul.f32 %v5862, %v5950
      %v5952 = vsub.f32 1.0, %v5951
      %v5953 = vmul.f32 %v5950, %v5952
      %v5954 = vadd.f32 %v5950, %v5953
      %vm5955 = vweird.f32 %v5862
      %vm5956 = vweird.f32 %v5950
      %vm5957 = vmor %vm5955, %vm5956
      %v5958 = vsel %vm5957, %v5950, %v5954
      %v5959 = vand.u32 2147483647, %v5862
      %vm5960 = vcmp.eq.f32.partialorder %v5959, 8.507059e+37
      %v5961 = vand.u32 %v5862, 2147483648
      %v5962 = vor.u32 1.1754944e-38, %v5961
      %v5963 = vsel %vm5960, %v5962, %v5958
      %v5964 = vmul.f32 1.0, %v5963
      %v5965 = vrcp.pop %v5863
      %v5966 = vmul.f32 %v5863, %v5965
      %v5967 = vsub.f32 1.0, %v5966
      %v5968 = vmul.f32 %v5965, %v5967
      %v5969 = vadd.f32 %v5965, %v5968
      %vm5970 = vweird.f32 %v5863
      %vm5971 = vweird.f32 %v5965
      %vm5972 = vmor %vm5970, %vm5971
      %v5973 = vsel %vm5972, %v5965, %v5969
      %v5974 = vand.u32 2147483647, %v5863
      %vm5975 = vcmp.eq.f32.partialorder %v5974, 8.507059e+37
      %v5976 = vand.u32 %v5863, 2147483648
      %v5977 = vor.u32 1.1754944e-38, %v5976
      %v5978 = vsel %vm5975, %v5977, %v5973
      %v5979 = vmul.f32 1.0, %v5978
      %v5980 = vrcp.pop %v5864
      %v5981 = vmul.f32 %v5864, %v5980
      %v5982 = vsub.f32 1.0, %v5981
      %v5983 = vmul.f32 %v5980, %v5982
      %v5984 = vadd.f32 %v5980, %v5983
      %vm5985 = vweird.f32 %v5864
      %vm5986 = vweird.f32 %v5980
      %vm5987 = vmor %vm5985, %vm5986
      %v5988 = vsel %vm5987, %v5980, %v5984
      %v5989 = vand.u32 2147483647, %v5864
      %vm5990 = vcmp.eq.f32.partialorder %v5989, 8.507059e+37
      %v5991 = vand.u32 %v5864, 2147483648
      %v5992 = vor.u32 1.1754944e-38, %v5991
      %v5993 = vsel %vm5990, %v5992, %v5988
      %v5994 = vmul.f32 1.0, %v5993
      %v5995 = vrcp.pop %v5865
      %v5996 = vmul.f32 %v5865, %v5995
      %v5997 = vsub.f32 1.0, %v5996
      %v5998 = vmul.f32 %v5995, %v5997
      %v5999 = vadd.f32 %v5995, %v5998
      %vm6000 = vweird.f32 %v5865
      %vm6001 = vweird.f32 %v5995
      %vm6002 = vmor %vm6000, %vm6001
      %v6003 = vsel %vm6002, %v5995, %v5999
      %v6004 = vand.u32 2147483647, %v5865
      %vm6005 = vcmp.eq.f32.partialorder %v6004, 8.507059e+37
      %v6006 = vand.u32 %v5865, 2147483648
      %v6007 = vor.u32 1.1754944e-38, %v6006
      %v6008 = vsel %vm6005, %v6007, %v6003
      %v6009 = vmul.f32 1.0, %v6008
      %v6010 = vrcp.pop %v5866
      %v6011 = vmul.f32 %v5866, %v6010
      %v6012 = vsub.f32 1.0, %v6011
      %v6013 = vmul.f32 %v6010, %v6012
      %v6014 = vadd.f32 %v6010, %v6013
      %vm6015 = vweird.f32 %v5866
      %vm6016 = vweird.f32 %v6010
      %vm6017 = vmor %vm6015, %vm6016
      %v6018 = vsel %vm6017, %v6010, %v6014
      %v6019 = vand.u32 2147483647, %v5866
      %vm6020 = vcmp.eq.f32.partialorder %v6019, 8.507059e+37
      %v6021 = vand.u32 %v5866, 2147483648
      %v6022 = vor.u32 1.1754944e-38, %v6021
      %v6023 = vsel %vm6020, %v6022, %v6018
      %v6024 = vmul.f32 1.0, %v6023
      %v6025 = vrcp.pop %v5867
      %v6026 = vmul.f32 %v5867, %v6025
      %v6027 = vsub.f32 1.0, %v6026
      %v6028 = vmul.f32 %v6025, %v6027
      %v6029 = vadd.f32 %v6025, %v6028
      %vm6030 = vweird.f32 %v5867
      %vm6031 = vweird.f32 %v6025
      %vm6032 = vmor %vm6030, %vm6031
      %v6033 = vsel %vm6032, %v6025, %v6029
      %v6034 = vand.u32 2147483647, %v5867
      %vm6035 = vcmp.eq.f32.partialorder %v6034, 8.507059e+37
      %v6036 = vand.u32 %v5867, 2147483648
      %v6037 = vor.u32 1.1754944e-38, %v6036
      %v6038 = vsel %vm6035, %v6037, %v6033
      %v6039 = vmul.f32 1.0, %v6038
      %v6040 = vrcp.pop %v5868
      %v6041 = vmul.f32 %v5868, %v6040
      %v6042 = vsub.f32 1.0, %v6041
      %v6043 = vmul.f32 %v6040, %v6042
      %v6044 = vadd.f32 %v6040, %v6043
      %vm6045 = vweird.f32 %v5868
      %vm6046 = vweird.f32 %v6040
      %vm6047 = vmor %vm6045, %vm6046
      %v6048 = vsel %vm6047, %v6040, %v6044
      %v6049 = vand.u32 2147483647, %v5868
      %vm6050 = vcmp.eq.f32.partialorder %v6049, 8.507059e+37
      %v6051 = vand.u32 %v5868, 2147483648
      %v6052 = vor.u32 1.1754944e-38, %v6051
      %v6053 = vsel %vm6050, %v6052, %v6048
      %v6054 = vmul.f32 1.0, %v6053
      %v6055 = vrcp.pop %v5869
      %v6056 = vmul.f32 %v5869, %v6055
      %v6057 = vsub.f32 1.0, %v6056
      %v6058 = vmul.f32 %v6055, %v6057
      %v6059 = vadd.f32 %v6055, %v6058
      %vm6060 = vweird.f32 %v5869
      %vm6061 = vweird.f32 %v6055
      %vm6062 = vmor %vm6060, %vm6061
      %v6063 = vsel %vm6062, %v6055, %v6059
      %v6064 = vand.u32 2147483647, %v5869
      %vm6065 = vcmp.eq.f32.partialorder %v6064, 8.507059e+37
      %v6066 = vand.u32 %v5869, 2147483648
      %v6067 = vor.u32 1.1754944e-38, %v6066
      %v6068 = vsel %vm6065, %v6067, %v6063
      %v6069 = vmul.f32 1.0, %v6068
      %v6070 = vrcp.pop %v5870
      %v6071 = vmul.f32 %v5870, %v6070
      %v6072 = vsub.f32 1.0, %v6071
      %v6073 = vmul.f32 %v6070, %v6072
      %v6074 = vadd.f32 %v6070, %v6073
      %vm6075 = vweird.f32 %v5870
      %vm6076 = vweird.f32 %v6070
      %vm6077 = vmor %vm6075, %vm6076
      %v6078 = vsel %vm6077, %v6070, %v6074
      %v6079 = vand.u32 2147483647, %v5870
      %vm6080 = vcmp.eq.f32.partialorder %v6079, 8.507059e+37
      %v6081 = vand.u32 %v5870, 2147483648
      %v6082 = vor.u32 1.1754944e-38, %v6081
      %v6083 = vsel %vm6080, %v6082, %v6078
      %v6084 = vmul.f32 1.0, %v6083
      %v6085 = vrcp.pop %v5871
      %v6086 = vmul.f32 %v5871, %v6085
      %v6087 = vsub.f32 1.0, %v6086
      %v6088 = vmul.f32 %v6085, %v6087
      %v6089 = vadd.f32 %v6085, %v6088
      %vm6090 = vweird.f32 %v5871
      %vm6091 = vweird.f32 %v6085
      %vm6092 = vmor %vm6090, %vm6091
      %v6093 = vsel %vm6092, %v6085, %v6089
      %v6094 = vand.u32 2147483647, %v5871
      %vm6095 = vcmp.eq.f32.partialorder %v6094, 8.507059e+37
      %v6096 = vand.u32 %v5871, 2147483648
      %v6097 = vor.u32 1.1754944e-38, %v6096
      %v6098 = vsel %vm6095, %v6097, %v6093
      %v6099 = vmul.f32 1.0, %v6098
      %v6100 = vrcp.pop %v5872
      %v6101 = vmul.f32 %v5872, %v6100
      %v6102 = vsub.f32 1.0, %v6101
      %v6103 = vmul.f32 %v6100, %v6102
      %v6104 = vadd.f32 %v6100, %v6103
      %vm6105 = vweird.f32 %v5872
      %vm6106 = vweird.f32 %v6100
      %vm6107 = vmor %vm6105, %vm6106
      %v6108 = vsel %vm6107, %v6100, %v6104
      %v6109 = vand.u32 2147483647, %v5872
      %vm6110 = vcmp.eq.f32.partialorder %v6109, 8.507059e+37
      %v6111 = vand.u32 %v5872, 2147483648
      %v6112 = vor.u32 1.1754944e-38, %v6111
      %v6113 = vsel %vm6110, %v6112, %v6108
      %v6114 = vmul.f32 1.0, %v6113
      %v6115 = vrcp.pop %v5873
      %v6116 = vmul.f32 %v5873, %v6115
      %v6117 = vsub.f32 1.0, %v6116
      %v6118 = vmul.f32 %v6115, %v6117
      %v6119 = vadd.f32 %v6115, %v6118
      %vm6120 = vweird.f32 %v5873
      %vm6121 = vweird.f32 %v6115
      %vm6122 = vmor %vm6120, %vm6121
      %v6123 = vsel %vm6122, %v6115, %v6119
      %v6124 = vand.u32 2147483647, %v5873
      %vm6125 = vcmp.eq.f32.partialorder %v6124, 8.507059e+37
      %v6126 = vand.u32 %v5873, 2147483648
      %v6127 = vor.u32 1.1754944e-38, %v6126
      %v6128 = vsel %vm6125, %v6127, %v6123
      %v6129 = vmul.f32 1.0, %v6128
      %v6130 = vrcp.pop %v5874
      %v6131 = vmul.f32 %v5874, %v6130
      %v6132 = vsub.f32 1.0, %v6131
      %v6133 = vmul.f32 %v6130, %v6132
      %v6134 = vadd.f32 %v6130, %v6133
      %vm6135 = vweird.f32 %v5874
      %vm6136 = vweird.f32 %v6130
      %vm6137 = vmor %vm6135, %vm6136
      %v6138 = vsel %vm6137, %v6130, %v6134
      %v6139 = vand.u32 2147483647, %v5874
      %vm6140 = vcmp.eq.f32.partialorder %v6139, 8.507059e+37
      %v6141 = vand.u32 %v5874, 2147483648
      %v6142 = vor.u32 1.1754944e-38, %v6141
      %v6143 = vsel %vm6140, %v6142, %v6138
      %v6144 = vmul.f32 1.0, %v6143
      %v6145 = vrcp.pop %v5875
      %v6146 = vmul.f32 %v5875, %v6145
      %v6147 = vsub.f32 1.0, %v6146
      %v6148 = vmul.f32 %v6145, %v6147
      %v6149 = vadd.f32 %v6145, %v6148
      %vm6150 = vweird.f32 %v5875
      %vm6151 = vweird.f32 %v6145
      %vm6152 = vmor %vm6150, %vm6151
      %v6153 = vsel %vm6152, %v6145, %v6149
      %v6154 = vand.u32 2147483647, %v5875
      %vm6155 = vcmp.eq.f32.partialorder %v6154, 8.507059e+37
      %v6156 = vand.u32 %v5875, 2147483648
      %v6157 = vor.u32 1.1754944e-38, %v6156
      %v6158 = vsel %vm6155, %v6157, %v6153
      %v6159 = vmul.f32 1.0, %v6158
      %v6160 = vrcp.pop %v5876
      %v6161 = vmul.f32 %v5876, %v6160
      %v6162 = vsub.f32 1.0, %v6161
      %v6163 = vmul.f32 %v6160, %v6162
      %v6164 = vadd.f32 %v6160, %v6163
      %vm6165 = vweird.f32 %v5876
      %vm6166 = vweird.f32 %v6160
      %vm6167 = vmor %vm6165, %vm6166
      %v6168 = vsel %vm6167, %v6160, %v6164
      %v6169 = vand.u32 2147483647, %v5876
      %vm6170 = vcmp.eq.f32.partialorder %v6169, 8.507059e+37
      %v6171 = vand.u32 %v5876, 2147483648
      %v6172 = vor.u32 1.1754944e-38, %v6171
      %v6173 = vsel %vm6170, %v6172, %v6168
      %v6174 = vmul.f32 1.0, %v6173
      %v6175 = vrcp.pop %v5877
      %v6176 = vmul.f32 %v5877, %v6175
      %v6177 = vsub.f32 1.0, %v6176
      %v6178 = vmul.f32 %v6175, %v6177
      %v6179 = vadd.f32 %v6175, %v6178
      %vm6180 = vweird.f32 %v5877
      %vm6181 = vweird.f32 %v6175
      %vm6182 = vmor %vm6180, %vm6181
      %v6183 = vsel %vm6182, %v6175, %v6179
      %v6184 = vand.u32 2147483647, %v5877
      %vm6185 = vcmp.eq.f32.partialorder %v6184, 8.507059e+37
      %v6186 = vand.u32 %v5877, 2147483648
      %v6187 = vor.u32 1.1754944e-38, %v6186
      %v6188 = vsel %vm6185, %v6187, %v6183
      %v6189 = vmul.f32 1.0, %v6188
      %v6190 = vrcp.pop %v5878
      %v6191 = vmul.f32 %v5878, %v6190
      %v6192 = vsub.f32 1.0, %v6191
      %v6193 = vmul.f32 %v6190, %v6192
      %v6194 = vadd.f32 %v6190, %v6193
      %vm6195 = vweird.f32 %v5878
      %vm6196 = vweird.f32 %v6190
      %vm6197 = vmor %vm6195, %vm6196
      %v6198 = vsel %vm6197, %v6190, %v6194
      %v6199 = vand.u32 2147483647, %v5878
      %vm6200 = vcmp.eq.f32.partialorder %v6199, 8.507059e+37
      %v6201 = vand.u32 %v5878, 2147483648
      %v6202 = vor.u32 1.1754944e-38, %v6201
      %v6203 = vsel %vm6200, %v6202, %v6198
      %v6204 = vmul.f32 1.0, %v6203
      %v6205 = vrcp.pop %v5879
      %v6206 = vmul.f32 %v5879, %v6205
      %v6207 = vsub.f32 1.0, %v6206
      %v6208 = vmul.f32 %v6205, %v6207
      %v6209 = vadd.f32 %v6205, %v6208
      %vm6210 = vweird.f32 %v5879
      %vm6211 = vweird.f32 %v6205
      %vm6212 = vmor %vm6210, %vm6211
      %v6213 = vsel %vm6212, %v6205, %v6209
      %v6214 = vand.u32 2147483647, %v5879
      %vm6215 = vcmp.eq.f32.partialorder %v6214, 8.507059e+37
      %v6216 = vand.u32 %v5879, 2147483648
      %v6217 = vor.u32 1.1754944e-38, %v6216
      %v6218 = vsel %vm6215, %v6217, %v6213
      %v6219 = vmul.f32 1.0, %v6218
      %v6220 = vrcp.pop %v5880
      %v6221 = vmul.f32 %v5880, %v6220
      %v6222 = vsub.f32 1.0, %v6221
      %v6223 = vmul.f32 %v6220, %v6222
      %v6224 = vadd.f32 %v6220, %v6223
      %vm6225 = vweird.f32 %v5880
      %vm6226 = vweird.f32 %v6220
      %vm6227 = vmor %vm6225, %vm6226
      %v6228 = vsel %vm6227, %v6220, %v6224
      %v6229 = vand.u32 2147483647, %v5880
      %vm6230 = vcmp.eq.f32.partialorder %v6229, 8.507059e+37
      %v6231 = vand.u32 %v5880, 2147483648
      %v6232 = vor.u32 1.1754944e-38, %v6231
      %v6233 = vsel %vm6230, %v6232, %v6228
      %v6234 = vmul.f32 1.0, %v6233
      %v6235 = vrcp.pop %v5881
      %v6236 = vmul.f32 %v5881, %v6235
      %v6237 = vsub.f32 1.0, %v6236
      %v6238 = vmul.f32 %v6235, %v6237
      %v6239 = vadd.f32 %v6235, %v6238
      %vm6240 = vweird.f32 %v5881
      %vm6241 = vweird.f32 %v6235
      %vm6242 = vmor %vm6240, %vm6241
      %v6243 = vsel %vm6242, %v6235, %v6239
      %v6244 = vand.u32 2147483647, %v5881
      %vm6245 = vcmp.eq.f32.partialorder %v6244, 8.507059e+37
      %v6246 = vand.u32 %v5881, 2147483648
      %v6247 = vor.u32 1.1754944e-38, %v6246
      %v6248 = vsel %vm6245, %v6247, %v6243
      %v6249 = vmul.f32 1.0, %v6248
      %v6250 = vrcp.pop %v5882
      %v6251 = vmul.f32 %v5882, %v6250
      %v6252 = vsub.f32 1.0, %v6251
      %v6253 = vmul.f32 %v6250, %v6252
      %v6254 = vadd.f32 %v6250, %v6253
      %vm6255 = vweird.f32 %v5882
      %vm6256 = vweird.f32 %v6250
      %vm6257 = vmor %vm6255, %vm6256
      %v6258 = vsel %vm6257, %v6250, %v6254
      %v6259 = vand.u32 2147483647, %v5882
      %vm6260 = vcmp.eq.f32.partialorder %v6259, 8.507059e+37
      %v6261 = vand.u32 %v5882, 2147483648
      %v6262 = vor.u32 1.1754944e-38, %v6261
      %v6263 = vsel %vm6260, %v6262, %v6258
      %v6264 = vmul.f32 1.0, %v6263
      %v6265 = vrcp.pop %v5883
      %v6266 = vmul.f32 %v5883, %v6265
      %v6267 = vsub.f32 1.0, %v6266
      %v6268 = vmul.f32 %v6265, %v6267
      %v6269 = vadd.f32 %v6265, %v6268
      %vm6270 = vweird.f32 %v5883
      %vm6271 = vweird.f32 %v6265
      %vm6272 = vmor %vm6270, %vm6271
      %v6273 = vsel %vm6272, %v6265, %v6269
      %v6274 = vand.u32 2147483647, %v5883
      %vm6275 = vcmp.eq.f32.partialorder %v6274, 8.507059e+37
      %v6276 = vand.u32 %v5883, 2147483648
      %v6277 = vor.u32 1.1754944e-38, %v6276
      %v6278 = vsel %vm6275, %v6277, %v6273
      %v6279 = vmul.f32 1.0, %v6278
      %v6280 = vrcp.pop %v5884
      %v6281 = vmul.f32 %v5884, %v6280
      %v6282 = vsub.f32 1.0, %v6281
      %v6283 = vmul.f32 %v6280, %v6282
      %v6284 = vadd.f32 %v6280, %v6283
      %vm6285 = vweird.f32 %v5884
      %vm6286 = vweird.f32 %v6280
      %vm6287 = vmor %vm6285, %vm6286
      %v6288 = vsel %vm6287, %v6280, %v6284
      %v6289 = vand.u32 2147483647, %v5884
      %vm6290 = vcmp.eq.f32.partialorder %v6289, 8.507059e+37
      %v6291 = vand.u32 %v5884, 2147483648
      %v6292 = vor.u32 1.1754944e-38, %v6291
      %v6293 = vsel %vm6290, %v6292, %v6288
      %v6294 = vmul.f32 1.0, %v6293
      %v6295 = vrcp.pop %v5885
      %v6296 = vmul.f32 %v5885, %v6295
      %v6297 = vsub.f32 1.0, %v6296
      %v6298 = vmul.f32 %v6295, %v6297
      %v6299 = vadd.f32 %v6295, %v6298
      %vm6300 = vweird.f32 %v5885
      %vm6301 = vweird.f32 %v6295
      %vm6302 = vmor %vm6300, %vm6301
      %v6303 = vsel %vm6302, %v6295, %v6299
      %v6304 = vand.u32 2147483647, %v5885
      %vm6305 = vcmp.eq.f32.partialorder %v6304, 8.507059e+37
      %v6306 = vand.u32 %v5885, 2147483648
      %v6307 = vor.u32 1.1754944e-38, %v6306
      %v6308 = vsel %vm6305, %v6307, %v6303
      %v6309 = vmul.f32 1.0, %v6308
      %v6310 = vrcp.pop %v5886
      %v6311 = vmul.f32 %v5886, %v6310
      %v6312 = vsub.f32 1.0, %v6311
      %v6313 = vmul.f32 %v6310, %v6312
      %v6314 = vadd.f32 %v6310, %v6313
      %vm6315 = vweird.f32 %v5886
      %vm6316 = vweird.f32 %v6310
      %vm6317 = vmor %vm6315, %vm6316
      %v6318 = vsel %vm6317, %v6310, %v6314
      %v6319 = vand.u32 2147483647, %v5886
      %vm6320 = vcmp.eq.f32.partialorder %v6319, 8.507059e+37
      %v6321 = vand.u32 %v5886, 2147483648
      %v6322 = vor.u32 1.1754944e-38, %v6321
      %v6323 = vsel %vm6320, %v6322, %v6318
      %v6324 = vmul.f32 1.0, %v6323
      %v6325 = vrcp.pop %v5887
      %v6326 = vmul.f32 %v5887, %v6325
      %v6327 = vsub.f32 1.0, %v6326
      %v6328 = vmul.f32 %v6325, %v6327
      %v6329 = vadd.f32 %v6325, %v6328
      %vm6330 = vweird.f32 %v5887
      %vm6331 = vweird.f32 %v6325
      %vm6332 = vmor %vm6330, %vm6331
      %v6333 = vsel %vm6332, %v6325, %v6329
      %v6334 = vand.u32 2147483647, %v5887
      %vm6335 = vcmp.eq.f32.partialorder %v6334, 8.507059e+37
      %v6336 = vand.u32 %v5887, 2147483648
      %v6337 = vor.u32 1.1754944e-38, %v6336
      %v6338 = vsel %vm6335, %v6337, %v6333
      %v6339 = vmul.f32 1.0, %v6338
      %v6340 = vrcp.pop %v5888
      %v6341 = vmul.f32 %v5888, %v6340
      %v6342 = vsub.f32 1.0, %v6341
      %v6343 = vmul.f32 %v6340, %v6342
      %v6344 = vadd.f32 %v6340, %v6343
      %vm6345 = vweird.f32 %v5888
      %vm6346 = vweird.f32 %v6340
      %vm6347 = vmor %vm6345, %vm6346
      %v6348 = vsel %vm6347, %v6340, %v6344
      %v6349 = vand.u32 2147483647, %v5888
      %vm6350 = vcmp.eq.f32.partialorder %v6349, 8.507059e+37
      %v6351 = vand.u32 %v5888, 2147483648
      %v6352 = vor.u32 1.1754944e-38, %v6351
      %v6353 = vsel %vm6350, %v6352, %v6348
      %v6354 = vmul.f32 1.0, %v6353
      %v6355 = vrcp.pop %v5889
      %v6356 = vmul.f32 %v5889, %v6355
      %v6357 = vsub.f32 1.0, %v6356
      %v6358 = vmul.f32 %v6355, %v6357
      %v6359 = vadd.f32 %v6355, %v6358
      %vm6360 = vweird.f32 %v5889
      %vm6361 = vweird.f32 %v6355
      %vm6362 = vmor %vm6360, %vm6361
      %v6363 = vsel %vm6362, %v6355, %v6359
      %v6364 = vand.u32 2147483647, %v5889
      %vm6365 = vcmp.eq.f32.partialorder %v6364, 8.507059e+37
      %v6366 = vand.u32 %v5889, 2147483648
      %v6367 = vor.u32 1.1754944e-38, %v6366
      %v6368 = vsel %vm6365, %v6367, %v6363
      %v6369 = vmul.f32 1.0, %v6368
      %v6370 = vsel %vm5442, %v5904, 0.0
      %v6371 = vsel %vm5443, %v5919, 0.0
      %v6372 = vsel %vm5444, %v5934, 0.0
      %v6373 = vsel %vm5445, %v5949, 0.0
      %v6374 = vsel %vm5446, %v5964, 0.0
      %v6375 = vsel %vm5447, %v5979, 0.0
      %v6376 = vsel %vm5448, %v5994, 0.0
      %v6377 = vsel %vm5449, %v6009, 0.0
      %v6378 = vsel %vm5450, %v6024, 0.0
      %v6379 = vsel %vm5451, %v6039, 0.0
      %v6380 = vsel %vm5452, %v6054, 0.0
      %v6381 = vsel %vm5453, %v6069, 0.0
      %v6382 = vsel %vm5454, %v6084, 0.0
      %v6383 = vsel %vm5455, %v6099, 0.0
      %v6384 = vsel %vm5456, %v6114, 0.0
      %v6385 = vsel %vm5457, %v6129, 0.0
      %v6386 = vsel %vm5458, %v6144, 0.0
      %v6387 = vsel %vm5459, %v6159, 0.0
      %v6388 = vsel %vm5460, %v6174, 0.0
      %v6389 = vsel %vm5461, %v6189, 0.0
      %v6390 = vsel %vm5462, %v6204, 0.0
      %v6391 = vsel %vm5463, %v6219, 0.0
      %v6392 = vsel %vm5464, %v6234, 0.0
      %v6393 = vsel %vm5465, %v6249, 0.0
      %v6394 = vsel %vm5466, %v6264, 0.0
      %v6395 = vsel %vm5467, %v6279, 0.0
      %v6396 = vsel %vm5468, %v6294, 0.0
      %v6397 = vsel %vm5469, %v6309, 0.0
      %v6398 = vsel %vm5470, %v6324, 0.0
      %v6399 = vsel %vm5471, %v6339, 0.0
      %v6400 = vsel %vm5472, %v6354, 0.0
      %v6401 = vsel %vm5473, %v6369, 0.0
      %v6402 = vadd.f32 %v4706, %v6370
      %v6403 = vadd.f32 %v4707, %v6371
      %v6404 = vadd.f32 %v4708, %v6372
      %v6405 = vadd.f32 %v4709, %v6373
      %v6406 = vadd.f32 %v4710, %v6374
      %v6407 = vadd.f32 %v4711, %v6375
      %v6408 = vadd.f32 %v4712, %v6376
      %v6409 = vadd.f32 %v4713, %v6377
      %v6410 = vadd.f32 %v4714, %v6378
      %v6411 = vadd.f32 %v4715, %v6379
      %v6412 = vadd.f32 %v4716, %v6380
      %v6413 = vadd.f32 %v4717, %v6381
      %v6414 = vadd.f32 %v4718, %v6382
      %v6415 = vadd.f32 %v4719, %v6383
      %v6416 = vadd.f32 %v4720, %v6384
      %v6417 = vadd.f32 %v4721, %v6385
      %v6418 = vadd.f32 %v4722, %v6386
      %v6419 = vadd.f32 %v4723, %v6387
      %v6420 = vadd.f32 %v4724, %v6388
      %v6421 = vadd.f32 %v4725, %v6389
      %v6422 = vadd.f32 %v4726, %v6390
      %v6423 = vadd.f32 %v4727, %v6391
      %v6424 = vadd.f32 %v4728, %v6392
      %v6425 = vadd.f32 %v4729, %v6393
      %v6426 = vadd.f32 %v4730, %v6394
      %v6427 = vadd.f32 %v4731, %v6395
      %v6428 = vadd.f32 %v4732, %v6396
      %v6429 = vadd.f32 %v4733, %v6397
      %v6430 = vadd.f32 %v4734, %v6398
      %v6431 = vadd.f32 %v4735, %v6399
      %v6432 = vadd.f32 %v4736, %v6400
      %v6433 = vadd.f32 %v4737, %v6401
      %v6434 = vadd.f32 %v4738, %v5904
      %v6435 = vadd.f32 %v4739, %v5919
      %v6436 = vadd.f32 %v4740, %v5934
      %v6437 = vadd.f32 %v4741, %v5949
      %v6438 = vadd.f32 %v4742, %v5964
      %v6439 = vadd.f32 %v4743, %v5979
      %v6440 = vadd.f32 %v4744, %v5994
      %v6441 = vadd.f32 %v4745, %v6009
      %v6442 = vadd.f32 %v4746, %v6024
      %v6443 = vadd.f32 %v4747, %v6039
      %v6444 = vadd.f32 %v4748, %v6054
      %v6445 = vadd.f32 %v4749, %v6069
      %v6446 = vadd.f32 %v4750, %v6084
      %v6447 = vadd.f32 %v4751, %v6099
      %v6448 = vadd.f32 %v4752, %v6114
      %v6449 = vadd.f32 %v4753, %v6129
      %v6450 = vadd.f32 %v4754, %v6144
      %v6451 = vadd.f32 %v4755, %v6159
      %v6452 = vadd.f32 %v4756, %v6174
      %v6453 = vadd.f32 %v4757, %v6189
      %v6454 = vadd.f32 %v4758, %v6204
      %v6455 = vadd.f32 %v4759, %v6219
      %v6456 = vadd.f32 %v4760, %v6234
      %v6457 = vadd.f32 %v4761, %v6249
      %v6458 = vadd.f32 %v4762, %v6264
      %v6459 = vadd.f32 %v4763, %v6279
      %v6460 = vadd.f32 %v4764, %v6294
      %v6461 = vadd.f32 %v4765, %v6309
      %v6462 = vadd.f32 %v4766, %v6324
      %v6463 = vadd.f32 %v4767, %v6339
      %v6464 = vadd.f32 %v4768, %v6354
      %v6465 = vadd.f32 %v4769, %v6369
      %v6466 = vrcp.pop %v6434
      %v6467 = vmul.f32 %v6434, %v6466
      %v6468 = vsub.f32 1.0, %v6467
      %v6469 = vmul.f32 %v6466, %v6468
      %v6470 = vadd.f32 %v6466, %v6469
      %vm6471 = vweird.f32 %v6434
      %vm6472 = vweird.f32 %v6466
      %vm6473 = vmor %vm6471, %vm6472
      %v6474 = vsel %vm6473, %v6466, %v6470
      %v6475 = vand.u32 2147483647, %v6434
      %vm6476 = vcmp.eq.f32.partialorder %v6475, 8.507059e+37
      %v6477 = vand.u32 %v6434, 2147483648
      %v6478 = vor.u32 1.1754944e-38, %v6477
      %v6479 = vsel %vm6476, %v6478, %v6474
      %v6480 = vmul.f32 1.0, %v6479
      %v6481 = vrcp.pop %v6435
      %v6482 = vmul.f32 %v6435, %v6481
      %v6483 = vsub.f32 1.0, %v6482
      %v6484 = vmul.f32 %v6481, %v6483
      %v6485 = vadd.f32 %v6481, %v6484
      %vm6486 = vweird.f32 %v6435
      %vm6487 = vweird.f32 %v6481
      %vm6488 = vmor %vm6486, %vm6487
      %v6489 = vsel %vm6488, %v6481, %v6485
      %v6490 = vand.u32 2147483647, %v6435
      %vm6491 = vcmp.eq.f32.partialorder %v6490, 8.507059e+37
      %v6492 = vand.u32 %v6435, 2147483648
      %v6493 = vor.u32 1.1754944e-38, %v6492
      %v6494 = vsel %vm6491, %v6493, %v6489
      %v6495 = vmul.f32 1.0, %v6494
      %v6496 = vrcp.pop %v6436
      %v6497 = vmul.f32 %v6436, %v6496
      %v6498 = vsub.f32 1.0, %v6497
      %v6499 = vmul.f32 %v6496, %v6498
      %v6500 = vadd.f32 %v6496, %v6499
      %vm6501 = vweird.f32 %v6436
      %vm6502 = vweird.f32 %v6496
      %vm6503 = vmor %vm6501, %vm6502
      %v6504 = vsel %vm6503, %v6496, %v6500
      %v6505 = vand.u32 2147483647, %v6436
      %vm6506 = vcmp.eq.f32.partialorder %v6505, 8.507059e+37
      %v6507 = vand.u32 %v6436, 2147483648
      %v6508 = vor.u32 1.1754944e-38, %v6507
      %v6509 = vsel %vm6506, %v6508, %v6504
      %v6510 = vmul.f32 1.0, %v6509
      %v6511 = vrcp.pop %v6437
      %v6512 = vmul.f32 %v6437, %v6511
      %v6513 = vsub.f32 1.0, %v6512
      %v6514 = vmul.f32 %v6511, %v6513
      %v6515 = vadd.f32 %v6511, %v6514
      %vm6516 = vweird.f32 %v6437
      %vm6517 = vweird.f32 %v6511
      %vm6518 = vmor %vm6516, %vm6517
      %v6519 = vsel %vm6518, %v6511, %v6515
      %v6520 = vand.u32 2147483647, %v6437
      %vm6521 = vcmp.eq.f32.partialorder %v6520, 8.507059e+37
      %v6522 = vand.u32 %v6437, 2147483648
      %v6523 = vor.u32 1.1754944e-38, %v6522
      %v6524 = vsel %vm6521, %v6523, %v6519
      %v6525 = vmul.f32 1.0, %v6524
      %v6526 = vrcp.pop %v6438
      %v6527 = vmul.f32 %v6438, %v6526
      %v6528 = vsub.f32 1.0, %v6527
      %v6529 = vmul.f32 %v6526, %v6528
      %v6530 = vadd.f32 %v6526, %v6529
      %vm6531 = vweird.f32 %v6438
      %vm6532 = vweird.f32 %v6526
      %vm6533 = vmor %vm6531, %vm6532
      %v6534 = vsel %vm6533, %v6526, %v6530
      %v6535 = vand.u32 2147483647, %v6438
      %vm6536 = vcmp.eq.f32.partialorder %v6535, 8.507059e+37
      %v6537 = vand.u32 %v6438, 2147483648
      %v6538 = vor.u32 1.1754944e-38, %v6537
      %v6539 = vsel %vm6536, %v6538, %v6534
      %v6540 = vmul.f32 1.0, %v6539
      %v6541 = vrcp.pop %v6439
      %v6542 = vmul.f32 %v6439, %v6541
      %v6543 = vsub.f32 1.0, %v6542
      %v6544 = vmul.f32 %v6541, %v6543
      %v6545 = vadd.f32 %v6541, %v6544
      %vm6546 = vweird.f32 %v6439
      %vm6547 = vweird.f32 %v6541
      %vm6548 = vmor %vm6546, %vm6547
      %v6549 = vsel %vm6548, %v6541, %v6545
      %v6550 = vand.u32 2147483647, %v6439
      %vm6551 = vcmp.eq.f32.partialorder %v6550, 8.507059e+37
      %v6552 = vand.u32 %v6439, 2147483648
      %v6553 = vor.u32 1.1754944e-38, %v6552
      %v6554 = vsel %vm6551, %v6553, %v6549
      %v6555 = vmul.f32 1.0, %v6554
      %v6556 = vrcp.pop %v6440
      %v6557 = vmul.f32 %v6440, %v6556
      %v6558 = vsub.f32 1.0, %v6557
      %v6559 = vmul.f32 %v6556, %v6558
      %v6560 = vadd.f32 %v6556, %v6559
      %vm6561 = vweird.f32 %v6440
      %vm6562 = vweird.f32 %v6556
      %vm6563 = vmor %vm6561, %vm6562
      %v6564 = vsel %vm6563, %v6556, %v6560
      %v6565 = vand.u32 2147483647, %v6440
      %vm6566 = vcmp.eq.f32.partialorder %v6565, 8.507059e+37
      %v6567 = vand.u32 %v6440, 2147483648
      %v6568 = vor.u32 1.1754944e-38, %v6567
      %v6569 = vsel %vm6566, %v6568, %v6564
      %v6570 = vmul.f32 1.0, %v6569
      %v6571 = vrcp.pop %v6441
      %v6572 = vmul.f32 %v6441, %v6571
      %v6573 = vsub.f32 1.0, %v6572
      %v6574 = vmul.f32 %v6571, %v6573
      %v6575 = vadd.f32 %v6571, %v6574
      %vm6576 = vweird.f32 %v6441
      %vm6577 = vweird.f32 %v6571
      %vm6578 = vmor %vm6576, %vm6577
      %v6579 = vsel %vm6578, %v6571, %v6575
      %v6580 = vand.u32 2147483647, %v6441
      %vm6581 = vcmp.eq.f32.partialorder %v6580, 8.507059e+37
      %v6582 = vand.u32 %v6441, 2147483648
      %v6583 = vor.u32 1.1754944e-38, %v6582
      %v6584 = vsel %vm6581, %v6583, %v6579
      %v6585 = vmul.f32 1.0, %v6584
      %v6586 = vrcp.pop %v6442
      %v6587 = vmul.f32 %v6442, %v6586
      %v6588 = vsub.f32 1.0, %v6587
      %v6589 = vmul.f32 %v6586, %v6588
      %v6590 = vadd.f32 %v6586, %v6589
      %vm6591 = vweird.f32 %v6442
      %vm6592 = vweird.f32 %v6586
      %vm6593 = vmor %vm6591, %vm6592
      %v6594 = vsel %vm6593, %v6586, %v6590
      %v6595 = vand.u32 2147483647, %v6442
      %vm6596 = vcmp.eq.f32.partialorder %v6595, 8.507059e+37
      %v6597 = vand.u32 %v6442, 2147483648
      %v6598 = vor.u32 1.1754944e-38, %v6597
      %v6599 = vsel %vm6596, %v6598, %v6594
      %v6600 = vmul.f32 1.0, %v6599
      %v6601 = vrcp.pop %v6443
      %v6602 = vmul.f32 %v6443, %v6601
      %v6603 = vsub.f32 1.0, %v6602
      %v6604 = vmul.f32 %v6601, %v6603
      %v6605 = vadd.f32 %v6601, %v6604
      %vm6606 = vweird.f32 %v6443
      %vm6607 = vweird.f32 %v6601
      %vm6608 = vmor %vm6606, %vm6607
      %v6609 = vsel %vm6608, %v6601, %v6605
      %v6610 = vand.u32 2147483647, %v6443
      %vm6611 = vcmp.eq.f32.partialorder %v6610, 8.507059e+37
      %v6612 = vand.u32 %v6443, 2147483648
      %v6613 = vor.u32 1.1754944e-38, %v6612
      %v6614 = vsel %vm6611, %v6613, %v6609
      %v6615 = vmul.f32 1.0, %v6614
      %v6616 = vrcp.pop %v6444
      %v6617 = vmul.f32 %v6444, %v6616
      %v6618 = vsub.f32 1.0, %v6617
      %v6619 = vmul.f32 %v6616, %v6618
      %v6620 = vadd.f32 %v6616, %v6619
      %vm6621 = vweird.f32 %v6444
      %vm6622 = vweird.f32 %v6616
      %vm6623 = vmor %vm6621, %vm6622
      %v6624 = vsel %vm6623, %v6616, %v6620
      %v6625 = vand.u32 2147483647, %v6444
      %vm6626 = vcmp.eq.f32.partialorder %v6625, 8.507059e+37
      %v6627 = vand.u32 %v6444, 2147483648
      %v6628 = vor.u32 1.1754944e-38, %v6627
      %v6629 = vsel %vm6626, %v6628, %v6624
      %v6630 = vmul.f32 1.0, %v6629
      %v6631 = vrcp.pop %v6445
      %v6632 = vmul.f32 %v6445, %v6631
      %v6633 = vsub.f32 1.0, %v6632
      %v6634 = vmul.f32 %v6631, %v6633
      %v6635 = vadd.f32 %v6631, %v6634
      %vm6636 = vweird.f32 %v6445
      %vm6637 = vweird.f32 %v6631
      %vm6638 = vmor %vm6636, %vm6637
      %v6639 = vsel %vm6638, %v6631, %v6635
      %v6640 = vand.u32 2147483647, %v6445
      %vm6641 = vcmp.eq.f32.partialorder %v6640, 8.507059e+37
      %v6642 = vand.u32 %v6445, 2147483648
      %v6643 = vor.u32 1.1754944e-38, %v6642
      %v6644 = vsel %vm6641, %v6643, %v6639
      %v6645 = vmul.f32 1.0, %v6644
      %v6646 = vrcp.pop %v6446
      %v6647 = vmul.f32 %v6446, %v6646
      %v6648 = vsub.f32 1.0, %v6647
      %v6649 = vmul.f32 %v6646, %v6648
      %v6650 = vadd.f32 %v6646, %v6649
      %vm6651 = vweird.f32 %v6446
      %vm6652 = vweird.f32 %v6646
      %vm6653 = vmor %vm6651, %vm6652
      %v6654 = vsel %vm6653, %v6646, %v6650
      %v6655 = vand.u32 2147483647, %v6446
      %vm6656 = vcmp.eq.f32.partialorder %v6655, 8.507059e+37
      %v6657 = vand.u32 %v6446, 2147483648
      %v6658 = vor.u32 1.1754944e-38, %v6657
      %v6659 = vsel %vm6656, %v6658, %v6654
      %v6660 = vmul.f32 1.0, %v6659
      %v6661 = vrcp.pop %v6447
      %v6662 = vmul.f32 %v6447, %v6661
      %v6663 = vsub.f32 1.0, %v6662
      %v6664 = vmul.f32 %v6661, %v6663
      %v6665 = vadd.f32 %v6661, %v6664
      %vm6666 = vweird.f32 %v6447
      %vm6667 = vweird.f32 %v6661
      %vm6668 = vmor %vm6666, %vm6667
      %v6669 = vsel %vm6668, %v6661, %v6665
      %v6670 = vand.u32 2147483647, %v6447
      %vm6671 = vcmp.eq.f32.partialorder %v6670, 8.507059e+37
      %v6672 = vand.u32 %v6447, 2147483648
      %v6673 = vor.u32 1.1754944e-38, %v6672
      %v6674 = vsel %vm6671, %v6673, %v6669
      %v6675 = vmul.f32 1.0, %v6674
      %v6676 = vrcp.pop %v6448
      %v6677 = vmul.f32 %v6448, %v6676
      %v6678 = vsub.f32 1.0, %v6677
      %v6679 = vmul.f32 %v6676, %v6678
      %v6680 = vadd.f32 %v6676, %v6679
      %vm6681 = vweird.f32 %v6448
      %vm6682 = vweird.f32 %v6676
      %vm6683 = vmor %vm6681, %vm6682
      %v6684 = vsel %vm6683, %v6676, %v6680
      %v6685 = vand.u32 2147483647, %v6448
      %vm6686 = vcmp.eq.f32.partialorder %v6685, 8.507059e+37
      %v6687 = vand.u32 %v6448, 2147483648
      %v6688 = vor.u32 1.1754944e-38, %v6687
      %v6689 = vsel %vm6686, %v6688, %v6684
      %v6690 = vmul.f32 1.0, %v6689
      %v6691 = vrcp.pop %v6449
      %v6692 = vmul.f32 %v6449, %v6691
      %v6693 = vsub.f32 1.0, %v6692
      %v6694 = vmul.f32 %v6691, %v6693
      %v6695 = vadd.f32 %v6691, %v6694
      %vm6696 = vweird.f32 %v6449
      %vm6697 = vweird.f32 %v6691
      %vm6698 = vmor %vm6696, %vm6697
      %v6699 = vsel %vm6698, %v6691, %v6695
      %v6700 = vand.u32 2147483647, %v6449
      %vm6701 = vcmp.eq.f32.partialorder %v6700, 8.507059e+37
      %v6702 = vand.u32 %v6449, 2147483648
      %v6703 = vor.u32 1.1754944e-38, %v6702
      %v6704 = vsel %vm6701, %v6703, %v6699
      %v6705 = vmul.f32 1.0, %v6704
      %v6706 = vrcp.pop %v6450
      %v6707 = vmul.f32 %v6450, %v6706
      %v6708 = vsub.f32 1.0, %v6707
      %v6709 = vmul.f32 %v6706, %v6708
      %v6710 = vadd.f32 %v6706, %v6709
      %vm6711 = vweird.f32 %v6450
      %vm6712 = vweird.f32 %v6706
      %vm6713 = vmor %vm6711, %vm6712
      %v6714 = vsel %vm6713, %v6706, %v6710
      %v6715 = vand.u32 2147483647, %v6450
      %vm6716 = vcmp.eq.f32.partialorder %v6715, 8.507059e+37
      %v6717 = vand.u32 %v6450, 2147483648
      %v6718 = vor.u32 1.1754944e-38, %v6717
      %v6719 = vsel %vm6716, %v6718, %v6714
      %v6720 = vmul.f32 1.0, %v6719
      %v6721 = vrcp.pop %v6451
      %v6722 = vmul.f32 %v6451, %v6721
      %v6723 = vsub.f32 1.0, %v6722
      %v6724 = vmul.f32 %v6721, %v6723
      %v6725 = vadd.f32 %v6721, %v6724
      %vm6726 = vweird.f32 %v6451
      %vm6727 = vweird.f32 %v6721
      %vm6728 = vmor %vm6726, %vm6727
      %v6729 = vsel %vm6728, %v6721, %v6725
      %v6730 = vand.u32 2147483647, %v6451
      %vm6731 = vcmp.eq.f32.partialorder %v6730, 8.507059e+37
      %v6732 = vand.u32 %v6451, 2147483648
      %v6733 = vor.u32 1.1754944e-38, %v6732
      %v6734 = vsel %vm6731, %v6733, %v6729
      %v6735 = vmul.f32 1.0, %v6734
      %v6736 = vrcp.pop %v6452
      %v6737 = vmul.f32 %v6452, %v6736
      %v6738 = vsub.f32 1.0, %v6737
      %v6739 = vmul.f32 %v6736, %v6738
      %v6740 = vadd.f32 %v6736, %v6739
      %vm6741 = vweird.f32 %v6452
      %vm6742 = vweird.f32 %v6736
      %vm6743 = vmor %vm6741, %vm6742
      %v6744 = vsel %vm6743, %v6736, %v6740
      %v6745 = vand.u32 2147483647, %v6452
      %vm6746 = vcmp.eq.f32.partialorder %v6745, 8.507059e+37
      %v6747 = vand.u32 %v6452, 2147483648
      %v6748 = vor.u32 1.1754944e-38, %v6747
      %v6749 = vsel %vm6746, %v6748, %v6744
      %v6750 = vmul.f32 1.0, %v6749
      %v6751 = vrcp.pop %v6453
      %v6752 = vmul.f32 %v6453, %v6751
      %v6753 = vsub.f32 1.0, %v6752
      %v6754 = vmul.f32 %v6751, %v6753
      %v6755 = vadd.f32 %v6751, %v6754
      %vm6756 = vweird.f32 %v6453
      %vm6757 = vweird.f32 %v6751
      %vm6758 = vmor %vm6756, %vm6757
      %v6759 = vsel %vm6758, %v6751, %v6755
      %v6760 = vand.u32 2147483647, %v6453
      %vm6761 = vcmp.eq.f32.partialorder %v6760, 8.507059e+37
      %v6762 = vand.u32 %v6453, 2147483648
      %v6763 = vor.u32 1.1754944e-38, %v6762
      %v6764 = vsel %vm6761, %v6763, %v6759
      %v6765 = vmul.f32 1.0, %v6764
      %v6766 = vrcp.pop %v6454
      %v6767 = vmul.f32 %v6454, %v6766
      %v6768 = vsub.f32 1.0, %v6767
      %v6769 = vmul.f32 %v6766, %v6768
      %v6770 = vadd.f32 %v6766, %v6769
      %vm6771 = vweird.f32 %v6454
      %vm6772 = vweird.f32 %v6766
      %vm6773 = vmor %vm6771, %vm6772
      %v6774 = vsel %vm6773, %v6766, %v6770
      %v6775 = vand.u32 2147483647, %v6454
      %vm6776 = vcmp.eq.f32.partialorder %v6775, 8.507059e+37
      %v6777 = vand.u32 %v6454, 2147483648
      %v6778 = vor.u32 1.1754944e-38, %v6777
      %v6779 = vsel %vm6776, %v6778, %v6774
      %v6780 = vmul.f32 1.0, %v6779
      %v6781 = vrcp.pop %v6455
      %v6782 = vmul.f32 %v6455, %v6781
      %v6783 = vsub.f32 1.0, %v6782
      %v6784 = vmul.f32 %v6781, %v6783
      %v6785 = vadd.f32 %v6781, %v6784
      %vm6786 = vweird.f32 %v6455
      %vm6787 = vweird.f32 %v6781
      %vm6788 = vmor %vm6786, %vm6787
      %v6789 = vsel %vm6788, %v6781, %v6785
      %v6790 = vand.u32 2147483647, %v6455
      %vm6791 = vcmp.eq.f32.partialorder %v6790, 8.507059e+37
      %v6792 = vand.u32 %v6455, 2147483648
      %v6793 = vor.u32 1.1754944e-38, %v6792
      %v6794 = vsel %vm6791, %v6793, %v6789
      %v6795 = vmul.f32 1.0, %v6794
      %v6796 = vrcp.pop %v6456
      %v6797 = vmul.f32 %v6456, %v6796
      %v6798 = vsub.f32 1.0, %v6797
      %v6799 = vmul.f32 %v6796, %v6798
      %v6800 = vadd.f32 %v6796, %v6799
      %vm6801 = vweird.f32 %v6456
      %vm6802 = vweird.f32 %v6796
      %vm6803 = vmor %vm6801, %vm6802
      %v6804 = vsel %vm6803, %v6796, %v6800
      %v6805 = vand.u32 2147483647, %v6456
      %vm6806 = vcmp.eq.f32.partialorder %v6805, 8.507059e+37
      %v6807 = vand.u32 %v6456, 2147483648
      %v6808 = vor.u32 1.1754944e-38, %v6807
      %v6809 = vsel %vm6806, %v6808, %v6804
      %v6810 = vmul.f32 1.0, %v6809
      %v6811 = vrcp.pop %v6457
      %v6812 = vmul.f32 %v6457, %v6811
      %v6813 = vsub.f32 1.0, %v6812
      %v6814 = vmul.f32 %v6811, %v6813
      %v6815 = vadd.f32 %v6811, %v6814
      %vm6816 = vweird.f32 %v6457
      %vm6817 = vweird.f32 %v6811
      %vm6818 = vmor %vm6816, %vm6817
      %v6819 = vsel %vm6818, %v6811, %v6815
      %v6820 = vand.u32 2147483647, %v6457
      %vm6821 = vcmp.eq.f32.partialorder %v6820, 8.507059e+37
      %v6822 = vand.u32 %v6457, 2147483648
      %v6823 = vor.u32 1.1754944e-38, %v6822
      %v6824 = vsel %vm6821, %v6823, %v6819
      %v6825 = vmul.f32 1.0, %v6824
      %v6826 = vrcp.pop %v6458
      %v6827 = vmul.f32 %v6458, %v6826
      %v6828 = vsub.f32 1.0, %v6827
      %v6829 = vmul.f32 %v6826, %v6828
      %v6830 = vadd.f32 %v6826, %v6829
      %vm6831 = vweird.f32 %v6458
      %vm6832 = vweird.f32 %v6826
      %vm6833 = vmor %vm6831, %vm6832
      %v6834 = vsel %vm6833, %v6826, %v6830
      %v6835 = vand.u32 2147483647, %v6458
      %vm6836 = vcmp.eq.f32.partialorder %v6835, 8.507059e+37
      %v6837 = vand.u32 %v6458, 2147483648
      %v6838 = vor.u32 1.1754944e-38, %v6837
      %v6839 = vsel %vm6836, %v6838, %v6834
      %v6840 = vmul.f32 1.0, %v6839
      %v6841 = vrcp.pop %v6459
      %v6842 = vmul.f32 %v6459, %v6841
      %v6843 = vsub.f32 1.0, %v6842
      %v6844 = vmul.f32 %v6841, %v6843
      %v6845 = vadd.f32 %v6841, %v6844
      %vm6846 = vweird.f32 %v6459
      %vm6847 = vweird.f32 %v6841
      %vm6848 = vmor %vm6846, %vm6847
      %v6849 = vsel %vm6848, %v6841, %v6845
      %v6850 = vand.u32 2147483647, %v6459
      %vm6851 = vcmp.eq.f32.partialorder %v6850, 8.507059e+37
      %v6852 = vand.u32 %v6459, 2147483648
      %v6853 = vor.u32 1.1754944e-38, %v6852
      %v6854 = vsel %vm6851, %v6853, %v6849
      %v6855 = vmul.f32 1.0, %v6854
      %v6856 = vrcp.pop %v6460
      %v6857 = vmul.f32 %v6460, %v6856
      %v6858 = vsub.f32 1.0, %v6857
      %v6859 = vmul.f32 %v6856, %v6858
      %v6860 = vadd.f32 %v6856, %v6859
      %vm6861 = vweird.f32 %v6460
      %vm6862 = vweird.f32 %v6856
      %vm6863 = vmor %vm6861, %vm6862
      %v6864 = vsel %vm6863, %v6856, %v6860
      %v6865 = vand.u32 2147483647, %v6460
      %vm6866 = vcmp.eq.f32.partialorder %v6865, 8.507059e+37
      %v6867 = vand.u32 %v6460, 2147483648
      %v6868 = vor.u32 1.1754944e-38, %v6867
      %v6869 = vsel %vm6866, %v6868, %v6864
      %v6870 = vmul.f32 1.0, %v6869
      %v6871 = vrcp.pop %v6461
      %v6872 = vmul.f32 %v6461, %v6871
      %v6873 = vsub.f32 1.0, %v6872
      %v6874 = vmul.f32 %v6871, %v6873
      %v6875 = vadd.f32 %v6871, %v6874
      %vm6876 = vweird.f32 %v6461
      %vm6877 = vweird.f32 %v6871
      %vm6878 = vmor %vm6876, %vm6877
      %v6879 = vsel %vm6878, %v6871, %v6875
      %v6880 = vand.u32 2147483647, %v6461
      %vm6881 = vcmp.eq.f32.partialorder %v6880, 8.507059e+37
      %v6882 = vand.u32 %v6461, 2147483648
      %v6883 = vor.u32 1.1754944e-38, %v6882
      %v6884 = vsel %vm6881, %v6883, %v6879
      %v6885 = vmul.f32 1.0, %v6884
      %v6886 = vrcp.pop %v6462
      %v6887 = vmul.f32 %v6462, %v6886
      %v6888 = vsub.f32 1.0, %v6887
      %v6889 = vmul.f32 %v6886, %v6888
      %v6890 = vadd.f32 %v6886, %v6889
      %vm6891 = vweird.f32 %v6462
      %vm6892 = vweird.f32 %v6886
      %vm6893 = vmor %vm6891, %vm6892
      %v6894 = vsel %vm6893, %v6886, %v6890
      %v6895 = vand.u32 2147483647, %v6462
      %vm6896 = vcmp.eq.f32.partialorder %v6895, 8.507059e+37
      %v6897 = vand.u32 %v6462, 2147483648
      %v6898 = vor.u32 1.1754944e-38, %v6897
      %v6899 = vsel %vm6896, %v6898, %v6894
      %v6900 = vmul.f32 1.0, %v6899
      %v6901 = vrcp.pop %v6463
      %v6902 = vmul.f32 %v6463, %v6901
      %v6903 = vsub.f32 1.0, %v6902
      %v6904 = vmul.f32 %v6901, %v6903
      %v6905 = vadd.f32 %v6901, %v6904
      %vm6906 = vweird.f32 %v6463
      %vm6907 = vweird.f32 %v6901
      %vm6908 = vmor %vm6906, %vm6907
      %v6909 = vsel %vm6908, %v6901, %v6905
      %v6910 = vand.u32 2147483647, %v6463
      %vm6911 = vcmp.eq.f32.partialorder %v6910, 8.507059e+37
      %v6912 = vand.u32 %v6463, 2147483648
      %v6913 = vor.u32 1.1754944e-38, %v6912
      %v6914 = vsel %vm6911, %v6913, %v6909
      %v6915 = vmul.f32 1.0, %v6914
      %v6916 = vrcp.pop %v6464
      %v6917 = vmul.f32 %v6464, %v6916
      %v6918 = vsub.f32 1.0, %v6917
      %v6919 = vmul.f32 %v6916, %v6918
      %v6920 = vadd.f32 %v6916, %v6919
      %vm6921 = vweird.f32 %v6464
      %vm6922 = vweird.f32 %v6916
      %vm6923 = vmor %vm6921, %vm6922
      %v6924 = vsel %vm6923, %v6916, %v6920
      %v6925 = vand.u32 2147483647, %v6464
      %vm6926 = vcmp.eq.f32.partialorder %v6925, 8.507059e+37
      %v6927 = vand.u32 %v6464, 2147483648
      %v6928 = vor.u32 1.1754944e-38, %v6927
      %v6929 = vsel %vm6926, %v6928, %v6924
      %v6930 = vmul.f32 1.0, %v6929
      %v6931 = vrcp.pop %v6465
      %v6932 = vmul.f32 %v6465, %v6931
      %v6933 = vsub.f32 1.0, %v6932
      %v6934 = vmul.f32 %v6931, %v6933
      %v6935 = vadd.f32 %v6931, %v6934
      %vm6936 = vweird.f32 %v6465
      %vm6937 = vweird.f32 %v6931
      %vm6938 = vmor %vm6936, %vm6937
      %v6939 = vsel %vm6938, %v6931, %v6935
      %v6940 = vand.u32 2147483647, %v6465
      %vm6941 = vcmp.eq.f32.partialorder %v6940, 8.507059e+37
      %v6942 = vand.u32 %v6465, 2147483648
      %v6943 = vor.u32 1.1754944e-38, %v6942
      %v6944 = vsel %vm6941, %v6943, %v6939
      %v6945 = vmul.f32 1.0, %v6944
      %v6946 = vmul.f32 %v6402, %v6480
      %v6947 = vmul.f32 %v6403, %v6495
      %v6948 = vmul.f32 %v6404, %v6510
      %v6949 = vmul.f32 %v6405, %v6525
      %v6950 = vmul.f32 %v6406, %v6540
      %v6951 = vmul.f32 %v6407, %v6555
      %v6952 = vmul.f32 %v6408, %v6570
      %v6953 = vmul.f32 %v6409, %v6585
      %v6954 = vmul.f32 %v6410, %v6600
      %v6955 = vmul.f32 %v6411, %v6615
      %v6956 = vmul.f32 %v6412, %v6630
      %v6957 = vmul.f32 %v6413, %v6645
      %v6958 = vmul.f32 %v6414, %v6660
      %v6959 = vmul.f32 %v6415, %v6675
      %v6960 = vmul.f32 %v6416, %v6690
      %v6961 = vmul.f32 %v6417, %v6705
      %v6962 = vmul.f32 %v6418, %v6720
      %v6963 = vmul.f32 %v6419, %v6735
      %v6964 = vmul.f32 %v6420, %v6750
      %v6965 = vmul.f32 %v6421, %v6765
      %v6966 = vmul.f32 %v6422, %v6780
      %v6967 = vmul.f32 %v6423, %v6795
      %v6968 = vmul.f32 %v6424, %v6810
      %v6969 = vmul.f32 %v6425, %v6825
      %v6970 = vmul.f32 %v6426, %v6840
      %v6971 = vmul.f32 %v6427, %v6855
      %v6972 = vmul.f32 %v6428, %v6870
      %v6973 = vmul.f32 %v6429, %v6885
      %v6974 = vmul.f32 %v6430, %v6900
      %v6975 = vmul.f32 %v6431, %v6915
      %v6976 = vmul.f32 %v6432, %v6930
      %v6977 = vmul.f32 %v6433, %v6945
      %v6978 = vpack.c.bf16 %v6947, %v6946
      %v6979 = vpack.c.bf16 %v6949, %v6948
      %v6980 = vpack.c.bf16 %v6951, %v6950
      %v6981 = vpack.c.bf16 %v6953, %v6952
      %v6982 = vpack.c.bf16 %v6955, %v6954
      %v6983 = vpack.c.bf16 %v6957, %v6956
      %v6984 = vpack.c.bf16 %v6959, %v6958
      %v6985 = vpack.c.bf16 %v6961, %v6960
      %v6986 = vpack.c.bf16 %v6963, %v6962
      %v6987 = vpack.c.bf16 %v6965, %v6964
      %v6988 = vpack.c.bf16 %v6967, %v6966
      %v6989 = vpack.c.bf16 %v6969, %v6968
      %v6990 = vpack.c.bf16 %v6971, %v6970
      %v6991 = vpack.c.bf16 %v6973, %v6972
      %v6992 = vpack.c.bf16 %v6975, %v6974
      %v6993 = vpack.c.bf16 %v6977, %v6976
      %v6996 = vunpack.c.l.b16 %v730
      %v6997 = vunpack.c.l.b16 %v731
      %v6998 = vpack.c.b16 %v6997, %v6996
      %v7000 = vsel %vm1409, %v6998, 0
      %v7003 = vsel %vm1409, %v6978, 0
      %v7006 = vsel %vm1409, %v6979, 0
      %v7009 = vsel %vm1409, %v6980, 0
      %v7012 = vsel %vm1409, %v6981, 0
      %v7015 = vsel %vm1409, %v6982, 0
      %v7018 = vsel %vm1409, %v6983, 0
      %v7021 = vsel %vm1409, %v6984, 0
      %v7024 = vsel %vm1409, %v6985, 0
      %v7027 = vsel %vm1409, %v6986, 0
      %v7030 = vsel %vm1409, %v6987, 0
      %v7033 = vsel %vm1409, %v6988, 0
      %v7036 = vsel %vm1409, %v6989, 0
      %v7039 = vsel %vm1409, %v6990, 0
      %v7042 = vsel %vm1409, %v6991, 0
      %v7045 = vsel %vm1409, %v6992, 0
      %v7048 = vsel %vm1409, %v6993, 0
      %7050 = vmatpush.bf16.xpose.msra.mxu0 %v7024
      %7051 = vmatpush.bf16.xpose.msra.mxu0 %v7021
      %7052 = vmatpush.bf16.xpose.msra.mxu0 %v7018
      %7053 = vmatpush.bf16.xpose.msra.mxu0 %v7015
      %7054 = vmatpush.bf16.xpose.msra.mxu0 %v7012
      %7055 = vmatpush.bf16.xpose.msra.mxu0 %v7009
      %7056 = vmatpush.bf16.xpose.msra.mxu0 %v7006
      %7057 = vmatpush.bf16.xpose.msra.mxu0 %v7003
      %7058 = vmatmul.bf16.gmra.mxu0 %v7000
      %v7059 = vpop.f32.mrf.mxu0
      %v7060 = vadd.f32 0.0, %v7059
      %v7061 = vpop.f32.mrf.mxu0
      %v7062 = vadd.f32 0.0, %v7061
      %7063 = vdwg.mxu0
      %7064 = vmatpush.bf16.xpose.msra.mxu0 %v7048
      %7065 = vmatpush.bf16.xpose.msra.mxu0 %v7045
      %7066 = vmatpush.bf16.xpose.msra.mxu0 %v7042
      %7067 = vmatpush.bf16.xpose.msra.mxu0 %v7039
      %7068 = vmatpush.bf16.xpose.msra.mxu0 %v7036
      %7069 = vmatpush.bf16.xpose.msra.mxu0 %v7033
      %7070 = vmatpush.bf16.xpose.msra.mxu0 %v7030
      %7071 = vmatpush.bf16.xpose.msra.mxu0 %v7027
      %7072 = vmatmul.bf16.gmra.mxu0 %v7000
      %v7073 = vpop.f32.mrf.mxu0
      %v7074 = vadd.f32 0.0, %v7073
      %v7075 = vpop.f32.mrf.mxu0
      %v7076 = vadd.f32 0.0, %v7075
      %7077 = vdwg.mxu0
      %v7078 = vpack.c.bf16 %v7062, %v7060
      %v7079 = vpack.c.bf16 %v7076, %v7074
      %v7080 = vld [vmem:[%s5] sm:$0xf]
      %v7081 = vld [vmem:[%s5 + $0x4] sm:$0xf]
      %v7082 = vld [vmem:[%s5 + $0x8] sm:$0xf]
      %v7083 = vld [vmem:[%s5 + $0xc] sm:$0xf]
      %v7084 = vld [vmem:[%s6] sm:$0xf]
      %v7085 = vld [vmem:[%s6 + $0x4] sm:$0xf]
      %v7086 = vld [vmem:[%s6 + $0x8] sm:$0xf]
      %v7087 = vld [vmem:[%s6 + $0xc] sm:$0xf]
      %v7092 = vunpack.c.l.b16 %v7084
      %v7093 = vunpack.c.l.b16 %v7085
      %v7094 = vunpack.c.l.b16 %v7086
      %v7095 = vunpack.c.l.b16 %v7087
      %v7096 = vpack.c.b16 %v7093, %v7092
      %v7097 = vpack.c.b16 %v7095, %v7094
      %v7099 = vunpack.c.l.b16 %v729
      %v7100 = vunpack.c.h.b16 %v729
      %v7101 = vpack.c.b16 %v7099, %v7099
      %v7102 = vpack.c.b16 %v7100, %v7100
      %vm7103 = vcmask 48128
      %v7105 = vsel %vm7103, %v7096, 0
      %v7108 = vsel %vm7103, %v7097, 0
      %vm7110 = vcmask 1042432
      %v7112 = vsel %vm7110, %v7101, 0
      %v7115 = vsel %vm7110, %v7102, 0
      %7117 = vmatpush.bf16.msra.mxu0 0
      %7118 = vmatpush.bf16.msra.mxu0 0
      %7119 = vmatpush.bf16.msra.mxu0 0
      %7120 = vmatpush.bf16.msra.mxu0 0
      %7121 = vmatpush.bf16.msra.mxu0 0
      %7122 = vmatpush.bf16.msra.mxu0 0
      %7123 = vmatpush.bf16.msra.mxu0 0
      %7124 = vmatpush.bf16.msra.mxu0 %v7112
      %7125 = vmatmul.bf16.gmra.mxu0 %v7105
      %v7126 = vpop.f32.mrf.mxu0
      %v7127 = vadd.f32 0.0, %v7126
      %v7128 = vpop.f32.mrf.mxu0
      %v7129 = vadd.f32 0.0, %v7128
      %7130 = vmatmul.bf16.gmra.mxu0 %v7108
      %v7131 = vpop.f32.mrf.mxu0
      %v7132 = vadd.f32 0.0, %v7131
      %v7133 = vpop.f32.mrf.mxu0
      %v7134 = vadd.f32 0.0, %v7133
      %7135 = vdwg.mxu0
      %7136 = vmatpush.bf16.msra.mxu0 0
      %7137 = vmatpush.bf16.msra.mxu0 0
      %7138 = vmatpush.bf16.msra.mxu0 0
      %7139 = vmatpush.bf16.msra.mxu0 0
      %7140 = vmatpush.bf16.msra.mxu0 0
      %7141 = vmatpush.bf16.msra.mxu0 0
      %7142 = vmatpush.bf16.msra.mxu0 0
      %7143 = vmatpush.bf16.msra.mxu0 %v7115
      %7144 = vmatmul.bf16.gmra.mxu0 %v7105
      %v7145 = vpop.f32.mrf.mxu0
      %v7146 = vadd.f32 0.0, %v7145
      %v7147 = vpop.f32.mrf.mxu0
      %v7148 = vadd.f32 0.0, %v7147
      %7149 = vmatmul.bf16.gmra.mxu0 %v7108
      %v7150 = vpop.f32.mrf.mxu0
      %v7151 = vadd.f32 0.0, %v7150
      %v7152 = vpop.f32.mrf.mxu0
      %v7153 = vadd.f32 0.0, %v7152
      %7154 = vdwg.mxu0
      %v7159 = vunpack.c.l.b16 %v7080
      %v7160 = vunpack.c.l.b16 %v7081
      %v7161 = vunpack.c.l.b16 %v7082
      %v7162 = vunpack.c.l.b16 %v7083
      %v7163 = vpack.c.b16 %v7160, %v7159
      %v7164 = vpack.c.b16 %v7162, %v7161
      %vm7165 = vcmask 80896
      %v7167 = vsel %vm7165, %v7163, 0
      %v7170 = vsel %vm7165, %v7164, 0
      %vm7172 = vcmask 1044480
      %v7174 = vsel %vm7172, %v7078, 0
      %v7177 = vsel %vm7172, %v7079, 0
      %7179 = vmatpush.bf16.msra.mxu0 0
      %7180 = vmatpush.bf16.msra.mxu0 0
      %7181 = vmatpush.bf16.msra.mxu0 0
      %7182 = vmatpush.bf16.msra.mxu0 0
      %7183 = vmatpush.bf16.msra.mxu0 0
      %7184 = vmatpush.bf16.msra.mxu0 0
      %7185 = vmatpush.bf16.msra.mxu0 0
      %7186 = vmatpush.bf16.msra.mxu0 %v7174
      %7187 = vmatmul.bf16.gmra.mxu0 %v7167
      %v7188 = vpop.f32.mrf.mxu0
      %v7189 = vadd.f32 %v7127, %v7188
      %v7190 = vpop.f32.mrf.mxu0
      %v7191 = vadd.f32 %v7129, %v7190
      %7192 = vmatmul.bf16.gmra.mxu0 %v7170
      %v7193 = vpop.f32.mrf.mxu0
      %v7194 = vadd.f32 %v7132, %v7193
      %v7195 = vpop.f32.mrf.mxu0
      %v7196 = vadd.f32 %v7134, %v7195
      %7197 = vdwg.mxu0
      %7198 = vmatpush.bf16.msra.mxu0 0
      %7199 = vmatpush.bf16.msra.mxu0 0
      %7200 = vmatpush.bf16.msra.mxu0 0
      %7201 = vmatpush.bf16.msra.mxu0 0
      %7202 = vmatpush.bf16.msra.mxu0 0
      %7203 = vmatpush.bf16.msra.mxu0 0
      %7204 = vmatpush.bf16.msra.mxu0 0
      %7205 = vmatpush.bf16.msra.mxu0 %v7177
      %7206 = vmatmul.bf16.gmra.mxu0 %v7167
      %v7207 = vpop.f32.mrf.mxu0
      %v7208 = vadd.f32 %v7146, %v7207
      %v7209 = vpop.f32.mrf.mxu0
      %v7210 = vadd.f32 %v7148, %v7209
      %7211 = vmatmul.bf16.gmra.mxu0 %v7170
      %v7212 = vpop.f32.mrf.mxu0
      %v7213 = vadd.f32 %v7151, %v7212
      %v7214 = vpop.f32.mrf.mxu0
      %v7215 = vadd.f32 %v7153, %v7214
      %7216 = vdwg.mxu0
      %v7217 = vmax.f32 %v7189, 0.0
      %v7218 = vmax.f32 %v7208, 0.0
      %v7219 = vmax.f32 %v7191, 0.0
      %v7220 = vmax.f32 %v7210, 0.0
      %v7221 = vmax.f32 %v7194, 0.0
      %v7222 = vmax.f32 %v7213, 0.0
      %v7223 = vmax.f32 %v7196, 0.0
      %v7224 = vmax.f32 %v7215, 0.0
      %v7225 = vpack.c.bf16 %v7219, %v7217
      %v7226 = vpack.c.bf16 %v7220, %v7218
      %v7227 = vpack.c.bf16 %v7223, %v7221
      %v7228 = vpack.c.bf16 %v7224, %v7222
      %v7229 = vld [vmem:[%s7] sm:$0xf]
      %v7230 = vld [vmem:[%s7 + $0x4] sm:$0xf]
      %v7231 = vld [vmem:[%s7 + $0x8] sm:$0xf]
      %v7232 = vld [vmem:[%s7 + $0xc] sm:$0xf]
      %v7233 = vld [vmem:[%s7 + $0x10] sm:$0xf]
      %v7234 = vld [vmem:[%s7 + $0x14] sm:$0xf]
      %v7235 = vld [vmem:[%s7 + $0x18] sm:$0xf]
      %v7236 = vld [vmem:[%s7 + $0x1c] sm:$0xf]
      %v7245 = vunpack.c.l.b16 %v7229
      %v7246 = vunpack.c.l.b16 %v7230
      %v7247 = vunpack.c.l.b16 %v7231
      %v7248 = vunpack.c.l.b16 %v7232
      %v7249 = vunpack.c.l.b16 %v7233
      %v7250 = vunpack.c.l.b16 %v7234
      %v7251 = vunpack.c.l.b16 %v7235
      %v7252 = vunpack.c.l.b16 %v7236
      %v7253 = vpack.c.b16 %v7246, %v7245
      %v7254 = vpack.c.b16 %v7248, %v7247
      %v7255 = vpack.c.b16 %v7250, %v7249
      %v7256 = vpack.c.b16 %v7252, %v7251
      %v7258 = vsel %vm1409, %v7253, 0
      %v7261 = vsel %vm1409, %v7254, 0
      %v7264 = vsel %vm1409, %v7255, 0
      %v7267 = vsel %vm1409, %v7256, 0
      %7269 = vmatpush.bf16.msra.mxu0 0
      %7270 = vmatpush.bf16.msra.mxu0 0
      %7271 = vmatpush.bf16.msra.mxu0 0
      %7272 = vmatpush.bf16.msra.mxu0 0
      %7273 = vmatpush.bf16.msra.mxu0 0
      %7274 = vmatpush.bf16.msra.mxu0 0
      %7275 = vmatpush.bf16.msra.mxu0 %v7227
      %7276 = vmatpush.bf16.msra.mxu0 %v7225
      %7277 = vmatmul.bf16.gmra.mxu0 %v7258
      %v7278 = vpop.f32.mrf.mxu0
      %v7279 = vadd.f32 0.0, %v7278
      %v7280 = vpop.f32.mrf.mxu0
      %v7281 = vadd.f32 0.0, %v7280
      %7282 = vmatmul.bf16.gmra.mxu0 %v7261
      %v7283 = vpop.f32.mrf.mxu0
      %v7284 = vadd.f32 0.0, %v7283
      %v7285 = vpop.f32.mrf.mxu0
      %v7286 = vadd.f32 0.0, %v7285
      %7287 = vmatmul.bf16.gmra.mxu0 %v7264
      %v7288 = vpop.f32.mrf.mxu0
      %v7289 = vadd.f32 0.0, %v7288
      %v7290 = vpop.f32.mrf.mxu0
      %v7291 = vadd.f32 0.0, %v7290
      %7292 = vmatmul.bf16.gmra.mxu0 %v7267
      %v7293 = vpop.f32.mrf.mxu0
      %v7294 = vadd.f32 0.0, %v7293
      %v7295 = vpop.f32.mrf.mxu0
      %v7296 = vadd.f32 0.0, %v7295
      %7297 = vdwg.mxu0
      %7298 = vmatpush.bf16.msra.mxu0 0
      %7299 = vmatpush.bf16.msra.mxu0 0
      %7300 = vmatpush.bf16.msra.mxu0 0
      %7301 = vmatpush.bf16.msra.mxu0 0
      %7302 = vmatpush.bf16.msra.mxu0 0
      %7303 = vmatpush.bf16.msra.mxu0 0
      %7304 = vmatpush.bf16.msra.mxu0 %v7228
      %7305 = vmatpush.bf16.msra.mxu0 %v7226
      %7306 = vmatmul.bf16.gmra.mxu0 %v7258
      %v7307 = vpop.f32.mrf.mxu0
      %v7308 = vadd.f32 0.0, %v7307
      %v7309 = vpop.f32.mrf.mxu0
      %v7310 = vadd.f32 0.0, %v7309
      %7311 = vmatmul.bf16.gmra.mxu0 %v7261
      %v7312 = vpop.f32.mrf.mxu0
      %v7313 = vadd.f32 0.0, %v7312
      %v7314 = vpop.f32.mrf.mxu0
      %v7315 = vadd.f32 0.0, %v7314
      %7316 = vmatmul.bf16.gmra.mxu0 %v7264
      %v7317 = vpop.f32.mrf.mxu0
      %v7318 = vadd.f32 0.0, %v7317
      %v7319 = vpop.f32.mrf.mxu0
      %v7320 = vadd.f32 0.0, %v7319
      %7321 = vmatmul.bf16.gmra.mxu0 %v7267
      %v7322 = vpop.f32.mrf.mxu0
      %v7323 = vadd.f32 0.0, %v7322
      %v7324 = vpop.f32.mrf.mxu0
      %v7325 = vadd.f32 0.0, %v7324
      %7326 = vdwg.mxu0
      %v7327 = vmax.f32 %v7279, 0.0
      %v7328 = vmax.f32 %v7308, 0.0
      %v7329 = vmax.f32 %v7281, 0.0
      %v7330 = vmax.f32 %v7310, 0.0
      %v7331 = vmax.f32 %v7284, 0.0
      %v7332 = vmax.f32 %v7313, 0.0
      %v7333 = vmax.f32 %v7286, 0.0
      %v7334 = vmax.f32 %v7315, 0.0
      %v7335 = vmax.f32 %v7289, 0.0
      %v7336 = vmax.f32 %v7318, 0.0
      %v7337 = vmax.f32 %v7291, 0.0
      %v7338 = vmax.f32 %v7320, 0.0
      %v7339 = vmax.f32 %v7294, 0.0
      %v7340 = vmax.f32 %v7323, 0.0
      %v7341 = vmax.f32 %v7296, 0.0
      %v7342 = vmax.f32 %v7325, 0.0
      %v7343 = vpack.c.bf16 %v7329, %v7327
      %v7344 = vpack.c.bf16 %v7330, %v7328
      %v7345 = vpack.c.bf16 %v7333, %v7331
      %v7346 = vpack.c.bf16 %v7334, %v7332
      %v7347 = vpack.c.bf16 %v7337, %v7335
      %v7348 = vpack.c.bf16 %v7338, %v7336
      %v7349 = vpack.c.bf16 %v7341, %v7339
      %v7350 = vpack.c.bf16 %v7342, %v7340
      %7352 = vst [vmem:[#allocation1] ss:$2 sm:$0xff] %v727
      %v7353 = vld.sshfl [vmem:[#allocation1] sm:$0xff pattern:$0x75316420]
      %v7354 = vld.sshfl [vmem:[#allocation1 + $0x8] sm:$0xff pattern:$0x75316420]
      %v7357 = vpack.c.bf16 %v7353, %v7353
      %v7358 = vpack.c.bf16 %v7354, %v7354
      %v7359 = vld [vmem:[%s8] sm:$0xf]
      %v7360 = vld [vmem:[%s8 + $0x4] sm:$0xf]
      %v7361 = vld [vmem:[%s8 + $0x8] sm:$0xf]
      %v7362 = vld [vmem:[%s8 + $0xc] sm:$0xf]
      %v7363 = vld [vmem:[%s8 + $0x10] sm:$0xf]
      %v7364 = vld [vmem:[%s8 + $0x14] sm:$0xf]
      %v7365 = vld [vmem:[%s8 + $0x18] sm:$0xf]
      %v7366 = vld [vmem:[%s8 + $0x1c] sm:$0xf]
      %v7375 = vunpack.c.l.b16 %v7359
      %v7376 = vunpack.c.l.b16 %v7360
      %v7377 = vunpack.c.l.b16 %v7361
      %v7378 = vunpack.c.l.b16 %v7362
      %v7379 = vunpack.c.l.b16 %v7363
      %v7380 = vunpack.c.l.b16 %v7364
      %v7381 = vunpack.c.l.b16 %v7365
      %v7382 = vunpack.c.l.b16 %v7366
      %v7383 = vpack.c.b16 %v7376, %v7375
      %v7384 = vpack.c.b16 %v7378, %v7377
      %v7385 = vpack.c.b16 %v7380, %v7379
      %v7386 = vpack.c.b16 %v7382, %v7381
      %vm7387 = vcmask 23552
      %v7389 = vsel %vm7387, %v7383, 0
      %v7392 = vsel %vm7387, %v7384, 0
      %v7395 = vsel %vm7387, %v7385, 0
      %v7398 = vsel %vm7387, %v7386, 0
      %vm7400 = vcmask 1040384
      %vm7401 = vcmask 1041408
      %v7402 = vsel %vm7400, 4294967295, 65535
      %v7403 = vsel %vm7401, %v7402, 0
      %v7405 = vand.u32 %v7357, %v7403
      %v7408 = vand.u32 %v7358, %v7403
      %7410 = vmatpush.bf16.msra.mxu0 0
      %7411 = vmatpush.bf16.msra.mxu0 0
      %7412 = vmatpush.bf16.msra.mxu0 0
      %7413 = vmatpush.bf16.msra.mxu0 0
      %7414 = vmatpush.bf16.msra.mxu0 0
      %7415 = vmatpush.bf16.msra.mxu0 0
      %7416 = vmatpush.bf16.msra.mxu0 0
      %7417 = vmatpush.bf16.msra.mxu0 %v7405
      %7418 = vmatmul.bf16.gmra.mxu0 %v7389
      %v7419 = vpop.f32.mrf.mxu0
      %v7420 = vadd.f32 0.0, %v7419
      %v7421 = vpop.f32.mrf.mxu0
      %v7422 = vadd.f32 0.0, %v7421
      %7423 = vmatmul.bf16.gmra.mxu0 %v7392
      %v7424 = vpop.f32.mrf.mxu0
      %v7425 = vadd.f32 0.0, %v7424
      %v7426 = vpop.f32.mrf.mxu0
      %v7427 = vadd.f32 0.0, %v7426
      %7428 = vmatmul.bf16.gmra.mxu0 %v7395
      %v7429 = vpop.f32.mrf.mxu0
      %v7430 = vadd.f32 0.0, %v7429
      %v7431 = vpop.f32.mrf.mxu0
      %v7432 = vadd.f32 0.0, %v7431
      %7433 = vmatmul.bf16.gmra.mxu0 %v7398
      %v7434 = vpop.f32.mrf.mxu0
      %v7435 = vadd.f32 0.0, %v7434
      %v7436 = vpop.f32.mrf.mxu0
      %v7437 = vadd.f32 0.0, %v7436
      %7438 = vdwg.mxu0
      %7439 = vmatpush.bf16.msra.mxu0 0
      %7440 = vmatpush.bf16.msra.mxu0 0
      %7441 = vmatpush.bf16.msra.mxu0 0
      %7442 = vmatpush.bf16.msra.mxu0 0
      %7443 = vmatpush.bf16.msra.mxu0 0
      %7444 = vmatpush.bf16.msra.mxu0 0
      %7445 = vmatpush.bf16.msra.mxu0 0
      %7446 = vmatpush.bf16.msra.mxu0 %v7408
      %7447 = vmatmul.bf16.gmra.mxu0 %v7389
      %v7448 = vpop.f32.mrf.mxu0
      %v7449 = vadd.f32 0.0, %v7448
      %v7450 = vpop.f32.mrf.mxu0
      %v7451 = vadd.f32 0.0, %v7450
      %7452 = vmatmul.bf16.gmra.mxu0 %v7392
      %v7453 = vpop.f32.mrf.mxu0
      %v7454 = vadd.f32 0.0, %v7453
      %v7455 = vpop.f32.mrf.mxu0
      %v7456 = vadd.f32 0.0, %v7455
      %7457 = vmatmul.bf16.gmra.mxu0 %v7395
      %v7458 = vpop.f32.mrf.mxu0
      %v7459 = vadd.f32 0.0, %v7458
      %v7460 = vpop.f32.mrf.mxu0
      %v7461 = vadd.f32 0.0, %v7460
      %7462 = vmatmul.bf16.gmra.mxu0 %v7398
      %v7463 = vpop.f32.mrf.mxu0
      %v7464 = vadd.f32 0.0, %v7463
      %v7465 = vpop.f32.mrf.mxu0
      %v7466 = vadd.f32 0.0, %v7465
      %7467 = vdwg.mxu0
      %v7468 = vmax.f32 %v7420, 0.0
      %v7469 = vmax.f32 %v7449, 0.0
      %v7470 = vmax.f32 %v7422, 0.0
      %v7471 = vmax.f32 %v7451, 0.0
      %v7472 = vmax.f32 %v7425, 0.0
      %v7473 = vmax.f32 %v7454, 0.0
      %v7474 = vmax.f32 %v7427, 0.0
      %v7475 = vmax.f32 %v7456, 0.0
      %v7476 = vmax.f32 %v7430, 0.0
      %v7477 = vmax.f32 %v7459, 0.0
      %v7478 = vmax.f32 %v7432, 0.0
      %v7479 = vmax.f32 %v7461, 0.0
      %v7480 = vmax.f32 %v7435, 0.0
      %v7481 = vmax.f32 %v7464, 0.0
      %v7482 = vmax.f32 %v7437, 0.0
      %v7483 = vmax.f32 %v7466, 0.0
      %v7484 = vld [vmem:[%s9] sm:$0xf]
      %v7485 = vld [vmem:[%s9 + $0x4] sm:$0xf]
      %v7486 = vld [vmem:[%s9 + $0x8] sm:$0xf]
      %v7487 = vld [vmem:[%s9 + $0xc] sm:$0xf]
      %v7488 = vld [vmem:[%s9 + $0x10] sm:$0xf]
      %v7489 = vld [vmem:[%s9 + $0x14] sm:$0xf]
      %v7490 = vld [vmem:[%s9 + $0x18] sm:$0xf]
      %v7491 = vld [vmem:[%s9 + $0x1c] sm:$0xf]
      %v7500 = vunpack.c.l.b16 %v7484
      %v7501 = vunpack.c.l.b16 %v7485
      %v7502 = vunpack.c.l.b16 %v7486
      %v7503 = vunpack.c.l.b16 %v7487
      %v7504 = vunpack.c.l.b16 %v7488
      %v7505 = vunpack.c.l.b16 %v7489
      %v7506 = vunpack.c.l.b16 %v7490
      %v7507 = vunpack.c.l.b16 %v7491
      %v7508 = vpack.c.b16 %v7501, %v7500
      %v7509 = vpack.c.b16 %v7503, %v7502
      %v7510 = vpack.c.b16 %v7505, %v7504
      %v7511 = vpack.c.b16 %v7507, %v7506
      %vm7512 = vcmask 523264
      %v7514 = vsel %vm7512, %v7508, 0
      %v7517 = vsel %vm7512, %v7509, 0
      %v7520 = vsel %vm7512, %v7510, 0
      %v7523 = vsel %vm7512, %v7511, 0
      %7525 = vmatpush.bf16.msra.mxu0 0
      %7526 = vmatpush.bf16.msra.mxu0 0
      %7527 = vmatpush.bf16.msra.mxu0 0
      %7528 = vmatpush.bf16.msra.mxu0 0
      %7529 = vmatpush.bf16.msra.mxu0 %v7349
      %7530 = vmatpush.bf16.msra.mxu0 %v7347
      %7531 = vmatpush.bf16.msra.mxu0 %v7345
      %7532 = vmatpush.bf16.msra.mxu0 %v7343
      %7533 = vmatmul.bf16.gmra.mxu0 %v7514
      %v7534 = vpop.f32.mrf.mxu0
      %v7535 = vadd.f32 0.0, %v7534
      %v7536 = vpop.f32.mrf.mxu0
      %v7537 = vadd.f32 0.0, %v7536
      %7538 = vmatmul.bf16.gmra.mxu0 %v7517
      %v7539 = vpop.f32.mrf.mxu0
      %v7540 = vadd.f32 0.0, %v7539
      %v7541 = vpop.f32.mrf.mxu0
      %v7542 = vadd.f32 0.0, %v7541
      %7543 = vmatmul.bf16.gmra.mxu0 %v7520
      %v7544 = vpop.f32.mrf.mxu0
      %v7545 = vadd.f32 0.0, %v7544
      %v7546 = vpop.f32.mrf.mxu0
      %v7547 = vadd.f32 0.0, %v7546
      %7548 = vmatmul.bf16.gmra.mxu0 %v7523
      %v7549 = vpop.f32.mrf.mxu0
      %v7550 = vadd.f32 0.0, %v7549
      %v7551 = vpop.f32.mrf.mxu0
      %v7552 = vadd.f32 0.0, %v7551
      %7553 = vdwg.mxu0
      %7554 = vmatpush.bf16.msra.mxu0 0
      %7555 = vmatpush.bf16.msra.mxu0 0
      %7556 = vmatpush.bf16.msra.mxu0 0
      %7557 = vmatpush.bf16.msra.mxu0 0
      %7558 = vmatpush.bf16.msra.mxu0 %v7350
      %7559 = vmatpush.bf16.msra.mxu0 %v7348
      %7560 = vmatpush.bf16.msra.mxu0 %v7346
      %7561 = vmatpush.bf16.msra.mxu0 %v7344
      %7562 = vmatmul.bf16.gmra.mxu0 %v7514
      %v7563 = vpop.f32.mrf.mxu0
      %v7564 = vadd.f32 0.0, %v7563
      %v7565 = vpop.f32.mrf.mxu0
      %v7566 = vadd.f32 0.0, %v7565
      %7567 = vmatmul.bf16.gmra.mxu0 %v7517
      %v7568 = vpop.f32.mrf.mxu0
      %v7569 = vadd.f32 0.0, %v7568
      %v7570 = vpop.f32.mrf.mxu0
      %v7571 = vadd.f32 0.0, %v7570
      %7572 = vmatmul.bf16.gmra.mxu0 %v7520
      %v7573 = vpop.f32.mrf.mxu0
      %v7574 = vadd.f32 0.0, %v7573
      %v7575 = vpop.f32.mrf.mxu0
      %v7576 = vadd.f32 0.0, %v7575
      %7577 = vmatmul.bf16.gmra.mxu0 %v7523
      %v7578 = vpop.f32.mrf.mxu0
      %v7579 = vadd.f32 0.0, %v7578
      %v7580 = vpop.f32.mrf.mxu0
      %v7581 = vadd.f32 0.0, %v7580
      %7582 = vdwg.mxu0
      %v7583 = vmax.f32 %v7535, 0.0
      %v7584 = vmax.f32 %v7564, 0.0
      %v7585 = vmax.f32 %v7537, 0.0
      %v7586 = vmax.f32 %v7566, 0.0
      %v7587 = vmax.f32 %v7540, 0.0
      %v7588 = vmax.f32 %v7569, 0.0
      %v7589 = vmax.f32 %v7542, 0.0
      %v7590 = vmax.f32 %v7571, 0.0
      %v7591 = vmax.f32 %v7545, 0.0
      %v7592 = vmax.f32 %v7574, 0.0
      %v7593 = vmax.f32 %v7547, 0.0
      %v7594 = vmax.f32 %v7576, 0.0
      %v7595 = vmax.f32 %v7550, 0.0
      %v7596 = vmax.f32 %v7579, 0.0
      %v7597 = vmax.f32 %v7552, 0.0
      %v7598 = vmax.f32 %v7581, 0.0
      %v7599 = vld [vmem:[%s10] sm:$0xf]
      %v7600 = vld [vmem:[%s10 + $0x4] sm:$0xf]
      %v7601 = vld [vmem:[%s10 + $0x8] sm:$0xf]
      %v7602 = vld [vmem:[%s10 + $0xc] sm:$0xf]
      %v7607 = vunpack.c.l.b16 %v7599
      %v7608 = vunpack.c.l.b16 %v7600
      %v7609 = vunpack.c.l.b16 %v7601
      %v7610 = vunpack.c.l.b16 %v7602
      %v7611 = vpack.c.b16 %v7608, %v7607
      %v7612 = vpack.c.b16 %v7610, %v7609
      %v7614 = vsel %vm7512, %v7611, 0
      %v7617 = vsel %vm7512, %v7612, 0
      %7619 = vmatpush.bf16.msra.mxu0 0
      %7620 = vmatpush.bf16.msra.mxu0 0
      %7621 = vmatpush.bf16.msra.mxu0 0
      %7622 = vmatpush.bf16.msra.mxu0 0
      %7623 = vmatpush.bf16.msra.mxu0 %v7349
      %7624 = vmatpush.bf16.msra.mxu0 %v7347
      %7625 = vmatpush.bf16.msra.mxu0 %v7345
      %7626 = vmatpush.bf16.msra.mxu0 %v7343
      %7627 = vmatmul.bf16.gmra.mxu0 %v7614
      %v7628 = vpop.f32.mrf.mxu0
      %v7629 = vadd.f32 0.0, %v7628
      %v7630 = vpop.f32.mrf.mxu0
      %v7631 = vadd.f32 0.0, %v7630
      %7632 = vmatmul.bf16.gmra.mxu0 %v7617
      %v7633 = vpop.f32.mrf.mxu0
      %v7634 = vadd.f32 0.0, %v7633
      %v7635 = vpop.f32.mrf.mxu0
      %v7636 = vadd.f32 0.0, %v7635
      %7637 = vdwg.mxu0
      %7638 = vmatpush.bf16.msra.mxu0 0
      %7639 = vmatpush.bf16.msra.mxu0 0
      %7640 = vmatpush.bf16.msra.mxu0 0
      %7641 = vmatpush.bf16.msra.mxu0 0
      %7642 = vmatpush.bf16.msra.mxu0 %v7350
      %7643 = vmatpush.bf16.msra.mxu0 %v7348
      %7644 = vmatpush.bf16.msra.mxu0 %v7346
      %7645 = vmatpush.bf16.msra.mxu0 %v7344
      %7646 = vmatmul.bf16.gmra.mxu0 %v7614
      %v7647 = vpop.f32.mrf.mxu0
      %v7648 = vadd.f32 0.0, %v7647
      %v7649 = vpop.f32.mrf.mxu0
      %v7650 = vadd.f32 0.0, %v7649
      %7651 = vmatmul.bf16.gmra.mxu0 %v7617
      %v7652 = vpop.f32.mrf.mxu0
      %v7653 = vadd.f32 0.0, %v7652
      %v7654 = vpop.f32.mrf.mxu0
      %v7655 = vadd.f32 0.0, %v7654
      %7656 = vdwg.mxu0
      %v7657 = vmax.f32 %v7629, 0.0
      %v7658 = vmax.f32 %v7648, 0.0
      %v7659 = vmax.f32 %v7631, 0.0
      %v7660 = vmax.f32 %v7650, 0.0
      %v7661 = vmax.f32 %v7634, 0.0
      %v7662 = vmax.f32 %v7653, 0.0
      %v7663 = vmax.f32 %v7636, 0.0
      %v7664 = vmax.f32 %v7655, 0.0
      %v7665 = vpack.c.bf16 %v7659, %v7657
      %v7666 = vpack.c.bf16 %v7660, %v7658
      %v7667 = vpack.c.bf16 %v7663, %v7661
      %v7668 = vpack.c.bf16 %v7664, %v7662
      %v7669 = vld [vmem:[%s11] sm:$0xf]
      %v7670 = vld [vmem:[%s11 + $0x4] sm:$0xf]
      %v7671 = vld [vmem:[%s11 + $0x8] sm:$0xf]
      %v7672 = vld [vmem:[%s11 + $0xc] sm:$0xf]
      %v7673 = vld [vmem:[%s11 + $0x10] sm:$0xf]
      %v7674 = vld [vmem:[%s11 + $0x14] sm:$0xf]
      %v7675 = vld [vmem:[%s11 + $0x18] sm:$0xf]
      %v7676 = vld [vmem:[%s11 + $0x1c] sm:$0xf]
      %v7685 = vunpack.c.l.b16 %v7669
      %v7686 = vunpack.c.l.b16 %v7670
      %v7687 = vunpack.c.l.b16 %v7671
      %v7688 = vunpack.c.l.b16 %v7672
      %v7689 = vunpack.c.l.b16 %v7673
      %v7690 = vunpack.c.l.b16 %v7674
      %v7691 = vunpack.c.l.b16 %v7675
      %v7692 = vunpack.c.l.b16 %v7676
      %v7693 = vpack.c.b16 %v7686, %v7685
      %v7694 = vpack.c.b16 %v7688, %v7687
      %v7695 = vpack.c.b16 %v7690, %v7689
      %v7696 = vpack.c.b16 %v7692, %v7691
      %v7698 = vsel %vm1409, %v7693, 0
      %v7701 = vsel %vm1409, %v7694, 0
      %v7704 = vsel %vm1409, %v7695, 0
      %v7707 = vsel %vm1409, %v7696, 0
      %7709 = vmatpush.bf16.msra.mxu0 0
      %7710 = vmatpush.bf16.msra.mxu0 0
      %7711 = vmatpush.bf16.msra.mxu0 0
      %7712 = vmatpush.bf16.msra.mxu0 0
      %7713 = vmatpush.bf16.msra.mxu0 0
      %7714 = vmatpush.bf16.msra.mxu0 0
      %7715 = vmatpush.bf16.msra.mxu0 %v7667
      %7716 = vmatpush.bf16.msra.mxu0 %v7665
      %7717 = vmatmul.bf16.gmra.mxu0 %v7698
      %v7718 = vpop.f32.mrf.mxu0
      %v7719 = vadd.f32 0.0, %v7718
      %v7720 = vpop.f32.mrf.mxu0
      %v7721 = vadd.f32 0.0, %v7720
      %7722 = vmatmul.bf16.gmra.mxu0 %v7701
      %v7723 = vpop.f32.mrf.mxu0
      %v7724 = vadd.f32 0.0, %v7723
      %v7725 = vpop.f32.mrf.mxu0
      %v7726 = vadd.f32 0.0, %v7725
      %7727 = vmatmul.bf16.gmra.mxu0 %v7704
      %v7728 = vpop.f32.mrf.mxu0
      %v7729 = vadd.f32 0.0, %v7728
      %v7730 = vpop.f32.mrf.mxu0
      %v7731 = vadd.f32 0.0, %v7730
      %7732 = vmatmul.bf16.gmra.mxu0 %v7707
      %v7733 = vpop.f32.mrf.mxu0
      %v7734 = vadd.f32 0.0, %v7733
      %v7735 = vpop.f32.mrf.mxu0
      %v7736 = vadd.f32 0.0, %v7735
      %7737 = vdwg.mxu0
      %7738 = vmatpush.bf16.msra.mxu0 0
      %7739 = vmatpush.bf16.msra.mxu0 0
      %7740 = vmatpush.bf16.msra.mxu0 0
      %7741 = vmatpush.bf16.msra.mxu0 0
      %7742 = vmatpush.bf16.msra.mxu0 0
      %7743 = vmatpush.bf16.msra.mxu0 0
      %7744 = vmatpush.bf16.msra.mxu0 %v7668
      %7745 = vmatpush.bf16.msra.mxu0 %v7666
      %7746 = vmatmul.bf16.gmra.mxu0 %v7698
      %v7747 = vpop.f32.mrf.mxu0
      %v7748 = vadd.f32 0.0, %v7747
      %v7749 = vpop.f32.mrf.mxu0
      %v7750 = vadd.f32 0.0, %v7749
      %7751 = vmatmul.bf16.gmra.mxu0 %v7701
      %v7752 = vpop.f32.mrf.mxu0
      %v7753 = vadd.f32 0.0, %v7752
      %v7754 = vpop.f32.mrf.mxu0
      %v7755 = vadd.f32 0.0, %v7754
      %7756 = vmatmul.bf16.gmra.mxu0 %v7704
      %v7757 = vpop.f32.mrf.mxu0
      %v7758 = vadd.f32 0.0, %v7757
      %v7759 = vpop.f32.mrf.mxu0
      %v7760 = vadd.f32 0.0, %v7759
      %7761 = vmatmul.bf16.gmra.mxu0 %v7707
      %v7762 = vpop.f32.mrf.mxu0
      %v7763 = vadd.f32 0.0, %v7762
      %v7764 = vpop.f32.mrf.mxu0
      %v7765 = vadd.f32 0.0, %v7764
      %7766 = vdwg.mxu0
      %v7767 = vmax.f32 %v7719, 0.0
      %v7768 = vmax.f32 %v7748, 0.0
      %v7769 = vmax.f32 %v7721, 0.0
      %v7770 = vmax.f32 %v7750, 0.0
      %v7771 = vmax.f32 %v7724, 0.0
      %v7772 = vmax.f32 %v7753, 0.0
      %v7773 = vmax.f32 %v7726, 0.0
      %v7774 = vmax.f32 %v7755, 0.0
      %v7775 = vmax.f32 %v7729, 0.0
      %v7776 = vmax.f32 %v7758, 0.0
      %v7777 = vmax.f32 %v7731, 0.0
      %v7778 = vmax.f32 %v7760, 0.0
      %v7779 = vmax.f32 %v7734, 0.0
      %v7780 = vmax.f32 %v7763, 0.0
      %v7781 = vmax.f32 %v7736, 0.0
      %v7782 = vmax.f32 %v7765, 0.0
      %v7783 = vpack.c.bf16 %v7470, %v7468
      %v7784 = vpack.c.bf16 %v7471, %v7469
      %v7785 = vpack.c.bf16 %v7474, %v7472
      %v7786 = vpack.c.bf16 %v7475, %v7473
      %v7787 = vpack.c.bf16 %v7478, %v7476
      %v7788 = vpack.c.bf16 %v7479, %v7477
      %v7789 = vpack.c.bf16 %v7482, %v7480
      %v7790 = vpack.c.bf16 %v7483, %v7481
      %v7791 = vld [vmem:[%s13] sm:$0x1]
      %v7793 = vsel %vm7512, %v7791, 0
      %7795 = vmatpush.bf16.msra.mxu0 0
      %7796 = vmatpush.bf16.msra.mxu0 0
      %7797 = vmatpush.bf16.msra.mxu0 0
      %7798 = vmatpush.bf16.msra.mxu0 0
      %7799 = vmatpush.bf16.msra.mxu0 %v7789
      %7800 = vmatpush.bf16.msra.mxu0 %v7787
      %7801 = vmatpush.bf16.msra.mxu0 %v7785
      %7802 = vmatpush.bf16.msra.mxu0 %v7783
      %7803 = vmatmul.bf16.gmra.mxu0 %v7793
      %v7804 = vpop.f32.mrf.mxu0
      %v7805 = vadd.f32 0.0, %v7804
      %v7806 = vpop.f32.mrf.mxu0
      %7807 = vdwg.mxu0
      %7808 = vmatpush.bf16.msra.mxu0 0
      %7809 = vmatpush.bf16.msra.mxu0 0
      %7810 = vmatpush.bf16.msra.mxu0 0
      %7811 = vmatpush.bf16.msra.mxu0 0
      %7812 = vmatpush.bf16.msra.mxu0 %v7790
      %7813 = vmatpush.bf16.msra.mxu0 %v7788
      %7814 = vmatpush.bf16.msra.mxu0 %v7786
      %7815 = vmatpush.bf16.msra.mxu0 %v7784
      %7816 = vmatmul.bf16.gmra.mxu0 %v7793
      %v7817 = vpop.f32.mrf.mxu0
      %v7818 = vadd.f32 0.0, %v7817
      %v7819 = vpop.f32.mrf.mxu0
      %7820 = vdwg.mxu0
      %v7821 = vsub.f32 0.0, %v7805
      %v7822 = vsub.f32 0.0, %v7818
      %v7823 = vmul.f32 %v7821, 1.442695
      %v7824 = vpow.pop %v7823
      %v7825 = vmul.f32 %v7822, 1.442695
      %v7826 = vpow.pop %v7825
      %v7827 = vadd.f32 %v7824, 1.0
      %v7828 = vadd.f32 %v7826, 1.0
      %v7829 = vrcp.pop %v7827
      %v7830 = vmul.f32 %v7827, %v7829
      %v7831 = vsub.f32 1.0, %v7830
      %v7832 = vmul.f32 %v7829, %v7831
      %v7833 = vadd.f32 %v7829, %v7832
      %vm7834 = vweird.f32 %v7827
      %vm7835 = vweird.f32 %v7829
      %vm7836 = vmor %vm7834, %vm7835
      %v7837 = vsel %vm7836, %v7829, %v7833
      %v7838 = vand.u32 2147483647, %v7827
      %vm7839 = vcmp.eq.f32.partialorder %v7838, 8.507059e+37
      %v7840 = vand.u32 %v7827, 2147483648
      %v7841 = vor.u32 1.1754944e-38, %v7840
      %v7842 = vsel %vm7839, %v7841, %v7837
      %v7843 = vmul.f32 1.0, %v7842
      %v7844 = vrcp.pop %v7828
      %v7845 = vmul.f32 %v7828, %v7844
      %v7846 = vsub.f32 1.0, %v7845
      %v7847 = vmul.f32 %v7844, %v7846
      %v7848 = vadd.f32 %v7844, %v7847
      %vm7849 = vweird.f32 %v7828
      %vm7850 = vweird.f32 %v7844
      %vm7851 = vmor %vm7849, %vm7850
      %v7852 = vsel %vm7851, %v7844, %v7848
      %v7853 = vand.u32 2147483647, %v7828
      %vm7854 = vcmp.eq.f32.partialorder %v7853, 8.507059e+37
      %v7855 = vand.u32 %v7828, 2147483648
      %v7856 = vor.u32 1.1754944e-38, %v7855
      %v7857 = vsel %vm7854, %v7856, %v7852
      %v7858 = vmul.f32 1.0, %v7857
      %v7859 = vpack.c.bf16 %v7585, %v7583
      %v7860 = vpack.c.bf16 %v7586, %v7584
      %v7861 = vpack.c.bf16 %v7589, %v7587
      %v7862 = vpack.c.bf16 %v7590, %v7588
      %v7863 = vpack.c.bf16 %v7593, %v7591
      %v7864 = vpack.c.bf16 %v7594, %v7592
      %v7865 = vpack.c.bf16 %v7597, %v7595
      %v7866 = vpack.c.bf16 %v7598, %v7596
      %v7867 = vld [vmem:[%s14] sm:$0x1]
      %v7869 = vsel %vm7512, %v7867, 0
      %7871 = vmatpush.bf16.msra.mxu0 0
      %7872 = vmatpush.bf16.msra.mxu0 0
      %7873 = vmatpush.bf16.msra.mxu0 0
      %7874 = vmatpush.bf16.msra.mxu0 0
      %7875 = vmatpush.bf16.msra.mxu0 %v7865
      %7876 = vmatpush.bf16.msra.mxu0 %v7863
      %7877 = vmatpush.bf16.msra.mxu0 %v7861
      %7878 = vmatpush.bf16.msra.mxu0 %v7859
      %7879 = vmatmul.bf16.gmra.mxu0 %v7869
      %v7880 = vpop.f32.mrf.mxu0
      %v7881 = vadd.f32 0.0, %v7880
      %v7882 = vpop.f32.mrf.mxu0
      %7883 = vdwg.mxu0
      %7884 = vmatpush.bf16.msra.mxu0 0
      %7885 = vmatpush.bf16.msra.mxu0 0
      %7886 = vmatpush.bf16.msra.mxu0 0
      %7887 = vmatpush.bf16.msra.mxu0 0
      %7888 = vmatpush.bf16.msra.mxu0 %v7866
      %7889 = vmatpush.bf16.msra.mxu0 %v7864
      %7890 = vmatpush.bf16.msra.mxu0 %v7862
      %7891 = vmatpush.bf16.msra.mxu0 %v7860
      %7892 = vmatmul.bf16.gmra.mxu0 %v7869
      %v7893 = vpop.f32.mrf.mxu0
      %v7894 = vadd.f32 0.0, %v7893
      %v7895 = vpop.f32.mrf.mxu0
      %7896 = vdwg.mxu0
      %v7897 = vsub.f32 0.0, %v7881
      %v7898 = vsub.f32 0.0, %v7894
      %v7899 = vmul.f32 %v7897, 1.442695
      %v7900 = vpow.pop %v7899
      %v7901 = vmul.f32 %v7898, 1.442695
      %v7902 = vpow.pop %v7901
      %v7903 = vadd.f32 %v7900, 1.0
      %v7904 = vadd.f32 %v7902, 1.0
      %v7905 = vrcp.pop %v7903
      %v7906 = vmul.f32 %v7903, %v7905
      %v7907 = vsub.f32 1.0, %v7906
      %v7908 = vmul.f32 %v7905, %v7907
      %v7909 = vadd.f32 %v7905, %v7908
      %vm7910 = vweird.f32 %v7903
      %vm7911 = vweird.f32 %v7905
      %vm7912 = vmor %vm7910, %vm7911
      %v7913 = vsel %vm7912, %v7905, %v7909
      %v7914 = vand.u32 2147483647, %v7903
      %vm7915 = vcmp.eq.f32.partialorder %v7914, 8.507059e+37
      %v7916 = vand.u32 %v7903, 2147483648
      %v7917 = vor.u32 1.1754944e-38, %v7916
      %v7918 = vsel %vm7915, %v7917, %v7913
      %v7919 = vmul.f32 1.0, %v7918
      %v7920 = vrcp.pop %v7904
      %v7921 = vmul.f32 %v7904, %v7920
      %v7922 = vsub.f32 1.0, %v7921
      %v7923 = vmul.f32 %v7920, %v7922
      %v7924 = vadd.f32 %v7920, %v7923
      %vm7925 = vweird.f32 %v7904
      %vm7926 = vweird.f32 %v7920
      %vm7927 = vmor %vm7925, %vm7926
      %v7928 = vsel %vm7927, %v7920, %v7924
      %v7929 = vand.u32 2147483647, %v7904
      %vm7930 = vcmp.eq.f32.partialorder %v7929, 8.507059e+37
      %v7931 = vand.u32 %v7904, 2147483648
      %v7932 = vor.u32 1.1754944e-38, %v7931
      %v7933 = vsel %vm7930, %v7932, %v7928
      %v7934 = vmul.f32 1.0, %v7933
      %v7935 = vperm.slane %v7843, 1
      %v7936 = vperm.slane %v7858, 1
      %v7937 = vmul.f32 %v7468, %v7935
      %v7938 = vmul.f32 %v7469, %v7936
      %v7939 = vmul.f32 %v7470, %v7935
      %v7940 = vmul.f32 %v7471, %v7936
      %v7941 = vmul.f32 %v7472, %v7935
      %v7942 = vmul.f32 %v7473, %v7936
      %v7943 = vmul.f32 %v7474, %v7935
      %v7944 = vmul.f32 %v7475, %v7936
      %v7945 = vmul.f32 %v7476, %v7935
      %v7946 = vmul.f32 %v7477, %v7936
      %v7947 = vmul.f32 %v7478, %v7935
      %v7948 = vmul.f32 %v7479, %v7936
      %v7949 = vmul.f32 %v7480, %v7935
      %v7950 = vmul.f32 %v7481, %v7936
      %v7951 = vmul.f32 %v7482, %v7935
      %v7952 = vmul.f32 %v7483, %v7936
      %v7953 = vadd.f32 %v7767, %v7937
      %v7954 = vadd.f32 %v7768, %v7938
      %v7955 = vadd.f32 %v7769, %v7939
      %v7956 = vadd.f32 %v7770, %v7940
      %v7957 = vadd.f32 %v7771, %v7941
      %v7958 = vadd.f32 %v7772, %v7942
      %v7959 = vadd.f32 %v7773, %v7943
      %v7960 = vadd.f32 %v7774, %v7944
      %v7961 = vadd.f32 %v7775, %v7945
      %v7962 = vadd.f32 %v7776, %v7946
      %v7963 = vadd.f32 %v7777, %v7947
      %v7964 = vadd.f32 %v7778, %v7948
      %v7965 = vadd.f32 %v7779, %v7949
      %v7966 = vadd.f32 %v7780, %v7950
      %v7967 = vadd.f32 %v7781, %v7951
      %v7968 = vadd.f32 %v7782, %v7952
      %v7969 = vperm.slane %v7843, 0
      %v7970 = vperm.slane %v7858, 0
      %v7971 = vmul.f32 %v7468, %v7969
      %v7972 = vmul.f32 %v7469, %v7970
      %v7973 = vmul.f32 %v7470, %v7969
      %v7974 = vmul.f32 %v7471, %v7970
      %v7975 = vmul.f32 %v7472, %v7969
      %v7976 = vmul.f32 %v7473, %v7970
      %v7977 = vmul.f32 %v7474, %v7969
      %v7978 = vmul.f32 %v7475, %v7970
      %v7979 = vmul.f32 %v7476, %v7969
      %v7980 = vmul.f32 %v7477, %v7970
      %v7981 = vmul.f32 %v7478, %v7969
      %v7982 = vmul.f32 %v7479, %v7970
      %v7983 = vmul.f32 %v7480, %v7969
      %v7984 = vmul.f32 %v7481, %v7970
      %v7985 = vmul.f32 %v7482, %v7969
      %v7986 = vmul.f32 %v7483, %v7970
      %v7987 = vperm.slane %v7919, 0
      %v7988 = vperm.slane %v7934, 0
      %v7989 = vmul.f32 %v7583, %v7987
      %v7990 = vmul.f32 %v7584, %v7988
      %v7991 = vmul.f32 %v7585, %v7987
      %v7992 = vmul.f32 %v7586, %v7988
      %v7993 = vmul.f32 %v7587, %v7987
      %v7994 = vmul.f32 %v7588, %v7988
      %v7995 = vmul.f32 %v7589, %v7987
      %v7996 = vmul.f32 %v7590, %v7988
      %v7997 = vmul.f32 %v7591, %v7987
      %v7998 = vmul.f32 %v7592, %v7988
      %v7999 = vmul.f32 %v7593, %v7987
      %v8000 = vmul.f32 %v7594, %v7988
      %v8001 = vmul.f32 %v7595, %v7987
      %v8002 = vmul.f32 %v7596, %v7988
      %v8003 = vmul.f32 %v7597, %v7987
      %v8004 = vmul.f32 %v7598, %v7988
      %v8005 = vadd.f32 %v7971, %v7989
      %v8006 = vadd.f32 %v7972, %v7990
      %v8007 = vadd.f32 %v7973, %v7991
      %v8008 = vadd.f32 %v7974, %v7992
      %v8009 = vadd.f32 %v7975, %v7993
      %v8010 = vadd.f32 %v7976, %v7994
      %v8011 = vadd.f32 %v7977, %v7995
      %v8012 = vadd.f32 %v7978, %v7996
      %v8013 = vadd.f32 %v7979, %v7997
      %v8014 = vadd.f32 %v7980, %v7998
      %v8015 = vadd.f32 %v7981, %v7999
      %v8016 = vadd.f32 %v7982, %v8000
      %v8017 = vadd.f32 %v7983, %v8001
      %v8018 = vadd.f32 %v7984, %v8002
      %v8019 = vadd.f32 %v7985, %v8003
      %v8020 = vadd.f32 %v7986, %v8004
      %v8021 = vpack.c.bf16 %v8007, %v8005
      %v8022 = vpack.c.bf16 %v8008, %v8006
      %v8023 = vpack.c.bf16 %v8011, %v8009
      %v8024 = vpack.c.bf16 %v8012, %v8010
      %v8025 = vpack.c.bf16 %v8015, %v8013
      %v8026 = vpack.c.bf16 %v8016, %v8014
      %v8027 = vpack.c.bf16 %v8019, %v8017
      %v8028 = vpack.c.bf16 %v8020, %v8018
      %v8029 = vld [vmem:[%s12] sm:$0x3]
      %v8031 = vsel %vm7512, %v8029, 0
      %8033 = vmatpush.bf16.msra.mxu0 0
      %8034 = vmatpush.bf16.msra.mxu0 0
      %8035 = vmatpush.bf16.msra.mxu0 0
      %8036 = vmatpush.bf16.msra.mxu0 0
      %8037 = vmatpush.bf16.msra.mxu0 %v8027
      %8038 = vmatpush.bf16.msra.mxu0 %v8025
      %8039 = vmatpush.bf16.msra.mxu0 %v8023
      %8040 = vmatpush.bf16.msra.mxu0 %v8021
      %8041 = vmatmul.bf16.gmra.mxu0 %v8031
      %v8042 = vpop.f32.mrf.mxu0
      %v8043 = vadd.f32 0.0, %v8042
      %v8044 = vpop.f32.mrf.mxu0
      %8045 = vdwg.mxu0
      %8046 = vmatpush.bf16.msra.mxu0 0
      %8047 = vmatpush.bf16.msra.mxu0 0
      %8048 = vmatpush.bf16.msra.mxu0 0
      %8049 = vmatpush.bf16.msra.mxu0 0
      %8050 = vmatpush.bf16.msra.mxu0 %v8028
      %8051 = vmatpush.bf16.msra.mxu0 %v8026
      %8052 = vmatpush.bf16.msra.mxu0 %v8024
      %8053 = vmatpush.bf16.msra.mxu0 %v8022
      %8054 = vmatmul.bf16.gmra.mxu0 %v8031
      %v8055 = vpop.f32.mrf.mxu0
      %v8056 = vadd.f32 0.0, %v8055
      %v8057 = vpop.f32.mrf.mxu0
      %8058 = vdwg.mxu0
      %v8059 = vpack.c.bf16 %v7954, %v7953
      %v8060 = vpack.c.bf16 %v7956, %v7955
      %v8061 = vpack.c.bf16 %v7958, %v7957
      %v8062 = vpack.c.bf16 %v7960, %v7959
      %v8063 = vpack.c.bf16 %v7962, %v7961
      %v8064 = vpack.c.bf16 %v7964, %v7963
      %v8065 = vpack.c.bf16 %v7966, %v7965
      %v8066 = vpack.c.bf16 %v7968, %v7967
      %8067 = vst [vmem:[%s682] sm:$0xff] %v8059
      %8068 = vst [vmem:[%s682 + $0x8] sm:$0xff] %v8060
      %8069 = vst [vmem:[%s682 + $0x10] sm:$0xff] %v8061
      %8070 = vst [vmem:[%s682 + $0x18] sm:$0xff] %v8062
      %8071 = vst [vmem:[%s682 + $0x20] sm:$0xff] %v8063
      %8072 = vst [vmem:[%s682 + $0x28] sm:$0xff] %v8064
      %8073 = vst [vmem:[%s682 + $0x30] sm:$0xff] %v8065
      %8074 = vst [vmem:[%s682 + $0x38] sm:$0xff] %v8066
      %v8077 = vrot.slane %v8056, 4
      %vm8078 = vcmask 1043456
      %v8079 = vsel %vm8078, %v8043, %v8077
      %8081 = vst [vmem:[%s692] sm:$0xff] %v8079
      %s8082 = smul.u32 2, %s33
      %p8083 = scmp.lt.s32.totalorder %s32, 1
      %s8084 = scalar_select %p8083, %s32, 1
      %p8085 = scmp.lt.s32.totalorder %s8082, 1
      %s8086 = scalar_select %p8085, %s8082, 1
      %s8087 = smul.addr %s8084, 16
      %s8088 = sadd.s32 %s8086, %s8087
      %s8089 = smul.addr %s8088, 4
      %s8090 = scalar_lea.vmem %s15, %s8089
      %s8091 = smul.u32 2, %s33
      %p8092 = scmp.lt.s32.totalorder %s32, 1
      %s8093 = scalar_select %p8092, %s32, 1
      %p8094 = scmp.lt.s32.totalorder %s8091, 1
      %s8095 = scalar_select %p8094, %s8091, 1
      %s8096 = smul.addr %s8093, 2
      %s8097 = sadd.s32 %s8095, %s8096
      %s8098 = smul.addr %s8097, 4
      %s8099 = scalar_lea.vmem %s16, %s8098
      // Predicated region
      $region81: #{pointnet_fp_forward.1} parent=79 // pred_check
        %p8100 = pneg %p406
      $region82: #{pointnet_fp_forward.1} parent=79 // pred_check_branch
        %8102 = sbr.rel (%p8100) target = $region84
      $region83: #{pointnet_fp_forward.1} parent=79 // pred_region
        %s8103 = smul.u32 2, %s33
      $region84: #{pointnet_fp_forward.1} parent=79 // pred_fallthru
        _
      // Predicated region
      $region85: #{pointnet_fp_forward.1} parent=79 // pred_check
        %p8104 = pneg %p434
      $region86: #{pointnet_fp_forward.1} parent=79 // pred_check_branch
        %8106 = sbr.rel (%p8104) target = $region88
      $region87: #{pointnet_fp_forward.1} parent=79 // pred_region
        %s8107 = smul.u32 2, %s33
      $region88: #{pointnet_fp_forward.1} parent=79 // pred_fallthru
        _
    $region80: #{pointnet_fp_forward.1} parent=5 // pred_fallthru
      _
    %p8108 = scmp.le.s32.totalorder 2, %s23
    // Predicated region
    $region89: #{pointnet_fp_forward.1} parent=5 // pred_check
      %p8109 = pneg %p8108
    $region90: #{pointnet_fp_forward.1} parent=5 // pred_check_branch
      %8111 = sbr.rel (%p8109) target = $region92
    $region91: #{pointnet_fp_forward.1} parent=5 // pred_region
      %s8112 = ssub.s32 %s23, 2
      // Predicated region
      $region93: #{pointnet_fp_forward.1} parent=91 // pred_check
        %p8113 = pneg %p412
      $region94: #{pointnet_fp_forward.1} parent=91 // pred_check_branch
        %8115 = sbr.rel (%p8113) target = $region96
      $region95: #{pointnet_fp_forward.1} parent=91 // pred_region
        %s8116 = smul.u32 2, %s35
        %p8117 = scmp.lt.s32.totalorder %s34, 1
        %s8118 = scalar_select %p8117, %s34, 1
        %p8119 = scmp.lt.s32.totalorder %s8116, 1
        %s8120 = scalar_select %p8119, %s8116, 1
        %s8121 = smul.addr %s8118, 16
        %s8122 = sadd.s32 %s8120, %s8121
        %s8123 = smul.addr %s8122, 4
        %s8124 = scalar_lea.vmem %s15, %s8123
      $region96: #{pointnet_fp_forward.1} parent=91 // pred_fallthru
        _
      // Predicated region
      $region97: #{pointnet_fp_forward.1} parent=91 // pred_check
        %p8125 = pneg %p440
      $region98: #{pointnet_fp_forward.1} parent=91 // pred_check_branch
        %8127 = sbr.rel (%p8125) target = $region100
      $region99: #{pointnet_fp_forward.1} parent=91 // pred_region
        %s8128 = smul.u32 2, %s35
        %p8129 = scmp.lt.s32.totalorder %s34, 1
        %s8130 = scalar_select %p8129, %s34, 1
        %p8131 = scmp.lt.s32.totalorder %s8128, 1
        %s8132 = scalar_select %p8131, %s8128, 1
        %s8133 = smul.addr %s8130, 2
        %s8134 = sadd.s32 %s8132, %s8133
        %s8135 = smul.addr %s8134, 4
        %s8136 = scalar_lea.vmem %s16, %s8135
      $region100: #{pointnet_fp_forward.1} parent=91 // pred_fallthru
        _
    $region92: #{pointnet_fp_forward.1} parent=5 // pred_fallthru
      _
  $region6: #{pointnet_fp_forward.1} parent=0 // loop_footer
    %s27 = sadd.s32 1, %s23
  $region7: #{pointnet_fp_forward.1} parent=0 // loop_footer_branch
    %22 = sbr.rel target = $region3
  $region8: #{pointnet_fp_forward.1} parent=0 // loop_exit
    _

</llo_original>
